<compile_context>
chip_gen: v7x
topology: tpu7x:2x2x1
jax: 0.10.0
libtpu: 0.0.40
codegen_flags: <defaults>
</compile_context>

<pallas_src>
import functools

import numpy as np

import jax
import jax.numpy as jnp
from jax.experimental import pallas as pl
from jax.experimental.pallas import tpu as pltpu

F32 = jnp.float32
BF16 = jnp.bfloat16


# ----------------------------------------------------------------------------
# Trace-time constant: small per-tile pool2 gather (O(tile_b^2), tile_b <= 8).
# ----------------------------------------------------------------------------
def _pool2_gather(tile_b, n2):
    """(25*tile_b, n2) 0/0.25 gather: 2x2 mean-pool of conv2's valid 10x10
    region; rows ordered (position p, image t) so conv3's patch build reads
    each tap as one contiguous (tile_b, 16) block."""
    g = np.zeros((25 * tile_b, n2), np.float32)
    for p in range(25):
        y, x = divmod(p, 5)
        for t in range(tile_b):
            r = p * tile_b + t
            for dy in range(2):
                for dx in range(2):
                    g[r, t * 196 + (2 * y + dy) * 14 + (2 * x + dx)] = 0.25
    return g


# ----------------------------------------------------------------------------
# Fused kernel: one batch tile per grid step, everything VMEM-resident.
# ----------------------------------------------------------------------------
def _lenet5_kernel(patches_ref, w1_ref, b1_ref, w2_ref, b2_ref, g2_ref,
                   w3_ref, b3_ref, wf1_ref, bf1_ref, wf2_ref, bf2_ref,
                   out_ref, s2_ref, p2_ref, p3_ref, *, tile_b, n2):
    # conv1 (1->6, 5x5) + tanh + avgpool1 in "quad" layout: each patch row is
    # one pooled 14x14 position (K = 6x6 input window), lanes hold the 2x2
    # pre-pool outputs as 4 groups of 8 channels -> pooling is 3 lane-slice
    # adds, no strided loads, no dense pool matrix.
    a1 = jnp.dot(patches_ref[...].astype(BF16), w1_ref[...],
                 preferred_element_type=F32)                     # (T*196, 32)
    a1 = jnp.tanh(a1 + b1_ref[...])   # f32 tanh: portable to v5e (no bf16 EUP)
    s2_ref[...] = 0.25 * (a1[:, 0:8] + a1[:, 8:16]
                          + a1[:, 16:24] + a1[:, 24:32])         # (T*196, 8)

    # conv2 (6->16, 5x5) + tanh: in-kernel im2col into a (n2, 200) scratch
    # (25 taps x 8 ch at lane offsets t*8), then ONE bf16 MXU matmul with f32
    # accumulation (no 25x K=8 matmuls, no spilling live accumulator).
    for t in range(25):
        i, j = divmod(t, 5)
        p2_ref[:, t * 8:(t + 1) * 8] = s2_ref[pl.ds(i * 14 + j, n2), :]
    a2 = jnp.dot(p2_ref[...].astype(BF16), w2_ref[...],
                 preferred_element_type=F32)                     # (n2, 128)
    a2 = jnp.tanh(a2 + b2_ref[...]).astype(BF16)

    # avgpool2 + row reorder to (position, image): small per-tile 0/0.25 bf16
    # gather matmul (size independent of total batch).
    s4 = jnp.dot(g2_ref[...], a2, preferred_element_type=F32)    # (25*T, 128)

    # conv3 (16->120, 5x5 -> 1x1) + tanh: gather the 25 taps x 16 ch into one
    # (tile_b, 400) patch row per image, then ONE bf16 matmul (K=400).
    for p in range(25):
        p3_ref[:, p * 16:(p + 1) * 16] = s4[p * tile_b:(p + 1) * tile_b, :16]
    h = jnp.dot(p3_ref[...].astype(BF16), w3_ref[...],
                preferred_element_type=F32)                      # (T, 128)
    h = jnp.tanh(h + b3_ref[...])

    # classifier: fc1 + tanh, fc2 (outputs padded to 128 lanes, sliced outside).
    h = jnp.tanh(jnp.dot(h.astype(BF16), wf1_ref[...],
                         preferred_element_type=F32) + bf1_ref[...])
    logits = (jnp.dot(h.astype(BF16), wf2_ref[...],
                      preferred_element_type=F32) + bf2_ref[...])
    out_ref[0] = logits
    # NOTE: the PyTorch forward computes F.softmax(logits) but returns logits;
    # the softmax is dead code, so it is not computed here.


# ----------------------------------------------------------------------------
# Host-side wrappers
# ----------------------------------------------------------------------------
def prepare_params(params, n_classes):
    """One-time weight preprocessing into MXU-friendly bf16 (K, N) layouts;
    padded output channels are zero so they stay exactly 0 through bias+tanh."""
    def pad2(a, rows, cols):
        r, c = a.shape
        return jnp.pad(a, ((0, rows - r), (0, cols - c)))

    # conv1 "quad" weights: W1q[u*6+v, (dy*2+dx)*8 + c] = w1[c, 0, u-dy, v-dx]
    # (6x6 input window -> the four 2x2 pre-pool outputs in 8-lane groups).
    w1 = np.asarray(params["w1"], np.float32)            # (6, 1, 5, 5)
    w1q = np.zeros((36, 32), np.float32)
    for dy in range(2):
        for dx in range(2):
            g = dy * 2 + dx
            for u in range(6):
                for v in range(6):
                    i, j = u - dy, v - dx
                    if 0 <= i < 5 and 0 <= j < 5:
                        w1q[u * 6 + v, g * 8:g * 8 + 6] = w1[:, 0, i, j]
    b1q = jnp.tile(jnp.pad(params["b1"], (0, 2)), 4).reshape(1, 32)

    w2 = params["w2"].transpose(2, 3, 1, 0).reshape(25, 6, 16)
    w2 = jnp.pad(w2, ((0, 0), (0, 2), (0, 112))).reshape(200, 128)
    w3 = params["w3"].transpose(2, 3, 1, 0).reshape(25, 16, 120)
    w3 = jnp.pad(w3, ((0, 0), (0, 0), (0, 8))).reshape(400, 128)
    return {
        "W1q": jnp.asarray(w1q, BF16),                   # (36, 32)
        "b1q": b1q.astype(F32),                          # (1, 32)
        "W2m": w2.astype(BF16),                          # (200, 128)
        "b2": pad2(params["b2"].reshape(1, 16), 1, 128).astype(F32),
        "W3m": w3.astype(BF16),                          # (400, 128)
        "b3": pad2(params["b3"].reshape(1, 120), 1, 128).astype(F32),
        "Wf1": pad2(params["wf1"], 128, 128).astype(BF16),
        "bf1": pad2(params["bf1"].reshape(1, 84), 1, 128).astype(F32),
        "Wf2": pad2(params["wf2"], 128, 128).astype(BF16),
        "bf2": pad2(params["bf2"].reshape(1, n_classes), 1, 128).astype(F32),
    }


@functools.partial(jax.jit, static_argnums=(2, 3))
def lenet5_forward(x, prep, n_classes, tile_b=2):
    batch = x.shape[0]
    assert x.shape[1:] == (1, 32, 32), "classic LeNet5 expects (B, 1, 32, 32)"
    assert batch % tile_b == 0
    assert tile_b % 2 == 0 or tile_b == batch  # keep patch blocks 8-row aligned
    num_tiles = batch // tile_b
    n2 = (tile_b - 1) * 196 + 136   # last conv2 row actually needed per tile

    # conv1 input-side "quad" im2col: one row per pooled 14x14 position, K=36
    # (the 6x6 input window feeding its 2x2 pre-pool block).  ~28 KB/image.
    img = x[:, 0]
    cols = [img[:, u:u + 27:2, v:v + 27:2] for u in range(6) for v in range(6)]
    patches = jnp.stack(cols, axis=-1).reshape(batch * 196, 36).astype(F32)

    g2 = jnp.asarray(_pool2_gather(tile_b, n2), dtype=BF16)

    operands = (patches, prep["W1q"], prep["b1q"],
                prep["W2m"], prep["b2"], g2, prep["W3m"], prep["b3"],
                prep["Wf1"], prep["bf1"], prep["Wf2"], prep["bf2"])

    weight_specs = [pl.BlockSpec(o.shape, lambda i: (0, 0))
                    for o in operands[1:]]
    in_specs = ([pl.BlockSpec((tile_b * 196, 36), lambda i: (i, 0))]
                + weight_specs)

    flops = 2 * (batch * 196 * 36 * 32
                 + num_tiles * n2 * 200 * 128
                 + num_tiles * 25 * tile_b * n2 * 128
                 + batch * 400 * 128
                 + 2 * batch * 128 * 128)
    transcendentals = batch * 196 * 32 + num_tiles * n2 * 128 + 2 * batch * 128
    bytes_accessed = (sum(int(np.prod(o.shape)) * o.dtype.itemsize
                          for o in operands) + batch * 128 * 4)

    kernel = functools.partial(_lenet5_kernel, tile_b=tile_b, n2=n2)
    out = pl.pallas_call(
        kernel,
        out_shape=jax.ShapeDtypeStruct((num_tiles, tile_b, 128), F32),
        grid=(num_tiles,),
        in_specs=in_specs,
        out_specs=pl.BlockSpec((1, tile_b, 128), lambda i: (i, 0, 0)),
        scratch_shapes=[
            pltpu.VMEM((tile_b * 196, 8), F32),   # s2: pooled conv1 activations
            pltpu.VMEM((n2, 200), F32),           # conv2 im2col patches
            pltpu.VMEM((tile_b, 400), F32),       # conv3 im2col patches
        ],
        compiler_params=pltpu.CompilerParams(
            dimension_semantics=("parallel",),
            vmem_limit_bytes=32 * 1024 * 1024),
        cost_estimate=pl.CostEstimate(
            flops=flops, transcendentals=transcendentals,
            bytes_accessed=bytes_accessed),
    )(*operands)

    return out.reshape(batch, 128)[:, :n_classes]


def lenet5_reference(x, params):
    """Pure-JAX f32 reference matching the PyTorch module."""
    def conv_tanh(h, w, b):
        h = jax.lax.conv_general_dilated(
            h, w, window_strides=(1, 1), padding="VALID",
            dimension_numbers=("NCHW", "OIHW", "NCHW"))
        return jnp.tanh(h + b[None, :, None, None])

    def avgpool(h):
        b, c, hh, ww = h.shape
        return h.reshape(b, c, hh // 2, 2, ww // 2, 2).mean(axis=(3, 5))

    h = avgpool(conv_tanh(x, params["w1"], params["b1"]))
    h = avgpool(conv_tanh(h, params["w2"], params["b2"]))
    h = conv_tanh(h, params["w3"], params["b3"]).reshape(x.shape[0], -1)
    h = jnp.tanh(h @ params["wf1"] + params["bf1"])
    return h @ params["wf2"] + params["bf2"]


def init_params(key, n_classes):
    """Deterministic synthetic params (PyTorch-style uniform +/- 1/sqrt(fan_in))."""
    def uni(k, shape, fan_in):
        bound = 1.0 / (fan_in ** 0.5)
        return jax.random.uniform(k, shape, jnp.float32, -bound, bound)

    ks = jax.random.split(key, 10)
    return {
        "w1": uni(ks[0], (6, 1, 5, 5), 1 * 5 * 5),
        "b1": uni(ks[1], (6,), 1 * 5 * 5),
        "w2": uni(ks[2], (16, 6, 5, 5), 6 * 5 * 5),
        "b2": uni(ks[3], (16,), 6 * 5 * 5),
        "w3": uni(ks[4], (120, 16, 5, 5), 16 * 5 * 5),
        "b3": uni(ks[5], (120,), 16 * 5 * 5),
        # Linear weights stored as (in, out) so the forward computes x @ W + b.
        "wf1": uni(ks[6], (120, 84), 120),
        "bf1": uni(ks[7], (84,), 120),
        "wf2": uni(ks[8], (84, 10), 84),
        "bf2": uni(ks[9], (10,), 84),
    }


if __name__ == "__main__":
    n_classes = 10
    batch = 4
    tile_b = 2
    key = jax.random.PRNGKey(0)
    k_param, k_x = jax.random.split(key)
    params = init_params(k_param, n_classes)
    prep = prepare_params(params, n_classes)
    # Classic LeNet5 input: (B, 1, 32, 32) NCHW (required so conv3's 5x5 fits).
    x = jax.random.normal(k_x, (batch, 1, 32, 32), dtype=jnp.float32)

    logits = lenet5_forward(x, prep, n_classes, tile_b)
    logits = jax.block_until_ready(logits)
    assert logits.shape == (batch, n_classes)
    assert bool(jnp.all(jnp.isfinite(logits)))

    ref = lenet5_reference(x, params)
    err = float(jnp.max(jnp.abs(logits - ref)))
    assert err < 8e-2, f"max |kernel - reference| = {err}"
    print("KERNEL_OK")
</pallas_src>

<mosaic_0001>
module attributes {stable_mosaic.version = 11 : i64} {
  func.func @_lenet5_kernel(%arg0: i32, %arg1: memref<392x36xf32, #tpu.memory_space<vmem>>, %arg2: memref<36x32xbf16, #tpu.memory_space<vmem>>, %arg3: memref<1x32xf32, #tpu.memory_space<vmem>>, %arg4: memref<200x128xbf16, #tpu.memory_space<vmem>>, %arg5: memref<1x128xf32, #tpu.memory_space<vmem>>, %arg6: memref<50x332xbf16, #tpu.memory_space<vmem>>, %arg7: memref<400x128xbf16, #tpu.memory_space<vmem>>, %arg8: memref<1x128xf32, #tpu.memory_space<vmem>>, %arg9: memref<128x128xbf16, #tpu.memory_space<vmem>>, %arg10: memref<1x128xf32, #tpu.memory_space<vmem>>, %arg11: memref<128x128xbf16, #tpu.memory_space<vmem>>, %arg12: memref<1x128xf32, #tpu.memory_space<vmem>>, %arg13: memref<1x2x128xf32, #tpu.memory_space<vmem>>, %arg14: memref<392x8xf32, #tpu.memory_space<vmem>>, %arg15: memref<332x200xf32, #tpu.memory_space<vmem>>, %arg16: memref<2x400xf32, #tpu.memory_space<vmem>>) attributes {dimension_semantics = [#tpu.dimension_semantics<parallel>], iteration_bounds = array<i64: 2>, scalar_prefetch = 0 : i64, scratch_operands = 3 : i64, tpu.core_type = #tpu.core_type<tc>, window_params = [{transform_indices = @transform_0, window_bounds = array<i64: 392, 36>}, {pipeline_mode = #tpu.pipeline_mode<synchronous>, transform_indices = @transform_1, window_bounds = array<i64: 36, 32>}, {pipeline_mode = #tpu.pipeline_mode<synchronous>, transform_indices = @transform_2, window_bounds = array<i64: 1, 32>}, {pipeline_mode = #tpu.pipeline_mode<synchronous>, transform_indices = @transform_3, window_bounds = array<i64: 200, 128>}, {pipeline_mode = #tpu.pipeline_mode<synchronous>, transform_indices = @transform_4, window_bounds = array<i64: 1, 128>}, {pipeline_mode = #tpu.pipeline_mode<synchronous>, transform_indices = @transform_5, window_bounds = array<i64: 50, 332>}, {pipeline_mode = #tpu.pipeline_mode<synchronous>, transform_indices = @transform_6, window_bounds = array<i64: 400, 128>}, {pipeline_mode = #tpu.pipeline_mode<synchronous>, transform_indices = @transform_7, window_bounds = array<i64: 1, 128>}, {pipeline_mode = #tpu.pipeline_mode<synchronous>, transform_indices = @transform_8, window_bounds = array<i64: 128, 128>}, {pipeline_mode = #tpu.pipeline_mode<synchronous>, transform_indices = @transform_9, window_bounds = array<i64: 1, 128>}, {pipeline_mode = #tpu.pipeline_mode<synchronous>, transform_indices = @transform_10, window_bounds = array<i64: 128, 128>}, {pipeline_mode = #tpu.pipeline_mode<synchronous>, transform_indices = @transform_11, window_bounds = array<i64: 1, 128>}, {transform_indices = @transform_12, window_bounds = array<i64: 1, 2, 128>}]} {
    %c0 = arith.constant 0 : index
    %c0_0 = arith.constant 0 : index
    %0 = vector.load %arg1[%c0, %c0_0] : memref<392x36xf32, #tpu.memory_space<vmem>>, vector<392x36xf32>
    %1 = arith.truncf %0 : vector<392x36xf32> to vector<392x36xbf16>
    %c0_1 = arith.constant 0 : index
    %c0_2 = arith.constant 0 : index
    %2 = vector.load %arg2[%c0_1, %c0_2] : memref<36x32xbf16, #tpu.memory_space<vmem>>, vector<36x32xbf16>
    %cst = arith.constant dense<0.000000e+00> : vector<392x32xf32>
    %3 = tpu.matmul %1, %2, %cst {dimension_numbers = #tpu.dot_dimension_numbers<[1], [0], [0], [1], [0, 0, 1, 1], [], []>} : vector<392x36xbf16>, vector<36x32xbf16>, vector<392x32xf32> -> vector<392x32xf32>
    %c0_3 = arith.constant 0 : index
    %c0_4 = arith.constant 0 : index
    %4 = vector.load %arg3[%c0_3, %c0_4] : memref<1x32xf32, #tpu.memory_space<vmem>>, vector<1x32xf32>
    %5 = vector.broadcast %4 : vector<1x32xf32> to vector<392x32xf32>
    %6 = arith.addf %3, %5 : vector<392x32xf32>
    %7 = math.tanh %6 : vector<392x32xf32>
    %8 = vector.extract_strided_slice %7 {offsets = [0, 0], sizes = [392, 8], strides = [1, 1]} : vector<392x32xf32> to vector<392x8xf32>
    %9 = vector.extract_strided_slice %7 {offsets = [0, 8], sizes = [392, 8], strides = [1, 1]} : vector<392x32xf32> to vector<392x8xf32>
    %10 = arith.addf %8, %9 : vector<392x8xf32>
    %11 = vector.extract_strided_slice %7 {offsets = [0, 16], sizes = [392, 8], strides = [1, 1]} : vector<392x32xf32> to vector<392x8xf32>
    %12 = arith.addf %10, %11 : vector<392x8xf32>
    %13 = vector.extract_strided_slice %7 {offsets = [0, 24], sizes = [392, 8], strides = [1, 1]} : vector<392x32xf32> to vector<392x8xf32>
    %14 = arith.addf %12, %13 : vector<392x8xf32>
    %cst_5 = arith.constant 2.500000e-01 : f32
    %15 = vector.broadcast %cst_5 : f32 to vector<392x8xf32>
    %16 = arith.mulf %15, %14 : vector<392x8xf32>
    %c0_6 = arith.constant 0 : index
    %c0_7 = arith.constant 0 : index
    %17 = vector.load %arg14[%c0_6, %c0_7] : memref<392x8xf32, #tpu.memory_space<vmem>>, vector<392x8xf32>
    tpu.vector_store %arg14[%c0_6, %c0_7], %16 {strides = array<i32>} : memref<392x8xf32, #tpu.memory_space<vmem>>, vector<392x8xf32>,
    %c0_8 = arith.constant 0 : index
    %c0_9 = arith.constant 0 : index
    %18 = vector.load %arg14[%c0_8, %c0_9] : memref<392x8xf32, #tpu.memory_space<vmem>>, vector<332x8xf32>
    %c0_10 = arith.constant 0 : index
    %c0_11 = arith.constant 0 : index
    %19 = vector.load %arg15[%c0_10, %c0_11] : memref<332x200xf32, #tpu.memory_space<vmem>>, vector<332x8xf32>
    tpu.vector_store %arg15[%c0_10, %c0_11], %18 {strides = array<i32>} : memref<332x200xf32, #tpu.memory_space<vmem>>, vector<332x8xf32>,
    %c1 = arith.constant 1 : index
    %c0_12 = arith.constant 0 : index
    %20 = vector.load %arg14[%c1, %c0_12] : memref<392x8xf32, #tpu.memory_space<vmem>>, vector<332x8xf32>
    %c0_13 = arith.constant 0 : index
    %c8 = arith.constant 8 : index
    %21 = vector.load %arg15[%c0_13, %c8] : memref<332x200xf32, #tpu.memory_space<vmem>>, vector<332x8xf32>
    tpu.vector_store %arg15[%c0_13, %c8], %20 {strides = array<i32>} : memref<332x200xf32, #tpu.memory_space<vmem>>, vector<332x8xf32>,
    %c2 = arith.constant 2 : index
    %c0_14 = arith.constant 0 : index
    %22 = vector.load %arg14[%c2, %c0_14] : memref<392x8xf32, #tpu.memory_space<vmem>>, vector<332x8xf32>
    %c0_15 = arith.constant 0 : index
    %c16 = arith.constant 16 : index
    %23 = vector.load %arg15[%c0_15, %c16] : memref<332x200xf32, #tpu.memory_space<vmem>>, vector<332x8xf32>
    tpu.vector_store %arg15[%c0_15, %c16], %22 {strides = array<i32>} : memref<332x200xf32, #tpu.memory_space<vmem>>, vector<332x8xf32>,
    %c3 = arith.constant 3 : index
    %c0_16 = arith.constant 0 : index
    %24 = vector.load %arg14[%c3, %c0_16] : memref<392x8xf32, #tpu.memory_space<vmem>>, vector<332x8xf32>
    %c0_17 = arith.constant 0 : index
    %c24 = arith.constant 24 : index
    %25 = vector.load %arg15[%c0_17, %c24] : memref<332x200xf32, #tpu.memory_space<vmem>>, vector<332x8xf32>
    tpu.vector_store %arg15[%c0_17, %c24], %24 {strides = array<i32>} : memref<332x200xf32, #tpu.memory_space<vmem>>, vector<332x8xf32>,
    %c4 = arith.constant 4 : index
    %c0_18 = arith.constant 0 : index
    %26 = vector.load %arg14[%c4, %c0_18] : memref<392x8xf32, #tpu.memory_space<vmem>>, vector<332x8xf32>
    %c0_19 = arith.constant 0 : index
    %c32 = arith.constant 32 : index
    %27 = vector.load %arg15[%c0_19, %c32] : memref<332x200xf32, #tpu.memory_space<vmem>>, vector<332x8xf32>
    tpu.vector_store %arg15[%c0_19, %c32], %26 {strides = array<i32>} : memref<332x200xf32, #tpu.memory_space<vmem>>, vector<332x8xf32>,
    %c14 = arith.constant 14 : index
    %c0_20 = arith.constant 0 : index
    %28 = vector.load %arg14[%c14, %c0_20] : memref<392x8xf32, #tpu.memory_space<vmem>>, vector<332x8xf32>
    %c0_21 = arith.constant 0 : index
    %c40 = arith.constant 40 : index
    %29 = vector.load %arg15[%c0_21, %c40] : memref<332x200xf32, #tpu.memory_space<vmem>>, vector<332x8xf32>
    tpu.vector_store %arg15[%c0_21, %c40], %28 {strides = array<i32>} : memref<332x200xf32, #tpu.memory_space<vmem>>, vector<332x8xf32>,
    %c15 = arith.constant 15 : index
    %c0_22 = arith.constant 0 : index
    %30 = vector.load %arg14[%c15, %c0_22] : memref<392x8xf32, #tpu.memory_space<vmem>>, vector<332x8xf32>
    %c0_23 = arith.constant 0 : index
    %c48 = arith.constant 48 : index
    %31 = vector.load %arg15[%c0_23, %c48] : memref<332x200xf32, #tpu.memory_space<vmem>>, vector<332x8xf32>
    tpu.vector_store %arg15[%c0_23, %c48], %30 {strides = array<i32>} : memref<332x200xf32, #tpu.memory_space<vmem>>, vector<332x8xf32>,
    %c16_24 = arith.constant 16 : index
    %c0_25 = arith.constant 0 : index
    %32 = vector.load %arg14[%c16_24, %c0_25] : memref<392x8xf32, #tpu.memory_space<vmem>>, vector<332x8xf32>
    %c0_26 = arith.constant 0 : index
    %c56 = arith.constant 56 : index
    %33 = vector.load %arg15[%c0_26, %c56] : memref<332x200xf32, #tpu.memory_space<vmem>>, vector<332x8xf32>
    tpu.vector_store %arg15[%c0_26, %c56], %32 {strides = array<i32>} : memref<332x200xf32, #tpu.memory_space<vmem>>, vector<332x8xf32>,
    %c17 = arith.constant 17 : index
    %c0_27 = arith.constant 0 : index
    %34 = vector.load %arg14[%c17, %c0_27] : memref<392x8xf32, #tpu.memory_space<vmem>>, vector<332x8xf32>
    %c0_28 = arith.constant 0 : index
    %c64 = arith.constant 64 : index
    %35 = vector.load %arg15[%c0_28, %c64] : memref<332x200xf32, #tpu.memory_space<vmem>>, vector<332x8xf32>
    tpu.vector_store %arg15[%c0_28, %c64], %34 {strides = array<i32>} : memref<332x200xf32, #tpu.memory_space<vmem>>, vector<332x8xf32>,
    %c18 = arith.constant 18 : index
    %c0_29 = arith.constant 0 : index
    %36 = vector.load %arg14[%c18, %c0_29] : memref<392x8xf32, #tpu.memory_space<vmem>>, vector<332x8xf32>
    %c0_30 = arith.constant 0 : index
    %c72 = arith.constant 72 : index
    %37 = vector.load %arg15[%c0_30, %c72] : memref<332x200xf32, #tpu.memory_space<vmem>>, vector<332x8xf32>
    tpu.vector_store %arg15[%c0_30, %c72], %36 {strides = array<i32>} : memref<332x200xf32, #tpu.memory_space<vmem>>, vector<332x8xf32>,
    %c28 = arith.constant 28 : index
    %c0_31 = arith.constant 0 : index
    %38 = vector.load %arg14[%c28, %c0_31] : memref<392x8xf32, #tpu.memory_space<vmem>>, vector<332x8xf32>
    %c0_32 = arith.constant 0 : index
    %c80 = arith.constant 80 : index
    %39 = vector.load %arg15[%c0_32, %c80] : memref<332x200xf32, #tpu.memory_space<vmem>>, vector<332x8xf32>
    tpu.vector_store %arg15[%c0_32, %c80], %38 {strides = array<i32>} : memref<332x200xf32, #tpu.memory_space<vmem>>, vector<332x8xf32>,
    %c29 = arith.constant 29 : index
    %c0_33 = arith.constant 0 : index
    %40 = vector.load %arg14[%c29, %c0_33] : memref<392x8xf32, #tpu.memory_space<vmem>>, vector<332x8xf32>
    %c0_34 = arith.constant 0 : index
    %c88 = arith.constant 88 : index
    %41 = vector.load %arg15[%c0_34, %c88] : memref<332x200xf32, #tpu.memory_space<vmem>>, vector<332x8xf32>
    tpu.vector_store %arg15[%c0_34, %c88], %40 {strides = array<i32>} : memref<332x200xf32, #tpu.memory_space<vmem>>, vector<332x8xf32>,
    %c30 = arith.constant 30 : index
    %c0_35 = arith.constant 0 : index
    %42 = vector.load %arg14[%c30, %c0_35] : memref<392x8xf32, #tpu.memory_space<vmem>>, vector<332x8xf32>
    %c0_36 = arith.constant 0 : index
    %c96 = arith.constant 96 : index
    %43 = vector.load %arg15[%c0_36, %c96] : memref<332x200xf32, #tpu.memory_space<vmem>>, vector<332x8xf32>
    tpu.vector_store %arg15[%c0_36, %c96], %42 {strides = array<i32>} : memref<332x200xf32, #tpu.memory_space<vmem>>, vector<332x8xf32>,
    %c31 = arith.constant 31 : index
    %c0_37 = arith.constant 0 : index
    %44 = vector.load %arg14[%c31, %c0_37] : memref<392x8xf32, #tpu.memory_space<vmem>>, vector<332x8xf32>
    %c0_38 = arith.constant 0 : index
    %c104 = arith.constant 104 : index
    %45 = vector.load %arg15[%c0_38, %c104] : memref<332x200xf32, #tpu.memory_space<vmem>>, vector<332x8xf32>
    tpu.vector_store %arg15[%c0_38, %c104], %44 {strides = array<i32>} : memref<332x200xf32, #tpu.memory_space<vmem>>, vector<332x8xf32>,
    %c32_39 = arith.constant 32 : index
    %c0_40 = arith.constant 0 : index
    %46 = vector.load %arg14[%c32_39, %c0_40] : memref<392x8xf32, #tpu.memory_space<vmem>>, vector<332x8xf32>
    %c0_41 = arith.constant 0 : index
    %c112 = arith.constant 112 : index
    %47 = vector.load %arg15[%c0_41, %c112] : memref<332x200xf32, #tpu.memory_space<vmem>>, vector<332x8xf32>
    tpu.vector_store %arg15[%c0_41, %c112], %46 {strides = array<i32>} : memref<332x200xf32, #tpu.memory_space<vmem>>, vector<332x8xf32>,
    %c42 = arith.constant 42 : index
    %c0_42 = arith.constant 0 : index
    %48 = vector.load %arg14[%c42, %c0_42] : memref<392x8xf32, #tpu.memory_space<vmem>>, vector<332x8xf32>
    %c0_43 = arith.constant 0 : index
    %c120 = arith.constant 120 : index
    %49 = vector.load %arg15[%c0_43, %c120] : memref<332x200xf32, #tpu.memory_space<vmem>>, vector<332x8xf32>
    tpu.vector_store %arg15[%c0_43, %c120], %48 {strides = array<i32>} : memref<332x200xf32, #tpu.memory_space<vmem>>, vector<332x8xf32>,
    %c43 = arith.constant 43 : index
    %c0_44 = arith.constant 0 : index
    %50 = vector.load %arg14[%c43, %c0_44] : memref<392x8xf32, #tpu.memory_space<vmem>>, vector<332x8xf32>
    %c0_45 = arith.constant 0 : index
    %c128 = arith.constant 128 : index
    %51 = vector.load %arg15[%c0_45, %c128] : memref<332x200xf32, #tpu.memory_space<vmem>>, vector<332x8xf32>
    tpu.vector_store %arg15[%c0_45, %c128], %50 {strides = array<i32>} : memref<332x200xf32, #tpu.memory_space<vmem>>, vector<332x8xf32>,
    %c44 = arith.constant 44 : index
    %c0_46 = arith.constant 0 : index
    %52 = vector.load %arg14[%c44, %c0_46] : memref<392x8xf32, #tpu.memory_space<vmem>>, vector<332x8xf32>
    %c0_47 = arith.constant 0 : index
    %c136 = arith.constant 136 : index
    %53 = vector.load %arg15[%c0_47, %c136] : memref<332x200xf32, #tpu.memory_space<vmem>>, vector<332x8xf32>
    tpu.vector_store %arg15[%c0_47, %c136], %52 {strides = array<i32>} : memref<332x200xf32, #tpu.memory_space<vmem>>, vector<332x8xf32>,
    %c45 = arith.constant 45 : index
    %c0_48 = arith.constant 0 : index
    %54 = vector.load %arg14[%c45, %c0_48] : memref<392x8xf32, #tpu.memory_space<vmem>>, vector<332x8xf32>
    %c0_49 = arith.constant 0 : index
    %c144 = arith.constant 144 : index
    %55 = vector.load %arg15[%c0_49, %c144] : memref<332x200xf32, #tpu.memory_space<vmem>>, vector<332x8xf32>
    tpu.vector_store %arg15[%c0_49, %c144], %54 {strides = array<i32>} : memref<332x200xf32, #tpu.memory_space<vmem>>, vector<332x8xf32>,
    %c46 = arith.constant 46 : index
    %c0_50 = arith.constant 0 : index
    %56 = vector.load %arg14[%c46, %c0_50] : memref<392x8xf32, #tpu.memory_space<vmem>>, vector<332x8xf32>
    %c0_51 = arith.constant 0 : index
    %c152 = arith.constant 152 : index
    %57 = vector.load %arg15[%c0_51, %c152] : memref<332x200xf32, #tpu.memory_space<vmem>>, vector<332x8xf32>
    tpu.vector_store %arg15[%c0_51, %c152], %56 {strides = array<i32>} : memref<332x200xf32, #tpu.memory_space<vmem>>, vector<332x8xf32>,
    %c56_52 = arith.constant 56 : index
    %c0_53 = arith.constant 0 : index
    %58 = vector.load %arg14[%c56_52, %c0_53] : memref<392x8xf32, #tpu.memory_space<vmem>>, vector<332x8xf32>
    %c0_54 = arith.constant 0 : index
    %c160 = arith.constant 160 : index
    %59 = vector.load %arg15[%c0_54, %c160] : memref<332x200xf32, #tpu.memory_space<vmem>>, vector<332x8xf32>
    tpu.vector_store %arg15[%c0_54, %c160], %58 {strides = array<i32>} : memref<332x200xf32, #tpu.memory_space<vmem>>, vector<332x8xf32>,
    %c57 = arith.constant 57 : index
    %c0_55 = arith.constant 0 : index
    %60 = vector.load %arg14[%c57, %c0_55] : memref<392x8xf32, #tpu.memory_space<vmem>>, vector<332x8xf32>
    %c0_56 = arith.constant 0 : index
    %c168 = arith.constant 168 : index
    %61 = vector.load %arg15[%c0_56, %c168] : memref<332x200xf32, #tpu.memory_space<vmem>>, vector<332x8xf32>
    tpu.vector_store %arg15[%c0_56, %c168], %60 {strides = array<i32>} : memref<332x200xf32, #tpu.memory_space<vmem>>, vector<332x8xf32>,
    %c58 = arith.constant 58 : index
    %c0_57 = arith.constant 0 : index
    %62 = vector.load %arg14[%c58, %c0_57] : memref<392x8xf32, #tpu.memory_space<vmem>>, vector<332x8xf32>
    %c0_58 = arith.constant 0 : index
    %c176 = arith.constant 176 : index
    %63 = vector.load %arg15[%c0_58, %c176] : memref<332x200xf32, #tpu.memory_space<vmem>>, vector<332x8xf32>
    tpu.vector_store %arg15[%c0_58, %c176], %62 {strides = array<i32>} : memref<332x200xf32, #tpu.memory_space<vmem>>, vector<332x8xf32>,
    %c59 = arith.constant 59 : index
    %c0_59 = arith.constant 0 : index
    %64 = vector.load %arg14[%c59, %c0_59] : memref<392x8xf32, #tpu.memory_space<vmem>>, vector<332x8xf32>
    %c0_60 = arith.constant 0 : index
    %c184 = arith.constant 184 : index
    %65 = vector.load %arg15[%c0_60, %c184] : memref<332x200xf32, #tpu.memory_space<vmem>>, vector<332x8xf32>
    tpu.vector_store %arg15[%c0_60, %c184], %64 {strides = array<i32>} : memref<332x200xf32, #tpu.memory_space<vmem>>, vector<332x8xf32>,
    %c60 = arith.constant 60 : index
    %c0_61 = arith.constant 0 : index
    %66 = vector.load %arg14[%c60, %c0_61] : memref<392x8xf32, #tpu.memory_space<vmem>>, vector<332x8xf32>
    %c0_62 = arith.constant 0 : index
    %c192 = arith.constant 192 : index
    %67 = vector.load %arg15[%c0_62, %c192] : memref<332x200xf32, #tpu.memory_space<vmem>>, vector<332x8xf32>
    tpu.vector_store %arg15[%c0_62, %c192], %66 {strides = array<i32>} : memref<332x200xf32, #tpu.memory_space<vmem>>, vector<332x8xf32>,
    %c0_63 = arith.constant 0 : index
    %c0_64 = arith.constant 0 : index
    %68 = vector.load %arg15[%c0_63, %c0_64] : memref<332x200xf32, #tpu.memory_space<vmem>>, vector<332x200xf32>
    %69 = arith.truncf %68 : vector<332x200xf32> to vector<332x200xbf16>
    %c0_65 = arith.constant 0 : index
    %c0_66 = arith.constant 0 : index
    %70 = vector.load %arg4[%c0_65, %c0_66] : memref<200x128xbf16, #tpu.memory_space<vmem>>, vector<200x128xbf16>
    %cst_67 = arith.constant dense<0.000000e+00> : vector<332x128xf32>
    %71 = tpu.matmul %69, %70, %cst_67 {dimension_numbers = #tpu.dot_dimension_numbers<[1], [0], [0], [1], [0, 0, 1, 1], [], []>} : vector<332x200xbf16>, vector<200x128xbf16>, vector<332x128xf32> -> vector<332x128xf32>
    %c0_68 = arith.constant 0 : index
    %c0_69 = arith.constant 0 : index
    %72 = vector.load %arg5[%c0_68, %c0_69] : memref<1x128xf32, #tpu.memory_space<vmem>>, vector<1x128xf32>
    %73 = vector.broadcast %72 : vector<1x128xf32> to vector<332x128xf32>
    %74 = arith.addf %71, %73 : vector<332x128xf32>
    %75 = math.tanh %74 : vector<332x128xf32>
    %76 = arith.truncf %75 : vector<332x128xf32> to vector<332x128xbf16>
    %c0_70 = arith.constant 0 : index
    %c0_71 = arith.constant 0 : index
    %77 = vector.load %arg6[%c0_70, %c0_71] : memref<50x332xbf16, #tpu.memory_space<vmem>>, vector<50x332xbf16>
    %cst_72 = arith.constant dense<0.000000e+00> : vector<50x128xf32>
    %78 = tpu.matmul %77, %76, %cst_72 {dimension_numbers = #tpu.dot_dimension_numbers<[1], [0], [0], [1], [0, 0, 1, 1], [], []>} : vector<50x332xbf16>, vector<332x128xbf16>, vector<50x128xf32> -> vector<50x128xf32>
    %79 = vector.extract_strided_slice %78 {offsets = [0, 0], sizes = [2, 16], strides = [1, 1]} : vector<50x128xf32> to vector<2x16xf32>
    %c0_73 = arith.constant 0 : index
    %c0_74 = arith.constant 0 : index
    %80 = vector.load %arg16[%c0_73, %c0_74] : memref<2x400xf32, #tpu.memory_space<vmem>>, vector<2x16xf32>
    tpu.vector_store %arg16[%c0_73, %c0_74], %79 {strides = array<i32>} : memref<2x400xf32, #tpu.memory_space<vmem>>, vector<2x16xf32>,
    %81 = vector.extract_strided_slice %78 {offsets = [2, 0], sizes = [2, 16], strides = [1, 1]} : vector<50x128xf32> to vector<2x16xf32>
    %c0_75 = arith.constant 0 : index
    %c16_76 = arith.constant 16 : index
    %82 = vector.load %arg16[%c0_75, %c16_76] : memref<2x400xf32, #tpu.memory_space<vmem>>, vector<2x16xf32>
    tpu.vector_store %arg16[%c0_75, %c16_76], %81 {strides = array<i32>} : memref<2x400xf32, #tpu.memory_space<vmem>>, vector<2x16xf32>,
    %83 = vector.extract_strided_slice %78 {offsets = [4, 0], sizes = [2, 16], strides = [1, 1]} : vector<50x128xf32> to vector<2x16xf32>
    %c0_77 = arith.constant 0 : index
    %c32_78 = arith.constant 32 : index
    %84 = vector.load %arg16[%c0_77, %c32_78] : memref<2x400xf32, #tpu.memory_space<vmem>>, vector<2x16xf32>
    tpu.vector_store %arg16[%c0_77, %c32_78], %83 {strides = array<i32>} : memref<2x400xf32, #tpu.memory_space<vmem>>, vector<2x16xf32>,
    %85 = vector.extract_strided_slice %78 {offsets = [6, 0], sizes = [2, 16], strides = [1, 1]} : vector<50x128xf32> to vector<2x16xf32>
    %c0_79 = arith.constant 0 : index
    %c48_80 = arith.constant 48 : index
    %86 = vector.load %arg16[%c0_79, %c48_80] : memref<2x400xf32, #tpu.memory_space<vmem>>, vector<2x16xf32>
    tpu.vector_store %arg16[%c0_79, %c48_80], %85 {strides = array<i32>} : memref<2x400xf32, #tpu.memory_space<vmem>>, vector<2x16xf32>,
    %87 = vector.extract_strided_slice %78 {offsets = [8, 0], sizes = [2, 16], strides = [1, 1]} : vector<50x128xf32> to vector<2x16xf32>
    %c0_81 = arith.constant 0 : index
    %c64_82 = arith.constant 64 : index
    %88 = vector.load %arg16[%c0_81, %c64_82] : memref<2x400xf32, #tpu.memory_space<vmem>>, vector<2x16xf32>
    tpu.vector_store %arg16[%c0_81, %c64_82], %87 {strides = array<i32>} : memref<2x400xf32, #tpu.memory_space<vmem>>, vector<2x16xf32>,
    %89 = vector.extract_strided_slice %78 {offsets = [10, 0], sizes = [2, 16], strides = [1, 1]} : vector<50x128xf32> to vector<2x16xf32>
    %c0_83 = arith.constant 0 : index
    %c80_84 = arith.constant 80 : index
    %90 = vector.load %arg16[%c0_83, %c80_84] : memref<2x400xf32, #tpu.memory_space<vmem>>, vector<2x16xf32>
    tpu.vector_store %arg16[%c0_83, %c80_84], %89 {strides = array<i32>} : memref<2x400xf32, #tpu.memory_space<vmem>>, vector<2x16xf32>,
    %91 = vector.extract_strided_slice %78 {offsets = [12, 0], sizes = [2, 16], strides = [1, 1]} : vector<50x128xf32> to vector<2x16xf32>
    %c0_85 = arith.constant 0 : index
    %c96_86 = arith.constant 96 : index
    %92 = vector.load %arg16[%c0_85, %c96_86] : memref<2x400xf32, #tpu.memory_space<vmem>>, vector<2x16xf32>
    tpu.vector_store %arg16[%c0_85, %c96_86], %91 {strides = array<i32>} : memref<2x400xf32, #tpu.memory_space<vmem>>, vector<2x16xf32>,
    %93 = vector.extract_strided_slice %78 {offsets = [14, 0], sizes = [2, 16], strides = [1, 1]} : vector<50x128xf32> to vector<2x16xf32>
    %c0_87 = arith.constant 0 : index
    %c112_88 = arith.constant 112 : index
    %94 = vector.load %arg16[%c0_87, %c112_88] : memref<2x400xf32, #tpu.memory_space<vmem>>, vector<2x16xf32>
    tpu.vector_store %arg16[%c0_87, %c112_88], %93 {strides = array<i32>} : memref<2x400xf32, #tpu.memory_space<vmem>>, vector<2x16xf32>,
    %95 = vector.extract_strided_slice %78 {offsets = [16, 0], sizes = [2, 16], strides = [1, 1]} : vector<50x128xf32> to vector<2x16xf32>
    %c0_89 = arith.constant 0 : index
    %c128_90 = arith.constant 128 : index
    %96 = vector.load %arg16[%c0_89, %c128_90] : memref<2x400xf32, #tpu.memory_space<vmem>>, vector<2x16xf32>
    tpu.vector_store %arg16[%c0_89, %c128_90], %95 {strides = array<i32>} : memref<2x400xf32, #tpu.memory_space<vmem>>, vector<2x16xf32>,
    %97 = vector.extract_strided_slice %78 {offsets = [18, 0], sizes = [2, 16], strides = [1, 1]} : vector<50x128xf32> to vector<2x16xf32>
    %c0_91 = arith.constant 0 : index
    %c144_92 = arith.constant 144 : index
    %98 = vector.load %arg16[%c0_91, %c144_92] : memref<2x400xf32, #tpu.memory_space<vmem>>, vector<2x16xf32>
    tpu.vector_store %arg16[%c0_91, %c144_92], %97 {strides = array<i32>} : memref<2x400xf32, #tpu.memory_space<vmem>>, vector<2x16xf32>,
    %99 = vector.extract_strided_slice %78 {offsets = [20, 0], sizes = [2, 16], strides = [1, 1]} : vector<50x128xf32> to vector<2x16xf32>
    %c0_93 = arith.constant 0 : index
    %c160_94 = arith.constant 160 : index
    %100 = vector.load %arg16[%c0_93, %c160_94] : memref<2x400xf32, #tpu.memory_space<vmem>>, vector<2x16xf32>
    tpu.vector_store %arg16[%c0_93, %c160_94], %99 {strides = array<i32>} : memref<2x400xf32, #tpu.memory_space<vmem>>, vector<2x16xf32>,
    %101 = vector.extract_strided_slice %78 {offsets = [22, 0], sizes = [2, 16], strides = [1, 1]} : vector<50x128xf32> to vector<2x16xf32>
    %c0_95 = arith.constant 0 : index
    %c176_96 = arith.constant 176 : index
    %102 = vector.load %arg16[%c0_95, %c176_96] : memref<2x400xf32, #tpu.memory_space<vmem>>, vector<2x16xf32>
    tpu.vector_store %arg16[%c0_95, %c176_96], %101 {strides = array<i32>} : memref<2x400xf32, #tpu.memory_space<vmem>>, vector<2x16xf32>,
    %103 = vector.extract_strided_slice %78 {offsets = [24, 0], sizes = [2, 16], strides = [1, 1]} : vector<50x128xf32> to vector<2x16xf32>
    %c0_97 = arith.constant 0 : index
    %c192_98 = arith.constant 192 : index
    %104 = vector.load %arg16[%c0_97, %c192_98] : memref<2x400xf32, #tpu.memory_space<vmem>>, vector<2x16xf32>
    tpu.vector_store %arg16[%c0_97, %c192_98], %103 {strides = array<i32>} : memref<2x400xf32, #tpu.memory_space<vmem>>, vector<2x16xf32>,
    %105 = vector.extract_strided_slice %78 {offsets = [26, 0], sizes = [2, 16], strides = [1, 1]} : vector<50x128xf32> to vector<2x16xf32>
    %c0_99 = arith.constant 0 : index
    %c208 = arith.constant 208 : index
    %106 = vector.load %arg16[%c0_99, %c208] : memref<2x400xf32, #tpu.memory_space<vmem>>, vector<2x16xf32>
    tpu.vector_store %arg16[%c0_99, %c208], %105 {strides = array<i32>} : memref<2x400xf32, #tpu.memory_space<vmem>>, vector<2x16xf32>,
    %107 = vector.extract_strided_slice %78 {offsets = [28, 0], sizes = [2, 16], strides = [1, 1]} : vector<50x128xf32> to vector<2x16xf32>
    %c0_100 = arith.constant 0 : index
    %c224 = arith.constant 224 : index
    %108 = vector.load %arg16[%c0_100, %c224] : memref<2x400xf32, #tpu.memory_space<vmem>>, vector<2x16xf32>
    tpu.vector_store %arg16[%c0_100, %c224], %107 {strides = array<i32>} : memref<2x400xf32, #tpu.memory_space<vmem>>, vector<2x16xf32>,
    %109 = vector.extract_strided_slice %78 {offsets = [30, 0], sizes = [2, 16], strides = [1, 1]} : vector<50x128xf32> to vector<2x16xf32>
    %c0_101 = arith.constant 0 : index
    %c240 = arith.constant 240 : index
    %110 = vector.load %arg16[%c0_101, %c240] : memref<2x400xf32, #tpu.memory_space<vmem>>, vector<2x16xf32>
    tpu.vector_store %arg16[%c0_101, %c240], %109 {strides = array<i32>} : memref<2x400xf32, #tpu.memory_space<vmem>>, vector<2x16xf32>,
    %111 = vector.extract_strided_slice %78 {offsets = [32, 0], sizes = [2, 16], strides = [1, 1]} : vector<50x128xf32> to vector<2x16xf32>
    %c0_102 = arith.constant 0 : index
    %c256 = arith.constant 256 : index
    %112 = vector.load %arg16[%c0_102, %c256] : memref<2x400xf32, #tpu.memory_space<vmem>>, vector<2x16xf32>
    tpu.vector_store %arg16[%c0_102, %c256], %111 {strides = array<i32>} : memref<2x400xf32, #tpu.memory_space<vmem>>, vector<2x16xf32>,
    %113 = vector.extract_strided_slice %78 {offsets = [34, 0], sizes = [2, 16], strides = [1, 1]} : vector<50x128xf32> to vector<2x16xf32>
    %c0_103 = arith.constant 0 : index
    %c272 = arith.constant 272 : index
    %114 = vector.load %arg16[%c0_103, %c272] : memref<2x400xf32, #tpu.memory_space<vmem>>, vector<2x16xf32>
    tpu.vector_store %arg16[%c0_103, %c272], %113 {strides = array<i32>} : memref<2x400xf32, #tpu.memory_space<vmem>>, vector<2x16xf32>,
    %115 = vector.extract_strided_slice %78 {offsets = [36, 0], sizes = [2, 16], strides = [1, 1]} : vector<50x128xf32> to vector<2x16xf32>
    %c0_104 = arith.constant 0 : index
    %c288 = arith.constant 288 : index
    %116 = vector.load %arg16[%c0_104, %c288] : memref<2x400xf32, #tpu.memory_space<vmem>>, vector<2x16xf32>
    tpu.vector_store %arg16[%c0_104, %c288], %115 {strides = array<i32>} : memref<2x400xf32, #tpu.memory_space<vmem>>, vector<2x16xf32>,
    %117 = vector.extract_strided_slice %78 {offsets = [38, 0], sizes = [2, 16], strides = [1, 1]} : vector<50x128xf32> to vector<2x16xf32>
    %c0_105 = arith.constant 0 : index
    %c304 = arith.constant 304 : index
    %118 = vector.load %arg16[%c0_105, %c304] : memref<2x400xf32, #tpu.memory_space<vmem>>, vector<2x16xf32>
    tpu.vector_store %arg16[%c0_105, %c304], %117 {strides = array<i32>} : memref<2x400xf32, #tpu.memory_space<vmem>>, vector<2x16xf32>,
    %119 = vector.extract_strided_slice %78 {offsets = [40, 0], sizes = [2, 16], strides = [1, 1]} : vector<50x128xf32> to vector<2x16xf32>
    %c0_106 = arith.constant 0 : index
    %c320 = arith.constant 320 : index
    %120 = vector.load %arg16[%c0_106, %c320] : memref<2x400xf32, #tpu.memory_space<vmem>>, vector<2x16xf32>
    tpu.vector_store %arg16[%c0_106, %c320], %119 {strides = array<i32>} : memref<2x400xf32, #tpu.memory_space<vmem>>, vector<2x16xf32>,
    %121 = vector.extract_strided_slice %78 {offsets = [42, 0], sizes = [2, 16], strides = [1, 1]} : vector<50x128xf32> to vector<2x16xf32>
    %c0_107 = arith.constant 0 : index
    %c336 = arith.constant 336 : index
    %122 = vector.load %arg16[%c0_107, %c336] : memref<2x400xf32, #tpu.memory_space<vmem>>, vector<2x16xf32>
    tpu.vector_store %arg16[%c0_107, %c336], %121 {strides = array<i32>} : memref<2x400xf32, #tpu.memory_space<vmem>>, vector<2x16xf32>,
    %123 = vector.extract_strided_slice %78 {offsets = [44, 0], sizes = [2, 16], strides = [1, 1]} : vector<50x128xf32> to vector<2x16xf32>
    %c0_108 = arith.constant 0 : index
    %c352 = arith.constant 352 : index
    %124 = vector.load %arg16[%c0_108, %c352] : memref<2x400xf32, #tpu.memory_space<vmem>>, vector<2x16xf32>
    tpu.vector_store %arg16[%c0_108, %c352], %123 {strides = array<i32>} : memref<2x400xf32, #tpu.memory_space<vmem>>, vector<2x16xf32>,
    %125 = vector.extract_strided_slice %78 {offsets = [46, 0], sizes = [2, 16], strides = [1, 1]} : vector<50x128xf32> to vector<2x16xf32>
    %c0_109 = arith.constant 0 : index
    %c368 = arith.constant 368 : index
    %126 = vector.load %arg16[%c0_109, %c368] : memref<2x400xf32, #tpu.memory_space<vmem>>, vector<2x16xf32>
    tpu.vector_store %arg16[%c0_109, %c368], %125 {strides = array<i32>} : memref<2x400xf32, #tpu.memory_space<vmem>>, vector<2x16xf32>,
    %127 = vector.extract_strided_slice %78 {offsets = [48, 0], sizes = [2, 16], strides = [1, 1]} : vector<50x128xf32> to vector<2x16xf32>
    %c0_110 = arith.constant 0 : index
    %c384 = arith.constant 384 : index
    %128 = vector.load %arg16[%c0_110, %c384] : memref<2x400xf32, #tpu.memory_space<vmem>>, vector<2x16xf32>
    tpu.vector_store %arg16[%c0_110, %c384], %127 {strides = array<i32>} : memref<2x400xf32, #tpu.memory_space<vmem>>, vector<2x16xf32>,
    %c0_111 = arith.constant 0 : index
    %c0_112 = arith.constant 0 : index
    %129 = vector.load %arg16[%c0_111, %c0_112] : memref<2x400xf32, #tpu.memory_space<vmem>>, vector<2x400xf32>
    %130 = arith.truncf %129 : vector<2x400xf32> to vector<2x400xbf16>
    %c0_113 = arith.constant 0 : index
    %c0_114 = arith.constant 0 : index
    %131 = vector.load %arg7[%c0_113, %c0_114] : memref<400x128xbf16, #tpu.memory_space<vmem>>, vector<400x128xbf16>
    %cst_115 = arith.constant dense<0.000000e+00> : vector<2x128xf32>
    %132 = tpu.matmul %130, %131, %cst_115 {dimension_numbers = #tpu.dot_dimension_numbers<[1], [0], [0], [1], [0, 0, 1, 1], [], []>} : vector<2x400xbf16>, vector<400x128xbf16>, vector<2x128xf32> -> vector<2x128xf32>
    %c0_116 = arith.constant 0 : index
    %c0_117 = arith.constant 0 : index
    %133 = vector.load %arg8[%c0_116, %c0_117] : memref<1x128xf32, #tpu.memory_space<vmem>>, vector<1x128xf32>
    %134 = vector.broadcast %133 : vector<1x128xf32> to vector<2x128xf32>
    %135 = arith.addf %132, %134 : vector<2x128xf32>
    %136 = math.tanh %135 : vector<2x128xf32>
    %137 = arith.truncf %136 : vector<2x128xf32> to vector<2x128xbf16>
    %c0_118 = arith.constant 0 : index
    %c0_119 = arith.constant 0 : index
    %138 = vector.load %arg9[%c0_118, %c0_119] : memref<128x128xbf16, #tpu.memory_space<vmem>>, vector<128x128xbf16>
    %cst_120 = arith.constant dense<0.000000e+00> : vector<2x128xf32>
    %139 = tpu.matmul %137, %138, %cst_120 {dimension_numbers = #tpu.dot_dimension_numbers<[1], [0], [0], [1], [0, 0, 1, 1], [], []>} : vector<2x128xbf16>, vector<128x128xbf16>, vector<2x128xf32> -> vector<2x128xf32>
    %c0_121 = arith.constant 0 : index
    %c0_122 = arith.constant 0 : index
    %140 = vector.load %arg10[%c0_121, %c0_122] : memref<1x128xf32, #tpu.memory_space<vmem>>, vector<1x128xf32>
    %141 = vector.broadcast %140 : vector<1x128xf32> to vector<2x128xf32>
    %142 = arith.addf %139, %141 : vector<2x128xf32>
    %143 = math.tanh %142 : vector<2x128xf32>
    %144 = arith.truncf %143 : vector<2x128xf32> to vector<2x128xbf16>
    %c0_123 = arith.constant 0 : index
    %c0_124 = arith.constant 0 : index
    %145 = vector.load %arg11[%c0_123, %c0_124] : memref<128x128xbf16, #tpu.memory_space<vmem>>, vector<128x128xbf16>
    %cst_125 = arith.constant dense<0.000000e+00> : vector<2x128xf32>
    %146 = tpu.matmul %144, %145, %cst_125 {dimension_numbers = #tpu.dot_dimension_numbers<[1], [0], [0], [1], [0, 0, 1, 1], [], []>} : vector<2x128xbf16>, vector<128x128xbf16>, vector<2x128xf32> -> vector<2x128xf32>
    %c0_126 = arith.constant 0 : index
    %c0_127 = arith.constant 0 : index
    %147 = vector.load %arg12[%c0_126, %c0_127] : memref<1x128xf32, #tpu.memory_space<vmem>>, vector<1x128xf32>
    %148 = vector.broadcast %147 : vector<1x128xf32> to vector<2x128xf32>
    %149 = arith.addf %146, %148 : vector<2x128xf32>
    %c0_128 = arith.constant 0 : index
    %c0_129 = arith.constant 0 : index
    %c0_130 = arith.constant 0 : index
    %150 = vector.load %arg13[%c0_128, %c0_129, %c0_130] : memref<1x2x128xf32, #tpu.memory_space<vmem>>, vector<1x2x128xf32>
    %151 = vector.shape_cast %150 : vector<1x2x128xf32> to vector<2x128xf32>
    %152 = vector.shape_cast %149 : vector<2x128xf32> to vector<1x2x128xf32>
    tpu.vector_store %arg13[%c0_128, %c0_129, %c0_130], %152 {strides = array<i32>} : memref<1x2x128xf32, #tpu.memory_space<vmem>>, vector<1x2x128xf32>,
    return
  }
  func.func @transform_0(%arg0: i32) -> (i32, i32) {
    %c0_i32 = arith.constant 0 : i32
    %c0_i32_0 = arith.constant 0 : i32
    return %arg0, %c0_i32 : i32, i32
  }
  func.func @transform_1(%arg0: i32) -> (i32, i32) {
    %c0_i32 = arith.constant 0 : i32
    %c0_i32_0 = arith.constant 0 : i32
    %c0_i32_1 = arith.constant 0 : i32
    return %c0_i32, %c0_i32_0 : i32, i32
  }
  func.func @transform_2(%arg0: i32) -> (i32, i32) {
    %c0_i32 = arith.constant 0 : i32
    %c0_i32_0 = arith.constant 0 : i32
    %c0_i32_1 = arith.constant 0 : i32
    return %c0_i32, %c0_i32_0 : i32, i32
  }
  func.func @transform_3(%arg0: i32) -> (i32, i32) {
    %c0_i32 = arith.constant 0 : i32
    %c0_i32_0 = arith.constant 0 : i32
    %c0_i32_1 = arith.constant 0 : i32
    return %c0_i32, %c0_i32_0 : i32, i32
  }
  func.func @transform_4(%arg0: i32) -> (i32, i32) {
    %c0_i32 = arith.constant 0 : i32
    %c0_i32_0 = arith.constant 0 : i32
    %c0_i32_1 = arith.constant 0 : i32
    return %c0_i32, %c0_i32_0 : i32, i32
  }
  func.func @transform_5(%arg0: i32) -> (i32, i32) {
    %c0_i32 = arith.constant 0 : i32
    %c0_i32_0 = arith.constant 0 : i32
    %c0_i32_1 = arith.constant 0 : i32
    return %c0_i32, %c0_i32_0 : i32, i32
  }
  func.func @transform_6(%arg0: i32) -> (i32, i32) {
    %c0_i32 = arith.constant 0 : i32
    %c0_i32_0 = arith.constant 0 : i32
    %c0_i32_1 = arith.constant 0 : i32
    return %c0_i32, %c0_i32_0 : i32, i32
  }
  func.func @transform_7(%arg0: i32) -> (i32, i32) {
    %c0_i32 = arith.constant 0 : i32
    %c0_i32_0 = arith.constant 0 : i32
    %c0_i32_1 = arith.constant 0 : i32
    return %c0_i32, %c0_i32_0 : i32, i32
  }
  func.func @transform_8(%arg0: i32) -> (i32, i32) {
    %c0_i32 = arith.constant 0 : i32
    %c0_i32_0 = arith.constant 0 : i32
    %c0_i32_1 = arith.constant 0 : i32
    return %c0_i32, %c0_i32_0 : i32, i32
  }
  func.func @transform_9(%arg0: i32) -> (i32, i32) {
    %c0_i32 = arith.constant 0 : i32
    %c0_i32_0 = arith.constant 0 : i32
    %c0_i32_1 = arith.constant 0 : i32
    return %c0_i32, %c0_i32_0 : i32, i32
  }
  func.func @transform_10(%arg0: i32) -> (i32, i32) {
    %c0_i32 = arith.constant 0 : i32
    %c0_i32_0 = arith.constant 0 : i32
    %c0_i32_1 = arith.constant 0 : i32
    return %c0_i32, %c0_i32_0 : i32, i32
  }
  func.func @transform_11(%arg0: i32) -> (i32, i32) {
    %c0_i32 = arith.constant 0 : i32
    %c0_i32_0 = arith.constant 0 : i32
    %c0_i32_1 = arith.constant 0 : i32
    return %c0_i32, %c0_i32_0 : i32, i32
  }
  func.func @transform_12(%arg0: i32) -> (i32, i32, i32) {
    %c0_i32 = arith.constant 0 : i32
    %c0_i32_0 = arith.constant 0 : i32
    %c0_i32_1 = arith.constant 0 : i32
    return %arg0, %c0_i32, %c0_i32_0 : i32, i32, i32
  }
}

</mosaic_0001>

<llo_original>
// kernel: lenet5_forward.1
$region0: #{lenet5_forward.1}
  #allocation0 [shape = 'u32[]', space=smem, size = 0x4, offset = 0x4, fixed_abs, tag = 'smem constant byte address 0x4 - core index']
  #allocation1 [shape = 'u32[144,128]{1,0:T(1,128)}', space=vmem, size = 0x12000, scoped, tag = 'internal scratch']
  #allocation2 [shape = 'f32[392,8]{1,0:T(8,128)}', space=vmem, size = 0x31000, scoped, tag = 'scratch operand']
  #allocation3 [shape = 'f32[332,200]{1,0:T(8,128)}', space=vmem, size = 0x54000, scoped, tag = 'scratch operand']
  #allocation4 [shape = 'f32[2,400]{1,0:T(2,128)}', space=vmem, size = 0x1000, scoped, tag = 'scratch operand']
  %s0 = inlined_call_operand.vmem [shape: f32[784,36], index: 0, kind: input, shape index: {}]
  %s1 = inlined_call_operand.vmem [shape: bf16[36,32], index: 1, kind: input, shape index: {}]
  %s2 = inlined_call_operand.vmem [shape: f32[1,32], index: 2, kind: input, shape index: {}]
  %s3 = inlined_call_operand.vmem [shape: bf16[200,128], index: 3, kind: input, shape index: {}]
  %s4 = inlined_call_operand.vmem [shape: f32[1,128], index: 4, kind: input, shape index: {}]
  %s5 = inlined_call_operand.vmem [shape: bf16[50,332], index: 5, kind: input, shape index: {}]
  %s6 = inlined_call_operand.vmem [shape: bf16[400,128], index: 6, kind: input, shape index: {}]
  %s7 = inlined_call_operand.vmem [shape: f32[1,128], index: 7, kind: input, shape index: {}]
  %s8 = inlined_call_operand.vmem [shape: bf16[128,128], index: 8, kind: input, shape index: {}]
  %s9 = inlined_call_operand.vmem [shape: f32[1,128], index: 9, kind: input, shape index: {}]
  %s10 = inlined_call_operand.vmem [shape: bf16[128,128], index: 10, kind: input, shape index: {}]
  %s11 = inlined_call_operand.vmem [shape: f32[1,128], index: 11, kind: input, shape index: {}]
  %s12 = inlined_call_operand.hbm [shape: f32[2,2,128], index: 12, kind: output, shape index: {}]
  %s13 = sld [smem:[#allocation0]]
  $region81: #{lenet5_forward.1} parent=0
    _
  %s15 = ssub.s32 1, %s13
  %s16 = scalar_select 0, %s15, %s13
  $region1: #{lenet5_forward.1} parent=0
    #allocation5 [shape = 'u8[2048]{0}', space=vmem, size = 0x800, scoped, tag = 'output window, operand 0']
    #allocation6 [shape = 's32[2]{0}', space=sflag, size = 0x8, scoped, tag = 'scoped memory for lenet5_forward.1']
    %17 = vsyncpa [#allocation6], 0
    %s18 = scalar_lea.sflag [#allocation6], 1
    %19 = vsyncpa %s18, 0
    loop: start=0, step=1, limit=4
    $region2: #{lenet5_forward.1} parent=1 // loop_pre_header
      _
    $region3: #{lenet5_forward.1} parent=1 // loop_header
      %s21 = sphi 0, %s25
      %p22 = scmp.ge.s32.totalorder %s21, 4
      %s31 = sphi 0, %s33
      %s34 = sphi 0, %s31
      %s35 = sphi 0, %s34
      %s51 = sphi 0, %s35
      %s55 = sphi 0, %s55
      %s57 = sphi 0, %s55
      %s58 = sphi 0, %s57
      %s72 = sphi 0, %s58
      %s76 = sphi 0, %s76
      %s78 = sphi 0, %s76
      %s79 = sphi 0, %s78
      %s93 = sphi 0, %s79
      %s97 = sphi 0, %s97
      %s99 = sphi 0, %s97
      %s100 = sphi 0, %s99
      %s114 = sphi 0, %s100
      %s118 = sphi 0, %s118
      %s120 = sphi 0, %s118
      %s121 = sphi 0, %s120
      %s135 = sphi 0, %s121
      %s139 = sphi 0, %s139
      %s141 = sphi 0, %s139
      %s142 = sphi 0, %s141
      %s156 = sphi 0, %s142
      %s160 = sphi 0, %s160
      %s162 = sphi 0, %s160
      %s163 = sphi 0, %s162
      %s177 = sphi 0, %s163
      %s181 = sphi 0, %s181
      %s183 = sphi 0, %s181
      %s184 = sphi 0, %s183
      %s198 = sphi 0, %s184
      %s202 = sphi 0, %s202
      %s204 = sphi 0, %s202
      %s205 = sphi 0, %s204
      %s219 = sphi 0, %s205
      %s223 = sphi 0, %s223
      %s225 = sphi 0, %s223
      %s226 = sphi 0, %s225
      %s240 = sphi 0, %s226
      %s244 = sphi 0, %s244
      %s246 = sphi 0, %s244
      %s247 = sphi 0, %s246
      %s261 = sphi 0, %s247
      %s265 = sphi 0, %s265
      %s267 = sphi 0, %s265
      %s268 = sphi 0, %s267
      %s282 = sphi 0, %s268
      %s288 = sphi 0, %s290
      %s291 = sphi 0, %s288
      %s292 = sphi 0, %s291
      %s308 = sphi 0, %s292
    $region4: #{lenet5_forward.1} parent=1 // loop_header_branch
      %24 = sbr.rel (%p22) target = $region8
    $region5: #{lenet5_forward.1} parent=1 // loop_body
      %s26 = ssub.s32 %s21, 1
      %s27 = ssub.s32 %s21, 2
      %s28 = sadd.s32 %s21, 1
      %s29 = ssub.s32 %s21, %s28
      %p30 = scmp.eq.s32.totalorder %s29, 0
      %s32 = sadd.s32 %s31, 1
      %s33 = scalar_select %p30, %s31, %s32
      %p36 = pneg %p30
      %p37 = scmp.eq.s32.totalorder %s21, 1
      %p38 = por %p36, %p37
      %p39 = scmp.ne.s32.totalorder %s31, %s34
      %p40 = scmp.eq.s32.totalorder %s21, 0
      %p41 = por %p39, %p40
      %p42 = scmp.ne.s32.totalorder %s31, %s34
      %p43 = scmp.eq.s32.totalorder %s26, 1
      %p44 = por %p42, %p43
      %p45 = scmp.ne.s32.totalorder %s34, %s35
      %p46 = scmp.eq.s32.totalorder %s26, 0
      %p47 = por %p45, %p46
      %p48 = scmp.ne.s32.totalorder %s34, %s35
      %p49 = scmp.eq.s32.totalorder %s27, 1
      %p50 = por %p48, %p49
      %p52 = scmp.ne.s32.totalorder %s35, %s51
      %p53 = scmp.eq.s32.totalorder %s27, 0
      %p54 = por %p52, %p53
      %s56 = sadd.s32 %s55, 1
      %p59 = scmp.eq.s32.totalorder %s21, 1
      %p60 = scmp.ne.s32.totalorder %s55, %s57
      %p61 = scmp.eq.s32.totalorder %s21, 0
      %p62 = por %p60, %p61
      %p63 = scmp.ne.s32.totalorder %s55, %s57
      %p64 = scmp.eq.s32.totalorder %s26, 1
      %p65 = por %p63, %p64
      %p66 = scmp.ne.s32.totalorder %s57, %s58
      %p67 = scmp.eq.s32.totalorder %s26, 0
      %p68 = por %p66, %p67
      %p69 = scmp.ne.s32.totalorder %s57, %s58
      %p70 = scmp.eq.s32.totalorder %s27, 1
      %p71 = por %p69, %p70
      %p73 = scmp.ne.s32.totalorder %s58, %s72
      %p74 = scmp.eq.s32.totalorder %s27, 0
      %p75 = por %p73, %p74
      %s77 = sadd.s32 %s76, 1
      %p80 = scmp.eq.s32.totalorder %s21, 1
      %p81 = scmp.ne.s32.totalorder %s76, %s78
      %p82 = scmp.eq.s32.totalorder %s21, 0
      %p83 = por %p81, %p82
      %p84 = scmp.ne.s32.totalorder %s76, %s78
      %p85 = scmp.eq.s32.totalorder %s26, 1
      %p86 = por %p84, %p85
      %p87 = scmp.ne.s32.totalorder %s78, %s79
      %p88 = scmp.eq.s32.totalorder %s26, 0
      %p89 = por %p87, %p88
      %p90 = scmp.ne.s32.totalorder %s78, %s79
      %p91 = scmp.eq.s32.totalorder %s27, 1
      %p92 = por %p90, %p91
      %p94 = scmp.ne.s32.totalorder %s79, %s93
      %p95 = scmp.eq.s32.totalorder %s27, 0
      %p96 = por %p94, %p95
      %s98 = sadd.s32 %s97, 1
      %p101 = scmp.eq.s32.totalorder %s21, 1
      %p102 = scmp.ne.s32.totalorder %s97, %s99
      %p103 = scmp.eq.s32.totalorder %s21, 0
      %p104 = por %p102, %p103
      %p105 = scmp.ne.s32.totalorder %s97, %s99
      %p106 = scmp.eq.s32.totalorder %s26, 1
      %p107 = por %p105, %p106
      %p108 = scmp.ne.s32.totalorder %s99, %s100
      %p109 = scmp.eq.s32.totalorder %s26, 0
      %p110 = por %p108, %p109
      %p111 = scmp.ne.s32.totalorder %s99, %s100
      %p112 = scmp.eq.s32.totalorder %s27, 1
      %p113 = por %p111, %p112
      %p115 = scmp.ne.s32.totalorder %s100, %s114
      %p116 = scmp.eq.s32.totalorder %s27, 0
      %p117 = por %p115, %p116
      %s119 = sadd.s32 %s118, 1
      %p122 = scmp.eq.s32.totalorder %s21, 1
      %p123 = scmp.ne.s32.totalorder %s118, %s120
      %p124 = scmp.eq.s32.totalorder %s21, 0
      %p125 = por %p123, %p124
      %p126 = scmp.ne.s32.totalorder %s118, %s120
      %p127 = scmp.eq.s32.totalorder %s26, 1
      %p128 = por %p126, %p127
      %p129 = scmp.ne.s32.totalorder %s120, %s121
      %p130 = scmp.eq.s32.totalorder %s26, 0
      %p131 = por %p129, %p130
      %p132 = scmp.ne.s32.totalorder %s120, %s121
      %p133 = scmp.eq.s32.totalorder %s27, 1
      %p134 = por %p132, %p133
      %p136 = scmp.ne.s32.totalorder %s121, %s135
      %p137 = scmp.eq.s32.totalorder %s27, 0
      %p138 = por %p136, %p137
      %s140 = sadd.s32 %s139, 1
      %p143 = scmp.eq.s32.totalorder %s21, 1
      %p144 = scmp.ne.s32.totalorder %s139, %s141
      %p145 = scmp.eq.s32.totalorder %s21, 0
      %p146 = por %p144, %p145
      %p147 = scmp.ne.s32.totalorder %s139, %s141
      %p148 = scmp.eq.s32.totalorder %s26, 1
      %p149 = por %p147, %p148
      %p150 = scmp.ne.s32.totalorder %s141, %s142
      %p151 = scmp.eq.s32.totalorder %s26, 0
      %p152 = por %p150, %p151
      %p153 = scmp.ne.s32.totalorder %s141, %s142
      %p154 = scmp.eq.s32.totalorder %s27, 1
      %p155 = por %p153, %p154
      %p157 = scmp.ne.s32.totalorder %s142, %s156
      %p158 = scmp.eq.s32.totalorder %s27, 0
      %p159 = por %p157, %p158
      %s161 = sadd.s32 %s160, 1
      %p164 = scmp.eq.s32.totalorder %s21, 1
      %p165 = scmp.ne.s32.totalorder %s160, %s162
      %p166 = scmp.eq.s32.totalorder %s21, 0
      %p167 = por %p165, %p166
      %p168 = scmp.ne.s32.totalorder %s160, %s162
      %p169 = scmp.eq.s32.totalorder %s26, 1
      %p170 = por %p168, %p169
      %p171 = scmp.ne.s32.totalorder %s162, %s163
      %p172 = scmp.eq.s32.totalorder %s26, 0
      %p173 = por %p171, %p172
      %p174 = scmp.ne.s32.totalorder %s162, %s163
      %p175 = scmp.eq.s32.totalorder %s27, 1
      %p176 = por %p174, %p175
      %p178 = scmp.ne.s32.totalorder %s163, %s177
      %p179 = scmp.eq.s32.totalorder %s27, 0
      %p180 = por %p178, %p179
      %s182 = sadd.s32 %s181, 1
      %p185 = scmp.eq.s32.totalorder %s21, 1
      %p186 = scmp.ne.s32.totalorder %s181, %s183
      %p187 = scmp.eq.s32.totalorder %s21, 0
      %p188 = por %p186, %p187
      %p189 = scmp.ne.s32.totalorder %s181, %s183
      %p190 = scmp.eq.s32.totalorder %s26, 1
      %p191 = por %p189, %p190
      %p192 = scmp.ne.s32.totalorder %s183, %s184
      %p193 = scmp.eq.s32.totalorder %s26, 0
      %p194 = por %p192, %p193
      %p195 = scmp.ne.s32.totalorder %s183, %s184
      %p196 = scmp.eq.s32.totalorder %s27, 1
      %p197 = por %p195, %p196
      %p199 = scmp.ne.s32.totalorder %s184, %s198
      %p200 = scmp.eq.s32.totalorder %s27, 0
      %p201 = por %p199, %p200
      %s203 = sadd.s32 %s202, 1
      %p206 = scmp.eq.s32.totalorder %s21, 1
      %p207 = scmp.ne.s32.totalorder %s202, %s204
      %p208 = scmp.eq.s32.totalorder %s21, 0
      %p209 = por %p207, %p208
      %p210 = scmp.ne.s32.totalorder %s202, %s204
      %p211 = scmp.eq.s32.totalorder %s26, 1
      %p212 = por %p210, %p211
      %p213 = scmp.ne.s32.totalorder %s204, %s205
      %p214 = scmp.eq.s32.totalorder %s26, 0
      %p215 = por %p213, %p214
      %p216 = scmp.ne.s32.totalorder %s204, %s205
      %p217 = scmp.eq.s32.totalorder %s27, 1
      %p218 = por %p216, %p217
      %p220 = scmp.ne.s32.totalorder %s205, %s219
      %p221 = scmp.eq.s32.totalorder %s27, 0
      %p222 = por %p220, %p221
      %s224 = sadd.s32 %s223, 1
      %p227 = scmp.eq.s32.totalorder %s21, 1
      %p228 = scmp.ne.s32.totalorder %s223, %s225
      %p229 = scmp.eq.s32.totalorder %s21, 0
      %p230 = por %p228, %p229
      %p231 = scmp.ne.s32.totalorder %s223, %s225
      %p232 = scmp.eq.s32.totalorder %s26, 1
      %p233 = por %p231, %p232
      %p234 = scmp.ne.s32.totalorder %s225, %s226
      %p235 = scmp.eq.s32.totalorder %s26, 0
      %p236 = por %p234, %p235
      %p237 = scmp.ne.s32.totalorder %s225, %s226
      %p238 = scmp.eq.s32.totalorder %s27, 1
      %p239 = por %p237, %p238
      %p241 = scmp.ne.s32.totalorder %s226, %s240
      %p242 = scmp.eq.s32.totalorder %s27, 0
      %p243 = por %p241, %p242
      %s245 = sadd.s32 %s244, 1
      %p248 = scmp.eq.s32.totalorder %s21, 1
      %p249 = scmp.ne.s32.totalorder %s244, %s246
      %p250 = scmp.eq.s32.totalorder %s21, 0
      %p251 = por %p249, %p250
      %p252 = scmp.ne.s32.totalorder %s244, %s246
      %p253 = scmp.eq.s32.totalorder %s26, 1
      %p254 = por %p252, %p253
      %p255 = scmp.ne.s32.totalorder %s246, %s247
      %p256 = scmp.eq.s32.totalorder %s26, 0
      %p257 = por %p255, %p256
      %p258 = scmp.ne.s32.totalorder %s246, %s247
      %p259 = scmp.eq.s32.totalorder %s27, 1
      %p260 = por %p258, %p259
      %p262 = scmp.ne.s32.totalorder %s247, %s261
      %p263 = scmp.eq.s32.totalorder %s27, 0
      %p264 = por %p262, %p263
      %s266 = sadd.s32 %s265, 1
      %p269 = scmp.eq.s32.totalorder %s21, 1
      %p270 = scmp.ne.s32.totalorder %s265, %s267
      %p271 = scmp.eq.s32.totalorder %s21, 0
      %p272 = por %p270, %p271
      %p273 = scmp.ne.s32.totalorder %s265, %s267
      %p274 = scmp.eq.s32.totalorder %s26, 1
      %p275 = por %p273, %p274
      %p276 = scmp.ne.s32.totalorder %s267, %s268
      %p277 = scmp.eq.s32.totalorder %s26, 0
      %p278 = por %p276, %p277
      %p279 = scmp.ne.s32.totalorder %s267, %s268
      %p280 = scmp.eq.s32.totalorder %s27, 1
      %p281 = por %p279, %p280
      %p283 = scmp.ne.s32.totalorder %s268, %s282
      %p284 = scmp.eq.s32.totalorder %s27, 0
      %p285 = por %p283, %p284
      %s286 = ssub.s32 %s21, %s28
      %p287 = scmp.eq.s32.totalorder %s286, 0
      %s289 = sadd.s32 %s288, 1
      %s290 = scalar_select %p287, %s288, %s289
      %p293 = pneg %p287
      %p294 = scmp.eq.s32.totalorder %s21, 1
      %p295 = por %p293, %p294
      %p296 = scmp.ne.s32.totalorder %s288, %s291
      %p297 = scmp.eq.s32.totalorder %s21, 0
      %p298 = por %p296, %p297
      %p299 = scmp.ne.s32.totalorder %s288, %s291
      %p300 = scmp.eq.s32.totalorder %s26, 1
      %p301 = por %p299, %p300
      %p302 = scmp.ne.s32.totalorder %s291, %s292
      %p303 = scmp.eq.s32.totalorder %s26, 0
      %p304 = por %p302, %p303
      %p305 = scmp.ne.s32.totalorder %s291, %s292
      %p306 = scmp.eq.s32.totalorder %s27, 1
      %p307 = por %p305, %p306
      %p309 = scmp.ne.s32.totalorder %s292, %s308
      %p310 = scmp.eq.s32.totalorder %s27, 0
      %p311 = por %p309, %p310
      %p312 = scmp.le.s32.totalorder 1, %s21
      %p313 = scmp.lt.s32.totalorder %s21, 3
      %p314 = pnand %p312, %p313
      %p315 = pneg %p314
      // Predicated region
      $region9: #{lenet5_forward.1} parent=5 // pred_check
        _
      $region10: #{lenet5_forward.1} parent=5 // pred_check_branch
        %317 = sbr.rel (%p314) target = $region12
      $region11: #{lenet5_forward.1} parent=5 // pred_region
        %s318 = ssub.s32 %s21, 1
        // Predicated region
        $region13: #{lenet5_forward.1} parent=11 // pred_check
          %p319 = pneg %p68
        $region14: #{lenet5_forward.1} parent=11 // pred_check_branch
          %321 = sbr.rel (%p319) target = $region16
        $region15: #{lenet5_forward.1} parent=11 // pred_region
          _
        $region16: #{lenet5_forward.1} parent=11 // pred_fallthru
          _
        // Predicated region
        $region17: #{lenet5_forward.1} parent=11 // pred_check
          %p322 = pneg %p89
        $region18: #{lenet5_forward.1} parent=11 // pred_check_branch
          %324 = sbr.rel (%p322) target = $region20
        $region19: #{lenet5_forward.1} parent=11 // pred_region
          _
        $region20: #{lenet5_forward.1} parent=11 // pred_fallthru
          _
        // Predicated region
        $region21: #{lenet5_forward.1} parent=11 // pred_check
          %p325 = pneg %p110
        $region22: #{lenet5_forward.1} parent=11 // pred_check_branch
          %327 = sbr.rel (%p325) target = $region24
        $region23: #{lenet5_forward.1} parent=11 // pred_region
          _
        $region24: #{lenet5_forward.1} parent=11 // pred_fallthru
          _
        // Predicated region
        $region25: #{lenet5_forward.1} parent=11 // pred_check
          %p328 = pneg %p131
        $region26: #{lenet5_forward.1} parent=11 // pred_check_branch
          %330 = sbr.rel (%p328) target = $region28
        $region27: #{lenet5_forward.1} parent=11 // pred_region
          _
        $region28: #{lenet5_forward.1} parent=11 // pred_fallthru
          _
        // Predicated region
        $region29: #{lenet5_forward.1} parent=11 // pred_check
          %p331 = pneg %p152
        $region30: #{lenet5_forward.1} parent=11 // pred_check_branch
          %333 = sbr.rel (%p331) target = $region32
        $region31: #{lenet5_forward.1} parent=11 // pred_region
          _
        $region32: #{lenet5_forward.1} parent=11 // pred_fallthru
          _
        // Predicated region
        $region33: #{lenet5_forward.1} parent=11 // pred_check
          %p334 = pneg %p173
        $region34: #{lenet5_forward.1} parent=11 // pred_check_branch
          %336 = sbr.rel (%p334) target = $region36
        $region35: #{lenet5_forward.1} parent=11 // pred_region
          _
        $region36: #{lenet5_forward.1} parent=11 // pred_fallthru
          _
        // Predicated region
        $region37: #{lenet5_forward.1} parent=11 // pred_check
          %p337 = pneg %p194
        $region38: #{lenet5_forward.1} parent=11 // pred_check_branch
          %339 = sbr.rel (%p337) target = $region40
        $region39: #{lenet5_forward.1} parent=11 // pred_region
          _
        $region40: #{lenet5_forward.1} parent=11 // pred_fallthru
          _
        // Predicated region
        $region41: #{lenet5_forward.1} parent=11 // pred_check
          %p340 = pneg %p215
        $region42: #{lenet5_forward.1} parent=11 // pred_check_branch
          %342 = sbr.rel (%p340) target = $region44
        $region43: #{lenet5_forward.1} parent=11 // pred_region
          _
        $region44: #{lenet5_forward.1} parent=11 // pred_fallthru
          _
        // Predicated region
        $region45: #{lenet5_forward.1} parent=11 // pred_check
          %p343 = pneg %p236
        $region46: #{lenet5_forward.1} parent=11 // pred_check_branch
          %345 = sbr.rel (%p343) target = $region48
        $region47: #{lenet5_forward.1} parent=11 // pred_region
          _
        $region48: #{lenet5_forward.1} parent=11 // pred_fallthru
          _
        // Predicated region
        $region49: #{lenet5_forward.1} parent=11 // pred_check
          %p346 = pneg %p257
        $region50: #{lenet5_forward.1} parent=11 // pred_check_branch
          %348 = sbr.rel (%p346) target = $region52
        $region51: #{lenet5_forward.1} parent=11 // pred_region
          _
        $region52: #{lenet5_forward.1} parent=11 // pred_fallthru
          _
        // Predicated region
        $region53: #{lenet5_forward.1} parent=11 // pred_check
          %p349 = pneg %p278
        $region54: #{lenet5_forward.1} parent=11 // pred_check_branch
          %351 = sbr.rel (%p349) target = $region56
        $region55: #{lenet5_forward.1} parent=11 // pred_region
          _
        $region56: #{lenet5_forward.1} parent=11 // pred_fallthru
          _
      $region12: #{lenet5_forward.1} parent=5 // pred_fallthru
        _
      %p352 = scmp.lt.s32.totalorder %s21, 2
      // Predicated region
      $region57: #{lenet5_forward.1} parent=5 // pred_check
        %p353 = pneg %p352
      $region58: #{lenet5_forward.1} parent=5 // pred_check_branch
        %355 = sbr.rel (%p353) target = $region60
      $region59: #{lenet5_forward.1} parent=5 // pred_region
        // Predicated region
        $region61: #{lenet5_forward.1} parent=59 // pred_check
          %p356 = pneg %p41
        $region62: #{lenet5_forward.1} parent=59 // pred_check_branch
          %358 = sbr.rel (%p356) target = $region64
        $region63: #{lenet5_forward.1} parent=59 // pred_region
          %s359 = smul.u32 49, %s21
          %p360 = scmp.lt.s32.totalorder %s359, 97
          %s361 = scalar_select %p360, %s359, 97
          %s362 = smul.addr %s361, 8
          %s363 = scalar_lea.vmem %s0, %s362
          %s364 = smul.u32 49, %s21
        $region64: #{lenet5_forward.1} parent=59 // pred_fallthru
          _
      $region60: #{lenet5_forward.1} parent=5 // pred_fallthru
        _
      %p365 = scmp.le.s32.totalorder 1, %s21
      %p366 = scmp.lt.s32.totalorder %s21, 3
      %p367 = pnand %p365, %p366
      %p368 = pneg %p367
      // Predicated region
      $region65: #{lenet5_forward.1} parent=5 // pred_check
        _
      $region66: #{lenet5_forward.1} parent=5 // pred_check_branch
        %370 = sbr.rel (%p367) target = $region68
      $region67: #{lenet5_forward.1} parent=5 // pred_region
        %s371 = ssub.s32 %s21, 1
        %s372 = smul.u32 49, %s26
        %p373 = scmp.lt.s32.totalorder %s372, 97
        %s374 = scalar_select %p373, %s372, 97
        %s375 = smul.addr %s374, 8
        %s376 = scalar_lea.vmem %s0, %s375
        %p377 = pneg %p47
        %p378 = pneg %p44
        %p379 = pneg %p68
        %p380 = pneg %p65
        %p381 = pneg %p89
        %p382 = pneg %p86
        %p383 = pneg %p110
        %p384 = pneg %p107
        %p385 = pneg %p131
        %p386 = pneg %p128
        %p387 = pneg %p152
        %p388 = pneg %p149
        %p389 = pneg %p173
        %p390 = pneg %p170
        %p391 = pneg %p194
        %p392 = pneg %p191
        %p393 = pneg %p215
        %p394 = pneg %p212
        %p395 = pneg %p236
        %p396 = pneg %p233
        %p397 = pneg %p257
        %p398 = pneg %p254
        %p399 = pneg %p278
        %p400 = pneg %p275
        %p401 = pneg %p304
        %p402 = pneg %p301
        %s403 = sand.u32 %s291, 1
        %s404 = scalar_lea.sflag [#allocation6], %s403
        %s405 = sand.u32 %s291, 1
        %s406 = smul.addr %s405, 2
        %s407 = scalar_lea.vmem [#allocation5], %s406
        %s408 = smul.u32 49, %s26
        %p409 = scmp.lt.s32.totalorder %s408, 97
        %s410 = scalar_select %p409, %s408, 97
        %s411 = smul.addr %s410, 8
        %s412 = scalar_lea.vmem %s0, %s411
        %s413 = smul.u32 49, %s26
        %v415 = vld [vmem:[%s412] sm:$0xff]
        %v416 = vld [vmem:[%s412 + $0x8] sm:$0xff]
        %v417 = vld [vmem:[%s412 + $0x10] sm:$0xff]
        %v418 = vld [vmem:[%s412 + $0x18] sm:$0xff]
        %v419 = vld [vmem:[%s412 + $0x20] sm:$0xff]
        %v420 = vld [vmem:[%s412 + $0x28] sm:$0xff]
        %v421 = vld [vmem:[%s412 + $0x30] sm:$0xff]
        %v422 = vld [vmem:[%s412 + $0x38] sm:$0xff]
        %v423 = vld [vmem:[%s412 + $0x40] sm:$0xff]
        %v424 = vld [vmem:[%s412 + $0x48] sm:$0xff]
        %v425 = vld [vmem:[%s412 + $0x50] sm:$0xff]
        %v426 = vld [vmem:[%s412 + $0x58] sm:$0xff]
        %v427 = vld [vmem:[%s412 + $0x60] sm:$0xff]
        %v428 = vld [vmem:[%s412 + $0x68] sm:$0xff]
        %v429 = vld [vmem:[%s412 + $0x70] sm:$0xff]
        %v430 = vld [vmem:[%s412 + $0x78] sm:$0xff]
        %v431 = vld [vmem:[%s412 + $0x80] sm:$0xff]
        %v432 = vld [vmem:[%s412 + $0x88] sm:$0xff]
        %v433 = vld [vmem:[%s412 + $0x90] sm:$0xff]
        %v434 = vld [vmem:[%s412 + $0x98] sm:$0xff]
        %v435 = vld [vmem:[%s412 + $0xa0] sm:$0xff]
        %v436 = vld [vmem:[%s412 + $0xa8] sm:$0xff]
        %v437 = vld [vmem:[%s412 + $0xb0] sm:$0xff]
        %v438 = vld [vmem:[%s412 + $0xb8] sm:$0xff]
        %v439 = vld [vmem:[%s412 + $0xc0] sm:$0xff]
        %v440 = vld [vmem:[%s412 + $0xc8] sm:$0xff]
        %v441 = vld [vmem:[%s412 + $0xd0] sm:$0xff]
        %v442 = vld [vmem:[%s412 + $0xd8] sm:$0xff]
        %v443 = vld [vmem:[%s412 + $0xe0] sm:$0xff]
        %v444 = vld [vmem:[%s412 + $0xe8] sm:$0xff]
        %v445 = vld [vmem:[%s412 + $0xf0] sm:$0xff]
        %v446 = vld [vmem:[%s412 + $0xf8] sm:$0xff]
        %v447 = vld [vmem:[%s412 + $0x100] sm:$0xff]
        %v448 = vld [vmem:[%s412 + $0x108] sm:$0xff]
        %v449 = vld [vmem:[%s412 + $0x110] sm:$0xff]
        %v450 = vld [vmem:[%s412 + $0x118] sm:$0xff]
        %v451 = vld [vmem:[%s412 + $0x120] sm:$0xff]
        %v452 = vld [vmem:[%s412 + $0x128] sm:$0xff]
        %v453 = vld [vmem:[%s412 + $0x130] sm:$0xff]
        %v454 = vld [vmem:[%s412 + $0x138] sm:$0xff]
        %v455 = vld [vmem:[%s412 + $0x140] sm:$0xff]
        %v456 = vld [vmem:[%s412 + $0x148] sm:$0xff]
        %v457 = vld [vmem:[%s412 + $0x150] sm:$0xff]
        %v458 = vld [vmem:[%s412 + $0x158] sm:$0xff]
        %v459 = vld [vmem:[%s412 + $0x160] sm:$0xff]
        %v460 = vld [vmem:[%s412 + $0x168] sm:$0xff]
        %v461 = vld [vmem:[%s412 + $0x170] sm:$0xff]
        %v462 = vld [vmem:[%s412 + $0x178] sm:$0xff]
        %v463 = vld [vmem:[%s412 + $0x180] sm:$0xff]
        %v464 = vpack.c.bf16 %v416, %v415
        %v465 = vpack.c.bf16 %v418, %v417
        %v466 = vpack.c.bf16 %v420, %v419
        %v467 = vpack.c.bf16 %v422, %v421
        %v468 = vpack.c.bf16 %v424, %v423
        %v469 = vpack.c.bf16 %v426, %v425
        %v470 = vpack.c.bf16 %v428, %v427
        %v471 = vpack.c.bf16 %v430, %v429
        %v472 = vpack.c.bf16 %v432, %v431
        %v473 = vpack.c.bf16 %v434, %v433
        %v474 = vpack.c.bf16 %v436, %v435
        %v475 = vpack.c.bf16 %v438, %v437
        %v476 = vpack.c.bf16 %v440, %v439
        %v477 = vpack.c.bf16 %v442, %v441
        %v478 = vpack.c.bf16 %v444, %v443
        %v479 = vpack.c.bf16 %v446, %v445
        %v480 = vpack.c.bf16 %v448, %v447
        %v481 = vpack.c.bf16 %v450, %v449
        %v482 = vpack.c.bf16 %v452, %v451
        %v483 = vpack.c.bf16 %v454, %v453
        %v484 = vpack.c.bf16 %v456, %v455
        %v485 = vpack.c.bf16 %v458, %v457
        %v486 = vpack.c.bf16 %v460, %v459
        %v487 = vpack.c.bf16 %v462, %v461
        %v488 = vpack.c.bf16 %v463, %v463
        %v489 = vld [vmem:[%s1] sm:$0xf]
        %v490 = vld [vmem:[%s1 + $0x4] sm:$0xf]
        %v491 = vld [vmem:[%s1 + $0x8] sm:$0xf]
        %v492 = vld [vmem:[%s1 + $0xc] sm:$0xf]
        %v493 = vld [vmem:[%s1 + $0x10] sm:$0x3]
        %v494 = vld [vmem:[%s2] sm:$0x1]
        %v496 = vlaneseq
        %v497 = vshrl.u32 %v496, 7
        %v498 = vsub.s32 0, %v497
        %v499 = vrot.slane %v494, %v498
        %v506 = vunpack.c.l.b16 %v489
        %v507 = vunpack.c.l.b16 %v490
        %v508 = vunpack.c.l.b16 %v491
        %v509 = vunpack.c.l.b16 %v492
        %v510 = vunpack.c.l.b16 %v493
        %v511 = vpack.c.b16 %v507, %v506
        %v512 = vpack.c.b16 %v509, %v508
        %v513 = vpack.c.b16 %v510, %v510
        %vm516 = vcmask 293888
        %v518 = vsel %vm516, %v464, 0
        %v521 = vsel %vm516, %v465, 0
        %v524 = vsel %vm516, %v466, 0
        %v527 = vsel %vm516, %v467, 0
        %v530 = vsel %vm516, %v468, 0
        %v533 = vsel %vm516, %v469, 0
        %v536 = vsel %vm516, %v470, 0
        %v539 = vsel %vm516, %v471, 0
        %v542 = vsel %vm516, %v472, 0
        %v545 = vsel %vm516, %v473, 0
        %v548 = vsel %vm516, %v474, 0
        %v551 = vsel %vm516, %v475, 0
        %v554 = vsel %vm516, %v476, 0
        %v557 = vsel %vm516, %v477, 0
        %v560 = vsel %vm516, %v478, 0
        %v563 = vsel %vm516, %v479, 0
        %v566 = vsel %vm516, %v480, 0
        %v569 = vsel %vm516, %v481, 0
        %v572 = vsel %vm516, %v482, 0
        %v575 = vsel %vm516, %v483, 0
        %v578 = vsel %vm516, %v484, 0
        %v581 = vsel %vm516, %v485, 0
        %v584 = vsel %vm516, %v486, 0
        %v587 = vsel %vm516, %v487, 0
        %v590 = vsel %vm516, %v488, 0
        %vm592 = vcmask 1041408
        %v594 = vsel %vm592, %v513, 0
        %596 = vmatprep.subr.bf16.mxu0 0
        %597 = vmatpush1.bf16.msra.mxu0 %v511
        %598 = vmatprep.subr.bf16.mxu0 0
        %599 = vmatpush1.bf16.msra.mxu0 %v512
        %600 = vmatprep.subr.bf16.mxu0 0
        %601 = vmatpush1.bf16.msra.mxu0 %v594
        %602 = vmatprep.subr.bf16.mxu0 0
        %603 = vmatpush1.bf16.msra.mxu0 0
        %604 = vmatprep.subr.bf16.mxu0 0
        %605 = vmatpush1.bf16.msra.mxu0 0
        %606 = vmatprep.subr.bf16.mxu0 0
        %607 = vmatpush1.bf16.msra.mxu0 0
        %608 = vmatprep.subr.bf16.mxu0 0
        %609 = vmatpush1.bf16.msra.mxu0 0
        %610 = vmatprep.subr.bf16.mxu0 0
        %611 = vmatpush1.bf16.msra.mxu0 0
        %612 = vmatprep.subr.bf16.mxu0 0
        %613 = vmatpush1.bf16.msra.mxu0 0
        %614 = vmatprep.subr.bf16.mxu0 0
        %615 = vmatpush1.bf16.msra.mxu0 0
        %616 = vmatprep.subr.bf16.mxu0 0
        %617 = vmatpush1.bf16.msra.mxu0 0
        %618 = vmatprep.subr.bf16.mxu0 0
        %619 = vmatpush1.bf16.msra.mxu0 0
        %620 = vmatprep.subr.bf16.mxu0 0
        %621 = vmatpush1.bf16.msra.mxu0 0
        %622 = vmatprep.subr.bf16.mxu0 0
        %623 = vmatpush1.bf16.msra.mxu0 0
        %624 = vmatprep.subr.bf16.mxu0 0
        %625 = vmatpush1.bf16.msra.mxu0 0
        %626 = vmatprep.subr.bf16.mxu0 0
        %627 = vmatpush1.bf16.msra.mxu0 0
        %628 = vmatprep.mubr.bf16.mxu0 0
        %629 = vmatmul.mubr.bf16.gmra.mrb[0].mxu0 %v518
        %v630 = vpop.f32.mrb[0].mxu0
        %v631 = vadd.f32 %v499, %v630
        %v632 = vpop.f32.mrb[0].mxu0
        %v633 = vpop.f32.mrb[0].mxu0
        %v634 = vadd.f32 %v499, %v633
        %v635 = vpop.f32.mrb[0].mxu0
        %636 = vmatprep.mubr.bf16.mxu0 0
        %637 = vmatmul.mubr.bf16.gmra.mrb[0].mxu0 %v521
        %v638 = vpop.f32.mrb[0].mxu0
        %v639 = vadd.f32 %v499, %v638
        %v640 = vpop.f32.mrb[0].mxu0
        %v641 = vpop.f32.mrb[0].mxu0
        %v642 = vadd.f32 %v499, %v641
        %v643 = vpop.f32.mrb[0].mxu0
        %644 = vmatprep.mubr.bf16.mxu0 0
        %645 = vmatmul.mubr.bf16.gmra.mrb[0].mxu0 %v524
        %v646 = vpop.f32.mrb[0].mxu0
        %v647 = vadd.f32 %v499, %v646
        %v648 = vpop.f32.mrb[0].mxu0
        %v649 = vpop.f32.mrb[0].mxu0
        %v650 = vadd.f32 %v499, %v649
        %v651 = vpop.f32.mrb[0].mxu0
        %652 = vmatprep.mubr.bf16.mxu0 0
        %653 = vmatmul.mubr.bf16.gmra.mrb[0].mxu0 %v527
        %v654 = vpop.f32.mrb[0].mxu0
        %v655 = vadd.f32 %v499, %v654
        %v656 = vpop.f32.mrb[0].mxu0
        %v657 = vpop.f32.mrb[0].mxu0
        %v658 = vadd.f32 %v499, %v657
        %v659 = vpop.f32.mrb[0].mxu0
        %660 = vmatprep.mubr.bf16.mxu0 0
        %661 = vmatmul.mubr.bf16.gmra.mrb[0].mxu0 %v530
        %v662 = vpop.f32.mrb[0].mxu0
        %v663 = vadd.f32 %v499, %v662
        %v664 = vpop.f32.mrb[0].mxu0
        %v665 = vpop.f32.mrb[0].mxu0
        %v666 = vadd.f32 %v499, %v665
        %v667 = vpop.f32.mrb[0].mxu0
        %668 = vmatprep.mubr.bf16.mxu0 0
        %669 = vmatmul.mubr.bf16.gmra.mrb[0].mxu0 %v533
        %v670 = vpop.f32.mrb[0].mxu0
        %v671 = vadd.f32 %v499, %v670
        %v672 = vpop.f32.mrb[0].mxu0
        %v673 = vpop.f32.mrb[0].mxu0
        %v674 = vadd.f32 %v499, %v673
        %v675 = vpop.f32.mrb[0].mxu0
        %676 = vmatprep.mubr.bf16.mxu0 0
        %677 = vmatmul.mubr.bf16.gmra.mrb[0].mxu0 %v536
        %v678 = vpop.f32.mrb[0].mxu0
        %v679 = vadd.f32 %v499, %v678
        %v680 = vpop.f32.mrb[0].mxu0
        %v681 = vpop.f32.mrb[0].mxu0
        %v682 = vadd.f32 %v499, %v681
        %v683 = vpop.f32.mrb[0].mxu0
        %684 = vmatprep.mubr.bf16.mxu0 0
        %685 = vmatmul.mubr.bf16.gmra.mrb[0].mxu0 %v539
        %v686 = vpop.f32.mrb[0].mxu0
        %v687 = vadd.f32 %v499, %v686
        %v688 = vpop.f32.mrb[0].mxu0
        %v689 = vpop.f32.mrb[0].mxu0
        %v690 = vadd.f32 %v499, %v689
        %v691 = vpop.f32.mrb[0].mxu0
        %692 = vmatprep.mubr.bf16.mxu0 0
        %693 = vmatmul.mubr.bf16.gmra.mrb[0].mxu0 %v542
        %v694 = vpop.f32.mrb[0].mxu0
        %v695 = vadd.f32 %v499, %v694
        %v696 = vpop.f32.mrb[0].mxu0
        %v697 = vpop.f32.mrb[0].mxu0
        %v698 = vadd.f32 %v499, %v697
        %v699 = vpop.f32.mrb[0].mxu0
        %700 = vmatprep.mubr.bf16.mxu0 0
        %701 = vmatmul.mubr.bf16.gmra.mrb[0].mxu0 %v545
        %v702 = vpop.f32.mrb[0].mxu0
        %v703 = vadd.f32 %v499, %v702
        %v704 = vpop.f32.mrb[0].mxu0
        %v705 = vpop.f32.mrb[0].mxu0
        %v706 = vadd.f32 %v499, %v705
        %v707 = vpop.f32.mrb[0].mxu0
        %708 = vmatprep.mubr.bf16.mxu0 0
        %709 = vmatmul.mubr.bf16.gmra.mrb[0].mxu0 %v548
        %v710 = vpop.f32.mrb[0].mxu0
        %v711 = vadd.f32 %v499, %v710
        %v712 = vpop.f32.mrb[0].mxu0
        %v713 = vpop.f32.mrb[0].mxu0
        %v714 = vadd.f32 %v499, %v713
        %v715 = vpop.f32.mrb[0].mxu0
        %716 = vmatprep.mubr.bf16.mxu0 0
        %717 = vmatmul.mubr.bf16.gmra.mrb[0].mxu0 %v551
        %v718 = vpop.f32.mrb[0].mxu0
        %v719 = vadd.f32 %v499, %v718
        %v720 = vpop.f32.mrb[0].mxu0
        %v721 = vpop.f32.mrb[0].mxu0
        %v722 = vadd.f32 %v499, %v721
        %v723 = vpop.f32.mrb[0].mxu0
        %724 = vmatprep.mubr.bf16.mxu0 0
        %725 = vmatmul.mubr.bf16.gmra.mrb[0].mxu0 %v554
        %v726 = vpop.f32.mrb[0].mxu0
        %v727 = vadd.f32 %v499, %v726
        %v728 = vpop.f32.mrb[0].mxu0
        %v729 = vpop.f32.mrb[0].mxu0
        %v730 = vadd.f32 %v499, %v729
        %v731 = vpop.f32.mrb[0].mxu0
        %732 = vmatprep.mubr.bf16.mxu0 0
        %733 = vmatmul.mubr.bf16.gmra.mrb[0].mxu0 %v557
        %v734 = vpop.f32.mrb[0].mxu0
        %v735 = vadd.f32 %v499, %v734
        %v736 = vpop.f32.mrb[0].mxu0
        %v737 = vpop.f32.mrb[0].mxu0
        %v738 = vadd.f32 %v499, %v737
        %v739 = vpop.f32.mrb[0].mxu0
        %740 = vmatprep.mubr.bf16.mxu0 0
        %741 = vmatmul.mubr.bf16.gmra.mrb[0].mxu0 %v560
        %v742 = vpop.f32.mrb[0].mxu0
        %v743 = vadd.f32 %v499, %v742
        %v744 = vpop.f32.mrb[0].mxu0
        %v745 = vpop.f32.mrb[0].mxu0
        %v746 = vadd.f32 %v499, %v745
        %v747 = vpop.f32.mrb[0].mxu0
        %748 = vmatprep.mubr.bf16.mxu0 0
        %749 = vmatmul.mubr.bf16.gmra.mrb[0].mxu0 %v563
        %v750 = vpop.f32.mrb[0].mxu0
        %v751 = vadd.f32 %v499, %v750
        %v752 = vpop.f32.mrb[0].mxu0
        %v753 = vpop.f32.mrb[0].mxu0
        %v754 = vadd.f32 %v499, %v753
        %v755 = vpop.f32.mrb[0].mxu0
        %756 = vmatprep.mubr.bf16.mxu0 0
        %757 = vmatmul.mubr.bf16.gmra.mrb[0].mxu0 %v566
        %v758 = vpop.f32.mrb[0].mxu0
        %v759 = vadd.f32 %v499, %v758
        %v760 = vpop.f32.mrb[0].mxu0
        %v761 = vpop.f32.mrb[0].mxu0
        %v762 = vadd.f32 %v499, %v761
        %v763 = vpop.f32.mrb[0].mxu0
        %764 = vmatprep.mubr.bf16.mxu0 0
        %765 = vmatmul.mubr.bf16.gmra.mrb[0].mxu0 %v569
        %v766 = vpop.f32.mrb[0].mxu0
        %v767 = vadd.f32 %v499, %v766
        %v768 = vpop.f32.mrb[0].mxu0
        %v769 = vpop.f32.mrb[0].mxu0
        %v770 = vadd.f32 %v499, %v769
        %v771 = vpop.f32.mrb[0].mxu0
        %772 = vmatprep.mubr.bf16.mxu0 0
        %773 = vmatmul.mubr.bf16.gmra.mrb[0].mxu0 %v572
        %v774 = vpop.f32.mrb[0].mxu0
        %v775 = vadd.f32 %v499, %v774
        %v776 = vpop.f32.mrb[0].mxu0
        %v777 = vpop.f32.mrb[0].mxu0
        %v778 = vadd.f32 %v499, %v777
        %v779 = vpop.f32.mrb[0].mxu0
        %780 = vmatprep.mubr.bf16.mxu0 0
        %781 = vmatmul.mubr.bf16.gmra.mrb[0].mxu0 %v575
        %v782 = vpop.f32.mrb[0].mxu0
        %v783 = vadd.f32 %v499, %v782
        %v784 = vpop.f32.mrb[0].mxu0
        %v785 = vpop.f32.mrb[0].mxu0
        %v786 = vadd.f32 %v499, %v785
        %v787 = vpop.f32.mrb[0].mxu0
        %788 = vmatprep.mubr.bf16.mxu0 0
        %789 = vmatmul.mubr.bf16.gmra.mrb[0].mxu0 %v578
        %v790 = vpop.f32.mrb[0].mxu0
        %v791 = vadd.f32 %v499, %v790
        %v792 = vpop.f32.mrb[0].mxu0
        %v793 = vpop.f32.mrb[0].mxu0
        %v794 = vadd.f32 %v499, %v793
        %v795 = vpop.f32.mrb[0].mxu0
        %796 = vmatprep.mubr.bf16.mxu0 0
        %797 = vmatmul.mubr.bf16.gmra.mrb[0].mxu0 %v581
        %v798 = vpop.f32.mrb[0].mxu0
        %v799 = vadd.f32 %v499, %v798
        %v800 = vpop.f32.mrb[0].mxu0
        %v801 = vpop.f32.mrb[0].mxu0
        %v802 = vadd.f32 %v499, %v801
        %v803 = vpop.f32.mrb[0].mxu0
        %804 = vmatprep.mubr.bf16.mxu0 0
        %805 = vmatmul.mubr.bf16.gmra.mrb[0].mxu0 %v584
        %v806 = vpop.f32.mrb[0].mxu0
        %v807 = vadd.f32 %v499, %v806
        %v808 = vpop.f32.mrb[0].mxu0
        %v809 = vpop.f32.mrb[0].mxu0
        %v810 = vadd.f32 %v499, %v809
        %v811 = vpop.f32.mrb[0].mxu0
        %812 = vmatprep.mubr.bf16.mxu0 0
        %813 = vmatmul.mubr.bf16.gmra.mrb[0].mxu0 %v587
        %v814 = vpop.f32.mrb[0].mxu0
        %v815 = vadd.f32 %v499, %v814
        %v816 = vpop.f32.mrb[0].mxu0
        %v817 = vpop.f32.mrb[0].mxu0
        %v818 = vadd.f32 %v499, %v817
        %v819 = vpop.f32.mrb[0].mxu0
        %820 = vmatprep.mubr.bf16.mxu0 0
        %821 = vmatmul.mubr.bf16.gmra.mrb[0].mxu0 %v590
        %v822 = vpop.f32.mrb[0].mxu0
        %v823 = vadd.f32 %v499, %v822
        %v824 = vpop.f32.mrb[0].mxu0
        %v825 = vpop.f32.mrb[0].mxu0
        %v826 = vpop.f32.mrb[0].mxu0
        %827 = vdwg.mxu0
        %v828 = vtanh.pop %v631
        %v829 = vtanh.pop %v634
        %v830 = vtanh.pop %v639
        %v831 = vtanh.pop %v642
        %v832 = vtanh.pop %v647
        %v833 = vtanh.pop %v650
        %v834 = vtanh.pop %v655
        %v835 = vtanh.pop %v658
        %v836 = vtanh.pop %v663
        %v837 = vtanh.pop %v666
        %v838 = vtanh.pop %v671
        %v839 = vtanh.pop %v674
        %v840 = vtanh.pop %v679
        %v841 = vtanh.pop %v682
        %v842 = vtanh.pop %v687
        %v843 = vtanh.pop %v690
        %v844 = vtanh.pop %v695
        %v845 = vtanh.pop %v698
        %v846 = vtanh.pop %v703
        %v847 = vtanh.pop %v706
        %v848 = vtanh.pop %v711
        %v849 = vtanh.pop %v714
        %v850 = vtanh.pop %v719
        %v851 = vtanh.pop %v722
        %v852 = vtanh.pop %v727
        %v853 = vtanh.pop %v730
        %v854 = vtanh.pop %v735
        %v855 = vtanh.pop %v738
        %v856 = vtanh.pop %v743
        %v857 = vtanh.pop %v746
        %v858 = vtanh.pop %v751
        %v859 = vtanh.pop %v754
        %v860 = vtanh.pop %v759
        %v861 = vtanh.pop %v762
        %v862 = vtanh.pop %v767
        %v863 = vtanh.pop %v770
        %v864 = vtanh.pop %v775
        %v865 = vtanh.pop %v778
        %v866 = vtanh.pop %v783
        %v867 = vtanh.pop %v786
        %v868 = vtanh.pop %v791
        %v869 = vtanh.pop %v794
        %v870 = vtanh.pop %v799
        %v871 = vtanh.pop %v802
        %v872 = vtanh.pop %v807
        %v873 = vtanh.pop %v810
        %v874 = vtanh.pop %v815
        %v875 = vtanh.pop %v818
        %v876 = vtanh.pop %v823
        %926 = vrot.lane.b32.xlu0 %v828, 120
        %v927 = vpop.permute.xlu0 %926
        %928 = vrot.lane.b32.xlu0 %v829, 120
        %v929 = vpop.permute.xlu0 %928
        %930 = vrot.lane.b32.xlu0 %v830, 120
        %v931 = vpop.permute.xlu0 %930
        %932 = vrot.lane.b32.xlu0 %v831, 120
        %v933 = vpop.permute.xlu0 %932
        %934 = vrot.lane.b32.xlu0 %v832, 120
        %v935 = vpop.permute.xlu0 %934
        %936 = vrot.lane.b32.xlu0 %v833, 120
        %v937 = vpop.permute.xlu0 %936
        %938 = vrot.lane.b32.xlu0 %v834, 120
        %v939 = vpop.permute.xlu0 %938
        %940 = vrot.lane.b32.xlu0 %v835, 120
        %v941 = vpop.permute.xlu0 %940
        %942 = vrot.lane.b32.xlu0 %v836, 120
        %v943 = vpop.permute.xlu0 %942
        %944 = vrot.lane.b32.xlu0 %v837, 120
        %v945 = vpop.permute.xlu0 %944
        %946 = vrot.lane.b32.xlu0 %v838, 120
        %v947 = vpop.permute.xlu0 %946
        %948 = vrot.lane.b32.xlu0 %v839, 120
        %v949 = vpop.permute.xlu0 %948
        %950 = vrot.lane.b32.xlu0 %v840, 120
        %v951 = vpop.permute.xlu0 %950
        %952 = vrot.lane.b32.xlu0 %v841, 120
        %v953 = vpop.permute.xlu0 %952
        %954 = vrot.lane.b32.xlu0 %v842, 120
        %v955 = vpop.permute.xlu0 %954
        %956 = vrot.lane.b32.xlu0 %v843, 120
        %v957 = vpop.permute.xlu0 %956
        %958 = vrot.lane.b32.xlu0 %v844, 120
        %v959 = vpop.permute.xlu0 %958
        %960 = vrot.lane.b32.xlu0 %v845, 120
        %v961 = vpop.permute.xlu0 %960
        %962 = vrot.lane.b32.xlu0 %v846, 120
        %v963 = vpop.permute.xlu0 %962
        %964 = vrot.lane.b32.xlu0 %v847, 120
        %v965 = vpop.permute.xlu0 %964
        %966 = vrot.lane.b32.xlu0 %v848, 120
        %v967 = vpop.permute.xlu0 %966
        %968 = vrot.lane.b32.xlu0 %v849, 120
        %v969 = vpop.permute.xlu0 %968
        %970 = vrot.lane.b32.xlu0 %v850, 120
        %v971 = vpop.permute.xlu0 %970
        %972 = vrot.lane.b32.xlu0 %v851, 120
        %v973 = vpop.permute.xlu0 %972
        %974 = vrot.lane.b32.xlu0 %v852, 120
        %v975 = vpop.permute.xlu0 %974
        %976 = vrot.lane.b32.xlu0 %v853, 120
        %v977 = vpop.permute.xlu0 %976
        %978 = vrot.lane.b32.xlu0 %v854, 120
        %v979 = vpop.permute.xlu0 %978
        %980 = vrot.lane.b32.xlu0 %v855, 120
        %v981 = vpop.permute.xlu0 %980
        %982 = vrot.lane.b32.xlu0 %v856, 120
        %v983 = vpop.permute.xlu0 %982
        %984 = vrot.lane.b32.xlu0 %v857, 120
        %v985 = vpop.permute.xlu0 %984
        %986 = vrot.lane.b32.xlu0 %v858, 120
        %v987 = vpop.permute.xlu0 %986
        %988 = vrot.lane.b32.xlu0 %v859, 120
        %v989 = vpop.permute.xlu0 %988
        %990 = vrot.lane.b32.xlu0 %v860, 120
        %v991 = vpop.permute.xlu0 %990
        %992 = vrot.lane.b32.xlu0 %v861, 120
        %v993 = vpop.permute.xlu0 %992
        %994 = vrot.lane.b32.xlu0 %v862, 120
        %v995 = vpop.permute.xlu0 %994
        %996 = vrot.lane.b32.xlu0 %v863, 120
        %v997 = vpop.permute.xlu0 %996
        %998 = vrot.lane.b32.xlu0 %v864, 120
        %v999 = vpop.permute.xlu0 %998
        %1000 = vrot.lane.b32.xlu0 %v865, 120
        %v1001 = vpop.permute.xlu0 %1000
        %1002 = vrot.lane.b32.xlu0 %v866, 120
        %v1003 = vpop.permute.xlu0 %1002
        %1004 = vrot.lane.b32.xlu0 %v867, 120
        %v1005 = vpop.permute.xlu0 %1004
        %1006 = vrot.lane.b32.xlu0 %v868, 120
        %v1007 = vpop.permute.xlu0 %1006
        %1008 = vrot.lane.b32.xlu0 %v869, 120
        %v1009 = vpop.permute.xlu0 %1008
        %1010 = vrot.lane.b32.xlu0 %v870, 120
        %v1011 = vpop.permute.xlu0 %1010
        %1012 = vrot.lane.b32.xlu0 %v871, 120
        %v1013 = vpop.permute.xlu0 %1012
        %1014 = vrot.lane.b32.xlu0 %v872, 120
        %v1015 = vpop.permute.xlu0 %1014
        %1016 = vrot.lane.b32.xlu0 %v873, 120
        %v1017 = vpop.permute.xlu0 %1016
        %1018 = vrot.lane.b32.xlu0 %v874, 120
        %v1019 = vpop.permute.xlu0 %1018
        %1020 = vrot.lane.b32.xlu0 %v875, 120
        %v1021 = vpop.permute.xlu0 %1020
        %1022 = vrot.lane.b32.xlu0 %v876, 120
        %v1023 = vpop.permute.xlu0 %1022
        %v1073 = vadd.f32 %v828, %v927
        %v1074 = vadd.f32 %v829, %v929
        %v1075 = vadd.f32 %v830, %v931
        %v1076 = vadd.f32 %v831, %v933
        %v1077 = vadd.f32 %v832, %v935
        %v1078 = vadd.f32 %v833, %v937
        %v1079 = vadd.f32 %v834, %v939
        %v1080 = vadd.f32 %v835, %v941
        %v1081 = vadd.f32 %v836, %v943
        %v1082 = vadd.f32 %v837, %v945
        %v1083 = vadd.f32 %v838, %v947
        %v1084 = vadd.f32 %v839, %v949
        %v1085 = vadd.f32 %v840, %v951
        %v1086 = vadd.f32 %v841, %v953
        %v1087 = vadd.f32 %v842, %v955
        %v1088 = vadd.f32 %v843, %v957
        %v1089 = vadd.f32 %v844, %v959
        %v1090 = vadd.f32 %v845, %v961
        %v1091 = vadd.f32 %v846, %v963
        %v1092 = vadd.f32 %v847, %v965
        %v1093 = vadd.f32 %v848, %v967
        %v1094 = vadd.f32 %v849, %v969
        %v1095 = vadd.f32 %v850, %v971
        %v1096 = vadd.f32 %v851, %v973
        %v1097 = vadd.f32 %v852, %v975
        %v1098 = vadd.f32 %v853, %v977
        %v1099 = vadd.f32 %v854, %v979
        %v1100 = vadd.f32 %v855, %v981
        %v1101 = vadd.f32 %v856, %v983
        %v1102 = vadd.f32 %v857, %v985
        %v1103 = vadd.f32 %v858, %v987
        %v1104 = vadd.f32 %v859, %v989
        %v1105 = vadd.f32 %v860, %v991
        %v1106 = vadd.f32 %v861, %v993
        %v1107 = vadd.f32 %v862, %v995
        %v1108 = vadd.f32 %v863, %v997
        %v1109 = vadd.f32 %v864, %v999
        %v1110 = vadd.f32 %v865, %v1001
        %v1111 = vadd.f32 %v866, %v1003
        %v1112 = vadd.f32 %v867, %v1005
        %v1113 = vadd.f32 %v868, %v1007
        %v1114 = vadd.f32 %v869, %v1009
        %v1115 = vadd.f32 %v870, %v1011
        %v1116 = vadd.f32 %v871, %v1013
        %v1117 = vadd.f32 %v872, %v1015
        %v1118 = vadd.f32 %v873, %v1017
        %v1119 = vadd.f32 %v874, %v1019
        %v1120 = vadd.f32 %v875, %v1021
        %v1121 = vadd.f32 %v876, %v1023
        %1122 = vrot.lane.b32.xlu0 %v828, 112
        %v1123 = vpop.permute.xlu0 %1122
        %1124 = vrot.lane.b32.xlu0 %v829, 112
        %v1125 = vpop.permute.xlu0 %1124
        %1126 = vrot.lane.b32.xlu0 %v830, 112
        %v1127 = vpop.permute.xlu0 %1126
        %1128 = vrot.lane.b32.xlu0 %v831, 112
        %v1129 = vpop.permute.xlu0 %1128
        %1130 = vrot.lane.b32.xlu0 %v832, 112
        %v1131 = vpop.permute.xlu0 %1130
        %1132 = vrot.lane.b32.xlu0 %v833, 112
        %v1133 = vpop.permute.xlu0 %1132
        %1134 = vrot.lane.b32.xlu0 %v834, 112
        %v1135 = vpop.permute.xlu0 %1134
        %1136 = vrot.lane.b32.xlu0 %v835, 112
        %v1137 = vpop.permute.xlu0 %1136
        %1138 = vrot.lane.b32.xlu0 %v836, 112
        %v1139 = vpop.permute.xlu0 %1138
        %1140 = vrot.lane.b32.xlu0 %v837, 112
        %v1141 = vpop.permute.xlu0 %1140
        %1142 = vrot.lane.b32.xlu0 %v838, 112
        %v1143 = vpop.permute.xlu0 %1142
        %1144 = vrot.lane.b32.xlu0 %v839, 112
        %v1145 = vpop.permute.xlu0 %1144
        %1146 = vrot.lane.b32.xlu0 %v840, 112
        %v1147 = vpop.permute.xlu0 %1146
        %1148 = vrot.lane.b32.xlu0 %v841, 112
        %v1149 = vpop.permute.xlu0 %1148
        %1150 = vrot.lane.b32.xlu0 %v842, 112
        %v1151 = vpop.permute.xlu0 %1150
        %1152 = vrot.lane.b32.xlu0 %v843, 112
        %v1153 = vpop.permute.xlu0 %1152
        %1154 = vrot.lane.b32.xlu0 %v844, 112
        %v1155 = vpop.permute.xlu0 %1154
        %1156 = vrot.lane.b32.xlu0 %v845, 112
        %v1157 = vpop.permute.xlu0 %1156
        %1158 = vrot.lane.b32.xlu0 %v846, 112
        %v1159 = vpop.permute.xlu0 %1158
        %1160 = vrot.lane.b32.xlu0 %v847, 112
        %v1161 = vpop.permute.xlu0 %1160
        %1162 = vrot.lane.b32.xlu0 %v848, 112
        %v1163 = vpop.permute.xlu0 %1162
        %1164 = vrot.lane.b32.xlu0 %v849, 112
        %v1165 = vpop.permute.xlu0 %1164
        %1166 = vrot.lane.b32.xlu0 %v850, 112
        %v1167 = vpop.permute.xlu0 %1166
        %1168 = vrot.lane.b32.xlu0 %v851, 112
        %v1169 = vpop.permute.xlu0 %1168
        %1170 = vrot.lane.b32.xlu0 %v852, 112
        %v1171 = vpop.permute.xlu0 %1170
        %1172 = vrot.lane.b32.xlu0 %v853, 112
        %v1173 = vpop.permute.xlu0 %1172
        %1174 = vrot.lane.b32.xlu0 %v854, 112
        %v1175 = vpop.permute.xlu0 %1174
        %1176 = vrot.lane.b32.xlu0 %v855, 112
        %v1177 = vpop.permute.xlu0 %1176
        %1178 = vrot.lane.b32.xlu0 %v856, 112
        %v1179 = vpop.permute.xlu0 %1178
        %1180 = vrot.lane.b32.xlu0 %v857, 112
        %v1181 = vpop.permute.xlu0 %1180
        %1182 = vrot.lane.b32.xlu0 %v858, 112
        %v1183 = vpop.permute.xlu0 %1182
        %1184 = vrot.lane.b32.xlu0 %v859, 112
        %v1185 = vpop.permute.xlu0 %1184
        %1186 = vrot.lane.b32.xlu0 %v860, 112
        %v1187 = vpop.permute.xlu0 %1186
        %1188 = vrot.lane.b32.xlu0 %v861, 112
        %v1189 = vpop.permute.xlu0 %1188
        %1190 = vrot.lane.b32.xlu0 %v862, 112
        %v1191 = vpop.permute.xlu0 %1190
        %1192 = vrot.lane.b32.xlu0 %v863, 112
        %v1193 = vpop.permute.xlu0 %1192
        %1194 = vrot.lane.b32.xlu0 %v864, 112
        %v1195 = vpop.permute.xlu0 %1194
        %1196 = vrot.lane.b32.xlu0 %v865, 112
        %v1197 = vpop.permute.xlu0 %1196
        %1198 = vrot.lane.b32.xlu0 %v866, 112
        %v1199 = vpop.permute.xlu0 %1198
        %1200 = vrot.lane.b32.xlu0 %v867, 112
        %v1201 = vpop.permute.xlu0 %1200
        %1202 = vrot.lane.b32.xlu0 %v868, 112
        %v1203 = vpop.permute.xlu0 %1202
        %1204 = vrot.lane.b32.xlu0 %v869, 112
        %v1205 = vpop.permute.xlu0 %1204
        %1206 = vrot.lane.b32.xlu0 %v870, 112
        %v1207 = vpop.permute.xlu0 %1206
        %1208 = vrot.lane.b32.xlu0 %v871, 112
        %v1209 = vpop.permute.xlu0 %1208
        %1210 = vrot.lane.b32.xlu0 %v872, 112
        %v1211 = vpop.permute.xlu0 %1210
        %1212 = vrot.lane.b32.xlu0 %v873, 112
        %v1213 = vpop.permute.xlu0 %1212
        %1214 = vrot.lane.b32.xlu0 %v874, 112
        %v1215 = vpop.permute.xlu0 %1214
        %1216 = vrot.lane.b32.xlu0 %v875, 112
        %v1217 = vpop.permute.xlu0 %1216
        %1218 = vrot.lane.b32.xlu0 %v876, 112
        %v1219 = vpop.permute.xlu0 %1218
        %v1269 = vadd.f32 %v1073, %v1123
        %v1270 = vadd.f32 %v1074, %v1125
        %v1271 = vadd.f32 %v1075, %v1127
        %v1272 = vadd.f32 %v1076, %v1129
        %v1273 = vadd.f32 %v1077, %v1131
        %v1274 = vadd.f32 %v1078, %v1133
        %v1275 = vadd.f32 %v1079, %v1135
        %v1276 = vadd.f32 %v1080, %v1137
        %v1277 = vadd.f32 %v1081, %v1139
        %v1278 = vadd.f32 %v1082, %v1141
        %v1279 = vadd.f32 %v1083, %v1143
        %v1280 = vadd.f32 %v1084, %v1145
        %v1281 = vadd.f32 %v1085, %v1147
        %v1282 = vadd.f32 %v1086, %v1149
        %v1283 = vadd.f32 %v1087, %v1151
        %v1284 = vadd.f32 %v1088, %v1153
        %v1285 = vadd.f32 %v1089, %v1155
        %v1286 = vadd.f32 %v1090, %v1157
        %v1287 = vadd.f32 %v1091, %v1159
        %v1288 = vadd.f32 %v1092, %v1161
        %v1289 = vadd.f32 %v1093, %v1163
        %v1290 = vadd.f32 %v1094, %v1165
        %v1291 = vadd.f32 %v1095, %v1167
        %v1292 = vadd.f32 %v1096, %v1169
        %v1293 = vadd.f32 %v1097, %v1171
        %v1294 = vadd.f32 %v1098, %v1173
        %v1295 = vadd.f32 %v1099, %v1175
        %v1296 = vadd.f32 %v1100, %v1177
        %v1297 = vadd.f32 %v1101, %v1179
        %v1298 = vadd.f32 %v1102, %v1181
        %v1299 = vadd.f32 %v1103, %v1183
        %v1300 = vadd.f32 %v1104, %v1185
        %v1301 = vadd.f32 %v1105, %v1187
        %v1302 = vadd.f32 %v1106, %v1189
        %v1303 = vadd.f32 %v1107, %v1191
        %v1304 = vadd.f32 %v1108, %v1193
        %v1305 = vadd.f32 %v1109, %v1195
        %v1306 = vadd.f32 %v1110, %v1197
        %v1307 = vadd.f32 %v1111, %v1199
        %v1308 = vadd.f32 %v1112, %v1201
        %v1309 = vadd.f32 %v1113, %v1203
        %v1310 = vadd.f32 %v1114, %v1205
        %v1311 = vadd.f32 %v1115, %v1207
        %v1312 = vadd.f32 %v1116, %v1209
        %v1313 = vadd.f32 %v1117, %v1211
        %v1314 = vadd.f32 %v1118, %v1213
        %v1315 = vadd.f32 %v1119, %v1215
        %v1316 = vadd.f32 %v1120, %v1217
        %v1317 = vadd.f32 %v1121, %v1219
        %1318 = vrot.lane.b32.xlu0 %v828, 104
        %v1319 = vpop.permute.xlu0 %1318
        %1320 = vrot.lane.b32.xlu0 %v829, 104
        %v1321 = vpop.permute.xlu0 %1320
        %1322 = vrot.lane.b32.xlu0 %v830, 104
        %v1323 = vpop.permute.xlu0 %1322
        %1324 = vrot.lane.b32.xlu0 %v831, 104
        %v1325 = vpop.permute.xlu0 %1324
        %1326 = vrot.lane.b32.xlu0 %v832, 104
        %v1327 = vpop.permute.xlu0 %1326
        %1328 = vrot.lane.b32.xlu0 %v833, 104
        %v1329 = vpop.permute.xlu0 %1328
        %1330 = vrot.lane.b32.xlu0 %v834, 104
        %v1331 = vpop.permute.xlu0 %1330
        %1332 = vrot.lane.b32.xlu0 %v835, 104
        %v1333 = vpop.permute.xlu0 %1332
        %1334 = vrot.lane.b32.xlu0 %v836, 104
        %v1335 = vpop.permute.xlu0 %1334
        %1336 = vrot.lane.b32.xlu0 %v837, 104
        %v1337 = vpop.permute.xlu0 %1336
        %1338 = vrot.lane.b32.xlu0 %v838, 104
        %v1339 = vpop.permute.xlu0 %1338
        %1340 = vrot.lane.b32.xlu0 %v839, 104
        %v1341 = vpop.permute.xlu0 %1340
        %1342 = vrot.lane.b32.xlu0 %v840, 104
        %v1343 = vpop.permute.xlu0 %1342
        %1344 = vrot.lane.b32.xlu0 %v841, 104
        %v1345 = vpop.permute.xlu0 %1344
        %1346 = vrot.lane.b32.xlu0 %v842, 104
        %v1347 = vpop.permute.xlu0 %1346
        %1348 = vrot.lane.b32.xlu0 %v843, 104
        %v1349 = vpop.permute.xlu0 %1348
        %1350 = vrot.lane.b32.xlu0 %v844, 104
        %v1351 = vpop.permute.xlu0 %1350
        %1352 = vrot.lane.b32.xlu0 %v845, 104
        %v1353 = vpop.permute.xlu0 %1352
        %1354 = vrot.lane.b32.xlu0 %v846, 104
        %v1355 = vpop.permute.xlu0 %1354
        %1356 = vrot.lane.b32.xlu0 %v847, 104
        %v1357 = vpop.permute.xlu0 %1356
        %1358 = vrot.lane.b32.xlu0 %v848, 104
        %v1359 = vpop.permute.xlu0 %1358
        %1360 = vrot.lane.b32.xlu0 %v849, 104
        %v1361 = vpop.permute.xlu0 %1360
        %1362 = vrot.lane.b32.xlu0 %v850, 104
        %v1363 = vpop.permute.xlu0 %1362
        %1364 = vrot.lane.b32.xlu0 %v851, 104
        %v1365 = vpop.permute.xlu0 %1364
        %1366 = vrot.lane.b32.xlu0 %v852, 104
        %v1367 = vpop.permute.xlu0 %1366
        %1368 = vrot.lane.b32.xlu0 %v853, 104
        %v1369 = vpop.permute.xlu0 %1368
        %1370 = vrot.lane.b32.xlu0 %v854, 104
        %v1371 = vpop.permute.xlu0 %1370
        %1372 = vrot.lane.b32.xlu0 %v855, 104
        %v1373 = vpop.permute.xlu0 %1372
        %1374 = vrot.lane.b32.xlu0 %v856, 104
        %v1375 = vpop.permute.xlu0 %1374
        %1376 = vrot.lane.b32.xlu0 %v857, 104
        %v1377 = vpop.permute.xlu0 %1376
        %1378 = vrot.lane.b32.xlu0 %v858, 104
        %v1379 = vpop.permute.xlu0 %1378
        %1380 = vrot.lane.b32.xlu0 %v859, 104
        %v1381 = vpop.permute.xlu0 %1380
        %1382 = vrot.lane.b32.xlu0 %v860, 104
        %v1383 = vpop.permute.xlu0 %1382
        %1384 = vrot.lane.b32.xlu0 %v861, 104
        %v1385 = vpop.permute.xlu0 %1384
        %1386 = vrot.lane.b32.xlu0 %v862, 104
        %v1387 = vpop.permute.xlu0 %1386
        %1388 = vrot.lane.b32.xlu0 %v863, 104
        %v1389 = vpop.permute.xlu0 %1388
        %1390 = vrot.lane.b32.xlu0 %v864, 104
        %v1391 = vpop.permute.xlu0 %1390
        %1392 = vrot.lane.b32.xlu0 %v865, 104
        %v1393 = vpop.permute.xlu0 %1392
        %1394 = vrot.lane.b32.xlu0 %v866, 104
        %v1395 = vpop.permute.xlu0 %1394
        %1396 = vrot.lane.b32.xlu0 %v867, 104
        %v1397 = vpop.permute.xlu0 %1396
        %1398 = vrot.lane.b32.xlu0 %v868, 104
        %v1399 = vpop.permute.xlu0 %1398
        %1400 = vrot.lane.b32.xlu0 %v869, 104
        %v1401 = vpop.permute.xlu0 %1400
        %1402 = vrot.lane.b32.xlu0 %v870, 104
        %v1403 = vpop.permute.xlu0 %1402
        %1404 = vrot.lane.b32.xlu0 %v871, 104
        %v1405 = vpop.permute.xlu0 %1404
        %1406 = vrot.lane.b32.xlu0 %v872, 104
        %v1407 = vpop.permute.xlu0 %1406
        %1408 = vrot.lane.b32.xlu0 %v873, 104
        %v1409 = vpop.permute.xlu0 %1408
        %1410 = vrot.lane.b32.xlu0 %v874, 104
        %v1411 = vpop.permute.xlu0 %1410
        %1412 = vrot.lane.b32.xlu0 %v875, 104
        %v1413 = vpop.permute.xlu0 %1412
        %1414 = vrot.lane.b32.xlu0 %v876, 104
        %v1415 = vpop.permute.xlu0 %1414
        %v1465 = vadd.f32 %v1269, %v1319
        %v1466 = vadd.f32 %v1270, %v1321
        %v1467 = vadd.f32 %v1271, %v1323
        %v1468 = vadd.f32 %v1272, %v1325
        %v1469 = vadd.f32 %v1273, %v1327
        %v1470 = vadd.f32 %v1274, %v1329
        %v1471 = vadd.f32 %v1275, %v1331
        %v1472 = vadd.f32 %v1276, %v1333
        %v1473 = vadd.f32 %v1277, %v1335
        %v1474 = vadd.f32 %v1278, %v1337
        %v1475 = vadd.f32 %v1279, %v1339
        %v1476 = vadd.f32 %v1280, %v1341
        %v1477 = vadd.f32 %v1281, %v1343
        %v1478 = vadd.f32 %v1282, %v1345
        %v1479 = vadd.f32 %v1283, %v1347
        %v1480 = vadd.f32 %v1284, %v1349
        %v1481 = vadd.f32 %v1285, %v1351
        %v1482 = vadd.f32 %v1286, %v1353
        %v1483 = vadd.f32 %v1287, %v1355
        %v1484 = vadd.f32 %v1288, %v1357
        %v1485 = vadd.f32 %v1289, %v1359
        %v1486 = vadd.f32 %v1290, %v1361
        %v1487 = vadd.f32 %v1291, %v1363
        %v1488 = vadd.f32 %v1292, %v1365
        %v1489 = vadd.f32 %v1293, %v1367
        %v1490 = vadd.f32 %v1294, %v1369
        %v1491 = vadd.f32 %v1295, %v1371
        %v1492 = vadd.f32 %v1296, %v1373
        %v1493 = vadd.f32 %v1297, %v1375
        %v1494 = vadd.f32 %v1298, %v1377
        %v1495 = vadd.f32 %v1299, %v1379
        %v1496 = vadd.f32 %v1300, %v1381
        %v1497 = vadd.f32 %v1301, %v1383
        %v1498 = vadd.f32 %v1302, %v1385
        %v1499 = vadd.f32 %v1303, %v1387
        %v1500 = vadd.f32 %v1304, %v1389
        %v1501 = vadd.f32 %v1305, %v1391
        %v1502 = vadd.f32 %v1306, %v1393
        %v1503 = vadd.f32 %v1307, %v1395
        %v1504 = vadd.f32 %v1308, %v1397
        %v1505 = vadd.f32 %v1309, %v1399
        %v1506 = vadd.f32 %v1310, %v1401
        %v1507 = vadd.f32 %v1311, %v1403
        %v1508 = vadd.f32 %v1312, %v1405
        %v1509 = vadd.f32 %v1313, %v1407
        %v1510 = vadd.f32 %v1314, %v1409
        %v1511 = vadd.f32 %v1315, %v1411
        %v1512 = vadd.f32 %v1316, %v1413
        %v1513 = vadd.f32 %v1317, %v1415
        %v1514 = vmul.f32 %v1465, 0.25
        %v1515 = vmul.f32 %v1466, 0.25
        %v1516 = vmul.f32 %v1467, 0.25
        %v1517 = vmul.f32 %v1468, 0.25
        %v1518 = vmul.f32 %v1469, 0.25
        %v1519 = vmul.f32 %v1470, 0.25
        %v1520 = vmul.f32 %v1471, 0.25
        %v1521 = vmul.f32 %v1472, 0.25
        %v1522 = vmul.f32 %v1473, 0.25
        %v1523 = vmul.f32 %v1474, 0.25
        %v1524 = vmul.f32 %v1475, 0.25
        %v1525 = vmul.f32 %v1476, 0.25
        %v1526 = vmul.f32 %v1477, 0.25
        %v1527 = vmul.f32 %v1478, 0.25
        %v1528 = vmul.f32 %v1479, 0.25
        %v1529 = vmul.f32 %v1480, 0.25
        %v1530 = vmul.f32 %v1481, 0.25
        %v1531 = vmul.f32 %v1482, 0.25
        %v1532 = vmul.f32 %v1483, 0.25
        %v1533 = vmul.f32 %v1484, 0.25
        %v1534 = vmul.f32 %v1485, 0.25
        %v1535 = vmul.f32 %v1486, 0.25
        %v1536 = vmul.f32 %v1487, 0.25
        %v1537 = vmul.f32 %v1488, 0.25
        %v1538 = vmul.f32 %v1489, 0.25
        %v1539 = vmul.f32 %v1490, 0.25
        %v1540 = vmul.f32 %v1491, 0.25
        %v1541 = vmul.f32 %v1492, 0.25
        %v1542 = vmul.f32 %v1493, 0.25
        %v1543 = vmul.f32 %v1494, 0.25
        %v1544 = vmul.f32 %v1495, 0.25
        %v1545 = vmul.f32 %v1496, 0.25
        %v1546 = vmul.f32 %v1497, 0.25
        %v1547 = vmul.f32 %v1498, 0.25
        %v1548 = vmul.f32 %v1499, 0.25
        %v1549 = vmul.f32 %v1500, 0.25
        %v1550 = vmul.f32 %v1501, 0.25
        %v1551 = vmul.f32 %v1502, 0.25
        %v1552 = vmul.f32 %v1503, 0.25
        %v1553 = vmul.f32 %v1504, 0.25
        %v1554 = vmul.f32 %v1505, 0.25
        %v1555 = vmul.f32 %v1506, 0.25
        %v1556 = vmul.f32 %v1507, 0.25
        %v1557 = vmul.f32 %v1508, 0.25
        %v1558 = vmul.f32 %v1509, 0.25
        %v1559 = vmul.f32 %v1510, 0.25
        %v1560 = vmul.f32 %v1511, 0.25
        %v1561 = vmul.f32 %v1512, 0.25
        %v1562 = vmul.f32 %v1513, 0.25
        %vm1563 = vcmask 64512
        %1564 = vst.msk [vmem:[#allocation2] sm:$0xff] %vm1563, %v1514
        %1565 = vst.msk [vmem:[#allocation2 + $0x8] sm:$0xff] %vm1563, %v1515
        %1566 = vst.msk [vmem:[#allocation2 + $0x10] sm:$0xff] %vm1563, %v1516
        %1567 = vst.msk [vmem:[#allocation2 + $0x18] sm:$0xff] %vm1563, %v1517
        %1568 = vst.msk [vmem:[#allocation2 + $0x20] sm:$0xff] %vm1563, %v1518
        %1569 = vst.msk [vmem:[#allocation2 + $0x28] sm:$0xff] %vm1563, %v1519
        %1570 = vst.msk [vmem:[#allocation2 + $0x30] sm:$0xff] %vm1563, %v1520
        %1571 = vst.msk [vmem:[#allocation2 + $0x38] sm:$0xff] %vm1563, %v1521
        %1572 = vst.msk [vmem:[#allocation2 + $0x40] sm:$0xff] %vm1563, %v1522
        %1573 = vst.msk [vmem:[#allocation2 + $0x48] sm:$0xff] %vm1563, %v1523
        %1574 = vst.msk [vmem:[#allocation2 + $0x50] sm:$0xff] %vm1563, %v1524
        %1575 = vst.msk [vmem:[#allocation2 + $0x58] sm:$0xff] %vm1563, %v1525
        %1576 = vst.msk [vmem:[#allocation2 + $0x60] sm:$0xff] %vm1563, %v1526
        %1577 = vst.msk [vmem:[#allocation2 + $0x68] sm:$0xff] %vm1563, %v1527
        %1578 = vst.msk [vmem:[#allocation2 + $0x70] sm:$0xff] %vm1563, %v1528
        %1579 = vst.msk [vmem:[#allocation2 + $0x78] sm:$0xff] %vm1563, %v1529
        %1580 = vst.msk [vmem:[#allocation2 + $0x80] sm:$0xff] %vm1563, %v1530
        %1581 = vst.msk [vmem:[#allocation2 + $0x88] sm:$0xff] %vm1563, %v1531
        %1582 = vst.msk [vmem:[#allocation2 + $0x90] sm:$0xff] %vm1563, %v1532
        %1583 = vst.msk [vmem:[#allocation2 + $0x98] sm:$0xff] %vm1563, %v1533
        %1584 = vst.msk [vmem:[#allocation2 + $0xa0] sm:$0xff] %vm1563, %v1534
        %1585 = vst.msk [vmem:[#allocation2 + $0xa8] sm:$0xff] %vm1563, %v1535
        %1586 = vst.msk [vmem:[#allocation2 + $0xb0] sm:$0xff] %vm1563, %v1536
        %1587 = vst.msk [vmem:[#allocation2 + $0xb8] sm:$0xff] %vm1563, %v1537
        %1588 = vst.msk [vmem:[#allocation2 + $0xc0] sm:$0xff] %vm1563, %v1538
        %1589 = vst.msk [vmem:[#allocation2 + $0xc8] sm:$0xff] %vm1563, %v1539
        %1590 = vst.msk [vmem:[#allocation2 + $0xd0] sm:$0xff] %vm1563, %v1540
        %1591 = vst.msk [vmem:[#allocation2 + $0xd8] sm:$0xff] %vm1563, %v1541
        %1592 = vst.msk [vmem:[#allocation2 + $0xe0] sm:$0xff] %vm1563, %v1542
        %1593 = vst.msk [vmem:[#allocation2 + $0xe8] sm:$0xff] %vm1563, %v1543
        %1594 = vst.msk [vmem:[#allocation2 + $0xf0] sm:$0xff] %vm1563, %v1544
        %1595 = vst.msk [vmem:[#allocation2 + $0xf8] sm:$0xff] %vm1563, %v1545
        %1596 = vst.msk [vmem:[#allocation2 + $0x100] sm:$0xff] %vm1563, %v1546
        %1597 = vst.msk [vmem:[#allocation2 + $0x108] sm:$0xff] %vm1563, %v1547
        %1598 = vst.msk [vmem:[#allocation2 + $0x110] sm:$0xff] %vm1563, %v1548
        %1599 = vst.msk [vmem:[#allocation2 + $0x118] sm:$0xff] %vm1563, %v1549
        %1600 = vst.msk [vmem:[#allocation2 + $0x120] sm:$0xff] %vm1563, %v1550
        %1601 = vst.msk [vmem:[#allocation2 + $0x128] sm:$0xff] %vm1563, %v1551
        %1602 = vst.msk [vmem:[#allocation2 + $0x130] sm:$0xff] %vm1563, %v1552
        %1603 = vst.msk [vmem:[#allocation2 + $0x138] sm:$0xff] %vm1563, %v1553
        %1604 = vst.msk [vmem:[#allocation2 + $0x140] sm:$0xff] %vm1563, %v1554
        %1605 = vst.msk [vmem:[#allocation2 + $0x148] sm:$0xff] %vm1563, %v1555
        %1606 = vst.msk [vmem:[#allocation2 + $0x150] sm:$0xff] %vm1563, %v1556
        %1607 = vst.msk [vmem:[#allocation2 + $0x158] sm:$0xff] %vm1563, %v1557
        %1608 = vst.msk [vmem:[#allocation2 + $0x160] sm:$0xff] %vm1563, %v1558
        %1609 = vst.msk [vmem:[#allocation2 + $0x168] sm:$0xff] %vm1563, %v1559
        %1610 = vst.msk [vmem:[#allocation2 + $0x170] sm:$0xff] %vm1563, %v1560
        %1611 = vst.msk [vmem:[#allocation2 + $0x178] sm:$0xff] %vm1563, %v1561
        %1612 = vst.msk [vmem:[#allocation2 + $0x180] sm:$0xff] %vm1563, %v1562
        %v1613 = vld [vmem:[#allocation2] sm:$0xff]
        %v1614 = vld [vmem:[#allocation2 + $0x8] sm:$0xff]
        %v1615 = vld [vmem:[#allocation2 + $0x10] sm:$0xff]
        %v1616 = vld [vmem:[#allocation2 + $0x18] sm:$0xff]
        %v1617 = vld [vmem:[#allocation2 + $0x20] sm:$0xff]
        %v1618 = vld [vmem:[#allocation2 + $0x28] sm:$0xff]
        %v1619 = vld [vmem:[#allocation2 + $0x30] sm:$0xff]
        %v1620 = vld [vmem:[#allocation2 + $0x38] sm:$0xff]
        %v1621 = vld [vmem:[#allocation2 + $0x40] sm:$0xff]
        %v1622 = vld [vmem:[#allocation2 + $0x48] sm:$0xff]
        %v1623 = vld [vmem:[#allocation2 + $0x50] sm:$0xff]
        %v1624 = vld [vmem:[#allocation2 + $0x58] sm:$0xff]
        %v1625 = vld [vmem:[#allocation2 + $0x60] sm:$0xff]
        %v1626 = vld [vmem:[#allocation2 + $0x68] sm:$0xff]
        %v1627 = vld [vmem:[#allocation2 + $0x70] sm:$0xff]
        %v1628 = vld [vmem:[#allocation2 + $0x78] sm:$0xff]
        %v1629 = vld [vmem:[#allocation2 + $0x80] sm:$0xff]
        %v1630 = vld [vmem:[#allocation2 + $0x88] sm:$0xff]
        %v1631 = vld [vmem:[#allocation2 + $0x90] sm:$0xff]
        %v1632 = vld [vmem:[#allocation2 + $0x98] sm:$0xff]
        %v1633 = vld [vmem:[#allocation2 + $0xa0] sm:$0xff]
        %v1634 = vld [vmem:[#allocation2 + $0xa8] sm:$0xff]
        %v1635 = vld [vmem:[#allocation2 + $0xb0] sm:$0xff]
        %v1636 = vld [vmem:[#allocation2 + $0xb8] sm:$0xff]
        %v1637 = vld [vmem:[#allocation2 + $0xc0] sm:$0xff]
        %v1638 = vld [vmem:[#allocation2 + $0xc8] sm:$0xff]
        %v1639 = vld [vmem:[#allocation2 + $0xd0] sm:$0xff]
        %v1640 = vld [vmem:[#allocation2 + $0xd8] sm:$0xff]
        %v1641 = vld [vmem:[#allocation2 + $0xe0] sm:$0xff]
        %v1642 = vld [vmem:[#allocation2 + $0xe8] sm:$0xff]
        %v1643 = vld [vmem:[#allocation2 + $0xf0] sm:$0xff]
        %v1644 = vld [vmem:[#allocation2 + $0xf8] sm:$0xff]
        %v1645 = vld [vmem:[#allocation2 + $0x100] sm:$0xff]
        %v1646 = vld [vmem:[#allocation2 + $0x108] sm:$0xff]
        %v1647 = vld [vmem:[#allocation2 + $0x110] sm:$0xff]
        %v1648 = vld [vmem:[#allocation2 + $0x118] sm:$0xff]
        %v1649 = vld [vmem:[#allocation2 + $0x120] sm:$0xff]
        %v1650 = vld [vmem:[#allocation2 + $0x128] sm:$0xff]
        %v1651 = vld [vmem:[#allocation2 + $0x130] sm:$0xff]
        %v1652 = vld [vmem:[#allocation2 + $0x138] sm:$0xff]
        %v1653 = vld [vmem:[#allocation2 + $0x140] sm:$0xff]
        %v1654 = vld [vmem:[#allocation2 + $0x148] sm:$0xf]
        %1655 = vst.msk [vmem:[#allocation3] sm:$0xff] %vm1563, %v1613
        %1656 = vst.msk [vmem:[#allocation3 + $0x10] sm:$0xff] %vm1563, %v1614
        %1657 = vst.msk [vmem:[#allocation3 + $0x20] sm:$0xff] %vm1563, %v1615
        %1658 = vst.msk [vmem:[#allocation3 + $0x30] sm:$0xff] %vm1563, %v1616
        %1659 = vst.msk [vmem:[#allocation3 + $0x40] sm:$0xff] %vm1563, %v1617
        %1660 = vst.msk [vmem:[#allocation3 + $0x50] sm:$0xff] %vm1563, %v1618
        %1661 = vst.msk [vmem:[#allocation3 + $0x60] sm:$0xff] %vm1563, %v1619
        %1662 = vst.msk [vmem:[#allocation3 + $0x70] sm:$0xff] %vm1563, %v1620
        %1663 = vst.msk [vmem:[#allocation3 + $0x80] sm:$0xff] %vm1563, %v1621
        %1664 = vst.msk [vmem:[#allocation3 + $0x90] sm:$0xff] %vm1563, %v1622
        %1665 = vst.msk [vmem:[#allocation3 + $0xa0] sm:$0xff] %vm1563, %v1623
        %1666 = vst.msk [vmem:[#allocation3 + $0xb0] sm:$0xff] %vm1563, %v1624
        %1667 = vst.msk [vmem:[#allocation3 + $0xc0] sm:$0xff] %vm1563, %v1625
        %1668 = vst.msk [vmem:[#allocation3 + $0xd0] sm:$0xff] %vm1563, %v1626
        %1669 = vst.msk [vmem:[#allocation3 + $0xe0] sm:$0xff] %vm1563, %v1627
        %1670 = vst.msk [vmem:[#allocation3 + $0xf0] sm:$0xff] %vm1563, %v1628
        %1671 = vst.msk [vmem:[#allocation3 + $0x100] sm:$0xff] %vm1563, %v1629
        %1672 = vst.msk [vmem:[#allocation3 + $0x110] sm:$0xff] %vm1563, %v1630
        %1673 = vst.msk [vmem:[#allocation3 + $0x120] sm:$0xff] %vm1563, %v1631
        %1674 = vst.msk [vmem:[#allocation3 + $0x130] sm:$0xff] %vm1563, %v1632
        %1675 = vst.msk [vmem:[#allocation3 + $0x140] sm:$0xff] %vm1563, %v1633
        %1676 = vst.msk [vmem:[#allocation3 + $0x150] sm:$0xff] %vm1563, %v1634
        %1677 = vst.msk [vmem:[#allocation3 + $0x160] sm:$0xff] %vm1563, %v1635
        %1678 = vst.msk [vmem:[#allocation3 + $0x170] sm:$0xff] %vm1563, %v1636
        %1679 = vst.msk [vmem:[#allocation3 + $0x180] sm:$0xff] %vm1563, %v1637
        %1680 = vst.msk [vmem:[#allocation3 + $0x190] sm:$0xff] %vm1563, %v1638
        %1681 = vst.msk [vmem:[#allocation3 + $0x1a0] sm:$0xff] %vm1563, %v1639
        %1682 = vst.msk [vmem:[#allocation3 + $0x1b0] sm:$0xff] %vm1563, %v1640
        %1683 = vst.msk [vmem:[#allocation3 + $0x1c0] sm:$0xff] %vm1563, %v1641
        %1684 = vst.msk [vmem:[#allocation3 + $0x1d0] sm:$0xff] %vm1563, %v1642
        %1685 = vst.msk [vmem:[#allocation3 + $0x1e0] sm:$0xff] %vm1563, %v1643
        %1686 = vst.msk [vmem:[#allocation3 + $0x1f0] sm:$0xff] %vm1563, %v1644
        %1687 = vst.msk [vmem:[#allocation3 + $0x200] sm:$0xff] %vm1563, %v1645
        %1688 = vst.msk [vmem:[#allocation3 + $0x210] sm:$0xff] %vm1563, %v1646
        %1689 = vst.msk [vmem:[#allocation3 + $0x220] sm:$0xff] %vm1563, %v1647
        %1690 = vst.msk [vmem:[#allocation3 + $0x230] sm:$0xff] %vm1563, %v1648
        %1691 = vst.msk [vmem:[#allocation3 + $0x240] sm:$0xff] %vm1563, %v1649
        %1692 = vst.msk [vmem:[#allocation3 + $0x250] sm:$0xff] %vm1563, %v1650
        %1693 = vst.msk [vmem:[#allocation3 + $0x260] sm:$0xff] %vm1563, %v1651
        %1694 = vst.msk [vmem:[#allocation3 + $0x270] sm:$0xff] %vm1563, %v1652
        %1695 = vst.msk [vmem:[#allocation3 + $0x280] sm:$0xff] %vm1563, %v1653
        %vm1696 = vcmask 60416
        %1697 = vst.msk [vmem:[#allocation3 + $0x290] sm:$0xf] %vm1696, %v1654
        %v1698 = vld [vmem:[#allocation2 + $0x1] sm:$0xff]
        %v1699 = vld [vmem:[#allocation2 + $0x9] sm:$0xff]
        %v1700 = vld [vmem:[#allocation2 + $0x11] sm:$0xff]
        %v1701 = vld [vmem:[#allocation2 + $0x19] sm:$0xff]
        %v1702 = vld [vmem:[#allocation2 + $0x21] sm:$0xff]
        %v1703 = vld [vmem:[#allocation2 + $0x29] sm:$0xff]
        %v1704 = vld [vmem:[#allocation2 + $0x31] sm:$0xff]
        %v1705 = vld [vmem:[#allocation2 + $0x39] sm:$0xff]
        %v1706 = vld [vmem:[#allocation2 + $0x41] sm:$0xff]
        %v1707 = vld [vmem:[#allocation2 + $0x49] sm:$0xff]
        %v1708 = vld [vmem:[#allocation2 + $0x51] sm:$0xff]
        %v1709 = vld [vmem:[#allocation2 + $0x59] sm:$0xff]
        %v1710 = vld [vmem:[#allocation2 + $0x61] sm:$0xff]
        %v1711 = vld [vmem:[#allocation2 + $0x69] sm:$0xff]
        %v1712 = vld [vmem:[#allocation2 + $0x71] sm:$0xff]
        %v1713 = vld [vmem:[#allocation2 + $0x79] sm:$0xff]
        %v1714 = vld [vmem:[#allocation2 + $0x81] sm:$0xff]
        %v1715 = vld [vmem:[#allocation2 + $0x89] sm:$0xff]
        %v1716 = vld [vmem:[#allocation2 + $0x91] sm:$0xff]
        %v1717 = vld [vmem:[#allocation2 + $0x99] sm:$0xff]
        %v1718 = vld [vmem:[#allocation2 + $0xa1] sm:$0xff]
        %v1719 = vld [vmem:[#allocation2 + $0xa9] sm:$0xff]
        %v1720 = vld [vmem:[#allocation2 + $0xb1] sm:$0xff]
        %v1721 = vld [vmem:[#allocation2 + $0xb9] sm:$0xff]
        %v1722 = vld [vmem:[#allocation2 + $0xc1] sm:$0xff]
        %v1723 = vld [vmem:[#allocation2 + $0xc9] sm:$0xff]
        %v1724 = vld [vmem:[#allocation2 + $0xd1] sm:$0xff]
        %v1725 = vld [vmem:[#allocation2 + $0xd9] sm:$0xff]
        %v1726 = vld [vmem:[#allocation2 + $0xe1] sm:$0xff]
        %v1727 = vld [vmem:[#allocation2 + $0xe9] sm:$0xff]
        %v1728 = vld [vmem:[#allocation2 + $0xf1] sm:$0xff]
        %v1729 = vld [vmem:[#allocation2 + $0xf9] sm:$0xff]
        %v1730 = vld [vmem:[#allocation2 + $0x101] sm:$0xff]
        %v1731 = vld [vmem:[#allocation2 + $0x109] sm:$0xff]
        %v1732 = vld [vmem:[#allocation2 + $0x111] sm:$0xff]
        %v1733 = vld [vmem:[#allocation2 + $0x119] sm:$0xff]
        %v1734 = vld [vmem:[#allocation2 + $0x121] sm:$0xff]
        %v1735 = vld [vmem:[#allocation2 + $0x129] sm:$0xff]
        %v1736 = vld [vmem:[#allocation2 + $0x131] sm:$0xff]
        %v1737 = vld [vmem:[#allocation2 + $0x139] sm:$0xff]
        %v1738 = vld [vmem:[#allocation2 + $0x141] sm:$0xff]
        %v1739 = vld [vmem:[#allocation2 + $0x149] sm:$0xf]
        %1782 = vrot.lane.b32.xlu0 %v1698, 8
        %v1783 = vpop.permute.xlu0 %1782
        %1784 = vrot.lane.b32.xlu0 %v1699, 8
        %v1785 = vpop.permute.xlu0 %1784
        %1786 = vrot.lane.b32.xlu0 %v1700, 8
        %v1787 = vpop.permute.xlu0 %1786
        %1788 = vrot.lane.b32.xlu0 %v1701, 8
        %v1789 = vpop.permute.xlu0 %1788
        %1790 = vrot.lane.b32.xlu0 %v1702, 8
        %v1791 = vpop.permute.xlu0 %1790
        %1792 = vrot.lane.b32.xlu0 %v1703, 8
        %v1793 = vpop.permute.xlu0 %1792
        %1794 = vrot.lane.b32.xlu0 %v1704, 8
        %v1795 = vpop.permute.xlu0 %1794
        %1796 = vrot.lane.b32.xlu0 %v1705, 8
        %v1797 = vpop.permute.xlu0 %1796
        %1798 = vrot.lane.b32.xlu0 %v1706, 8
        %v1799 = vpop.permute.xlu0 %1798
        %1800 = vrot.lane.b32.xlu0 %v1707, 8
        %v1801 = vpop.permute.xlu0 %1800
        %1802 = vrot.lane.b32.xlu0 %v1708, 8
        %v1803 = vpop.permute.xlu0 %1802
        %1804 = vrot.lane.b32.xlu0 %v1709, 8
        %v1805 = vpop.permute.xlu0 %1804
        %1806 = vrot.lane.b32.xlu0 %v1710, 8
        %v1807 = vpop.permute.xlu0 %1806
        %1808 = vrot.lane.b32.xlu0 %v1711, 8
        %v1809 = vpop.permute.xlu0 %1808
        %1810 = vrot.lane.b32.xlu0 %v1712, 8
        %v1811 = vpop.permute.xlu0 %1810
        %1812 = vrot.lane.b32.xlu0 %v1713, 8
        %v1813 = vpop.permute.xlu0 %1812
        %1814 = vrot.lane.b32.xlu0 %v1714, 8
        %v1815 = vpop.permute.xlu0 %1814
        %1816 = vrot.lane.b32.xlu0 %v1715, 8
        %v1817 = vpop.permute.xlu0 %1816
        %1818 = vrot.lane.b32.xlu0 %v1716, 8
        %v1819 = vpop.permute.xlu0 %1818
        %1820 = vrot.lane.b32.xlu0 %v1717, 8
        %v1821 = vpop.permute.xlu0 %1820
        %1822 = vrot.lane.b32.xlu0 %v1718, 8
        %v1823 = vpop.permute.xlu0 %1822
        %1824 = vrot.lane.b32.xlu0 %v1719, 8
        %v1825 = vpop.permute.xlu0 %1824
        %1826 = vrot.lane.b32.xlu0 %v1720, 8
        %v1827 = vpop.permute.xlu0 %1826
        %1828 = vrot.lane.b32.xlu0 %v1721, 8
        %v1829 = vpop.permute.xlu0 %1828
        %1830 = vrot.lane.b32.xlu0 %v1722, 8
        %v1831 = vpop.permute.xlu0 %1830
        %1832 = vrot.lane.b32.xlu0 %v1723, 8
        %v1833 = vpop.permute.xlu0 %1832
        %1834 = vrot.lane.b32.xlu0 %v1724, 8
        %v1835 = vpop.permute.xlu0 %1834
        %1836 = vrot.lane.b32.xlu0 %v1725, 8
        %v1837 = vpop.permute.xlu0 %1836
        %1838 = vrot.lane.b32.xlu0 %v1726, 8
        %v1839 = vpop.permute.xlu0 %1838
        %1840 = vrot.lane.b32.xlu0 %v1727, 8
        %v1841 = vpop.permute.xlu0 %1840
        %1842 = vrot.lane.b32.xlu0 %v1728, 8
        %v1843 = vpop.permute.xlu0 %1842
        %1844 = vrot.lane.b32.xlu0 %v1729, 8
        %v1845 = vpop.permute.xlu0 %1844
        %1846 = vrot.lane.b32.xlu0 %v1730, 8
        %v1847 = vpop.permute.xlu0 %1846
        %1848 = vrot.lane.b32.xlu0 %v1731, 8
        %v1849 = vpop.permute.xlu0 %1848
        %1850 = vrot.lane.b32.xlu0 %v1732, 8
        %v1851 = vpop.permute.xlu0 %1850
        %1852 = vrot.lane.b32.xlu0 %v1733, 8
        %v1853 = vpop.permute.xlu0 %1852
        %1854 = vrot.lane.b32.xlu0 %v1734, 8
        %v1855 = vpop.permute.xlu0 %1854
        %1856 = vrot.lane.b32.xlu0 %v1735, 8
        %v1857 = vpop.permute.xlu0 %1856
        %1858 = vrot.lane.b32.xlu0 %v1736, 8
        %v1859 = vpop.permute.xlu0 %1858
        %1860 = vrot.lane.b32.xlu0 %v1737, 8
        %v1861 = vpop.permute.xlu0 %1860
        %1862 = vrot.lane.b32.xlu0 %v1738, 8
        %v1863 = vpop.permute.xlu0 %1862
        %1864 = vrot.lane.b32.xlu0 %v1739, 8
        %v1865 = vpop.permute.xlu0 %1864
        %vm1908 = vcmask 130112
        %1909 = vst.msk [vmem:[#allocation3] sm:$0xff] %vm1908, %v1783
        %1910 = vst.msk [vmem:[#allocation3 + $0x10] sm:$0xff] %vm1908, %v1785
        %1911 = vst.msk [vmem:[#allocation3 + $0x20] sm:$0xff] %vm1908, %v1787
        %1912 = vst.msk [vmem:[#allocation3 + $0x30] sm:$0xff] %vm1908, %v1789
        %1913 = vst.msk [vmem:[#allocation3 + $0x40] sm:$0xff] %vm1908, %v1791
        %1914 = vst.msk [vmem:[#allocation3 + $0x50] sm:$0xff] %vm1908, %v1793
        %1915 = vst.msk [vmem:[#allocation3 + $0x60] sm:$0xff] %vm1908, %v1795
        %1916 = vst.msk [vmem:[#allocation3 + $0x70] sm:$0xff] %vm1908, %v1797
        %1917 = vst.msk [vmem:[#allocation3 + $0x80] sm:$0xff] %vm1908, %v1799
        %1918 = vst.msk [vmem:[#allocation3 + $0x90] sm:$0xff] %vm1908, %v1801
        %1919 = vst.msk [vmem:[#allocation3 + $0xa0] sm:$0xff] %vm1908, %v1803
        %1920 = vst.msk [vmem:[#allocation3 + $0xb0] sm:$0xff] %vm1908, %v1805
        %1921 = vst.msk [vmem:[#allocation3 + $0xc0] sm:$0xff] %vm1908, %v1807
        %1922 = vst.msk [vmem:[#allocation3 + $0xd0] sm:$0xff] %vm1908, %v1809
        %1923 = vst.msk [vmem:[#allocation3 + $0xe0] sm:$0xff] %vm1908, %v1811
        %1924 = vst.msk [vmem:[#allocation3 + $0xf0] sm:$0xff] %vm1908, %v1813
        %1925 = vst.msk [vmem:[#allocation3 + $0x100] sm:$0xff] %vm1908, %v1815
        %1926 = vst.msk [vmem:[#allocation3 + $0x110] sm:$0xff] %vm1908, %v1817
        %1927 = vst.msk [vmem:[#allocation3 + $0x120] sm:$0xff] %vm1908, %v1819
        %1928 = vst.msk [vmem:[#allocation3 + $0x130] sm:$0xff] %vm1908, %v1821
        %1929 = vst.msk [vmem:[#allocation3 + $0x140] sm:$0xff] %vm1908, %v1823
        %1930 = vst.msk [vmem:[#allocation3 + $0x150] sm:$0xff] %vm1908, %v1825
        %1931 = vst.msk [vmem:[#allocation3 + $0x160] sm:$0xff] %vm1908, %v1827
        %1932 = vst.msk [vmem:[#allocation3 + $0x170] sm:$0xff] %vm1908, %v1829
        %1933 = vst.msk [vmem:[#allocation3 + $0x180] sm:$0xff] %vm1908, %v1831
        %1934 = vst.msk [vmem:[#allocation3 + $0x190] sm:$0xff] %vm1908, %v1833
        %1935 = vst.msk [vmem:[#allocation3 + $0x1a0] sm:$0xff] %vm1908, %v1835
        %1936 = vst.msk [vmem:[#allocation3 + $0x1b0] sm:$0xff] %vm1908, %v1837
        %1937 = vst.msk [vmem:[#allocation3 + $0x1c0] sm:$0xff] %vm1908, %v1839
        %1938 = vst.msk [vmem:[#allocation3 + $0x1d0] sm:$0xff] %vm1908, %v1841
        %1939 = vst.msk [vmem:[#allocation3 + $0x1e0] sm:$0xff] %vm1908, %v1843
        %1940 = vst.msk [vmem:[#allocation3 + $0x1f0] sm:$0xff] %vm1908, %v1845
        %1941 = vst.msk [vmem:[#allocation3 + $0x200] sm:$0xff] %vm1908, %v1847
        %1942 = vst.msk [vmem:[#allocation3 + $0x210] sm:$0xff] %vm1908, %v1849
        %1943 = vst.msk [vmem:[#allocation3 + $0x220] sm:$0xff] %vm1908, %v1851
        %1944 = vst.msk [vmem:[#allocation3 + $0x230] sm:$0xff] %vm1908, %v1853
        %1945 = vst.msk [vmem:[#allocation3 + $0x240] sm:$0xff] %vm1908, %v1855
        %1946 = vst.msk [vmem:[#allocation3 + $0x250] sm:$0xff] %vm1908, %v1857
        %1947 = vst.msk [vmem:[#allocation3 + $0x260] sm:$0xff] %vm1908, %v1859
        %1948 = vst.msk [vmem:[#allocation3 + $0x270] sm:$0xff] %vm1908, %v1861
        %1949 = vst.msk [vmem:[#allocation3 + $0x280] sm:$0xff] %vm1908, %v1863
        %vm1950 = vcmask 126016
        %1951 = vst.msk [vmem:[#allocation3 + $0x290] sm:$0xf] %vm1950, %v1865
        %v1952 = vld [vmem:[#allocation2 + $0x2] sm:$0xff]
        %v1953 = vld [vmem:[#allocation2 + $0xa] sm:$0xff]
        %v1954 = vld [vmem:[#allocation2 + $0x12] sm:$0xff]
        %v1955 = vld [vmem:[#allocation2 + $0x1a] sm:$0xff]
        %v1956 = vld [vmem:[#allocation2 + $0x22] sm:$0xff]
        %v1957 = vld [vmem:[#allocation2 + $0x2a] sm:$0xff]
        %v1958 = vld [vmem:[#allocation2 + $0x32] sm:$0xff]
        %v1959 = vld [vmem:[#allocation2 + $0x3a] sm:$0xff]
        %v1960 = vld [vmem:[#allocation2 + $0x42] sm:$0xff]
        %v1961 = vld [vmem:[#allocation2 + $0x4a] sm:$0xff]
        %v1962 = vld [vmem:[#allocation2 + $0x52] sm:$0xff]
        %v1963 = vld [vmem:[#allocation2 + $0x5a] sm:$0xff]
        %v1964 = vld [vmem:[#allocation2 + $0x62] sm:$0xff]
        %v1965 = vld [vmem:[#allocation2 + $0x6a] sm:$0xff]
        %v1966 = vld [vmem:[#allocation2 + $0x72] sm:$0xff]
        %v1967 = vld [vmem:[#allocation2 + $0x7a] sm:$0xff]
        %v1968 = vld [vmem:[#allocation2 + $0x82] sm:$0xff]
        %v1969 = vld [vmem:[#allocation2 + $0x8a] sm:$0xff]
        %v1970 = vld [vmem:[#allocation2 + $0x92] sm:$0xff]
        %v1971 = vld [vmem:[#allocation2 + $0x9a] sm:$0xff]
        %v1972 = vld [vmem:[#allocation2 + $0xa2] sm:$0xff]
        %v1973 = vld [vmem:[#allocation2 + $0xaa] sm:$0xff]
        %v1974 = vld [vmem:[#allocation2 + $0xb2] sm:$0xff]
        %v1975 = vld [vmem:[#allocation2 + $0xba] sm:$0xff]
        %v1976 = vld [vmem:[#allocation2 + $0xc2] sm:$0xff]
        %v1977 = vld [vmem:[#allocation2 + $0xca] sm:$0xff]
        %v1978 = vld [vmem:[#allocation2 + $0xd2] sm:$0xff]
        %v1979 = vld [vmem:[#allocation2 + $0xda] sm:$0xff]
        %v1980 = vld [vmem:[#allocation2 + $0xe2] sm:$0xff]
        %v1981 = vld [vmem:[#allocation2 + $0xea] sm:$0xff]
        %v1982 = vld [vmem:[#allocation2 + $0xf2] sm:$0xff]
        %v1983 = vld [vmem:[#allocation2 + $0xfa] sm:$0xff]
        %v1984 = vld [vmem:[#allocation2 + $0x102] sm:$0xff]
        %v1985 = vld [vmem:[#allocation2 + $0x10a] sm:$0xff]
        %v1986 = vld [vmem:[#allocation2 + $0x112] sm:$0xff]
        %v1987 = vld [vmem:[#allocation2 + $0x11a] sm:$0xff]
        %v1988 = vld [vmem:[#allocation2 + $0x122] sm:$0xff]
        %v1989 = vld [vmem:[#allocation2 + $0x12a] sm:$0xff]
        %v1990 = vld [vmem:[#allocation2 + $0x132] sm:$0xff]
        %v1991 = vld [vmem:[#allocation2 + $0x13a] sm:$0xff]
        %v1992 = vld [vmem:[#allocation2 + $0x142] sm:$0xff]
        %v1993 = vld [vmem:[#allocation2 + $0x14a] sm:$0xf]
        %2036 = vrot.lane.b32.xlu0 %v1952, 16
        %v2037 = vpop.permute.xlu0 %2036
        %2038 = vrot.lane.b32.xlu0 %v1953, 16
        %v2039 = vpop.permute.xlu0 %2038
        %2040 = vrot.lane.b32.xlu0 %v1954, 16
        %v2041 = vpop.permute.xlu0 %2040
        %2042 = vrot.lane.b32.xlu0 %v1955, 16
        %v2043 = vpop.permute.xlu0 %2042
        %2044 = vrot.lane.b32.xlu0 %v1956, 16
        %v2045 = vpop.permute.xlu0 %2044
        %2046 = vrot.lane.b32.xlu0 %v1957, 16
        %v2047 = vpop.permute.xlu0 %2046
        %2048 = vrot.lane.b32.xlu0 %v1958, 16
        %v2049 = vpop.permute.xlu0 %2048
        %2050 = vrot.lane.b32.xlu0 %v1959, 16
        %v2051 = vpop.permute.xlu0 %2050
        %2052 = vrot.lane.b32.xlu0 %v1960, 16
        %v2053 = vpop.permute.xlu0 %2052
        %2054 = vrot.lane.b32.xlu0 %v1961, 16
        %v2055 = vpop.permute.xlu0 %2054
        %2056 = vrot.lane.b32.xlu0 %v1962, 16
        %v2057 = vpop.permute.xlu0 %2056
        %2058 = vrot.lane.b32.xlu0 %v1963, 16
        %v2059 = vpop.permute.xlu0 %2058
        %2060 = vrot.lane.b32.xlu0 %v1964, 16
        %v2061 = vpop.permute.xlu0 %2060
        %2062 = vrot.lane.b32.xlu0 %v1965, 16
        %v2063 = vpop.permute.xlu0 %2062
        %2064 = vrot.lane.b32.xlu0 %v1966, 16
        %v2065 = vpop.permute.xlu0 %2064
        %2066 = vrot.lane.b32.xlu0 %v1967, 16
        %v2067 = vpop.permute.xlu0 %2066
        %2068 = vrot.lane.b32.xlu0 %v1968, 16
        %v2069 = vpop.permute.xlu0 %2068
        %2070 = vrot.lane.b32.xlu0 %v1969, 16
        %v2071 = vpop.permute.xlu0 %2070
        %2072 = vrot.lane.b32.xlu0 %v1970, 16
        %v2073 = vpop.permute.xlu0 %2072
        %2074 = vrot.lane.b32.xlu0 %v1971, 16
        %v2075 = vpop.permute.xlu0 %2074
        %2076 = vrot.lane.b32.xlu0 %v1972, 16
        %v2077 = vpop.permute.xlu0 %2076
        %2078 = vrot.lane.b32.xlu0 %v1973, 16
        %v2079 = vpop.permute.xlu0 %2078
        %2080 = vrot.lane.b32.xlu0 %v1974, 16
        %v2081 = vpop.permute.xlu0 %2080
        %2082 = vrot.lane.b32.xlu0 %v1975, 16
        %v2083 = vpop.permute.xlu0 %2082
        %2084 = vrot.lane.b32.xlu0 %v1976, 16
        %v2085 = vpop.permute.xlu0 %2084
        %2086 = vrot.lane.b32.xlu0 %v1977, 16
        %v2087 = vpop.permute.xlu0 %2086
        %2088 = vrot.lane.b32.xlu0 %v1978, 16
        %v2089 = vpop.permute.xlu0 %2088
        %2090 = vrot.lane.b32.xlu0 %v1979, 16
        %v2091 = vpop.permute.xlu0 %2090
        %2092 = vrot.lane.b32.xlu0 %v1980, 16
        %v2093 = vpop.permute.xlu0 %2092
        %2094 = vrot.lane.b32.xlu0 %v1981, 16
        %v2095 = vpop.permute.xlu0 %2094
        %2096 = vrot.lane.b32.xlu0 %v1982, 16
        %v2097 = vpop.permute.xlu0 %2096
        %2098 = vrot.lane.b32.xlu0 %v1983, 16
        %v2099 = vpop.permute.xlu0 %2098
        %2100 = vrot.lane.b32.xlu0 %v1984, 16
        %v2101 = vpop.permute.xlu0 %2100
        %2102 = vrot.lane.b32.xlu0 %v1985, 16
        %v2103 = vpop.permute.xlu0 %2102
        %2104 = vrot.lane.b32.xlu0 %v1986, 16
        %v2105 = vpop.permute.xlu0 %2104
        %2106 = vrot.lane.b32.xlu0 %v1987, 16
        %v2107 = vpop.permute.xlu0 %2106
        %2108 = vrot.lane.b32.xlu0 %v1988, 16
        %v2109 = vpop.permute.xlu0 %2108
        %2110 = vrot.lane.b32.xlu0 %v1989, 16
        %v2111 = vpop.permute.xlu0 %2110
        %2112 = vrot.lane.b32.xlu0 %v1990, 16
        %v2113 = vpop.permute.xlu0 %2112
        %2114 = vrot.lane.b32.xlu0 %v1991, 16
        %v2115 = vpop.permute.xlu0 %2114
        %2116 = vrot.lane.b32.xlu0 %v1992, 16
        %v2117 = vpop.permute.xlu0 %2116
        %2118 = vrot.lane.b32.xlu0 %v1993, 16
        %v2119 = vpop.permute.xlu0 %2118
        %vm2162 = vcmask 195712
        %2163 = vst.msk [vmem:[#allocation3] sm:$0xff] %vm2162, %v2037
        %2164 = vst.msk [vmem:[#allocation3 + $0x10] sm:$0xff] %vm2162, %v2039
        %2165 = vst.msk [vmem:[#allocation3 + $0x20] sm:$0xff] %vm2162, %v2041
        %2166 = vst.msk [vmem:[#allocation3 + $0x30] sm:$0xff] %vm2162, %v2043
        %2167 = vst.msk [vmem:[#allocation3 + $0x40] sm:$0xff] %vm2162, %v2045
        %2168 = vst.msk [vmem:[#allocation3 + $0x50] sm:$0xff] %vm2162, %v2047
        %2169 = vst.msk [vmem:[#allocation3 + $0x60] sm:$0xff] %vm2162, %v2049
        %2170 = vst.msk [vmem:[#allocation3 + $0x70] sm:$0xff] %vm2162, %v2051
        %2171 = vst.msk [vmem:[#allocation3 + $0x80] sm:$0xff] %vm2162, %v2053
        %2172 = vst.msk [vmem:[#allocation3 + $0x90] sm:$0xff] %vm2162, %v2055
        %2173 = vst.msk [vmem:[#allocation3 + $0xa0] sm:$0xff] %vm2162, %v2057
        %2174 = vst.msk [vmem:[#allocation3 + $0xb0] sm:$0xff] %vm2162, %v2059
        %2175 = vst.msk [vmem:[#allocation3 + $0xc0] sm:$0xff] %vm2162, %v2061
        %2176 = vst.msk [vmem:[#allocation3 + $0xd0] sm:$0xff] %vm2162, %v2063
        %2177 = vst.msk [vmem:[#allocation3 + $0xe0] sm:$0xff] %vm2162, %v2065
        %2178 = vst.msk [vmem:[#allocation3 + $0xf0] sm:$0xff] %vm2162, %v2067
        %2179 = vst.msk [vmem:[#allocation3 + $0x100] sm:$0xff] %vm2162, %v2069
        %2180 = vst.msk [vmem:[#allocation3 + $0x110] sm:$0xff] %vm2162, %v2071
        %2181 = vst.msk [vmem:[#allocation3 + $0x120] sm:$0xff] %vm2162, %v2073
        %2182 = vst.msk [vmem:[#allocation3 + $0x130] sm:$0xff] %vm2162, %v2075
        %2183 = vst.msk [vmem:[#allocation3 + $0x140] sm:$0xff] %vm2162, %v2077
        %2184 = vst.msk [vmem:[#allocation3 + $0x150] sm:$0xff] %vm2162, %v2079
        %2185 = vst.msk [vmem:[#allocation3 + $0x160] sm:$0xff] %vm2162, %v2081
        %2186 = vst.msk [vmem:[#allocation3 + $0x170] sm:$0xff] %vm2162, %v2083
        %2187 = vst.msk [vmem:[#allocation3 + $0x180] sm:$0xff] %vm2162, %v2085
        %2188 = vst.msk [vmem:[#allocation3 + $0x190] sm:$0xff] %vm2162, %v2087
        %2189 = vst.msk [vmem:[#allocation3 + $0x1a0] sm:$0xff] %vm2162, %v2089
        %2190 = vst.msk [vmem:[#allocation3 + $0x1b0] sm:$0xff] %vm2162, %v2091
        %2191 = vst.msk [vmem:[#allocation3 + $0x1c0] sm:$0xff] %vm2162, %v2093
        %2192 = vst.msk [vmem:[#allocation3 + $0x1d0] sm:$0xff] %vm2162, %v2095
        %2193 = vst.msk [vmem:[#allocation3 + $0x1e0] sm:$0xff] %vm2162, %v2097
        %2194 = vst.msk [vmem:[#allocation3 + $0x1f0] sm:$0xff] %vm2162, %v2099
        %2195 = vst.msk [vmem:[#allocation3 + $0x200] sm:$0xff] %vm2162, %v2101
        %2196 = vst.msk [vmem:[#allocation3 + $0x210] sm:$0xff] %vm2162, %v2103
        %2197 = vst.msk [vmem:[#allocation3 + $0x220] sm:$0xff] %vm2162, %v2105
        %2198 = vst.msk [vmem:[#allocation3 + $0x230] sm:$0xff] %vm2162, %v2107
        %2199 = vst.msk [vmem:[#allocation3 + $0x240] sm:$0xff] %vm2162, %v2109
        %2200 = vst.msk [vmem:[#allocation3 + $0x250] sm:$0xff] %vm2162, %v2111
        %2201 = vst.msk [vmem:[#allocation3 + $0x260] sm:$0xff] %vm2162, %v2113
        %2202 = vst.msk [vmem:[#allocation3 + $0x270] sm:$0xff] %vm2162, %v2115
        %2203 = vst.msk [vmem:[#allocation3 + $0x280] sm:$0xff] %vm2162, %v2117
        %vm2204 = vcmask 191616
        %2205 = vst.msk [vmem:[#allocation3 + $0x290] sm:$0xf] %vm2204, %v2119
        %v2206 = vld [vmem:[#allocation2 + $0x3] sm:$0xff]
        %v2207 = vld [vmem:[#allocation2 + $0xb] sm:$0xff]
        %v2208 = vld [vmem:[#allocation2 + $0x13] sm:$0xff]
        %v2209 = vld [vmem:[#allocation2 + $0x1b] sm:$0xff]
        %v2210 = vld [vmem:[#allocation2 + $0x23] sm:$0xff]
        %v2211 = vld [vmem:[#allocation2 + $0x2b] sm:$0xff]
        %v2212 = vld [vmem:[#allocation2 + $0x33] sm:$0xff]
        %v2213 = vld [vmem:[#allocation2 + $0x3b] sm:$0xff]
        %v2214 = vld [vmem:[#allocation2 + $0x43] sm:$0xff]
        %v2215 = vld [vmem:[#allocation2 + $0x4b] sm:$0xff]
        %v2216 = vld [vmem:[#allocation2 + $0x53] sm:$0xff]
        %v2217 = vld [vmem:[#allocation2 + $0x5b] sm:$0xff]
        %v2218 = vld [vmem:[#allocation2 + $0x63] sm:$0xff]
        %v2219 = vld [vmem:[#allocation2 + $0x6b] sm:$0xff]
        %v2220 = vld [vmem:[#allocation2 + $0x73] sm:$0xff]
        %v2221 = vld [vmem:[#allocation2 + $0x7b] sm:$0xff]
        %v2222 = vld [vmem:[#allocation2 + $0x83] sm:$0xff]
        %v2223 = vld [vmem:[#allocation2 + $0x8b] sm:$0xff]
        %v2224 = vld [vmem:[#allocation2 + $0x93] sm:$0xff]
        %v2225 = vld [vmem:[#allocation2 + $0x9b] sm:$0xff]
        %v2226 = vld [vmem:[#allocation2 + $0xa3] sm:$0xff]
        %v2227 = vld [vmem:[#allocation2 + $0xab] sm:$0xff]
        %v2228 = vld [vmem:[#allocation2 + $0xb3] sm:$0xff]
        %v2229 = vld [vmem:[#allocation2 + $0xbb] sm:$0xff]
        %v2230 = vld [vmem:[#allocation2 + $0xc3] sm:$0xff]
        %v2231 = vld [vmem:[#allocation2 + $0xcb] sm:$0xff]
        %v2232 = vld [vmem:[#allocation2 + $0xd3] sm:$0xff]
        %v2233 = vld [vmem:[#allocation2 + $0xdb] sm:$0xff]
        %v2234 = vld [vmem:[#allocation2 + $0xe3] sm:$0xff]
        %v2235 = vld [vmem:[#allocation2 + $0xeb] sm:$0xff]
        %v2236 = vld [vmem:[#allocation2 + $0xf3] sm:$0xff]
        %v2237 = vld [vmem:[#allocation2 + $0xfb] sm:$0xff]
        %v2238 = vld [vmem:[#allocation2 + $0x103] sm:$0xff]
        %v2239 = vld [vmem:[#allocation2 + $0x10b] sm:$0xff]
        %v2240 = vld [vmem:[#allocation2 + $0x113] sm:$0xff]
        %v2241 = vld [vmem:[#allocation2 + $0x11b] sm:$0xff]
        %v2242 = vld [vmem:[#allocation2 + $0x123] sm:$0xff]
        %v2243 = vld [vmem:[#allocation2 + $0x12b] sm:$0xff]
        %v2244 = vld [vmem:[#allocation2 + $0x133] sm:$0xff]
        %v2245 = vld [vmem:[#allocation2 + $0x13b] sm:$0xff]
        %v2246 = vld [vmem:[#allocation2 + $0x143] sm:$0xff]
        %v2247 = vld [vmem:[#allocation2 + $0x14b] sm:$0xf]
        %2290 = vrot.lane.b32.xlu0 %v2206, 24
        %v2291 = vpop.permute.xlu0 %2290
        %2292 = vrot.lane.b32.xlu0 %v2207, 24
        %v2293 = vpop.permute.xlu0 %2292
        %2294 = vrot.lane.b32.xlu0 %v2208, 24
        %v2295 = vpop.permute.xlu0 %2294
        %2296 = vrot.lane.b32.xlu0 %v2209, 24
        %v2297 = vpop.permute.xlu0 %2296
        %2298 = vrot.lane.b32.xlu0 %v2210, 24
        %v2299 = vpop.permute.xlu0 %2298
        %2300 = vrot.lane.b32.xlu0 %v2211, 24
        %v2301 = vpop.permute.xlu0 %2300
        %2302 = vrot.lane.b32.xlu0 %v2212, 24
        %v2303 = vpop.permute.xlu0 %2302
        %2304 = vrot.lane.b32.xlu0 %v2213, 24
        %v2305 = vpop.permute.xlu0 %2304
        %2306 = vrot.lane.b32.xlu0 %v2214, 24
        %v2307 = vpop.permute.xlu0 %2306
        %2308 = vrot.lane.b32.xlu0 %v2215, 24
        %v2309 = vpop.permute.xlu0 %2308
        %2310 = vrot.lane.b32.xlu0 %v2216, 24
        %v2311 = vpop.permute.xlu0 %2310
        %2312 = vrot.lane.b32.xlu0 %v2217, 24
        %v2313 = vpop.permute.xlu0 %2312
        %2314 = vrot.lane.b32.xlu0 %v2218, 24
        %v2315 = vpop.permute.xlu0 %2314
        %2316 = vrot.lane.b32.xlu0 %v2219, 24
        %v2317 = vpop.permute.xlu0 %2316
        %2318 = vrot.lane.b32.xlu0 %v2220, 24
        %v2319 = vpop.permute.xlu0 %2318
        %2320 = vrot.lane.b32.xlu0 %v2221, 24
        %v2321 = vpop.permute.xlu0 %2320
        %2322 = vrot.lane.b32.xlu0 %v2222, 24
        %v2323 = vpop.permute.xlu0 %2322
        %2324 = vrot.lane.b32.xlu0 %v2223, 24
        %v2325 = vpop.permute.xlu0 %2324
        %2326 = vrot.lane.b32.xlu0 %v2224, 24
        %v2327 = vpop.permute.xlu0 %2326
        %2328 = vrot.lane.b32.xlu0 %v2225, 24
        %v2329 = vpop.permute.xlu0 %2328
        %2330 = vrot.lane.b32.xlu0 %v2226, 24
        %v2331 = vpop.permute.xlu0 %2330
        %2332 = vrot.lane.b32.xlu0 %v2227, 24
        %v2333 = vpop.permute.xlu0 %2332
        %2334 = vrot.lane.b32.xlu0 %v2228, 24
        %v2335 = vpop.permute.xlu0 %2334
        %2336 = vrot.lane.b32.xlu0 %v2229, 24
        %v2337 = vpop.permute.xlu0 %2336
        %2338 = vrot.lane.b32.xlu0 %v2230, 24
        %v2339 = vpop.permute.xlu0 %2338
        %2340 = vrot.lane.b32.xlu0 %v2231, 24
        %v2341 = vpop.permute.xlu0 %2340
        %2342 = vrot.lane.b32.xlu0 %v2232, 24
        %v2343 = vpop.permute.xlu0 %2342
        %2344 = vrot.lane.b32.xlu0 %v2233, 24
        %v2345 = vpop.permute.xlu0 %2344
        %2346 = vrot.lane.b32.xlu0 %v2234, 24
        %v2347 = vpop.permute.xlu0 %2346
        %2348 = vrot.lane.b32.xlu0 %v2235, 24
        %v2349 = vpop.permute.xlu0 %2348
        %2350 = vrot.lane.b32.xlu0 %v2236, 24
        %v2351 = vpop.permute.xlu0 %2350
        %2352 = vrot.lane.b32.xlu0 %v2237, 24
        %v2353 = vpop.permute.xlu0 %2352
        %2354 = vrot.lane.b32.xlu0 %v2238, 24
        %v2355 = vpop.permute.xlu0 %2354
        %2356 = vrot.lane.b32.xlu0 %v2239, 24
        %v2357 = vpop.permute.xlu0 %2356
        %2358 = vrot.lane.b32.xlu0 %v2240, 24
        %v2359 = vpop.permute.xlu0 %2358
        %2360 = vrot.lane.b32.xlu0 %v2241, 24
        %v2361 = vpop.permute.xlu0 %2360
        %2362 = vrot.lane.b32.xlu0 %v2242, 24
        %v2363 = vpop.permute.xlu0 %2362
        %2364 = vrot.lane.b32.xlu0 %v2243, 24
        %v2365 = vpop.permute.xlu0 %2364
        %2366 = vrot.lane.b32.xlu0 %v2244, 24
        %v2367 = vpop.permute.xlu0 %2366
        %2368 = vrot.lane.b32.xlu0 %v2245, 24
        %v2369 = vpop.permute.xlu0 %2368
        %2370 = vrot.lane.b32.xlu0 %v2246, 24
        %v2371 = vpop.permute.xlu0 %2370
        %2372 = vrot.lane.b32.xlu0 %v2247, 24
        %v2373 = vpop.permute.xlu0 %2372
        %vm2416 = vcmask 261312
        %2417 = vst.msk [vmem:[#allocation3] sm:$0xff] %vm2416, %v2291
        %2418 = vst.msk [vmem:[#allocation3 + $0x10] sm:$0xff] %vm2416, %v2293
        %2419 = vst.msk [vmem:[#allocation3 + $0x20] sm:$0xff] %vm2416, %v2295
        %2420 = vst.msk [vmem:[#allocation3 + $0x30] sm:$0xff] %vm2416, %v2297
        %2421 = vst.msk [vmem:[#allocation3 + $0x40] sm:$0xff] %vm2416, %v2299
        %2422 = vst.msk [vmem:[#allocation3 + $0x50] sm:$0xff] %vm2416, %v2301
        %2423 = vst.msk [vmem:[#allocation3 + $0x60] sm:$0xff] %vm2416, %v2303
        %2424 = vst.msk [vmem:[#allocation3 + $0x70] sm:$0xff] %vm2416, %v2305
        %2425 = vst.msk [vmem:[#allocation3 + $0x80] sm:$0xff] %vm2416, %v2307
        %2426 = vst.msk [vmem:[#allocation3 + $0x90] sm:$0xff] %vm2416, %v2309
        %2427 = vst.msk [vmem:[#allocation3 + $0xa0] sm:$0xff] %vm2416, %v2311
        %2428 = vst.msk [vmem:[#allocation3 + $0xb0] sm:$0xff] %vm2416, %v2313
        %2429 = vst.msk [vmem:[#allocation3 + $0xc0] sm:$0xff] %vm2416, %v2315
        %2430 = vst.msk [vmem:[#allocation3 + $0xd0] sm:$0xff] %vm2416, %v2317
        %2431 = vst.msk [vmem:[#allocation3 + $0xe0] sm:$0xff] %vm2416, %v2319
        %2432 = vst.msk [vmem:[#allocation3 + $0xf0] sm:$0xff] %vm2416, %v2321
        %2433 = vst.msk [vmem:[#allocation3 + $0x100] sm:$0xff] %vm2416, %v2323
        %2434 = vst.msk [vmem:[#allocation3 + $0x110] sm:$0xff] %vm2416, %v2325
        %2435 = vst.msk [vmem:[#allocation3 + $0x120] sm:$0xff] %vm2416, %v2327
        %2436 = vst.msk [vmem:[#allocation3 + $0x130] sm:$0xff] %vm2416, %v2329
        %2437 = vst.msk [vmem:[#allocation3 + $0x140] sm:$0xff] %vm2416, %v2331
        %2438 = vst.msk [vmem:[#allocation3 + $0x150] sm:$0xff] %vm2416, %v2333
        %2439 = vst.msk [vmem:[#allocation3 + $0x160] sm:$0xff] %vm2416, %v2335
        %2440 = vst.msk [vmem:[#allocation3 + $0x170] sm:$0xff] %vm2416, %v2337
        %2441 = vst.msk [vmem:[#allocation3 + $0x180] sm:$0xff] %vm2416, %v2339
        %2442 = vst.msk [vmem:[#allocation3 + $0x190] sm:$0xff] %vm2416, %v2341
        %2443 = vst.msk [vmem:[#allocation3 + $0x1a0] sm:$0xff] %vm2416, %v2343
        %2444 = vst.msk [vmem:[#allocation3 + $0x1b0] sm:$0xff] %vm2416, %v2345
        %2445 = vst.msk [vmem:[#allocation3 + $0x1c0] sm:$0xff] %vm2416, %v2347
        %2446 = vst.msk [vmem:[#allocation3 + $0x1d0] sm:$0xff] %vm2416, %v2349
        %2447 = vst.msk [vmem:[#allocation3 + $0x1e0] sm:$0xff] %vm2416, %v2351
        %2448 = vst.msk [vmem:[#allocation3 + $0x1f0] sm:$0xff] %vm2416, %v2353
        %2449 = vst.msk [vmem:[#allocation3 + $0x200] sm:$0xff] %vm2416, %v2355
        %2450 = vst.msk [vmem:[#allocation3 + $0x210] sm:$0xff] %vm2416, %v2357
        %2451 = vst.msk [vmem:[#allocation3 + $0x220] sm:$0xff] %vm2416, %v2359
        %2452 = vst.msk [vmem:[#allocation3 + $0x230] sm:$0xff] %vm2416, %v2361
        %2453 = vst.msk [vmem:[#allocation3 + $0x240] sm:$0xff] %vm2416, %v2363
        %2454 = vst.msk [vmem:[#allocation3 + $0x250] sm:$0xff] %vm2416, %v2365
        %2455 = vst.msk [vmem:[#allocation3 + $0x260] sm:$0xff] %vm2416, %v2367
        %2456 = vst.msk [vmem:[#allocation3 + $0x270] sm:$0xff] %vm2416, %v2369
        %2457 = vst.msk [vmem:[#allocation3 + $0x280] sm:$0xff] %vm2416, %v2371
        %vm2458 = vcmask 257216
        %2459 = vst.msk [vmem:[#allocation3 + $0x290] sm:$0xf] %vm2458, %v2373
        %v2460 = vld [vmem:[#allocation2 + $0x4] sm:$0xff]
        %v2461 = vld [vmem:[#allocation2 + $0xc] sm:$0xff]
        %v2462 = vld [vmem:[#allocation2 + $0x14] sm:$0xff]
        %v2463 = vld [vmem:[#allocation2 + $0x1c] sm:$0xff]
        %v2464 = vld [vmem:[#allocation2 + $0x24] sm:$0xff]
        %v2465 = vld [vmem:[#allocation2 + $0x2c] sm:$0xff]
        %v2466 = vld [vmem:[#allocation2 + $0x34] sm:$0xff]
        %v2467 = vld [vmem:[#allocation2 + $0x3c] sm:$0xff]
        %v2468 = vld [vmem:[#allocation2 + $0x44] sm:$0xff]
        %v2469 = vld [vmem:[#allocation2 + $0x4c] sm:$0xff]
        %v2470 = vld [vmem:[#allocation2 + $0x54] sm:$0xff]
        %v2471 = vld [vmem:[#allocation2 + $0x5c] sm:$0xff]
        %v2472 = vld [vmem:[#allocation2 + $0x64] sm:$0xff]
        %v2473 = vld [vmem:[#allocation2 + $0x6c] sm:$0xff]
        %v2474 = vld [vmem:[#allocation2 + $0x74] sm:$0xff]
        %v2475 = vld [vmem:[#allocation2 + $0x7c] sm:$0xff]
        %v2476 = vld [vmem:[#allocation2 + $0x84] sm:$0xff]
        %v2477 = vld [vmem:[#allocation2 + $0x8c] sm:$0xff]
        %v2478 = vld [vmem:[#allocation2 + $0x94] sm:$0xff]
        %v2479 = vld [vmem:[#allocation2 + $0x9c] sm:$0xff]
        %v2480 = vld [vmem:[#allocation2 + $0xa4] sm:$0xff]
        %v2481 = vld [vmem:[#allocation2 + $0xac] sm:$0xff]
        %v2482 = vld [vmem:[#allocation2 + $0xb4] sm:$0xff]
        %v2483 = vld [vmem:[#allocation2 + $0xbc] sm:$0xff]
        %v2484 = vld [vmem:[#allocation2 + $0xc4] sm:$0xff]
        %v2485 = vld [vmem:[#allocation2 + $0xcc] sm:$0xff]
        %v2486 = vld [vmem:[#allocation2 + $0xd4] sm:$0xff]
        %v2487 = vld [vmem:[#allocation2 + $0xdc] sm:$0xff]
        %v2488 = vld [vmem:[#allocation2 + $0xe4] sm:$0xff]
        %v2489 = vld [vmem:[#allocation2 + $0xec] sm:$0xff]
        %v2490 = vld [vmem:[#allocation2 + $0xf4] sm:$0xff]
        %v2491 = vld [vmem:[#allocation2 + $0xfc] sm:$0xff]
        %v2492 = vld [vmem:[#allocation2 + $0x104] sm:$0xff]
        %v2493 = vld [vmem:[#allocation2 + $0x10c] sm:$0xff]
        %v2494 = vld [vmem:[#allocation2 + $0x114] sm:$0xff]
        %v2495 = vld [vmem:[#allocation2 + $0x11c] sm:$0xff]
        %v2496 = vld [vmem:[#allocation2 + $0x124] sm:$0xff]
        %v2497 = vld [vmem:[#allocation2 + $0x12c] sm:$0xff]
        %v2498 = vld [vmem:[#allocation2 + $0x134] sm:$0xff]
        %v2499 = vld [vmem:[#allocation2 + $0x13c] sm:$0xff]
        %v2500 = vld [vmem:[#allocation2 + $0x144] sm:$0xff]
        %v2501 = vld [vmem:[#allocation2 + $0x14c] sm:$0xf]
        %2544 = vrot.lane.b32.xlu0 %v2460, 32
        %v2545 = vpop.permute.xlu0 %2544
        %2546 = vrot.lane.b32.xlu0 %v2461, 32
        %v2547 = vpop.permute.xlu0 %2546
        %2548 = vrot.lane.b32.xlu0 %v2462, 32
        %v2549 = vpop.permute.xlu0 %2548
        %2550 = vrot.lane.b32.xlu0 %v2463, 32
        %v2551 = vpop.permute.xlu0 %2550
        %2552 = vrot.lane.b32.xlu0 %v2464, 32
        %v2553 = vpop.permute.xlu0 %2552
        %2554 = vrot.lane.b32.xlu0 %v2465, 32
        %v2555 = vpop.permute.xlu0 %2554
        %2556 = vrot.lane.b32.xlu0 %v2466, 32
        %v2557 = vpop.permute.xlu0 %2556
        %2558 = vrot.lane.b32.xlu0 %v2467, 32
        %v2559 = vpop.permute.xlu0 %2558
        %2560 = vrot.lane.b32.xlu0 %v2468, 32
        %v2561 = vpop.permute.xlu0 %2560
        %2562 = vrot.lane.b32.xlu0 %v2469, 32
        %v2563 = vpop.permute.xlu0 %2562
        %2564 = vrot.lane.b32.xlu0 %v2470, 32
        %v2565 = vpop.permute.xlu0 %2564
        %2566 = vrot.lane.b32.xlu0 %v2471, 32
        %v2567 = vpop.permute.xlu0 %2566
        %2568 = vrot.lane.b32.xlu0 %v2472, 32
        %v2569 = vpop.permute.xlu0 %2568
        %2570 = vrot.lane.b32.xlu0 %v2473, 32
        %v2571 = vpop.permute.xlu0 %2570
        %2572 = vrot.lane.b32.xlu0 %v2474, 32
        %v2573 = vpop.permute.xlu0 %2572
        %2574 = vrot.lane.b32.xlu0 %v2475, 32
        %v2575 = vpop.permute.xlu0 %2574
        %2576 = vrot.lane.b32.xlu0 %v2476, 32
        %v2577 = vpop.permute.xlu0 %2576
        %2578 = vrot.lane.b32.xlu0 %v2477, 32
        %v2579 = vpop.permute.xlu0 %2578
        %2580 = vrot.lane.b32.xlu0 %v2478, 32
        %v2581 = vpop.permute.xlu0 %2580
        %2582 = vrot.lane.b32.xlu0 %v2479, 32
        %v2583 = vpop.permute.xlu0 %2582
        %2584 = vrot.lane.b32.xlu0 %v2480, 32
        %v2585 = vpop.permute.xlu0 %2584
        %2586 = vrot.lane.b32.xlu0 %v2481, 32
        %v2587 = vpop.permute.xlu0 %2586
        %2588 = vrot.lane.b32.xlu0 %v2482, 32
        %v2589 = vpop.permute.xlu0 %2588
        %2590 = vrot.lane.b32.xlu0 %v2483, 32
        %v2591 = vpop.permute.xlu0 %2590
        %2592 = vrot.lane.b32.xlu0 %v2484, 32
        %v2593 = vpop.permute.xlu0 %2592
        %2594 = vrot.lane.b32.xlu0 %v2485, 32
        %v2595 = vpop.permute.xlu0 %2594
        %2596 = vrot.lane.b32.xlu0 %v2486, 32
        %v2597 = vpop.permute.xlu0 %2596
        %2598 = vrot.lane.b32.xlu0 %v2487, 32
        %v2599 = vpop.permute.xlu0 %2598
        %2600 = vrot.lane.b32.xlu0 %v2488, 32
        %v2601 = vpop.permute.xlu0 %2600
        %2602 = vrot.lane.b32.xlu0 %v2489, 32
        %v2603 = vpop.permute.xlu0 %2602
        %2604 = vrot.lane.b32.xlu0 %v2490, 32
        %v2605 = vpop.permute.xlu0 %2604
        %2606 = vrot.lane.b32.xlu0 %v2491, 32
        %v2607 = vpop.permute.xlu0 %2606
        %2608 = vrot.lane.b32.xlu0 %v2492, 32
        %v2609 = vpop.permute.xlu0 %2608
        %2610 = vrot.lane.b32.xlu0 %v2493, 32
        %v2611 = vpop.permute.xlu0 %2610
        %2612 = vrot.lane.b32.xlu0 %v2494, 32
        %v2613 = vpop.permute.xlu0 %2612
        %2614 = vrot.lane.b32.xlu0 %v2495, 32
        %v2615 = vpop.permute.xlu0 %2614
        %2616 = vrot.lane.b32.xlu0 %v2496, 32
        %v2617 = vpop.permute.xlu0 %2616
        %2618 = vrot.lane.b32.xlu0 %v2497, 32
        %v2619 = vpop.permute.xlu0 %2618
        %2620 = vrot.lane.b32.xlu0 %v2498, 32
        %v2621 = vpop.permute.xlu0 %2620
        %2622 = vrot.lane.b32.xlu0 %v2499, 32
        %v2623 = vpop.permute.xlu0 %2622
        %2624 = vrot.lane.b32.xlu0 %v2500, 32
        %v2625 = vpop.permute.xlu0 %2624
        %2626 = vrot.lane.b32.xlu0 %v2501, 32
        %v2627 = vpop.permute.xlu0 %2626
        %vm2670 = vcmask 326912
        %2671 = vst.msk [vmem:[#allocation3] sm:$0xff] %vm2670, %v2545
        %2672 = vst.msk [vmem:[#allocation3 + $0x10] sm:$0xff] %vm2670, %v2547
        %2673 = vst.msk [vmem:[#allocation3 + $0x20] sm:$0xff] %vm2670, %v2549
        %2674 = vst.msk [vmem:[#allocation3 + $0x30] sm:$0xff] %vm2670, %v2551
        %2675 = vst.msk [vmem:[#allocation3 + $0x40] sm:$0xff] %vm2670, %v2553
        %2676 = vst.msk [vmem:[#allocation3 + $0x50] sm:$0xff] %vm2670, %v2555
        %2677 = vst.msk [vmem:[#allocation3 + $0x60] sm:$0xff] %vm2670, %v2557
        %2678 = vst.msk [vmem:[#allocation3 + $0x70] sm:$0xff] %vm2670, %v2559
        %2679 = vst.msk [vmem:[#allocation3 + $0x80] sm:$0xff] %vm2670, %v2561
        %2680 = vst.msk [vmem:[#allocation3 + $0x90] sm:$0xff] %vm2670, %v2563
        %2681 = vst.msk [vmem:[#allocation3 + $0xa0] sm:$0xff] %vm2670, %v2565
        %2682 = vst.msk [vmem:[#allocation3 + $0xb0] sm:$0xff] %vm2670, %v2567
        %2683 = vst.msk [vmem:[#allocation3 + $0xc0] sm:$0xff] %vm2670, %v2569
        %2684 = vst.msk [vmem:[#allocation3 + $0xd0] sm:$0xff] %vm2670, %v2571
        %2685 = vst.msk [vmem:[#allocation3 + $0xe0] sm:$0xff] %vm2670, %v2573
        %2686 = vst.msk [vmem:[#allocation3 + $0xf0] sm:$0xff] %vm2670, %v2575
        %2687 = vst.msk [vmem:[#allocation3 + $0x100] sm:$0xff] %vm2670, %v2577
        %2688 = vst.msk [vmem:[#allocation3 + $0x110] sm:$0xff] %vm2670, %v2579
        %2689 = vst.msk [vmem:[#allocation3 + $0x120] sm:$0xff] %vm2670, %v2581
        %2690 = vst.msk [vmem:[#allocation3 + $0x130] sm:$0xff] %vm2670, %v2583
        %2691 = vst.msk [vmem:[#allocation3 + $0x140] sm:$0xff] %vm2670, %v2585
        %2692 = vst.msk [vmem:[#allocation3 + $0x150] sm:$0xff] %vm2670, %v2587
        %2693 = vst.msk [vmem:[#allocation3 + $0x160] sm:$0xff] %vm2670, %v2589
        %2694 = vst.msk [vmem:[#allocation3 + $0x170] sm:$0xff] %vm2670, %v2591
        %2695 = vst.msk [vmem:[#allocation3 + $0x180] sm:$0xff] %vm2670, %v2593
        %2696 = vst.msk [vmem:[#allocation3 + $0x190] sm:$0xff] %vm2670, %v2595
        %2697 = vst.msk [vmem:[#allocation3 + $0x1a0] sm:$0xff] %vm2670, %v2597
        %2698 = vst.msk [vmem:[#allocation3 + $0x1b0] sm:$0xff] %vm2670, %v2599
        %2699 = vst.msk [vmem:[#allocation3 + $0x1c0] sm:$0xff] %vm2670, %v2601
        %2700 = vst.msk [vmem:[#allocation3 + $0x1d0] sm:$0xff] %vm2670, %v2603
        %2701 = vst.msk [vmem:[#allocation3 + $0x1e0] sm:$0xff] %vm2670, %v2605
        %2702 = vst.msk [vmem:[#allocation3 + $0x1f0] sm:$0xff] %vm2670, %v2607
        %2703 = vst.msk [vmem:[#allocation3 + $0x200] sm:$0xff] %vm2670, %v2609
        %2704 = vst.msk [vmem:[#allocation3 + $0x210] sm:$0xff] %vm2670, %v2611
        %2705 = vst.msk [vmem:[#allocation3 + $0x220] sm:$0xff] %vm2670, %v2613
        %2706 = vst.msk [vmem:[#allocation3 + $0x230] sm:$0xff] %vm2670, %v2615
        %2707 = vst.msk [vmem:[#allocation3 + $0x240] sm:$0xff] %vm2670, %v2617
        %2708 = vst.msk [vmem:[#allocation3 + $0x250] sm:$0xff] %vm2670, %v2619
        %2709 = vst.msk [vmem:[#allocation3 + $0x260] sm:$0xff] %vm2670, %v2621
        %2710 = vst.msk [vmem:[#allocation3 + $0x270] sm:$0xff] %vm2670, %v2623
        %2711 = vst.msk [vmem:[#allocation3 + $0x280] sm:$0xff] %vm2670, %v2625
        %vm2712 = vcmask 322816
        %2713 = vst.msk [vmem:[#allocation3 + $0x290] sm:$0xf] %vm2712, %v2627
        %v2714 = vld [vmem:[#allocation2 + $0xe] sm:$0xff]
        %v2715 = vld [vmem:[#allocation2 + $0x16] sm:$0xff]
        %v2716 = vld [vmem:[#allocation2 + $0x1e] sm:$0xff]
        %v2717 = vld [vmem:[#allocation2 + $0x26] sm:$0xff]
        %v2718 = vld [vmem:[#allocation2 + $0x2e] sm:$0xff]
        %v2719 = vld [vmem:[#allocation2 + $0x36] sm:$0xff]
        %v2720 = vld [vmem:[#allocation2 + $0x3e] sm:$0xff]
        %v2721 = vld [vmem:[#allocation2 + $0x46] sm:$0xff]
        %v2722 = vld [vmem:[#allocation2 + $0x4e] sm:$0xff]
        %v2723 = vld [vmem:[#allocation2 + $0x56] sm:$0xff]
        %v2724 = vld [vmem:[#allocation2 + $0x5e] sm:$0xff]
        %v2725 = vld [vmem:[#allocation2 + $0x66] sm:$0xff]
        %v2726 = vld [vmem:[#allocation2 + $0x6e] sm:$0xff]
        %v2727 = vld [vmem:[#allocation2 + $0x76] sm:$0xff]
        %v2728 = vld [vmem:[#allocation2 + $0x7e] sm:$0xff]
        %v2729 = vld [vmem:[#allocation2 + $0x86] sm:$0xff]
        %v2730 = vld [vmem:[#allocation2 + $0x8e] sm:$0xff]
        %v2731 = vld [vmem:[#allocation2 + $0x96] sm:$0xff]
        %v2732 = vld [vmem:[#allocation2 + $0x9e] sm:$0xff]
        %v2733 = vld [vmem:[#allocation2 + $0xa6] sm:$0xff]
        %v2734 = vld [vmem:[#allocation2 + $0xae] sm:$0xff]
        %v2735 = vld [vmem:[#allocation2 + $0xb6] sm:$0xff]
        %v2736 = vld [vmem:[#allocation2 + $0xbe] sm:$0xff]
        %v2737 = vld [vmem:[#allocation2 + $0xc6] sm:$0xff]
        %v2738 = vld [vmem:[#allocation2 + $0xce] sm:$0xff]
        %v2739 = vld [vmem:[#allocation2 + $0xd6] sm:$0xff]
        %v2740 = vld [vmem:[#allocation2 + $0xde] sm:$0xff]
        %v2741 = vld [vmem:[#allocation2 + $0xe6] sm:$0xff]
        %v2742 = vld [vmem:[#allocation2 + $0xee] sm:$0xff]
        %v2743 = vld [vmem:[#allocation2 + $0xf6] sm:$0xff]
        %v2744 = vld [vmem:[#allocation2 + $0xfe] sm:$0xff]
        %v2745 = vld [vmem:[#allocation2 + $0x106] sm:$0xff]
        %v2746 = vld [vmem:[#allocation2 + $0x10e] sm:$0xff]
        %v2747 = vld [vmem:[#allocation2 + $0x116] sm:$0xff]
        %v2748 = vld [vmem:[#allocation2 + $0x11e] sm:$0xff]
        %v2749 = vld [vmem:[#allocation2 + $0x126] sm:$0xff]
        %v2750 = vld [vmem:[#allocation2 + $0x12e] sm:$0xff]
        %v2751 = vld [vmem:[#allocation2 + $0x136] sm:$0xff]
        %v2752 = vld [vmem:[#allocation2 + $0x13e] sm:$0xff]
        %v2753 = vld [vmem:[#allocation2 + $0x146] sm:$0xff]
        %v2754 = vld [vmem:[#allocation2 + $0x14e] sm:$0xff]
        %v2755 = vld [vmem:[#allocation2 + $0x156] sm:$0xf]
        %2798 = vrot.lane.b32.xlu0 %v2714, 40
        %v2799 = vpop.permute.xlu0 %2798
        %2800 = vrot.lane.b32.xlu0 %v2715, 40
        %v2801 = vpop.permute.xlu0 %2800
        %2802 = vrot.lane.b32.xlu0 %v2716, 40
        %v2803 = vpop.permute.xlu0 %2802
        %2804 = vrot.lane.b32.xlu0 %v2717, 40
        %v2805 = vpop.permute.xlu0 %2804
        %2806 = vrot.lane.b32.xlu0 %v2718, 40
        %v2807 = vpop.permute.xlu0 %2806
        %2808 = vrot.lane.b32.xlu0 %v2719, 40
        %v2809 = vpop.permute.xlu0 %2808
        %2810 = vrot.lane.b32.xlu0 %v2720, 40
        %v2811 = vpop.permute.xlu0 %2810
        %2812 = vrot.lane.b32.xlu0 %v2721, 40
        %v2813 = vpop.permute.xlu0 %2812
        %2814 = vrot.lane.b32.xlu0 %v2722, 40
        %v2815 = vpop.permute.xlu0 %2814
        %2816 = vrot.lane.b32.xlu0 %v2723, 40
        %v2817 = vpop.permute.xlu0 %2816
        %2818 = vrot.lane.b32.xlu0 %v2724, 40
        %v2819 = vpop.permute.xlu0 %2818
        %2820 = vrot.lane.b32.xlu0 %v2725, 40
        %v2821 = vpop.permute.xlu0 %2820
        %2822 = vrot.lane.b32.xlu0 %v2726, 40
        %v2823 = vpop.permute.xlu0 %2822
        %2824 = vrot.lane.b32.xlu0 %v2727, 40
        %v2825 = vpop.permute.xlu0 %2824
        %2826 = vrot.lane.b32.xlu0 %v2728, 40
        %v2827 = vpop.permute.xlu0 %2826
        %2828 = vrot.lane.b32.xlu0 %v2729, 40
        %v2829 = vpop.permute.xlu0 %2828
        %2830 = vrot.lane.b32.xlu0 %v2730, 40
        %v2831 = vpop.permute.xlu0 %2830
        %2832 = vrot.lane.b32.xlu0 %v2731, 40
        %v2833 = vpop.permute.xlu0 %2832
        %2834 = vrot.lane.b32.xlu0 %v2732, 40
        %v2835 = vpop.permute.xlu0 %2834
        %2836 = vrot.lane.b32.xlu0 %v2733, 40
        %v2837 = vpop.permute.xlu0 %2836
        %2838 = vrot.lane.b32.xlu0 %v2734, 40
        %v2839 = vpop.permute.xlu0 %2838
        %2840 = vrot.lane.b32.xlu0 %v2735, 40
        %v2841 = vpop.permute.xlu0 %2840
        %2842 = vrot.lane.b32.xlu0 %v2736, 40
        %v2843 = vpop.permute.xlu0 %2842
        %2844 = vrot.lane.b32.xlu0 %v2737, 40
        %v2845 = vpop.permute.xlu0 %2844
        %2846 = vrot.lane.b32.xlu0 %v2738, 40
        %v2847 = vpop.permute.xlu0 %2846
        %2848 = vrot.lane.b32.xlu0 %v2739, 40
        %v2849 = vpop.permute.xlu0 %2848
        %2850 = vrot.lane.b32.xlu0 %v2740, 40
        %v2851 = vpop.permute.xlu0 %2850
        %2852 = vrot.lane.b32.xlu0 %v2741, 40
        %v2853 = vpop.permute.xlu0 %2852
        %2854 = vrot.lane.b32.xlu0 %v2742, 40
        %v2855 = vpop.permute.xlu0 %2854
        %2856 = vrot.lane.b32.xlu0 %v2743, 40
        %v2857 = vpop.permute.xlu0 %2856
        %2858 = vrot.lane.b32.xlu0 %v2744, 40
        %v2859 = vpop.permute.xlu0 %2858
        %2860 = vrot.lane.b32.xlu0 %v2745, 40
        %v2861 = vpop.permute.xlu0 %2860
        %2862 = vrot.lane.b32.xlu0 %v2746, 40
        %v2863 = vpop.permute.xlu0 %2862
        %2864 = vrot.lane.b32.xlu0 %v2747, 40
        %v2865 = vpop.permute.xlu0 %2864
        %2866 = vrot.lane.b32.xlu0 %v2748, 40
        %v2867 = vpop.permute.xlu0 %2866
        %2868 = vrot.lane.b32.xlu0 %v2749, 40
        %v2869 = vpop.permute.xlu0 %2868
        %2870 = vrot.lane.b32.xlu0 %v2750, 40
        %v2871 = vpop.permute.xlu0 %2870
        %2872 = vrot.lane.b32.xlu0 %v2751, 40
        %v2873 = vpop.permute.xlu0 %2872
        %2874 = vrot.lane.b32.xlu0 %v2752, 40
        %v2875 = vpop.permute.xlu0 %2874
        %2876 = vrot.lane.b32.xlu0 %v2753, 40
        %v2877 = vpop.permute.xlu0 %2876
        %2878 = vrot.lane.b32.xlu0 %v2754, 40
        %v2879 = vpop.permute.xlu0 %2878
        %2880 = vrot.lane.b32.xlu0 %v2755, 40
        %v2881 = vpop.permute.xlu0 %2880
        %vm2924 = vcmask 392512
        %2925 = vst.msk [vmem:[#allocation3] sm:$0xff] %vm2924, %v2799
        %2926 = vst.msk [vmem:[#allocation3 + $0x10] sm:$0xff] %vm2924, %v2801
        %2927 = vst.msk [vmem:[#allocation3 + $0x20] sm:$0xff] %vm2924, %v2803
        %2928 = vst.msk [vmem:[#allocation3 + $0x30] sm:$0xff] %vm2924, %v2805
        %2929 = vst.msk [vmem:[#allocation3 + $0x40] sm:$0xff] %vm2924, %v2807
        %2930 = vst.msk [vmem:[#allocation3 + $0x50] sm:$0xff] %vm2924, %v2809
        %2931 = vst.msk [vmem:[#allocation3 + $0x60] sm:$0xff] %vm2924, %v2811
        %2932 = vst.msk [vmem:[#allocation3 + $0x70] sm:$0xff] %vm2924, %v2813
        %2933 = vst.msk [vmem:[#allocation3 + $0x80] sm:$0xff] %vm2924, %v2815
        %2934 = vst.msk [vmem:[#allocation3 + $0x90] sm:$0xff] %vm2924, %v2817
        %2935 = vst.msk [vmem:[#allocation3 + $0xa0] sm:$0xff] %vm2924, %v2819
        %2936 = vst.msk [vmem:[#allocation3 + $0xb0] sm:$0xff] %vm2924, %v2821
        %2937 = vst.msk [vmem:[#allocation3 + $0xc0] sm:$0xff] %vm2924, %v2823
        %2938 = vst.msk [vmem:[#allocation3 + $0xd0] sm:$0xff] %vm2924, %v2825
        %2939 = vst.msk [vmem:[#allocation3 + $0xe0] sm:$0xff] %vm2924, %v2827
        %2940 = vst.msk [vmem:[#allocation3 + $0xf0] sm:$0xff] %vm2924, %v2829
        %2941 = vst.msk [vmem:[#allocation3 + $0x100] sm:$0xff] %vm2924, %v2831
        %2942 = vst.msk [vmem:[#allocation3 + $0x110] sm:$0xff] %vm2924, %v2833
        %2943 = vst.msk [vmem:[#allocation3 + $0x120] sm:$0xff] %vm2924, %v2835
        %2944 = vst.msk [vmem:[#allocation3 + $0x130] sm:$0xff] %vm2924, %v2837
        %2945 = vst.msk [vmem:[#allocation3 + $0x140] sm:$0xff] %vm2924, %v2839
        %2946 = vst.msk [vmem:[#allocation3 + $0x150] sm:$0xff] %vm2924, %v2841
        %2947 = vst.msk [vmem:[#allocation3 + $0x160] sm:$0xff] %vm2924, %v2843
        %2948 = vst.msk [vmem:[#allocation3 + $0x170] sm:$0xff] %vm2924, %v2845
        %2949 = vst.msk [vmem:[#allocation3 + $0x180] sm:$0xff] %vm2924, %v2847
        %2950 = vst.msk [vmem:[#allocation3 + $0x190] sm:$0xff] %vm2924, %v2849
        %2951 = vst.msk [vmem:[#allocation3 + $0x1a0] sm:$0xff] %vm2924, %v2851
        %2952 = vst.msk [vmem:[#allocation3 + $0x1b0] sm:$0xff] %vm2924, %v2853
        %2953 = vst.msk [vmem:[#allocation3 + $0x1c0] sm:$0xff] %vm2924, %v2855
        %2954 = vst.msk [vmem:[#allocation3 + $0x1d0] sm:$0xff] %vm2924, %v2857
        %2955 = vst.msk [vmem:[#allocation3 + $0x1e0] sm:$0xff] %vm2924, %v2859
        %2956 = vst.msk [vmem:[#allocation3 + $0x1f0] sm:$0xff] %vm2924, %v2861
        %2957 = vst.msk [vmem:[#allocation3 + $0x200] sm:$0xff] %vm2924, %v2863
        %2958 = vst.msk [vmem:[#allocation3 + $0x210] sm:$0xff] %vm2924, %v2865
        %2959 = vst.msk [vmem:[#allocation3 + $0x220] sm:$0xff] %vm2924, %v2867
        %2960 = vst.msk [vmem:[#allocation3 + $0x230] sm:$0xff] %vm2924, %v2869
        %2961 = vst.msk [vmem:[#allocation3 + $0x240] sm:$0xff] %vm2924, %v2871
        %2962 = vst.msk [vmem:[#allocation3 + $0x250] sm:$0xff] %vm2924, %v2873
        %2963 = vst.msk [vmem:[#allocation3 + $0x260] sm:$0xff] %vm2924, %v2875
        %2964 = vst.msk [vmem:[#allocation3 + $0x270] sm:$0xff] %vm2924, %v2877
        %2965 = vst.msk [vmem:[#allocation3 + $0x280] sm:$0xff] %vm2924, %v2879
        %vm2966 = vcmask 388416
        %2967 = vst.msk [vmem:[#allocation3 + $0x290] sm:$0xf] %vm2966, %v2881
        %v2968 = vld [vmem:[#allocation2 + $0xf] sm:$0xff]
        %v2969 = vld [vmem:[#allocation2 + $0x17] sm:$0xff]
        %v2970 = vld [vmem:[#allocation2 + $0x1f] sm:$0xff]
        %v2971 = vld [vmem:[#allocation2 + $0x27] sm:$0xff]
        %v2972 = vld [vmem:[#allocation2 + $0x2f] sm:$0xff]
        %v2973 = vld [vmem:[#allocation2 + $0x37] sm:$0xff]
        %v2974 = vld [vmem:[#allocation2 + $0x3f] sm:$0xff]
        %v2975 = vld [vmem:[#allocation2 + $0x47] sm:$0xff]
        %v2976 = vld [vmem:[#allocation2 + $0x4f] sm:$0xff]
        %v2977 = vld [vmem:[#allocation2 + $0x57] sm:$0xff]
        %v2978 = vld [vmem:[#allocation2 + $0x5f] sm:$0xff]
        %v2979 = vld [vmem:[#allocation2 + $0x67] sm:$0xff]
        %v2980 = vld [vmem:[#allocation2 + $0x6f] sm:$0xff]
        %v2981 = vld [vmem:[#allocation2 + $0x77] sm:$0xff]
        %v2982 = vld [vmem:[#allocation2 + $0x7f] sm:$0xff]
        %v2983 = vld [vmem:[#allocation2 + $0x87] sm:$0xff]
        %v2984 = vld [vmem:[#allocation2 + $0x8f] sm:$0xff]
        %v2985 = vld [vmem:[#allocation2 + $0x97] sm:$0xff]
        %v2986 = vld [vmem:[#allocation2 + $0x9f] sm:$0xff]
        %v2987 = vld [vmem:[#allocation2 + $0xa7] sm:$0xff]
        %v2988 = vld [vmem:[#allocation2 + $0xaf] sm:$0xff]
        %v2989 = vld [vmem:[#allocation2 + $0xb7] sm:$0xff]
        %v2990 = vld [vmem:[#allocation2 + $0xbf] sm:$0xff]
        %v2991 = vld [vmem:[#allocation2 + $0xc7] sm:$0xff]
        %v2992 = vld [vmem:[#allocation2 + $0xcf] sm:$0xff]
        %v2993 = vld [vmem:[#allocation2 + $0xd7] sm:$0xff]
        %v2994 = vld [vmem:[#allocation2 + $0xdf] sm:$0xff]
        %v2995 = vld [vmem:[#allocation2 + $0xe7] sm:$0xff]
        %v2996 = vld [vmem:[#allocation2 + $0xef] sm:$0xff]
        %v2997 = vld [vmem:[#allocation2 + $0xf7] sm:$0xff]
        %v2998 = vld [vmem:[#allocation2 + $0xff] sm:$0xff]
        %v2999 = vld [vmem:[#allocation2 + $0x107] sm:$0xff]
        %v3000 = vld [vmem:[#allocation2 + $0x10f] sm:$0xff]
        %v3001 = vld [vmem:[#allocation2 + $0x117] sm:$0xff]
        %v3002 = vld [vmem:[#allocation2 + $0x11f] sm:$0xff]
        %v3003 = vld [vmem:[#allocation2 + $0x127] sm:$0xff]
        %v3004 = vld [vmem:[#allocation2 + $0x12f] sm:$0xff]
        %v3005 = vld [vmem:[#allocation2 + $0x137] sm:$0xff]
        %v3006 = vld [vmem:[#allocation2 + $0x13f] sm:$0xff]
        %v3007 = vld [vmem:[#allocation2 + $0x147] sm:$0xff]
        %v3008 = vld [vmem:[#allocation2 + $0x14f] sm:$0xff]
        %v3009 = vld [vmem:[#allocation2 + $0x157] sm:$0xf]
        %3052 = vrot.lane.b32.xlu0 %v2968, 48
        %v3053 = vpop.permute.xlu0 %3052
        %3054 = vrot.lane.b32.xlu0 %v2969, 48
        %v3055 = vpop.permute.xlu0 %3054
        %3056 = vrot.lane.b32.xlu0 %v2970, 48
        %v3057 = vpop.permute.xlu0 %3056
        %3058 = vrot.lane.b32.xlu0 %v2971, 48
        %v3059 = vpop.permute.xlu0 %3058
        %3060 = vrot.lane.b32.xlu0 %v2972, 48
        %v3061 = vpop.permute.xlu0 %3060
        %3062 = vrot.lane.b32.xlu0 %v2973, 48
        %v3063 = vpop.permute.xlu0 %3062
        %3064 = vrot.lane.b32.xlu0 %v2974, 48
        %v3065 = vpop.permute.xlu0 %3064
        %3066 = vrot.lane.b32.xlu0 %v2975, 48
        %v3067 = vpop.permute.xlu0 %3066
        %3068 = vrot.lane.b32.xlu0 %v2976, 48
        %v3069 = vpop.permute.xlu0 %3068
        %3070 = vrot.lane.b32.xlu0 %v2977, 48
        %v3071 = vpop.permute.xlu0 %3070
        %3072 = vrot.lane.b32.xlu0 %v2978, 48
        %v3073 = vpop.permute.xlu0 %3072
        %3074 = vrot.lane.b32.xlu0 %v2979, 48
        %v3075 = vpop.permute.xlu0 %3074
        %3076 = vrot.lane.b32.xlu0 %v2980, 48
        %v3077 = vpop.permute.xlu0 %3076
        %3078 = vrot.lane.b32.xlu0 %v2981, 48
        %v3079 = vpop.permute.xlu0 %3078
        %3080 = vrot.lane.b32.xlu0 %v2982, 48
        %v3081 = vpop.permute.xlu0 %3080
        %3082 = vrot.lane.b32.xlu0 %v2983, 48
        %v3083 = vpop.permute.xlu0 %3082
        %3084 = vrot.lane.b32.xlu0 %v2984, 48
        %v3085 = vpop.permute.xlu0 %3084
        %3086 = vrot.lane.b32.xlu0 %v2985, 48
        %v3087 = vpop.permute.xlu0 %3086
        %3088 = vrot.lane.b32.xlu0 %v2986, 48
        %v3089 = vpop.permute.xlu0 %3088
        %3090 = vrot.lane.b32.xlu0 %v2987, 48
        %v3091 = vpop.permute.xlu0 %3090
        %3092 = vrot.lane.b32.xlu0 %v2988, 48
        %v3093 = vpop.permute.xlu0 %3092
        %3094 = vrot.lane.b32.xlu0 %v2989, 48
        %v3095 = vpop.permute.xlu0 %3094
        %3096 = vrot.lane.b32.xlu0 %v2990, 48
        %v3097 = vpop.permute.xlu0 %3096
        %3098 = vrot.lane.b32.xlu0 %v2991, 48
        %v3099 = vpop.permute.xlu0 %3098
        %3100 = vrot.lane.b32.xlu0 %v2992, 48
        %v3101 = vpop.permute.xlu0 %3100
        %3102 = vrot.lane.b32.xlu0 %v2993, 48
        %v3103 = vpop.permute.xlu0 %3102
        %3104 = vrot.lane.b32.xlu0 %v2994, 48
        %v3105 = vpop.permute.xlu0 %3104
        %3106 = vrot.lane.b32.xlu0 %v2995, 48
        %v3107 = vpop.permute.xlu0 %3106
        %3108 = vrot.lane.b32.xlu0 %v2996, 48
        %v3109 = vpop.permute.xlu0 %3108
        %3110 = vrot.lane.b32.xlu0 %v2997, 48
        %v3111 = vpop.permute.xlu0 %3110
        %3112 = vrot.lane.b32.xlu0 %v2998, 48
        %v3113 = vpop.permute.xlu0 %3112
        %3114 = vrot.lane.b32.xlu0 %v2999, 48
        %v3115 = vpop.permute.xlu0 %3114
        %3116 = vrot.lane.b32.xlu0 %v3000, 48
        %v3117 = vpop.permute.xlu0 %3116
        %3118 = vrot.lane.b32.xlu0 %v3001, 48
        %v3119 = vpop.permute.xlu0 %3118
        %3120 = vrot.lane.b32.xlu0 %v3002, 48
        %v3121 = vpop.permute.xlu0 %3120
        %3122 = vrot.lane.b32.xlu0 %v3003, 48
        %v3123 = vpop.permute.xlu0 %3122
        %3124 = vrot.lane.b32.xlu0 %v3004, 48
        %v3125 = vpop.permute.xlu0 %3124
        %3126 = vrot.lane.b32.xlu0 %v3005, 48
        %v3127 = vpop.permute.xlu0 %3126
        %3128 = vrot.lane.b32.xlu0 %v3006, 48
        %v3129 = vpop.permute.xlu0 %3128
        %3130 = vrot.lane.b32.xlu0 %v3007, 48
        %v3131 = vpop.permute.xlu0 %3130
        %3132 = vrot.lane.b32.xlu0 %v3008, 48
        %v3133 = vpop.permute.xlu0 %3132
        %3134 = vrot.lane.b32.xlu0 %v3009, 48
        %v3135 = vpop.permute.xlu0 %3134
        %vm3178 = vcmask 458112
        %3179 = vst.msk [vmem:[#allocation3] sm:$0xff] %vm3178, %v3053
        %3180 = vst.msk [vmem:[#allocation3 + $0x10] sm:$0xff] %vm3178, %v3055
        %3181 = vst.msk [vmem:[#allocation3 + $0x20] sm:$0xff] %vm3178, %v3057
        %3182 = vst.msk [vmem:[#allocation3 + $0x30] sm:$0xff] %vm3178, %v3059
        %3183 = vst.msk [vmem:[#allocation3 + $0x40] sm:$0xff] %vm3178, %v3061
        %3184 = vst.msk [vmem:[#allocation3 + $0x50] sm:$0xff] %vm3178, %v3063
        %3185 = vst.msk [vmem:[#allocation3 + $0x60] sm:$0xff] %vm3178, %v3065
        %3186 = vst.msk [vmem:[#allocation3 + $0x70] sm:$0xff] %vm3178, %v3067
        %3187 = vst.msk [vmem:[#allocation3 + $0x80] sm:$0xff] %vm3178, %v3069
        %3188 = vst.msk [vmem:[#allocation3 + $0x90] sm:$0xff] %vm3178, %v3071
        %3189 = vst.msk [vmem:[#allocation3 + $0xa0] sm:$0xff] %vm3178, %v3073
        %3190 = vst.msk [vmem:[#allocation3 + $0xb0] sm:$0xff] %vm3178, %v3075
        %3191 = vst.msk [vmem:[#allocation3 + $0xc0] sm:$0xff] %vm3178, %v3077
        %3192 = vst.msk [vmem:[#allocation3 + $0xd0] sm:$0xff] %vm3178, %v3079
        %3193 = vst.msk [vmem:[#allocation3 + $0xe0] sm:$0xff] %vm3178, %v3081
        %3194 = vst.msk [vmem:[#allocation3 + $0xf0] sm:$0xff] %vm3178, %v3083
        %3195 = vst.msk [vmem:[#allocation3 + $0x100] sm:$0xff] %vm3178, %v3085
        %3196 = vst.msk [vmem:[#allocation3 + $0x110] sm:$0xff] %vm3178, %v3087
        %3197 = vst.msk [vmem:[#allocation3 + $0x120] sm:$0xff] %vm3178, %v3089
        %3198 = vst.msk [vmem:[#allocation3 + $0x130] sm:$0xff] %vm3178, %v3091
        %3199 = vst.msk [vmem:[#allocation3 + $0x140] sm:$0xff] %vm3178, %v3093
        %3200 = vst.msk [vmem:[#allocation3 + $0x150] sm:$0xff] %vm3178, %v3095
        %3201 = vst.msk [vmem:[#allocation3 + $0x160] sm:$0xff] %vm3178, %v3097
        %3202 = vst.msk [vmem:[#allocation3 + $0x170] sm:$0xff] %vm3178, %v3099
        %3203 = vst.msk [vmem:[#allocation3 + $0x180] sm:$0xff] %vm3178, %v3101
        %3204 = vst.msk [vmem:[#allocation3 + $0x190] sm:$0xff] %vm3178, %v3103
        %3205 = vst.msk [vmem:[#allocation3 + $0x1a0] sm:$0xff] %vm3178, %v3105
        %3206 = vst.msk [vmem:[#allocation3 + $0x1b0] sm:$0xff] %vm3178, %v3107
        %3207 = vst.msk [vmem:[#allocation3 + $0x1c0] sm:$0xff] %vm3178, %v3109
        %3208 = vst.msk [vmem:[#allocation3 + $0x1d0] sm:$0xff] %vm3178, %v3111
        %3209 = vst.msk [vmem:[#allocation3 + $0x1e0] sm:$0xff] %vm3178, %v3113
        %3210 = vst.msk [vmem:[#allocation3 + $0x1f0] sm:$0xff] %vm3178, %v3115
        %3211 = vst.msk [vmem:[#allocation3 + $0x200] sm:$0xff] %vm3178, %v3117
        %3212 = vst.msk [vmem:[#allocation3 + $0x210] sm:$0xff] %vm3178, %v3119
        %3213 = vst.msk [vmem:[#allocation3 + $0x220] sm:$0xff] %vm3178, %v3121
        %3214 = vst.msk [vmem:[#allocation3 + $0x230] sm:$0xff] %vm3178, %v3123
        %3215 = vst.msk [vmem:[#allocation3 + $0x240] sm:$0xff] %vm3178, %v3125
        %3216 = vst.msk [vmem:[#allocation3 + $0x250] sm:$0xff] %vm3178, %v3127
        %3217 = vst.msk [vmem:[#allocation3 + $0x260] sm:$0xff] %vm3178, %v3129
        %3218 = vst.msk [vmem:[#allocation3 + $0x270] sm:$0xff] %vm3178, %v3131
        %3219 = vst.msk [vmem:[#allocation3 + $0x280] sm:$0xff] %vm3178, %v3133
        %vm3220 = vcmask 454016
        %3221 = vst.msk [vmem:[#allocation3 + $0x290] sm:$0xf] %vm3220, %v3135
        %v3222 = vld [vmem:[#allocation2 + $0x10] sm:$0xff]
        %v3223 = vld [vmem:[#allocation2 + $0x18] sm:$0xff]
        %v3224 = vld [vmem:[#allocation2 + $0x20] sm:$0xff]
        %v3225 = vld [vmem:[#allocation2 + $0x28] sm:$0xff]
        %v3226 = vld [vmem:[#allocation2 + $0x30] sm:$0xff]
        %v3227 = vld [vmem:[#allocation2 + $0x38] sm:$0xff]
        %v3228 = vld [vmem:[#allocation2 + $0x40] sm:$0xff]
        %v3229 = vld [vmem:[#allocation2 + $0x48] sm:$0xff]
        %v3230 = vld [vmem:[#allocation2 + $0x50] sm:$0xff]
        %v3231 = vld [vmem:[#allocation2 + $0x58] sm:$0xff]
        %v3232 = vld [vmem:[#allocation2 + $0x60] sm:$0xff]
        %v3233 = vld [vmem:[#allocation2 + $0x68] sm:$0xff]
        %v3234 = vld [vmem:[#allocation2 + $0x70] sm:$0xff]
        %v3235 = vld [vmem:[#allocation2 + $0x78] sm:$0xff]
        %v3236 = vld [vmem:[#allocation2 + $0x80] sm:$0xff]
        %v3237 = vld [vmem:[#allocation2 + $0x88] sm:$0xff]
        %v3238 = vld [vmem:[#allocation2 + $0x90] sm:$0xff]
        %v3239 = vld [vmem:[#allocation2 + $0x98] sm:$0xff]
        %v3240 = vld [vmem:[#allocation2 + $0xa0] sm:$0xff]
        %v3241 = vld [vmem:[#allocation2 + $0xa8] sm:$0xff]
        %v3242 = vld [vmem:[#allocation2 + $0xb0] sm:$0xff]
        %v3243 = vld [vmem:[#allocation2 + $0xb8] sm:$0xff]
        %v3244 = vld [vmem:[#allocation2 + $0xc0] sm:$0xff]
        %v3245 = vld [vmem:[#allocation2 + $0xc8] sm:$0xff]
        %v3246 = vld [vmem:[#allocation2 + $0xd0] sm:$0xff]
        %v3247 = vld [vmem:[#allocation2 + $0xd8] sm:$0xff]
        %v3248 = vld [vmem:[#allocation2 + $0xe0] sm:$0xff]
        %v3249 = vld [vmem:[#allocation2 + $0xe8] sm:$0xff]
        %v3250 = vld [vmem:[#allocation2 + $0xf0] sm:$0xff]
        %v3251 = vld [vmem:[#allocation2 + $0xf8] sm:$0xff]
        %v3252 = vld [vmem:[#allocation2 + $0x100] sm:$0xff]
        %v3253 = vld [vmem:[#allocation2 + $0x108] sm:$0xff]
        %v3254 = vld [vmem:[#allocation2 + $0x110] sm:$0xff]
        %v3255 = vld [vmem:[#allocation2 + $0x118] sm:$0xff]
        %v3256 = vld [vmem:[#allocation2 + $0x120] sm:$0xff]
        %v3257 = vld [vmem:[#allocation2 + $0x128] sm:$0xff]
        %v3258 = vld [vmem:[#allocation2 + $0x130] sm:$0xff]
        %v3259 = vld [vmem:[#allocation2 + $0x138] sm:$0xff]
        %v3260 = vld [vmem:[#allocation2 + $0x140] sm:$0xff]
        %v3261 = vld [vmem:[#allocation2 + $0x148] sm:$0xff]
        %v3262 = vld [vmem:[#allocation2 + $0x150] sm:$0xff]
        %v3263 = vld [vmem:[#allocation2 + $0x158] sm:$0xf]
        %3306 = vrot.lane.b32.xlu0 %v3222, 56
        %v3307 = vpop.permute.xlu0 %3306
        %3308 = vrot.lane.b32.xlu0 %v3223, 56
        %v3309 = vpop.permute.xlu0 %3308
        %3310 = vrot.lane.b32.xlu0 %v3224, 56
        %v3311 = vpop.permute.xlu0 %3310
        %3312 = vrot.lane.b32.xlu0 %v3225, 56
        %v3313 = vpop.permute.xlu0 %3312
        %3314 = vrot.lane.b32.xlu0 %v3226, 56
        %v3315 = vpop.permute.xlu0 %3314
        %3316 = vrot.lane.b32.xlu0 %v3227, 56
        %v3317 = vpop.permute.xlu0 %3316
        %3318 = vrot.lane.b32.xlu0 %v3228, 56
        %v3319 = vpop.permute.xlu0 %3318
        %3320 = vrot.lane.b32.xlu0 %v3229, 56
        %v3321 = vpop.permute.xlu0 %3320
        %3322 = vrot.lane.b32.xlu0 %v3230, 56
        %v3323 = vpop.permute.xlu0 %3322
        %3324 = vrot.lane.b32.xlu0 %v3231, 56
        %v3325 = vpop.permute.xlu0 %3324
        %3326 = vrot.lane.b32.xlu0 %v3232, 56
        %v3327 = vpop.permute.xlu0 %3326
        %3328 = vrot.lane.b32.xlu0 %v3233, 56
        %v3329 = vpop.permute.xlu0 %3328
        %3330 = vrot.lane.b32.xlu0 %v3234, 56
        %v3331 = vpop.permute.xlu0 %3330
        %3332 = vrot.lane.b32.xlu0 %v3235, 56
        %v3333 = vpop.permute.xlu0 %3332
        %3334 = vrot.lane.b32.xlu0 %v3236, 56
        %v3335 = vpop.permute.xlu0 %3334
        %3336 = vrot.lane.b32.xlu0 %v3237, 56
        %v3337 = vpop.permute.xlu0 %3336
        %3338 = vrot.lane.b32.xlu0 %v3238, 56
        %v3339 = vpop.permute.xlu0 %3338
        %3340 = vrot.lane.b32.xlu0 %v3239, 56
        %v3341 = vpop.permute.xlu0 %3340
        %3342 = vrot.lane.b32.xlu0 %v3240, 56
        %v3343 = vpop.permute.xlu0 %3342
        %3344 = vrot.lane.b32.xlu0 %v3241, 56
        %v3345 = vpop.permute.xlu0 %3344
        %3346 = vrot.lane.b32.xlu0 %v3242, 56
        %v3347 = vpop.permute.xlu0 %3346
        %3348 = vrot.lane.b32.xlu0 %v3243, 56
        %v3349 = vpop.permute.xlu0 %3348
        %3350 = vrot.lane.b32.xlu0 %v3244, 56
        %v3351 = vpop.permute.xlu0 %3350
        %3352 = vrot.lane.b32.xlu0 %v3245, 56
        %v3353 = vpop.permute.xlu0 %3352
        %3354 = vrot.lane.b32.xlu0 %v3246, 56
        %v3355 = vpop.permute.xlu0 %3354
        %3356 = vrot.lane.b32.xlu0 %v3247, 56
        %v3357 = vpop.permute.xlu0 %3356
        %3358 = vrot.lane.b32.xlu0 %v3248, 56
        %v3359 = vpop.permute.xlu0 %3358
        %3360 = vrot.lane.b32.xlu0 %v3249, 56
        %v3361 = vpop.permute.xlu0 %3360
        %3362 = vrot.lane.b32.xlu0 %v3250, 56
        %v3363 = vpop.permute.xlu0 %3362
        %3364 = vrot.lane.b32.xlu0 %v3251, 56
        %v3365 = vpop.permute.xlu0 %3364
        %3366 = vrot.lane.b32.xlu0 %v3252, 56
        %v3367 = vpop.permute.xlu0 %3366
        %3368 = vrot.lane.b32.xlu0 %v3253, 56
        %v3369 = vpop.permute.xlu0 %3368
        %3370 = vrot.lane.b32.xlu0 %v3254, 56
        %v3371 = vpop.permute.xlu0 %3370
        %3372 = vrot.lane.b32.xlu0 %v3255, 56
        %v3373 = vpop.permute.xlu0 %3372
        %3374 = vrot.lane.b32.xlu0 %v3256, 56
        %v3375 = vpop.permute.xlu0 %3374
        %3376 = vrot.lane.b32.xlu0 %v3257, 56
        %v3377 = vpop.permute.xlu0 %3376
        %3378 = vrot.lane.b32.xlu0 %v3258, 56
        %v3379 = vpop.permute.xlu0 %3378
        %3380 = vrot.lane.b32.xlu0 %v3259, 56
        %v3381 = vpop.permute.xlu0 %3380
        %3382 = vrot.lane.b32.xlu0 %v3260, 56
        %v3383 = vpop.permute.xlu0 %3382
        %3384 = vrot.lane.b32.xlu0 %v3261, 56
        %v3385 = vpop.permute.xlu0 %3384
        %3386 = vrot.lane.b32.xlu0 %v3262, 56
        %v3387 = vpop.permute.xlu0 %3386
        %3388 = vrot.lane.b32.xlu0 %v3263, 56
        %v3389 = vpop.permute.xlu0 %3388
        %vm3432 = vcmask 523712
        %3433 = vst.msk [vmem:[#allocation3] sm:$0xff] %vm3432, %v3307
        %3434 = vst.msk [vmem:[#allocation3 + $0x10] sm:$0xff] %vm3432, %v3309
        %3435 = vst.msk [vmem:[#allocation3 + $0x20] sm:$0xff] %vm3432, %v3311
        %3436 = vst.msk [vmem:[#allocation3 + $0x30] sm:$0xff] %vm3432, %v3313
        %3437 = vst.msk [vmem:[#allocation3 + $0x40] sm:$0xff] %vm3432, %v3315
        %3438 = vst.msk [vmem:[#allocation3 + $0x50] sm:$0xff] %vm3432, %v3317
        %3439 = vst.msk [vmem:[#allocation3 + $0x60] sm:$0xff] %vm3432, %v3319
        %3440 = vst.msk [vmem:[#allocation3 + $0x70] sm:$0xff] %vm3432, %v3321
        %3441 = vst.msk [vmem:[#allocation3 + $0x80] sm:$0xff] %vm3432, %v3323
        %3442 = vst.msk [vmem:[#allocation3 + $0x90] sm:$0xff] %vm3432, %v3325
        %3443 = vst.msk [vmem:[#allocation3 + $0xa0] sm:$0xff] %vm3432, %v3327
        %3444 = vst.msk [vmem:[#allocation3 + $0xb0] sm:$0xff] %vm3432, %v3329
        %3445 = vst.msk [vmem:[#allocation3 + $0xc0] sm:$0xff] %vm3432, %v3331
        %3446 = vst.msk [vmem:[#allocation3 + $0xd0] sm:$0xff] %vm3432, %v3333
        %3447 = vst.msk [vmem:[#allocation3 + $0xe0] sm:$0xff] %vm3432, %v3335
        %3448 = vst.msk [vmem:[#allocation3 + $0xf0] sm:$0xff] %vm3432, %v3337
        %3449 = vst.msk [vmem:[#allocation3 + $0x100] sm:$0xff] %vm3432, %v3339
        %3450 = vst.msk [vmem:[#allocation3 + $0x110] sm:$0xff] %vm3432, %v3341
        %3451 = vst.msk [vmem:[#allocation3 + $0x120] sm:$0xff] %vm3432, %v3343
        %3452 = vst.msk [vmem:[#allocation3 + $0x130] sm:$0xff] %vm3432, %v3345
        %3453 = vst.msk [vmem:[#allocation3 + $0x140] sm:$0xff] %vm3432, %v3347
        %3454 = vst.msk [vmem:[#allocation3 + $0x150] sm:$0xff] %vm3432, %v3349
        %3455 = vst.msk [vmem:[#allocation3 + $0x160] sm:$0xff] %vm3432, %v3351
        %3456 = vst.msk [vmem:[#allocation3 + $0x170] sm:$0xff] %vm3432, %v3353
        %3457 = vst.msk [vmem:[#allocation3 + $0x180] sm:$0xff] %vm3432, %v3355
        %3458 = vst.msk [vmem:[#allocation3 + $0x190] sm:$0xff] %vm3432, %v3357
        %3459 = vst.msk [vmem:[#allocation3 + $0x1a0] sm:$0xff] %vm3432, %v3359
        %3460 = vst.msk [vmem:[#allocation3 + $0x1b0] sm:$0xff] %vm3432, %v3361
        %3461 = vst.msk [vmem:[#allocation3 + $0x1c0] sm:$0xff] %vm3432, %v3363
        %3462 = vst.msk [vmem:[#allocation3 + $0x1d0] sm:$0xff] %vm3432, %v3365
        %3463 = vst.msk [vmem:[#allocation3 + $0x1e0] sm:$0xff] %vm3432, %v3367
        %3464 = vst.msk [vmem:[#allocation3 + $0x1f0] sm:$0xff] %vm3432, %v3369
        %3465 = vst.msk [vmem:[#allocation3 + $0x200] sm:$0xff] %vm3432, %v3371
        %3466 = vst.msk [vmem:[#allocation3 + $0x210] sm:$0xff] %vm3432, %v3373
        %3467 = vst.msk [vmem:[#allocation3 + $0x220] sm:$0xff] %vm3432, %v3375
        %3468 = vst.msk [vmem:[#allocation3 + $0x230] sm:$0xff] %vm3432, %v3377
        %3469 = vst.msk [vmem:[#allocation3 + $0x240] sm:$0xff] %vm3432, %v3379
        %3470 = vst.msk [vmem:[#allocation3 + $0x250] sm:$0xff] %vm3432, %v3381
        %3471 = vst.msk [vmem:[#allocation3 + $0x260] sm:$0xff] %vm3432, %v3383
        %3472 = vst.msk [vmem:[#allocation3 + $0x270] sm:$0xff] %vm3432, %v3385
        %3473 = vst.msk [vmem:[#allocation3 + $0x280] sm:$0xff] %vm3432, %v3387
        %vm3474 = vcmask 519616
        %3475 = vst.msk [vmem:[#allocation3 + $0x290] sm:$0xf] %vm3474, %v3389
        %v3476 = vld [vmem:[#allocation2 + $0x11] sm:$0xff]
        %v3477 = vld [vmem:[#allocation2 + $0x19] sm:$0xff]
        %v3478 = vld [vmem:[#allocation2 + $0x21] sm:$0xff]
        %v3479 = vld [vmem:[#allocation2 + $0x29] sm:$0xff]
        %v3480 = vld [vmem:[#allocation2 + $0x31] sm:$0xff]
        %v3481 = vld [vmem:[#allocation2 + $0x39] sm:$0xff]
        %v3482 = vld [vmem:[#allocation2 + $0x41] sm:$0xff]
        %v3483 = vld [vmem:[#allocation2 + $0x49] sm:$0xff]
        %v3484 = vld [vmem:[#allocation2 + $0x51] sm:$0xff]
        %v3485 = vld [vmem:[#allocation2 + $0x59] sm:$0xff]
        %v3486 = vld [vmem:[#allocation2 + $0x61] sm:$0xff]
        %v3487 = vld [vmem:[#allocation2 + $0x69] sm:$0xff]
        %v3488 = vld [vmem:[#allocation2 + $0x71] sm:$0xff]
        %v3489 = vld [vmem:[#allocation2 + $0x79] sm:$0xff]
        %v3490 = vld [vmem:[#allocation2 + $0x81] sm:$0xff]
        %v3491 = vld [vmem:[#allocation2 + $0x89] sm:$0xff]
        %v3492 = vld [vmem:[#allocation2 + $0x91] sm:$0xff]
        %v3493 = vld [vmem:[#allocation2 + $0x99] sm:$0xff]
        %v3494 = vld [vmem:[#allocation2 + $0xa1] sm:$0xff]
        %v3495 = vld [vmem:[#allocation2 + $0xa9] sm:$0xff]
        %v3496 = vld [vmem:[#allocation2 + $0xb1] sm:$0xff]
        %v3497 = vld [vmem:[#allocation2 + $0xb9] sm:$0xff]
        %v3498 = vld [vmem:[#allocation2 + $0xc1] sm:$0xff]
        %v3499 = vld [vmem:[#allocation2 + $0xc9] sm:$0xff]
        %v3500 = vld [vmem:[#allocation2 + $0xd1] sm:$0xff]
        %v3501 = vld [vmem:[#allocation2 + $0xd9] sm:$0xff]
        %v3502 = vld [vmem:[#allocation2 + $0xe1] sm:$0xff]
        %v3503 = vld [vmem:[#allocation2 + $0xe9] sm:$0xff]
        %v3504 = vld [vmem:[#allocation2 + $0xf1] sm:$0xff]
        %v3505 = vld [vmem:[#allocation2 + $0xf9] sm:$0xff]
        %v3506 = vld [vmem:[#allocation2 + $0x101] sm:$0xff]
        %v3507 = vld [vmem:[#allocation2 + $0x109] sm:$0xff]
        %v3508 = vld [vmem:[#allocation2 + $0x111] sm:$0xff]
        %v3509 = vld [vmem:[#allocation2 + $0x119] sm:$0xff]
        %v3510 = vld [vmem:[#allocation2 + $0x121] sm:$0xff]
        %v3511 = vld [vmem:[#allocation2 + $0x129] sm:$0xff]
        %v3512 = vld [vmem:[#allocation2 + $0x131] sm:$0xff]
        %v3513 = vld [vmem:[#allocation2 + $0x139] sm:$0xff]
        %v3514 = vld [vmem:[#allocation2 + $0x141] sm:$0xff]
        %v3515 = vld [vmem:[#allocation2 + $0x149] sm:$0xff]
        %v3516 = vld [vmem:[#allocation2 + $0x151] sm:$0xff]
        %v3517 = vld [vmem:[#allocation2 + $0x159] sm:$0xf]
        %3560 = vrot.lane.b32.xlu0 %v3476, 64
        %v3561 = vpop.permute.xlu0 %3560
        %3562 = vrot.lane.b32.xlu0 %v3477, 64
        %v3563 = vpop.permute.xlu0 %3562
        %3564 = vrot.lane.b32.xlu0 %v3478, 64
        %v3565 = vpop.permute.xlu0 %3564
        %3566 = vrot.lane.b32.xlu0 %v3479, 64
        %v3567 = vpop.permute.xlu0 %3566
        %3568 = vrot.lane.b32.xlu0 %v3480, 64
        %v3569 = vpop.permute.xlu0 %3568
        %3570 = vrot.lane.b32.xlu0 %v3481, 64
        %v3571 = vpop.permute.xlu0 %3570
        %3572 = vrot.lane.b32.xlu0 %v3482, 64
        %v3573 = vpop.permute.xlu0 %3572
        %3574 = vrot.lane.b32.xlu0 %v3483, 64
        %v3575 = vpop.permute.xlu0 %3574
        %3576 = vrot.lane.b32.xlu0 %v3484, 64
        %v3577 = vpop.permute.xlu0 %3576
        %3578 = vrot.lane.b32.xlu0 %v3485, 64
        %v3579 = vpop.permute.xlu0 %3578
        %3580 = vrot.lane.b32.xlu0 %v3486, 64
        %v3581 = vpop.permute.xlu0 %3580
        %3582 = vrot.lane.b32.xlu0 %v3487, 64
        %v3583 = vpop.permute.xlu0 %3582
        %3584 = vrot.lane.b32.xlu0 %v3488, 64
        %v3585 = vpop.permute.xlu0 %3584
        %3586 = vrot.lane.b32.xlu0 %v3489, 64
        %v3587 = vpop.permute.xlu0 %3586
        %3588 = vrot.lane.b32.xlu0 %v3490, 64
        %v3589 = vpop.permute.xlu0 %3588
        %3590 = vrot.lane.b32.xlu0 %v3491, 64
        %v3591 = vpop.permute.xlu0 %3590
        %3592 = vrot.lane.b32.xlu0 %v3492, 64
        %v3593 = vpop.permute.xlu0 %3592
        %3594 = vrot.lane.b32.xlu0 %v3493, 64
        %v3595 = vpop.permute.xlu0 %3594
        %3596 = vrot.lane.b32.xlu0 %v3494, 64
        %v3597 = vpop.permute.xlu0 %3596
        %3598 = vrot.lane.b32.xlu0 %v3495, 64
        %v3599 = vpop.permute.xlu0 %3598
        %3600 = vrot.lane.b32.xlu0 %v3496, 64
        %v3601 = vpop.permute.xlu0 %3600
        %3602 = vrot.lane.b32.xlu0 %v3497, 64
        %v3603 = vpop.permute.xlu0 %3602
        %3604 = vrot.lane.b32.xlu0 %v3498, 64
        %v3605 = vpop.permute.xlu0 %3604
        %3606 = vrot.lane.b32.xlu0 %v3499, 64
        %v3607 = vpop.permute.xlu0 %3606
        %3608 = vrot.lane.b32.xlu0 %v3500, 64
        %v3609 = vpop.permute.xlu0 %3608
        %3610 = vrot.lane.b32.xlu0 %v3501, 64
        %v3611 = vpop.permute.xlu0 %3610
        %3612 = vrot.lane.b32.xlu0 %v3502, 64
        %v3613 = vpop.permute.xlu0 %3612
        %3614 = vrot.lane.b32.xlu0 %v3503, 64
        %v3615 = vpop.permute.xlu0 %3614
        %3616 = vrot.lane.b32.xlu0 %v3504, 64
        %v3617 = vpop.permute.xlu0 %3616
        %3618 = vrot.lane.b32.xlu0 %v3505, 64
        %v3619 = vpop.permute.xlu0 %3618
        %3620 = vrot.lane.b32.xlu0 %v3506, 64
        %v3621 = vpop.permute.xlu0 %3620
        %3622 = vrot.lane.b32.xlu0 %v3507, 64
        %v3623 = vpop.permute.xlu0 %3622
        %3624 = vrot.lane.b32.xlu0 %v3508, 64
        %v3625 = vpop.permute.xlu0 %3624
        %3626 = vrot.lane.b32.xlu0 %v3509, 64
        %v3627 = vpop.permute.xlu0 %3626
        %3628 = vrot.lane.b32.xlu0 %v3510, 64
        %v3629 = vpop.permute.xlu0 %3628
        %3630 = vrot.lane.b32.xlu0 %v3511, 64
        %v3631 = vpop.permute.xlu0 %3630
        %3632 = vrot.lane.b32.xlu0 %v3512, 64
        %v3633 = vpop.permute.xlu0 %3632
        %3634 = vrot.lane.b32.xlu0 %v3513, 64
        %v3635 = vpop.permute.xlu0 %3634
        %3636 = vrot.lane.b32.xlu0 %v3514, 64
        %v3637 = vpop.permute.xlu0 %3636
        %3638 = vrot.lane.b32.xlu0 %v3515, 64
        %v3639 = vpop.permute.xlu0 %3638
        %3640 = vrot.lane.b32.xlu0 %v3516, 64
        %v3641 = vpop.permute.xlu0 %3640
        %3642 = vrot.lane.b32.xlu0 %v3517, 64
        %v3643 = vpop.permute.xlu0 %3642
        %vm3686 = vcmask 589312
        %3687 = vst.msk [vmem:[#allocation3] sm:$0xff] %vm3686, %v3561
        %3688 = vst.msk [vmem:[#allocation3 + $0x10] sm:$0xff] %vm3686, %v3563
        %3689 = vst.msk [vmem:[#allocation3 + $0x20] sm:$0xff] %vm3686, %v3565
        %3690 = vst.msk [vmem:[#allocation3 + $0x30] sm:$0xff] %vm3686, %v3567
        %3691 = vst.msk [vmem:[#allocation3 + $0x40] sm:$0xff] %vm3686, %v3569
        %3692 = vst.msk [vmem:[#allocation3 + $0x50] sm:$0xff] %vm3686, %v3571
        %3693 = vst.msk [vmem:[#allocation3 + $0x60] sm:$0xff] %vm3686, %v3573
        %3694 = vst.msk [vmem:[#allocation3 + $0x70] sm:$0xff] %vm3686, %v3575
        %3695 = vst.msk [vmem:[#allocation3 + $0x80] sm:$0xff] %vm3686, %v3577
        %3696 = vst.msk [vmem:[#allocation3 + $0x90] sm:$0xff] %vm3686, %v3579
        %3697 = vst.msk [vmem:[#allocation3 + $0xa0] sm:$0xff] %vm3686, %v3581
        %3698 = vst.msk [vmem:[#allocation3 + $0xb0] sm:$0xff] %vm3686, %v3583
        %3699 = vst.msk [vmem:[#allocation3 + $0xc0] sm:$0xff] %vm3686, %v3585
        %3700 = vst.msk [vmem:[#allocation3 + $0xd0] sm:$0xff] %vm3686, %v3587
        %3701 = vst.msk [vmem:[#allocation3 + $0xe0] sm:$0xff] %vm3686, %v3589
        %3702 = vst.msk [vmem:[#allocation3 + $0xf0] sm:$0xff] %vm3686, %v3591
        %3703 = vst.msk [vmem:[#allocation3 + $0x100] sm:$0xff] %vm3686, %v3593
        %3704 = vst.msk [vmem:[#allocation3 + $0x110] sm:$0xff] %vm3686, %v3595
        %3705 = vst.msk [vmem:[#allocation3 + $0x120] sm:$0xff] %vm3686, %v3597
        %3706 = vst.msk [vmem:[#allocation3 + $0x130] sm:$0xff] %vm3686, %v3599
        %3707 = vst.msk [vmem:[#allocation3 + $0x140] sm:$0xff] %vm3686, %v3601
        %3708 = vst.msk [vmem:[#allocation3 + $0x150] sm:$0xff] %vm3686, %v3603
        %3709 = vst.msk [vmem:[#allocation3 + $0x160] sm:$0xff] %vm3686, %v3605
        %3710 = vst.msk [vmem:[#allocation3 + $0x170] sm:$0xff] %vm3686, %v3607
        %3711 = vst.msk [vmem:[#allocation3 + $0x180] sm:$0xff] %vm3686, %v3609
        %3712 = vst.msk [vmem:[#allocation3 + $0x190] sm:$0xff] %vm3686, %v3611
        %3713 = vst.msk [vmem:[#allocation3 + $0x1a0] sm:$0xff] %vm3686, %v3613
        %3714 = vst.msk [vmem:[#allocation3 + $0x1b0] sm:$0xff] %vm3686, %v3615
        %3715 = vst.msk [vmem:[#allocation3 + $0x1c0] sm:$0xff] %vm3686, %v3617
        %3716 = vst.msk [vmem:[#allocation3 + $0x1d0] sm:$0xff] %vm3686, %v3619
        %3717 = vst.msk [vmem:[#allocation3 + $0x1e0] sm:$0xff] %vm3686, %v3621
        %3718 = vst.msk [vmem:[#allocation3 + $0x1f0] sm:$0xff] %vm3686, %v3623
        %3719 = vst.msk [vmem:[#allocation3 + $0x200] sm:$0xff] %vm3686, %v3625
        %3720 = vst.msk [vmem:[#allocation3 + $0x210] sm:$0xff] %vm3686, %v3627
        %3721 = vst.msk [vmem:[#allocation3 + $0x220] sm:$0xff] %vm3686, %v3629
        %3722 = vst.msk [vmem:[#allocation3 + $0x230] sm:$0xff] %vm3686, %v3631
        %3723 = vst.msk [vmem:[#allocation3 + $0x240] sm:$0xff] %vm3686, %v3633
        %3724 = vst.msk [vmem:[#allocation3 + $0x250] sm:$0xff] %vm3686, %v3635
        %3725 = vst.msk [vmem:[#allocation3 + $0x260] sm:$0xff] %vm3686, %v3637
        %3726 = vst.msk [vmem:[#allocation3 + $0x270] sm:$0xff] %vm3686, %v3639
        %3727 = vst.msk [vmem:[#allocation3 + $0x280] sm:$0xff] %vm3686, %v3641
        %vm3728 = vcmask 585216
        %3729 = vst.msk [vmem:[#allocation3 + $0x290] sm:$0xf] %vm3728, %v3643
        %v3730 = vld [vmem:[#allocation2 + $0x12] sm:$0xff]
        %v3731 = vld [vmem:[#allocation2 + $0x1a] sm:$0xff]
        %v3732 = vld [vmem:[#allocation2 + $0x22] sm:$0xff]
        %v3733 = vld [vmem:[#allocation2 + $0x2a] sm:$0xff]
        %v3734 = vld [vmem:[#allocation2 + $0x32] sm:$0xff]
        %v3735 = vld [vmem:[#allocation2 + $0x3a] sm:$0xff]
        %v3736 = vld [vmem:[#allocation2 + $0x42] sm:$0xff]
        %v3737 = vld [vmem:[#allocation2 + $0x4a] sm:$0xff]
        %v3738 = vld [vmem:[#allocation2 + $0x52] sm:$0xff]
        %v3739 = vld [vmem:[#allocation2 + $0x5a] sm:$0xff]
        %v3740 = vld [vmem:[#allocation2 + $0x62] sm:$0xff]
        %v3741 = vld [vmem:[#allocation2 + $0x6a] sm:$0xff]
        %v3742 = vld [vmem:[#allocation2 + $0x72] sm:$0xff]
        %v3743 = vld [vmem:[#allocation2 + $0x7a] sm:$0xff]
        %v3744 = vld [vmem:[#allocation2 + $0x82] sm:$0xff]
        %v3745 = vld [vmem:[#allocation2 + $0x8a] sm:$0xff]
        %v3746 = vld [vmem:[#allocation2 + $0x92] sm:$0xff]
        %v3747 = vld [vmem:[#allocation2 + $0x9a] sm:$0xff]
        %v3748 = vld [vmem:[#allocation2 + $0xa2] sm:$0xff]
        %v3749 = vld [vmem:[#allocation2 + $0xaa] sm:$0xff]
        %v3750 = vld [vmem:[#allocation2 + $0xb2] sm:$0xff]
        %v3751 = vld [vmem:[#allocation2 + $0xba] sm:$0xff]
        %v3752 = vld [vmem:[#allocation2 + $0xc2] sm:$0xff]
        %v3753 = vld [vmem:[#allocation2 + $0xca] sm:$0xff]
        %v3754 = vld [vmem:[#allocation2 + $0xd2] sm:$0xff]
        %v3755 = vld [vmem:[#allocation2 + $0xda] sm:$0xff]
        %v3756 = vld [vmem:[#allocation2 + $0xe2] sm:$0xff]
        %v3757 = vld [vmem:[#allocation2 + $0xea] sm:$0xff]
        %v3758 = vld [vmem:[#allocation2 + $0xf2] sm:$0xff]
        %v3759 = vld [vmem:[#allocation2 + $0xfa] sm:$0xff]
        %v3760 = vld [vmem:[#allocation2 + $0x102] sm:$0xff]
        %v3761 = vld [vmem:[#allocation2 + $0x10a] sm:$0xff]
        %v3762 = vld [vmem:[#allocation2 + $0x112] sm:$0xff]
        %v3763 = vld [vmem:[#allocation2 + $0x11a] sm:$0xff]
        %v3764 = vld [vmem:[#allocation2 + $0x122] sm:$0xff]
        %v3765 = vld [vmem:[#allocation2 + $0x12a] sm:$0xff]
        %v3766 = vld [vmem:[#allocation2 + $0x132] sm:$0xff]
        %v3767 = vld [vmem:[#allocation2 + $0x13a] sm:$0xff]
        %v3768 = vld [vmem:[#allocation2 + $0x142] sm:$0xff]
        %v3769 = vld [vmem:[#allocation2 + $0x14a] sm:$0xff]
        %v3770 = vld [vmem:[#allocation2 + $0x152] sm:$0xff]
        %v3771 = vld [vmem:[#allocation2 + $0x15a] sm:$0xf]
        %3814 = vrot.lane.b32.xlu0 %v3730, 72
        %v3815 = vpop.permute.xlu0 %3814
        %3816 = vrot.lane.b32.xlu0 %v3731, 72
        %v3817 = vpop.permute.xlu0 %3816
        %3818 = vrot.lane.b32.xlu0 %v3732, 72
        %v3819 = vpop.permute.xlu0 %3818
        %3820 = vrot.lane.b32.xlu0 %v3733, 72
        %v3821 = vpop.permute.xlu0 %3820
        %3822 = vrot.lane.b32.xlu0 %v3734, 72
        %v3823 = vpop.permute.xlu0 %3822
        %3824 = vrot.lane.b32.xlu0 %v3735, 72
        %v3825 = vpop.permute.xlu0 %3824
        %3826 = vrot.lane.b32.xlu0 %v3736, 72
        %v3827 = vpop.permute.xlu0 %3826
        %3828 = vrot.lane.b32.xlu0 %v3737, 72
        %v3829 = vpop.permute.xlu0 %3828
        %3830 = vrot.lane.b32.xlu0 %v3738, 72
        %v3831 = vpop.permute.xlu0 %3830
        %3832 = vrot.lane.b32.xlu0 %v3739, 72
        %v3833 = vpop.permute.xlu0 %3832
        %3834 = vrot.lane.b32.xlu0 %v3740, 72
        %v3835 = vpop.permute.xlu0 %3834
        %3836 = vrot.lane.b32.xlu0 %v3741, 72
        %v3837 = vpop.permute.xlu0 %3836
        %3838 = vrot.lane.b32.xlu0 %v3742, 72
        %v3839 = vpop.permute.xlu0 %3838
        %3840 = vrot.lane.b32.xlu0 %v3743, 72
        %v3841 = vpop.permute.xlu0 %3840
        %3842 = vrot.lane.b32.xlu0 %v3744, 72
        %v3843 = vpop.permute.xlu0 %3842
        %3844 = vrot.lane.b32.xlu0 %v3745, 72
        %v3845 = vpop.permute.xlu0 %3844
        %3846 = vrot.lane.b32.xlu0 %v3746, 72
        %v3847 = vpop.permute.xlu0 %3846
        %3848 = vrot.lane.b32.xlu0 %v3747, 72
        %v3849 = vpop.permute.xlu0 %3848
        %3850 = vrot.lane.b32.xlu0 %v3748, 72
        %v3851 = vpop.permute.xlu0 %3850
        %3852 = vrot.lane.b32.xlu0 %v3749, 72
        %v3853 = vpop.permute.xlu0 %3852
        %3854 = vrot.lane.b32.xlu0 %v3750, 72
        %v3855 = vpop.permute.xlu0 %3854
        %3856 = vrot.lane.b32.xlu0 %v3751, 72
        %v3857 = vpop.permute.xlu0 %3856
        %3858 = vrot.lane.b32.xlu0 %v3752, 72
        %v3859 = vpop.permute.xlu0 %3858
        %3860 = vrot.lane.b32.xlu0 %v3753, 72
        %v3861 = vpop.permute.xlu0 %3860
        %3862 = vrot.lane.b32.xlu0 %v3754, 72
        %v3863 = vpop.permute.xlu0 %3862
        %3864 = vrot.lane.b32.xlu0 %v3755, 72
        %v3865 = vpop.permute.xlu0 %3864
        %3866 = vrot.lane.b32.xlu0 %v3756, 72
        %v3867 = vpop.permute.xlu0 %3866
        %3868 = vrot.lane.b32.xlu0 %v3757, 72
        %v3869 = vpop.permute.xlu0 %3868
        %3870 = vrot.lane.b32.xlu0 %v3758, 72
        %v3871 = vpop.permute.xlu0 %3870
        %3872 = vrot.lane.b32.xlu0 %v3759, 72
        %v3873 = vpop.permute.xlu0 %3872
        %3874 = vrot.lane.b32.xlu0 %v3760, 72
        %v3875 = vpop.permute.xlu0 %3874
        %3876 = vrot.lane.b32.xlu0 %v3761, 72
        %v3877 = vpop.permute.xlu0 %3876
        %3878 = vrot.lane.b32.xlu0 %v3762, 72
        %v3879 = vpop.permute.xlu0 %3878
        %3880 = vrot.lane.b32.xlu0 %v3763, 72
        %v3881 = vpop.permute.xlu0 %3880
        %3882 = vrot.lane.b32.xlu0 %v3764, 72
        %v3883 = vpop.permute.xlu0 %3882
        %3884 = vrot.lane.b32.xlu0 %v3765, 72
        %v3885 = vpop.permute.xlu0 %3884
        %3886 = vrot.lane.b32.xlu0 %v3766, 72
        %v3887 = vpop.permute.xlu0 %3886
        %3888 = vrot.lane.b32.xlu0 %v3767, 72
        %v3889 = vpop.permute.xlu0 %3888
        %3890 = vrot.lane.b32.xlu0 %v3768, 72
        %v3891 = vpop.permute.xlu0 %3890
        %3892 = vrot.lane.b32.xlu0 %v3769, 72
        %v3893 = vpop.permute.xlu0 %3892
        %3894 = vrot.lane.b32.xlu0 %v3770, 72
        %v3895 = vpop.permute.xlu0 %3894
        %3896 = vrot.lane.b32.xlu0 %v3771, 72
        %v3897 = vpop.permute.xlu0 %3896
        %vm3940 = vcmask 654912
        %3941 = vst.msk [vmem:[#allocation3] sm:$0xff] %vm3940, %v3815
        %3942 = vst.msk [vmem:[#allocation3 + $0x10] sm:$0xff] %vm3940, %v3817
        %3943 = vst.msk [vmem:[#allocation3 + $0x20] sm:$0xff] %vm3940, %v3819
        %3944 = vst.msk [vmem:[#allocation3 + $0x30] sm:$0xff] %vm3940, %v3821
        %3945 = vst.msk [vmem:[#allocation3 + $0x40] sm:$0xff] %vm3940, %v3823
        %3946 = vst.msk [vmem:[#allocation3 + $0x50] sm:$0xff] %vm3940, %v3825
        %3947 = vst.msk [vmem:[#allocation3 + $0x60] sm:$0xff] %vm3940, %v3827
        %3948 = vst.msk [vmem:[#allocation3 + $0x70] sm:$0xff] %vm3940, %v3829
        %3949 = vst.msk [vmem:[#allocation3 + $0x80] sm:$0xff] %vm3940, %v3831
        %3950 = vst.msk [vmem:[#allocation3 + $0x90] sm:$0xff] %vm3940, %v3833
        %3951 = vst.msk [vmem:[#allocation3 + $0xa0] sm:$0xff] %vm3940, %v3835
        %3952 = vst.msk [vmem:[#allocation3 + $0xb0] sm:$0xff] %vm3940, %v3837
        %3953 = vst.msk [vmem:[#allocation3 + $0xc0] sm:$0xff] %vm3940, %v3839
        %3954 = vst.msk [vmem:[#allocation3 + $0xd0] sm:$0xff] %vm3940, %v3841
        %3955 = vst.msk [vmem:[#allocation3 + $0xe0] sm:$0xff] %vm3940, %v3843
        %3956 = vst.msk [vmem:[#allocation3 + $0xf0] sm:$0xff] %vm3940, %v3845
        %3957 = vst.msk [vmem:[#allocation3 + $0x100] sm:$0xff] %vm3940, %v3847
        %3958 = vst.msk [vmem:[#allocation3 + $0x110] sm:$0xff] %vm3940, %v3849
        %3959 = vst.msk [vmem:[#allocation3 + $0x120] sm:$0xff] %vm3940, %v3851
        %3960 = vst.msk [vmem:[#allocation3 + $0x130] sm:$0xff] %vm3940, %v3853
        %3961 = vst.msk [vmem:[#allocation3 + $0x140] sm:$0xff] %vm3940, %v3855
        %3962 = vst.msk [vmem:[#allocation3 + $0x150] sm:$0xff] %vm3940, %v3857
        %3963 = vst.msk [vmem:[#allocation3 + $0x160] sm:$0xff] %vm3940, %v3859
        %3964 = vst.msk [vmem:[#allocation3 + $0x170] sm:$0xff] %vm3940, %v3861
        %3965 = vst.msk [vmem:[#allocation3 + $0x180] sm:$0xff] %vm3940, %v3863
        %3966 = vst.msk [vmem:[#allocation3 + $0x190] sm:$0xff] %vm3940, %v3865
        %3967 = vst.msk [vmem:[#allocation3 + $0x1a0] sm:$0xff] %vm3940, %v3867
        %3968 = vst.msk [vmem:[#allocation3 + $0x1b0] sm:$0xff] %vm3940, %v3869
        %3969 = vst.msk [vmem:[#allocation3 + $0x1c0] sm:$0xff] %vm3940, %v3871
        %3970 = vst.msk [vmem:[#allocation3 + $0x1d0] sm:$0xff] %vm3940, %v3873
        %3971 = vst.msk [vmem:[#allocation3 + $0x1e0] sm:$0xff] %vm3940, %v3875
        %3972 = vst.msk [vmem:[#allocation3 + $0x1f0] sm:$0xff] %vm3940, %v3877
        %3973 = vst.msk [vmem:[#allocation3 + $0x200] sm:$0xff] %vm3940, %v3879
        %3974 = vst.msk [vmem:[#allocation3 + $0x210] sm:$0xff] %vm3940, %v3881
        %3975 = vst.msk [vmem:[#allocation3 + $0x220] sm:$0xff] %vm3940, %v3883
        %3976 = vst.msk [vmem:[#allocation3 + $0x230] sm:$0xff] %vm3940, %v3885
        %3977 = vst.msk [vmem:[#allocation3 + $0x240] sm:$0xff] %vm3940, %v3887
        %3978 = vst.msk [vmem:[#allocation3 + $0x250] sm:$0xff] %vm3940, %v3889
        %3979 = vst.msk [vmem:[#allocation3 + $0x260] sm:$0xff] %vm3940, %v3891
        %3980 = vst.msk [vmem:[#allocation3 + $0x270] sm:$0xff] %vm3940, %v3893
        %3981 = vst.msk [vmem:[#allocation3 + $0x280] sm:$0xff] %vm3940, %v3895
        %vm3982 = vcmask 650816
        %3983 = vst.msk [vmem:[#allocation3 + $0x290] sm:$0xf] %vm3982, %v3897
        %v3984 = vld [vmem:[#allocation2 + $0x1c] sm:$0xff]
        %v3985 = vld [vmem:[#allocation2 + $0x24] sm:$0xff]
        %v3986 = vld [vmem:[#allocation2 + $0x2c] sm:$0xff]
        %v3987 = vld [vmem:[#allocation2 + $0x34] sm:$0xff]
        %v3988 = vld [vmem:[#allocation2 + $0x3c] sm:$0xff]
        %v3989 = vld [vmem:[#allocation2 + $0x44] sm:$0xff]
        %v3990 = vld [vmem:[#allocation2 + $0x4c] sm:$0xff]
        %v3991 = vld [vmem:[#allocation2 + $0x54] sm:$0xff]
        %v3992 = vld [vmem:[#allocation2 + $0x5c] sm:$0xff]
        %v3993 = vld [vmem:[#allocation2 + $0x64] sm:$0xff]
        %v3994 = vld [vmem:[#allocation2 + $0x6c] sm:$0xff]
        %v3995 = vld [vmem:[#allocation2 + $0x74] sm:$0xff]
        %v3996 = vld [vmem:[#allocation2 + $0x7c] sm:$0xff]
        %v3997 = vld [vmem:[#allocation2 + $0x84] sm:$0xff]
        %v3998 = vld [vmem:[#allocation2 + $0x8c] sm:$0xff]
        %v3999 = vld [vmem:[#allocation2 + $0x94] sm:$0xff]
        %v4000 = vld [vmem:[#allocation2 + $0x9c] sm:$0xff]
        %v4001 = vld [vmem:[#allocation2 + $0xa4] sm:$0xff]
        %v4002 = vld [vmem:[#allocation2 + $0xac] sm:$0xff]
        %v4003 = vld [vmem:[#allocation2 + $0xb4] sm:$0xff]
        %v4004 = vld [vmem:[#allocation2 + $0xbc] sm:$0xff]
        %v4005 = vld [vmem:[#allocation2 + $0xc4] sm:$0xff]
        %v4006 = vld [vmem:[#allocation2 + $0xcc] sm:$0xff]
        %v4007 = vld [vmem:[#allocation2 + $0xd4] sm:$0xff]
        %v4008 = vld [vmem:[#allocation2 + $0xdc] sm:$0xff]
        %v4009 = vld [vmem:[#allocation2 + $0xe4] sm:$0xff]
        %v4010 = vld [vmem:[#allocation2 + $0xec] sm:$0xff]
        %v4011 = vld [vmem:[#allocation2 + $0xf4] sm:$0xff]
        %v4012 = vld [vmem:[#allocation2 + $0xfc] sm:$0xff]
        %v4013 = vld [vmem:[#allocation2 + $0x104] sm:$0xff]
        %v4014 = vld [vmem:[#allocation2 + $0x10c] sm:$0xff]
        %v4015 = vld [vmem:[#allocation2 + $0x114] sm:$0xff]
        %v4016 = vld [vmem:[#allocation2 + $0x11c] sm:$0xff]
        %v4017 = vld [vmem:[#allocation2 + $0x124] sm:$0xff]
        %v4018 = vld [vmem:[#allocation2 + $0x12c] sm:$0xff]
        %v4019 = vld [vmem:[#allocation2 + $0x134] sm:$0xff]
        %v4020 = vld [vmem:[#allocation2 + $0x13c] sm:$0xff]
        %v4021 = vld [vmem:[#allocation2 + $0x144] sm:$0xff]
        %v4022 = vld [vmem:[#allocation2 + $0x14c] sm:$0xff]
        %v4023 = vld [vmem:[#allocation2 + $0x154] sm:$0xff]
        %v4024 = vld [vmem:[#allocation2 + $0x15c] sm:$0xff]
        %v4025 = vld [vmem:[#allocation2 + $0x164] sm:$0xf]
        %4068 = vrot.lane.b32.xlu0 %v3984, 80
        %v4069 = vpop.permute.xlu0 %4068
        %4070 = vrot.lane.b32.xlu0 %v3985, 80
        %v4071 = vpop.permute.xlu0 %4070
        %4072 = vrot.lane.b32.xlu0 %v3986, 80
        %v4073 = vpop.permute.xlu0 %4072
        %4074 = vrot.lane.b32.xlu0 %v3987, 80
        %v4075 = vpop.permute.xlu0 %4074
        %4076 = vrot.lane.b32.xlu0 %v3988, 80
        %v4077 = vpop.permute.xlu0 %4076
        %4078 = vrot.lane.b32.xlu0 %v3989, 80
        %v4079 = vpop.permute.xlu0 %4078
        %4080 = vrot.lane.b32.xlu0 %v3990, 80
        %v4081 = vpop.permute.xlu0 %4080
        %4082 = vrot.lane.b32.xlu0 %v3991, 80
        %v4083 = vpop.permute.xlu0 %4082
        %4084 = vrot.lane.b32.xlu0 %v3992, 80
        %v4085 = vpop.permute.xlu0 %4084
        %4086 = vrot.lane.b32.xlu0 %v3993, 80
        %v4087 = vpop.permute.xlu0 %4086
        %4088 = vrot.lane.b32.xlu0 %v3994, 80
        %v4089 = vpop.permute.xlu0 %4088
        %4090 = vrot.lane.b32.xlu0 %v3995, 80
        %v4091 = vpop.permute.xlu0 %4090
        %4092 = vrot.lane.b32.xlu0 %v3996, 80
        %v4093 = vpop.permute.xlu0 %4092
        %4094 = vrot.lane.b32.xlu0 %v3997, 80
        %v4095 = vpop.permute.xlu0 %4094
        %4096 = vrot.lane.b32.xlu0 %v3998, 80
        %v4097 = vpop.permute.xlu0 %4096
        %4098 = vrot.lane.b32.xlu0 %v3999, 80
        %v4099 = vpop.permute.xlu0 %4098
        %4100 = vrot.lane.b32.xlu0 %v4000, 80
        %v4101 = vpop.permute.xlu0 %4100
        %4102 = vrot.lane.b32.xlu0 %v4001, 80
        %v4103 = vpop.permute.xlu0 %4102
        %4104 = vrot.lane.b32.xlu0 %v4002, 80
        %v4105 = vpop.permute.xlu0 %4104
        %4106 = vrot.lane.b32.xlu0 %v4003, 80
        %v4107 = vpop.permute.xlu0 %4106
        %4108 = vrot.lane.b32.xlu0 %v4004, 80
        %v4109 = vpop.permute.xlu0 %4108
        %4110 = vrot.lane.b32.xlu0 %v4005, 80
        %v4111 = vpop.permute.xlu0 %4110
        %4112 = vrot.lane.b32.xlu0 %v4006, 80
        %v4113 = vpop.permute.xlu0 %4112
        %4114 = vrot.lane.b32.xlu0 %v4007, 80
        %v4115 = vpop.permute.xlu0 %4114
        %4116 = vrot.lane.b32.xlu0 %v4008, 80
        %v4117 = vpop.permute.xlu0 %4116
        %4118 = vrot.lane.b32.xlu0 %v4009, 80
        %v4119 = vpop.permute.xlu0 %4118
        %4120 = vrot.lane.b32.xlu0 %v4010, 80
        %v4121 = vpop.permute.xlu0 %4120
        %4122 = vrot.lane.b32.xlu0 %v4011, 80
        %v4123 = vpop.permute.xlu0 %4122
        %4124 = vrot.lane.b32.xlu0 %v4012, 80
        %v4125 = vpop.permute.xlu0 %4124
        %4126 = vrot.lane.b32.xlu0 %v4013, 80
        %v4127 = vpop.permute.xlu0 %4126
        %4128 = vrot.lane.b32.xlu0 %v4014, 80
        %v4129 = vpop.permute.xlu0 %4128
        %4130 = vrot.lane.b32.xlu0 %v4015, 80
        %v4131 = vpop.permute.xlu0 %4130
        %4132 = vrot.lane.b32.xlu0 %v4016, 80
        %v4133 = vpop.permute.xlu0 %4132
        %4134 = vrot.lane.b32.xlu0 %v4017, 80
        %v4135 = vpop.permute.xlu0 %4134
        %4136 = vrot.lane.b32.xlu0 %v4018, 80
        %v4137 = vpop.permute.xlu0 %4136
        %4138 = vrot.lane.b32.xlu0 %v4019, 80
        %v4139 = vpop.permute.xlu0 %4138
        %4140 = vrot.lane.b32.xlu0 %v4020, 80
        %v4141 = vpop.permute.xlu0 %4140
        %4142 = vrot.lane.b32.xlu0 %v4021, 80
        %v4143 = vpop.permute.xlu0 %4142
        %4144 = vrot.lane.b32.xlu0 %v4022, 80
        %v4145 = vpop.permute.xlu0 %4144
        %4146 = vrot.lane.b32.xlu0 %v4023, 80
        %v4147 = vpop.permute.xlu0 %4146
        %4148 = vrot.lane.b32.xlu0 %v4024, 80
        %v4149 = vpop.permute.xlu0 %4148
        %4150 = vrot.lane.b32.xlu0 %v4025, 80
        %v4151 = vpop.permute.xlu0 %4150
        %vm4194 = vcmask 720512
        %4195 = vst.msk [vmem:[#allocation3] sm:$0xff] %vm4194, %v4069
        %4196 = vst.msk [vmem:[#allocation3 + $0x10] sm:$0xff] %vm4194, %v4071
        %4197 = vst.msk [vmem:[#allocation3 + $0x20] sm:$0xff] %vm4194, %v4073
        %4198 = vst.msk [vmem:[#allocation3 + $0x30] sm:$0xff] %vm4194, %v4075
        %4199 = vst.msk [vmem:[#allocation3 + $0x40] sm:$0xff] %vm4194, %v4077
        %4200 = vst.msk [vmem:[#allocation3 + $0x50] sm:$0xff] %vm4194, %v4079
        %4201 = vst.msk [vmem:[#allocation3 + $0x60] sm:$0xff] %vm4194, %v4081
        %4202 = vst.msk [vmem:[#allocation3 + $0x70] sm:$0xff] %vm4194, %v4083
        %4203 = vst.msk [vmem:[#allocation3 + $0x80] sm:$0xff] %vm4194, %v4085
        %4204 = vst.msk [vmem:[#allocation3 + $0x90] sm:$0xff] %vm4194, %v4087
        %4205 = vst.msk [vmem:[#allocation3 + $0xa0] sm:$0xff] %vm4194, %v4089
        %4206 = vst.msk [vmem:[#allocation3 + $0xb0] sm:$0xff] %vm4194, %v4091
        %4207 = vst.msk [vmem:[#allocation3 + $0xc0] sm:$0xff] %vm4194, %v4093
        %4208 = vst.msk [vmem:[#allocation3 + $0xd0] sm:$0xff] %vm4194, %v4095
        %4209 = vst.msk [vmem:[#allocation3 + $0xe0] sm:$0xff] %vm4194, %v4097
        %4210 = vst.msk [vmem:[#allocation3 + $0xf0] sm:$0xff] %vm4194, %v4099
        %4211 = vst.msk [vmem:[#allocation3 + $0x100] sm:$0xff] %vm4194, %v4101
        %4212 = vst.msk [vmem:[#allocation3 + $0x110] sm:$0xff] %vm4194, %v4103
        %4213 = vst.msk [vmem:[#allocation3 + $0x120] sm:$0xff] %vm4194, %v4105
        %4214 = vst.msk [vmem:[#allocation3 + $0x130] sm:$0xff] %vm4194, %v4107
        %4215 = vst.msk [vmem:[#allocation3 + $0x140] sm:$0xff] %vm4194, %v4109
        %4216 = vst.msk [vmem:[#allocation3 + $0x150] sm:$0xff] %vm4194, %v4111
        %4217 = vst.msk [vmem:[#allocation3 + $0x160] sm:$0xff] %vm4194, %v4113
        %4218 = vst.msk [vmem:[#allocation3 + $0x170] sm:$0xff] %vm4194, %v4115
        %4219 = vst.msk [vmem:[#allocation3 + $0x180] sm:$0xff] %vm4194, %v4117
        %4220 = vst.msk [vmem:[#allocation3 + $0x190] sm:$0xff] %vm4194, %v4119
        %4221 = vst.msk [vmem:[#allocation3 + $0x1a0] sm:$0xff] %vm4194, %v4121
        %4222 = vst.msk [vmem:[#allocation3 + $0x1b0] sm:$0xff] %vm4194, %v4123
        %4223 = vst.msk [vmem:[#allocation3 + $0x1c0] sm:$0xff] %vm4194, %v4125
        %4224 = vst.msk [vmem:[#allocation3 + $0x1d0] sm:$0xff] %vm4194, %v4127
        %4225 = vst.msk [vmem:[#allocation3 + $0x1e0] sm:$0xff] %vm4194, %v4129
        %4226 = vst.msk [vmem:[#allocation3 + $0x1f0] sm:$0xff] %vm4194, %v4131
        %4227 = vst.msk [vmem:[#allocation3 + $0x200] sm:$0xff] %vm4194, %v4133
        %4228 = vst.msk [vmem:[#allocation3 + $0x210] sm:$0xff] %vm4194, %v4135
        %4229 = vst.msk [vmem:[#allocation3 + $0x220] sm:$0xff] %vm4194, %v4137
        %4230 = vst.msk [vmem:[#allocation3 + $0x230] sm:$0xff] %vm4194, %v4139
        %4231 = vst.msk [vmem:[#allocation3 + $0x240] sm:$0xff] %vm4194, %v4141
        %4232 = vst.msk [vmem:[#allocation3 + $0x250] sm:$0xff] %vm4194, %v4143
        %4233 = vst.msk [vmem:[#allocation3 + $0x260] sm:$0xff] %vm4194, %v4145
        %4234 = vst.msk [vmem:[#allocation3 + $0x270] sm:$0xff] %vm4194, %v4147
        %4235 = vst.msk [vmem:[#allocation3 + $0x280] sm:$0xff] %vm4194, %v4149
        %vm4236 = vcmask 716416
        %4237 = vst.msk [vmem:[#allocation3 + $0x290] sm:$0xf] %vm4236, %v4151
        %v4238 = vld [vmem:[#allocation2 + $0x1d] sm:$0xff]
        %v4239 = vld [vmem:[#allocation2 + $0x25] sm:$0xff]
        %v4240 = vld [vmem:[#allocation2 + $0x2d] sm:$0xff]
        %v4241 = vld [vmem:[#allocation2 + $0x35] sm:$0xff]
        %v4242 = vld [vmem:[#allocation2 + $0x3d] sm:$0xff]
        %v4243 = vld [vmem:[#allocation2 + $0x45] sm:$0xff]
        %v4244 = vld [vmem:[#allocation2 + $0x4d] sm:$0xff]
        %v4245 = vld [vmem:[#allocation2 + $0x55] sm:$0xff]
        %v4246 = vld [vmem:[#allocation2 + $0x5d] sm:$0xff]
        %v4247 = vld [vmem:[#allocation2 + $0x65] sm:$0xff]
        %v4248 = vld [vmem:[#allocation2 + $0x6d] sm:$0xff]
        %v4249 = vld [vmem:[#allocation2 + $0x75] sm:$0xff]
        %v4250 = vld [vmem:[#allocation2 + $0x7d] sm:$0xff]
        %v4251 = vld [vmem:[#allocation2 + $0x85] sm:$0xff]
        %v4252 = vld [vmem:[#allocation2 + $0x8d] sm:$0xff]
        %v4253 = vld [vmem:[#allocation2 + $0x95] sm:$0xff]
        %v4254 = vld [vmem:[#allocation2 + $0x9d] sm:$0xff]
        %v4255 = vld [vmem:[#allocation2 + $0xa5] sm:$0xff]
        %v4256 = vld [vmem:[#allocation2 + $0xad] sm:$0xff]
        %v4257 = vld [vmem:[#allocation2 + $0xb5] sm:$0xff]
        %v4258 = vld [vmem:[#allocation2 + $0xbd] sm:$0xff]
        %v4259 = vld [vmem:[#allocation2 + $0xc5] sm:$0xff]
        %v4260 = vld [vmem:[#allocation2 + $0xcd] sm:$0xff]
        %v4261 = vld [vmem:[#allocation2 + $0xd5] sm:$0xff]
        %v4262 = vld [vmem:[#allocation2 + $0xdd] sm:$0xff]
        %v4263 = vld [vmem:[#allocation2 + $0xe5] sm:$0xff]
        %v4264 = vld [vmem:[#allocation2 + $0xed] sm:$0xff]
        %v4265 = vld [vmem:[#allocation2 + $0xf5] sm:$0xff]
        %v4266 = vld [vmem:[#allocation2 + $0xfd] sm:$0xff]
        %v4267 = vld [vmem:[#allocation2 + $0x105] sm:$0xff]
        %v4268 = vld [vmem:[#allocation2 + $0x10d] sm:$0xff]
        %v4269 = vld [vmem:[#allocation2 + $0x115] sm:$0xff]
        %v4270 = vld [vmem:[#allocation2 + $0x11d] sm:$0xff]
        %v4271 = vld [vmem:[#allocation2 + $0x125] sm:$0xff]
        %v4272 = vld [vmem:[#allocation2 + $0x12d] sm:$0xff]
        %v4273 = vld [vmem:[#allocation2 + $0x135] sm:$0xff]
        %v4274 = vld [vmem:[#allocation2 + $0x13d] sm:$0xff]
        %v4275 = vld [vmem:[#allocation2 + $0x145] sm:$0xff]
        %v4276 = vld [vmem:[#allocation2 + $0x14d] sm:$0xff]
        %v4277 = vld [vmem:[#allocation2 + $0x155] sm:$0xff]
        %v4278 = vld [vmem:[#allocation2 + $0x15d] sm:$0xff]
        %v4279 = vld [vmem:[#allocation2 + $0x165] sm:$0xf]
        %4322 = vrot.lane.b32.xlu0 %v4238, 88
        %v4323 = vpop.permute.xlu0 %4322
        %4324 = vrot.lane.b32.xlu0 %v4239, 88
        %v4325 = vpop.permute.xlu0 %4324
        %4326 = vrot.lane.b32.xlu0 %v4240, 88
        %v4327 = vpop.permute.xlu0 %4326
        %4328 = vrot.lane.b32.xlu0 %v4241, 88
        %v4329 = vpop.permute.xlu0 %4328
        %4330 = vrot.lane.b32.xlu0 %v4242, 88
        %v4331 = vpop.permute.xlu0 %4330
        %4332 = vrot.lane.b32.xlu0 %v4243, 88
        %v4333 = vpop.permute.xlu0 %4332
        %4334 = vrot.lane.b32.xlu0 %v4244, 88
        %v4335 = vpop.permute.xlu0 %4334
        %4336 = vrot.lane.b32.xlu0 %v4245, 88
        %v4337 = vpop.permute.xlu0 %4336
        %4338 = vrot.lane.b32.xlu0 %v4246, 88
        %v4339 = vpop.permute.xlu0 %4338
        %4340 = vrot.lane.b32.xlu0 %v4247, 88
        %v4341 = vpop.permute.xlu0 %4340
        %4342 = vrot.lane.b32.xlu0 %v4248, 88
        %v4343 = vpop.permute.xlu0 %4342
        %4344 = vrot.lane.b32.xlu0 %v4249, 88
        %v4345 = vpop.permute.xlu0 %4344
        %4346 = vrot.lane.b32.xlu0 %v4250, 88
        %v4347 = vpop.permute.xlu0 %4346
        %4348 = vrot.lane.b32.xlu0 %v4251, 88
        %v4349 = vpop.permute.xlu0 %4348
        %4350 = vrot.lane.b32.xlu0 %v4252, 88
        %v4351 = vpop.permute.xlu0 %4350
        %4352 = vrot.lane.b32.xlu0 %v4253, 88
        %v4353 = vpop.permute.xlu0 %4352
        %4354 = vrot.lane.b32.xlu0 %v4254, 88
        %v4355 = vpop.permute.xlu0 %4354
        %4356 = vrot.lane.b32.xlu0 %v4255, 88
        %v4357 = vpop.permute.xlu0 %4356
        %4358 = vrot.lane.b32.xlu0 %v4256, 88
        %v4359 = vpop.permute.xlu0 %4358
        %4360 = vrot.lane.b32.xlu0 %v4257, 88
        %v4361 = vpop.permute.xlu0 %4360
        %4362 = vrot.lane.b32.xlu0 %v4258, 88
        %v4363 = vpop.permute.xlu0 %4362
        %4364 = vrot.lane.b32.xlu0 %v4259, 88
        %v4365 = vpop.permute.xlu0 %4364
        %4366 = vrot.lane.b32.xlu0 %v4260, 88
        %v4367 = vpop.permute.xlu0 %4366
        %4368 = vrot.lane.b32.xlu0 %v4261, 88
        %v4369 = vpop.permute.xlu0 %4368
        %4370 = vrot.lane.b32.xlu0 %v4262, 88
        %v4371 = vpop.permute.xlu0 %4370
        %4372 = vrot.lane.b32.xlu0 %v4263, 88
        %v4373 = vpop.permute.xlu0 %4372
        %4374 = vrot.lane.b32.xlu0 %v4264, 88
        %v4375 = vpop.permute.xlu0 %4374
        %4376 = vrot.lane.b32.xlu0 %v4265, 88
        %v4377 = vpop.permute.xlu0 %4376
        %4378 = vrot.lane.b32.xlu0 %v4266, 88
        %v4379 = vpop.permute.xlu0 %4378
        %4380 = vrot.lane.b32.xlu0 %v4267, 88
        %v4381 = vpop.permute.xlu0 %4380
        %4382 = vrot.lane.b32.xlu0 %v4268, 88
        %v4383 = vpop.permute.xlu0 %4382
        %4384 = vrot.lane.b32.xlu0 %v4269, 88
        %v4385 = vpop.permute.xlu0 %4384
        %4386 = vrot.lane.b32.xlu0 %v4270, 88
        %v4387 = vpop.permute.xlu0 %4386
        %4388 = vrot.lane.b32.xlu0 %v4271, 88
        %v4389 = vpop.permute.xlu0 %4388
        %4390 = vrot.lane.b32.xlu0 %v4272, 88
        %v4391 = vpop.permute.xlu0 %4390
        %4392 = vrot.lane.b32.xlu0 %v4273, 88
        %v4393 = vpop.permute.xlu0 %4392
        %4394 = vrot.lane.b32.xlu0 %v4274, 88
        %v4395 = vpop.permute.xlu0 %4394
        %4396 = vrot.lane.b32.xlu0 %v4275, 88
        %v4397 = vpop.permute.xlu0 %4396
        %4398 = vrot.lane.b32.xlu0 %v4276, 88
        %v4399 = vpop.permute.xlu0 %4398
        %4400 = vrot.lane.b32.xlu0 %v4277, 88
        %v4401 = vpop.permute.xlu0 %4400
        %4402 = vrot.lane.b32.xlu0 %v4278, 88
        %v4403 = vpop.permute.xlu0 %4402
        %4404 = vrot.lane.b32.xlu0 %v4279, 88
        %v4405 = vpop.permute.xlu0 %4404
        %vm4448 = vcmask 786112
        %4449 = vst.msk [vmem:[#allocation3] sm:$0xff] %vm4448, %v4323
        %4450 = vst.msk [vmem:[#allocation3 + $0x10] sm:$0xff] %vm4448, %v4325
        %4451 = vst.msk [vmem:[#allocation3 + $0x20] sm:$0xff] %vm4448, %v4327
        %4452 = vst.msk [vmem:[#allocation3 + $0x30] sm:$0xff] %vm4448, %v4329
        %4453 = vst.msk [vmem:[#allocation3 + $0x40] sm:$0xff] %vm4448, %v4331
        %4454 = vst.msk [vmem:[#allocation3 + $0x50] sm:$0xff] %vm4448, %v4333
        %4455 = vst.msk [vmem:[#allocation3 + $0x60] sm:$0xff] %vm4448, %v4335
        %4456 = vst.msk [vmem:[#allocation3 + $0x70] sm:$0xff] %vm4448, %v4337
        %4457 = vst.msk [vmem:[#allocation3 + $0x80] sm:$0xff] %vm4448, %v4339
        %4458 = vst.msk [vmem:[#allocation3 + $0x90] sm:$0xff] %vm4448, %v4341
        %4459 = vst.msk [vmem:[#allocation3 + $0xa0] sm:$0xff] %vm4448, %v4343
        %4460 = vst.msk [vmem:[#allocation3 + $0xb0] sm:$0xff] %vm4448, %v4345
        %4461 = vst.msk [vmem:[#allocation3 + $0xc0] sm:$0xff] %vm4448, %v4347
        %4462 = vst.msk [vmem:[#allocation3 + $0xd0] sm:$0xff] %vm4448, %v4349
        %4463 = vst.msk [vmem:[#allocation3 + $0xe0] sm:$0xff] %vm4448, %v4351
        %4464 = vst.msk [vmem:[#allocation3 + $0xf0] sm:$0xff] %vm4448, %v4353
        %4465 = vst.msk [vmem:[#allocation3 + $0x100] sm:$0xff] %vm4448, %v4355
        %4466 = vst.msk [vmem:[#allocation3 + $0x110] sm:$0xff] %vm4448, %v4357
        %4467 = vst.msk [vmem:[#allocation3 + $0x120] sm:$0xff] %vm4448, %v4359
        %4468 = vst.msk [vmem:[#allocation3 + $0x130] sm:$0xff] %vm4448, %v4361
        %4469 = vst.msk [vmem:[#allocation3 + $0x140] sm:$0xff] %vm4448, %v4363
        %4470 = vst.msk [vmem:[#allocation3 + $0x150] sm:$0xff] %vm4448, %v4365
        %4471 = vst.msk [vmem:[#allocation3 + $0x160] sm:$0xff] %vm4448, %v4367
        %4472 = vst.msk [vmem:[#allocation3 + $0x170] sm:$0xff] %vm4448, %v4369
        %4473 = vst.msk [vmem:[#allocation3 + $0x180] sm:$0xff] %vm4448, %v4371
        %4474 = vst.msk [vmem:[#allocation3 + $0x190] sm:$0xff] %vm4448, %v4373
        %4475 = vst.msk [vmem:[#allocation3 + $0x1a0] sm:$0xff] %vm4448, %v4375
        %4476 = vst.msk [vmem:[#allocation3 + $0x1b0] sm:$0xff] %vm4448, %v4377
        %4477 = vst.msk [vmem:[#allocation3 + $0x1c0] sm:$0xff] %vm4448, %v4379
        %4478 = vst.msk [vmem:[#allocation3 + $0x1d0] sm:$0xff] %vm4448, %v4381
        %4479 = vst.msk [vmem:[#allocation3 + $0x1e0] sm:$0xff] %vm4448, %v4383
        %4480 = vst.msk [vmem:[#allocation3 + $0x1f0] sm:$0xff] %vm4448, %v4385
        %4481 = vst.msk [vmem:[#allocation3 + $0x200] sm:$0xff] %vm4448, %v4387
        %4482 = vst.msk [vmem:[#allocation3 + $0x210] sm:$0xff] %vm4448, %v4389
        %4483 = vst.msk [vmem:[#allocation3 + $0x220] sm:$0xff] %vm4448, %v4391
        %4484 = vst.msk [vmem:[#allocation3 + $0x230] sm:$0xff] %vm4448, %v4393
        %4485 = vst.msk [vmem:[#allocation3 + $0x240] sm:$0xff] %vm4448, %v4395
        %4486 = vst.msk [vmem:[#allocation3 + $0x250] sm:$0xff] %vm4448, %v4397
        %4487 = vst.msk [vmem:[#allocation3 + $0x260] sm:$0xff] %vm4448, %v4399
        %4488 = vst.msk [vmem:[#allocation3 + $0x270] sm:$0xff] %vm4448, %v4401
        %4489 = vst.msk [vmem:[#allocation3 + $0x280] sm:$0xff] %vm4448, %v4403
        %vm4490 = vcmask 782016
        %4491 = vst.msk [vmem:[#allocation3 + $0x290] sm:$0xf] %vm4490, %v4405
        %v4492 = vld [vmem:[#allocation2 + $0x1e] sm:$0xff]
        %v4493 = vld [vmem:[#allocation2 + $0x26] sm:$0xff]
        %v4494 = vld [vmem:[#allocation2 + $0x2e] sm:$0xff]
        %v4495 = vld [vmem:[#allocation2 + $0x36] sm:$0xff]
        %v4496 = vld [vmem:[#allocation2 + $0x3e] sm:$0xff]
        %v4497 = vld [vmem:[#allocation2 + $0x46] sm:$0xff]
        %v4498 = vld [vmem:[#allocation2 + $0x4e] sm:$0xff]
        %v4499 = vld [vmem:[#allocation2 + $0x56] sm:$0xff]
        %v4500 = vld [vmem:[#allocation2 + $0x5e] sm:$0xff]
        %v4501 = vld [vmem:[#allocation2 + $0x66] sm:$0xff]
        %v4502 = vld [vmem:[#allocation2 + $0x6e] sm:$0xff]
        %v4503 = vld [vmem:[#allocation2 + $0x76] sm:$0xff]
        %v4504 = vld [vmem:[#allocation2 + $0x7e] sm:$0xff]
        %v4505 = vld [vmem:[#allocation2 + $0x86] sm:$0xff]
        %v4506 = vld [vmem:[#allocation2 + $0x8e] sm:$0xff]
        %v4507 = vld [vmem:[#allocation2 + $0x96] sm:$0xff]
        %v4508 = vld [vmem:[#allocation2 + $0x9e] sm:$0xff]
        %v4509 = vld [vmem:[#allocation2 + $0xa6] sm:$0xff]
        %v4510 = vld [vmem:[#allocation2 + $0xae] sm:$0xff]
        %v4511 = vld [vmem:[#allocation2 + $0xb6] sm:$0xff]
        %v4512 = vld [vmem:[#allocation2 + $0xbe] sm:$0xff]
        %v4513 = vld [vmem:[#allocation2 + $0xc6] sm:$0xff]
        %v4514 = vld [vmem:[#allocation2 + $0xce] sm:$0xff]
        %v4515 = vld [vmem:[#allocation2 + $0xd6] sm:$0xff]
        %v4516 = vld [vmem:[#allocation2 + $0xde] sm:$0xff]
        %v4517 = vld [vmem:[#allocation2 + $0xe6] sm:$0xff]
        %v4518 = vld [vmem:[#allocation2 + $0xee] sm:$0xff]
        %v4519 = vld [vmem:[#allocation2 + $0xf6] sm:$0xff]
        %v4520 = vld [vmem:[#allocation2 + $0xfe] sm:$0xff]
        %v4521 = vld [vmem:[#allocation2 + $0x106] sm:$0xff]
        %v4522 = vld [vmem:[#allocation2 + $0x10e] sm:$0xff]
        %v4523 = vld [vmem:[#allocation2 + $0x116] sm:$0xff]
        %v4524 = vld [vmem:[#allocation2 + $0x11e] sm:$0xff]
        %v4525 = vld [vmem:[#allocation2 + $0x126] sm:$0xff]
        %v4526 = vld [vmem:[#allocation2 + $0x12e] sm:$0xff]
        %v4527 = vld [vmem:[#allocation2 + $0x136] sm:$0xff]
        %v4528 = vld [vmem:[#allocation2 + $0x13e] sm:$0xff]
        %v4529 = vld [vmem:[#allocation2 + $0x146] sm:$0xff]
        %v4530 = vld [vmem:[#allocation2 + $0x14e] sm:$0xff]
        %v4531 = vld [vmem:[#allocation2 + $0x156] sm:$0xff]
        %v4532 = vld [vmem:[#allocation2 + $0x15e] sm:$0xff]
        %v4533 = vld [vmem:[#allocation2 + $0x166] sm:$0xf]
        %4576 = vrot.lane.b32.xlu0 %v4492, 96
        %v4577 = vpop.permute.xlu0 %4576
        %4578 = vrot.lane.b32.xlu0 %v4493, 96
        %v4579 = vpop.permute.xlu0 %4578
        %4580 = vrot.lane.b32.xlu0 %v4494, 96
        %v4581 = vpop.permute.xlu0 %4580
        %4582 = vrot.lane.b32.xlu0 %v4495, 96
        %v4583 = vpop.permute.xlu0 %4582
        %4584 = vrot.lane.b32.xlu0 %v4496, 96
        %v4585 = vpop.permute.xlu0 %4584
        %4586 = vrot.lane.b32.xlu0 %v4497, 96
        %v4587 = vpop.permute.xlu0 %4586
        %4588 = vrot.lane.b32.xlu0 %v4498, 96
        %v4589 = vpop.permute.xlu0 %4588
        %4590 = vrot.lane.b32.xlu0 %v4499, 96
        %v4591 = vpop.permute.xlu0 %4590
        %4592 = vrot.lane.b32.xlu0 %v4500, 96
        %v4593 = vpop.permute.xlu0 %4592
        %4594 = vrot.lane.b32.xlu0 %v4501, 96
        %v4595 = vpop.permute.xlu0 %4594
        %4596 = vrot.lane.b32.xlu0 %v4502, 96
        %v4597 = vpop.permute.xlu0 %4596
        %4598 = vrot.lane.b32.xlu0 %v4503, 96
        %v4599 = vpop.permute.xlu0 %4598
        %4600 = vrot.lane.b32.xlu0 %v4504, 96
        %v4601 = vpop.permute.xlu0 %4600
        %4602 = vrot.lane.b32.xlu0 %v4505, 96
        %v4603 = vpop.permute.xlu0 %4602
        %4604 = vrot.lane.b32.xlu0 %v4506, 96
        %v4605 = vpop.permute.xlu0 %4604
        %4606 = vrot.lane.b32.xlu0 %v4507, 96
        %v4607 = vpop.permute.xlu0 %4606
        %4608 = vrot.lane.b32.xlu0 %v4508, 96
        %v4609 = vpop.permute.xlu0 %4608
        %4610 = vrot.lane.b32.xlu0 %v4509, 96
        %v4611 = vpop.permute.xlu0 %4610
        %4612 = vrot.lane.b32.xlu0 %v4510, 96
        %v4613 = vpop.permute.xlu0 %4612
        %4614 = vrot.lane.b32.xlu0 %v4511, 96
        %v4615 = vpop.permute.xlu0 %4614
        %4616 = vrot.lane.b32.xlu0 %v4512, 96
        %v4617 = vpop.permute.xlu0 %4616
        %4618 = vrot.lane.b32.xlu0 %v4513, 96
        %v4619 = vpop.permute.xlu0 %4618
        %4620 = vrot.lane.b32.xlu0 %v4514, 96
        %v4621 = vpop.permute.xlu0 %4620
        %4622 = vrot.lane.b32.xlu0 %v4515, 96
        %v4623 = vpop.permute.xlu0 %4622
        %4624 = vrot.lane.b32.xlu0 %v4516, 96
        %v4625 = vpop.permute.xlu0 %4624
        %4626 = vrot.lane.b32.xlu0 %v4517, 96
        %v4627 = vpop.permute.xlu0 %4626
        %4628 = vrot.lane.b32.xlu0 %v4518, 96
        %v4629 = vpop.permute.xlu0 %4628
        %4630 = vrot.lane.b32.xlu0 %v4519, 96
        %v4631 = vpop.permute.xlu0 %4630
        %4632 = vrot.lane.b32.xlu0 %v4520, 96
        %v4633 = vpop.permute.xlu0 %4632
        %4634 = vrot.lane.b32.xlu0 %v4521, 96
        %v4635 = vpop.permute.xlu0 %4634
        %4636 = vrot.lane.b32.xlu0 %v4522, 96
        %v4637 = vpop.permute.xlu0 %4636
        %4638 = vrot.lane.b32.xlu0 %v4523, 96
        %v4639 = vpop.permute.xlu0 %4638
        %4640 = vrot.lane.b32.xlu0 %v4524, 96
        %v4641 = vpop.permute.xlu0 %4640
        %4642 = vrot.lane.b32.xlu0 %v4525, 96
        %v4643 = vpop.permute.xlu0 %4642
        %4644 = vrot.lane.b32.xlu0 %v4526, 96
        %v4645 = vpop.permute.xlu0 %4644
        %4646 = vrot.lane.b32.xlu0 %v4527, 96
        %v4647 = vpop.permute.xlu0 %4646
        %4648 = vrot.lane.b32.xlu0 %v4528, 96
        %v4649 = vpop.permute.xlu0 %4648
        %4650 = vrot.lane.b32.xlu0 %v4529, 96
        %v4651 = vpop.permute.xlu0 %4650
        %4652 = vrot.lane.b32.xlu0 %v4530, 96
        %v4653 = vpop.permute.xlu0 %4652
        %4654 = vrot.lane.b32.xlu0 %v4531, 96
        %v4655 = vpop.permute.xlu0 %4654
        %4656 = vrot.lane.b32.xlu0 %v4532, 96
        %v4657 = vpop.permute.xlu0 %4656
        %4658 = vrot.lane.b32.xlu0 %v4533, 96
        %v4659 = vpop.permute.xlu0 %4658
        %vm4702 = vcmask 851712
        %4703 = vst.msk [vmem:[#allocation3] sm:$0xff] %vm4702, %v4577
        %4704 = vst.msk [vmem:[#allocation3 + $0x10] sm:$0xff] %vm4702, %v4579
        %4705 = vst.msk [vmem:[#allocation3 + $0x20] sm:$0xff] %vm4702, %v4581
        %4706 = vst.msk [vmem:[#allocation3 + $0x30] sm:$0xff] %vm4702, %v4583
        %4707 = vst.msk [vmem:[#allocation3 + $0x40] sm:$0xff] %vm4702, %v4585
        %4708 = vst.msk [vmem:[#allocation3 + $0x50] sm:$0xff] %vm4702, %v4587
        %4709 = vst.msk [vmem:[#allocation3 + $0x60] sm:$0xff] %vm4702, %v4589
        %4710 = vst.msk [vmem:[#allocation3 + $0x70] sm:$0xff] %vm4702, %v4591
        %4711 = vst.msk [vmem:[#allocation3 + $0x80] sm:$0xff] %vm4702, %v4593
        %4712 = vst.msk [vmem:[#allocation3 + $0x90] sm:$0xff] %vm4702, %v4595
        %4713 = vst.msk [vmem:[#allocation3 + $0xa0] sm:$0xff] %vm4702, %v4597
        %4714 = vst.msk [vmem:[#allocation3 + $0xb0] sm:$0xff] %vm4702, %v4599
        %4715 = vst.msk [vmem:[#allocation3 + $0xc0] sm:$0xff] %vm4702, %v4601
        %4716 = vst.msk [vmem:[#allocation3 + $0xd0] sm:$0xff] %vm4702, %v4603
        %4717 = vst.msk [vmem:[#allocation3 + $0xe0] sm:$0xff] %vm4702, %v4605
        %4718 = vst.msk [vmem:[#allocation3 + $0xf0] sm:$0xff] %vm4702, %v4607
        %4719 = vst.msk [vmem:[#allocation3 + $0x100] sm:$0xff] %vm4702, %v4609
        %4720 = vst.msk [vmem:[#allocation3 + $0x110] sm:$0xff] %vm4702, %v4611
        %4721 = vst.msk [vmem:[#allocation3 + $0x120] sm:$0xff] %vm4702, %v4613
        %4722 = vst.msk [vmem:[#allocation3 + $0x130] sm:$0xff] %vm4702, %v4615
        %4723 = vst.msk [vmem:[#allocation3 + $0x140] sm:$0xff] %vm4702, %v4617
        %4724 = vst.msk [vmem:[#allocation3 + $0x150] sm:$0xff] %vm4702, %v4619
        %4725 = vst.msk [vmem:[#allocation3 + $0x160] sm:$0xff] %vm4702, %v4621
        %4726 = vst.msk [vmem:[#allocation3 + $0x170] sm:$0xff] %vm4702, %v4623
        %4727 = vst.msk [vmem:[#allocation3 + $0x180] sm:$0xff] %vm4702, %v4625
        %4728 = vst.msk [vmem:[#allocation3 + $0x190] sm:$0xff] %vm4702, %v4627
        %4729 = vst.msk [vmem:[#allocation3 + $0x1a0] sm:$0xff] %vm4702, %v4629
        %4730 = vst.msk [vmem:[#allocation3 + $0x1b0] sm:$0xff] %vm4702, %v4631
        %4731 = vst.msk [vmem:[#allocation3 + $0x1c0] sm:$0xff] %vm4702, %v4633
        %4732 = vst.msk [vmem:[#allocation3 + $0x1d0] sm:$0xff] %vm4702, %v4635
        %4733 = vst.msk [vmem:[#allocation3 + $0x1e0] sm:$0xff] %vm4702, %v4637
        %4734 = vst.msk [vmem:[#allocation3 + $0x1f0] sm:$0xff] %vm4702, %v4639
        %4735 = vst.msk [vmem:[#allocation3 + $0x200] sm:$0xff] %vm4702, %v4641
        %4736 = vst.msk [vmem:[#allocation3 + $0x210] sm:$0xff] %vm4702, %v4643
        %4737 = vst.msk [vmem:[#allocation3 + $0x220] sm:$0xff] %vm4702, %v4645
        %4738 = vst.msk [vmem:[#allocation3 + $0x230] sm:$0xff] %vm4702, %v4647
        %4739 = vst.msk [vmem:[#allocation3 + $0x240] sm:$0xff] %vm4702, %v4649
        %4740 = vst.msk [vmem:[#allocation3 + $0x250] sm:$0xff] %vm4702, %v4651
        %4741 = vst.msk [vmem:[#allocation3 + $0x260] sm:$0xff] %vm4702, %v4653
        %4742 = vst.msk [vmem:[#allocation3 + $0x270] sm:$0xff] %vm4702, %v4655
        %4743 = vst.msk [vmem:[#allocation3 + $0x280] sm:$0xff] %vm4702, %v4657
        %vm4744 = vcmask 847616
        %4745 = vst.msk [vmem:[#allocation3 + $0x290] sm:$0xf] %vm4744, %v4659
        %v4746 = vld [vmem:[#allocation2 + $0x1f] sm:$0xff]
        %v4747 = vld [vmem:[#allocation2 + $0x27] sm:$0xff]
        %v4748 = vld [vmem:[#allocation2 + $0x2f] sm:$0xff]
        %v4749 = vld [vmem:[#allocation2 + $0x37] sm:$0xff]
        %v4750 = vld [vmem:[#allocation2 + $0x3f] sm:$0xff]
        %v4751 = vld [vmem:[#allocation2 + $0x47] sm:$0xff]
        %v4752 = vld [vmem:[#allocation2 + $0x4f] sm:$0xff]
        %v4753 = vld [vmem:[#allocation2 + $0x57] sm:$0xff]
        %v4754 = vld [vmem:[#allocation2 + $0x5f] sm:$0xff]
        %v4755 = vld [vmem:[#allocation2 + $0x67] sm:$0xff]
        %v4756 = vld [vmem:[#allocation2 + $0x6f] sm:$0xff]
        %v4757 = vld [vmem:[#allocation2 + $0x77] sm:$0xff]
        %v4758 = vld [vmem:[#allocation2 + $0x7f] sm:$0xff]
        %v4759 = vld [vmem:[#allocation2 + $0x87] sm:$0xff]
        %v4760 = vld [vmem:[#allocation2 + $0x8f] sm:$0xff]
        %v4761 = vld [vmem:[#allocation2 + $0x97] sm:$0xff]
        %v4762 = vld [vmem:[#allocation2 + $0x9f] sm:$0xff]
        %v4763 = vld [vmem:[#allocation2 + $0xa7] sm:$0xff]
        %v4764 = vld [vmem:[#allocation2 + $0xaf] sm:$0xff]
        %v4765 = vld [vmem:[#allocation2 + $0xb7] sm:$0xff]
        %v4766 = vld [vmem:[#allocation2 + $0xbf] sm:$0xff]
        %v4767 = vld [vmem:[#allocation2 + $0xc7] sm:$0xff]
        %v4768 = vld [vmem:[#allocation2 + $0xcf] sm:$0xff]
        %v4769 = vld [vmem:[#allocation2 + $0xd7] sm:$0xff]
        %v4770 = vld [vmem:[#allocation2 + $0xdf] sm:$0xff]
        %v4771 = vld [vmem:[#allocation2 + $0xe7] sm:$0xff]
        %v4772 = vld [vmem:[#allocation2 + $0xef] sm:$0xff]
        %v4773 = vld [vmem:[#allocation2 + $0xf7] sm:$0xff]
        %v4774 = vld [vmem:[#allocation2 + $0xff] sm:$0xff]
        %v4775 = vld [vmem:[#allocation2 + $0x107] sm:$0xff]
        %v4776 = vld [vmem:[#allocation2 + $0x10f] sm:$0xff]
        %v4777 = vld [vmem:[#allocation2 + $0x117] sm:$0xff]
        %v4778 = vld [vmem:[#allocation2 + $0x11f] sm:$0xff]
        %v4779 = vld [vmem:[#allocation2 + $0x127] sm:$0xff]
        %v4780 = vld [vmem:[#allocation2 + $0x12f] sm:$0xff]
        %v4781 = vld [vmem:[#allocation2 + $0x137] sm:$0xff]
        %v4782 = vld [vmem:[#allocation2 + $0x13f] sm:$0xff]
        %v4783 = vld [vmem:[#allocation2 + $0x147] sm:$0xff]
        %v4784 = vld [vmem:[#allocation2 + $0x14f] sm:$0xff]
        %v4785 = vld [vmem:[#allocation2 + $0x157] sm:$0xff]
        %v4786 = vld [vmem:[#allocation2 + $0x15f] sm:$0xff]
        %v4787 = vld [vmem:[#allocation2 + $0x167] sm:$0xf]
        %4830 = vrot.lane.b32.xlu0 %v4746, 104
        %v4831 = vpop.permute.xlu0 %4830
        %4832 = vrot.lane.b32.xlu0 %v4747, 104
        %v4833 = vpop.permute.xlu0 %4832
        %4834 = vrot.lane.b32.xlu0 %v4748, 104
        %v4835 = vpop.permute.xlu0 %4834
        %4836 = vrot.lane.b32.xlu0 %v4749, 104
        %v4837 = vpop.permute.xlu0 %4836
        %4838 = vrot.lane.b32.xlu0 %v4750, 104
        %v4839 = vpop.permute.xlu0 %4838
        %4840 = vrot.lane.b32.xlu0 %v4751, 104
        %v4841 = vpop.permute.xlu0 %4840
        %4842 = vrot.lane.b32.xlu0 %v4752, 104
        %v4843 = vpop.permute.xlu0 %4842
        %4844 = vrot.lane.b32.xlu0 %v4753, 104
        %v4845 = vpop.permute.xlu0 %4844
        %4846 = vrot.lane.b32.xlu0 %v4754, 104
        %v4847 = vpop.permute.xlu0 %4846
        %4848 = vrot.lane.b32.xlu0 %v4755, 104
        %v4849 = vpop.permute.xlu0 %4848
        %4850 = vrot.lane.b32.xlu0 %v4756, 104
        %v4851 = vpop.permute.xlu0 %4850
        %4852 = vrot.lane.b32.xlu0 %v4757, 104
        %v4853 = vpop.permute.xlu0 %4852
        %4854 = vrot.lane.b32.xlu0 %v4758, 104
        %v4855 = vpop.permute.xlu0 %4854
        %4856 = vrot.lane.b32.xlu0 %v4759, 104
        %v4857 = vpop.permute.xlu0 %4856
        %4858 = vrot.lane.b32.xlu0 %v4760, 104
        %v4859 = vpop.permute.xlu0 %4858
        %4860 = vrot.lane.b32.xlu0 %v4761, 104
        %v4861 = vpop.permute.xlu0 %4860
        %4862 = vrot.lane.b32.xlu0 %v4762, 104
        %v4863 = vpop.permute.xlu0 %4862
        %4864 = vrot.lane.b32.xlu0 %v4763, 104
        %v4865 = vpop.permute.xlu0 %4864
        %4866 = vrot.lane.b32.xlu0 %v4764, 104
        %v4867 = vpop.permute.xlu0 %4866
        %4868 = vrot.lane.b32.xlu0 %v4765, 104
        %v4869 = vpop.permute.xlu0 %4868
        %4870 = vrot.lane.b32.xlu0 %v4766, 104
        %v4871 = vpop.permute.xlu0 %4870
        %4872 = vrot.lane.b32.xlu0 %v4767, 104
        %v4873 = vpop.permute.xlu0 %4872
        %4874 = vrot.lane.b32.xlu0 %v4768, 104
        %v4875 = vpop.permute.xlu0 %4874
        %4876 = vrot.lane.b32.xlu0 %v4769, 104
        %v4877 = vpop.permute.xlu0 %4876
        %4878 = vrot.lane.b32.xlu0 %v4770, 104
        %v4879 = vpop.permute.xlu0 %4878
        %4880 = vrot.lane.b32.xlu0 %v4771, 104
        %v4881 = vpop.permute.xlu0 %4880
        %4882 = vrot.lane.b32.xlu0 %v4772, 104
        %v4883 = vpop.permute.xlu0 %4882
        %4884 = vrot.lane.b32.xlu0 %v4773, 104
        %v4885 = vpop.permute.xlu0 %4884
        %4886 = vrot.lane.b32.xlu0 %v4774, 104
        %v4887 = vpop.permute.xlu0 %4886
        %4888 = vrot.lane.b32.xlu0 %v4775, 104
        %v4889 = vpop.permute.xlu0 %4888
        %4890 = vrot.lane.b32.xlu0 %v4776, 104
        %v4891 = vpop.permute.xlu0 %4890
        %4892 = vrot.lane.b32.xlu0 %v4777, 104
        %v4893 = vpop.permute.xlu0 %4892
        %4894 = vrot.lane.b32.xlu0 %v4778, 104
        %v4895 = vpop.permute.xlu0 %4894
        %4896 = vrot.lane.b32.xlu0 %v4779, 104
        %v4897 = vpop.permute.xlu0 %4896
        %4898 = vrot.lane.b32.xlu0 %v4780, 104
        %v4899 = vpop.permute.xlu0 %4898
        %4900 = vrot.lane.b32.xlu0 %v4781, 104
        %v4901 = vpop.permute.xlu0 %4900
        %4902 = vrot.lane.b32.xlu0 %v4782, 104
        %v4903 = vpop.permute.xlu0 %4902
        %4904 = vrot.lane.b32.xlu0 %v4783, 104
        %v4905 = vpop.permute.xlu0 %4904
        %4906 = vrot.lane.b32.xlu0 %v4784, 104
        %v4907 = vpop.permute.xlu0 %4906
        %4908 = vrot.lane.b32.xlu0 %v4785, 104
        %v4909 = vpop.permute.xlu0 %4908
        %4910 = vrot.lane.b32.xlu0 %v4786, 104
        %v4911 = vpop.permute.xlu0 %4910
        %4912 = vrot.lane.b32.xlu0 %v4787, 104
        %v4913 = vpop.permute.xlu0 %4912
        %vm4956 = vcmask 917312
        %4957 = vst.msk [vmem:[#allocation3] sm:$0xff] %vm4956, %v4831
        %4958 = vst.msk [vmem:[#allocation3 + $0x10] sm:$0xff] %vm4956, %v4833
        %4959 = vst.msk [vmem:[#allocation3 + $0x20] sm:$0xff] %vm4956, %v4835
        %4960 = vst.msk [vmem:[#allocation3 + $0x30] sm:$0xff] %vm4956, %v4837
        %4961 = vst.msk [vmem:[#allocation3 + $0x40] sm:$0xff] %vm4956, %v4839
        %4962 = vst.msk [vmem:[#allocation3 + $0x50] sm:$0xff] %vm4956, %v4841
        %4963 = vst.msk [vmem:[#allocation3 + $0x60] sm:$0xff] %vm4956, %v4843
        %4964 = vst.msk [vmem:[#allocation3 + $0x70] sm:$0xff] %vm4956, %v4845
        %4965 = vst.msk [vmem:[#allocation3 + $0x80] sm:$0xff] %vm4956, %v4847
        %4966 = vst.msk [vmem:[#allocation3 + $0x90] sm:$0xff] %vm4956, %v4849
        %4967 = vst.msk [vmem:[#allocation3 + $0xa0] sm:$0xff] %vm4956, %v4851
        %4968 = vst.msk [vmem:[#allocation3 + $0xb0] sm:$0xff] %vm4956, %v4853
        %4969 = vst.msk [vmem:[#allocation3 + $0xc0] sm:$0xff] %vm4956, %v4855
        %4970 = vst.msk [vmem:[#allocation3 + $0xd0] sm:$0xff] %vm4956, %v4857
        %4971 = vst.msk [vmem:[#allocation3 + $0xe0] sm:$0xff] %vm4956, %v4859
        %4972 = vst.msk [vmem:[#allocation3 + $0xf0] sm:$0xff] %vm4956, %v4861
        %4973 = vst.msk [vmem:[#allocation3 + $0x100] sm:$0xff] %vm4956, %v4863
        %4974 = vst.msk [vmem:[#allocation3 + $0x110] sm:$0xff] %vm4956, %v4865
        %4975 = vst.msk [vmem:[#allocation3 + $0x120] sm:$0xff] %vm4956, %v4867
        %4976 = vst.msk [vmem:[#allocation3 + $0x130] sm:$0xff] %vm4956, %v4869
        %4977 = vst.msk [vmem:[#allocation3 + $0x140] sm:$0xff] %vm4956, %v4871
        %4978 = vst.msk [vmem:[#allocation3 + $0x150] sm:$0xff] %vm4956, %v4873
        %4979 = vst.msk [vmem:[#allocation3 + $0x160] sm:$0xff] %vm4956, %v4875
        %4980 = vst.msk [vmem:[#allocation3 + $0x170] sm:$0xff] %vm4956, %v4877
        %4981 = vst.msk [vmem:[#allocation3 + $0x180] sm:$0xff] %vm4956, %v4879
        %4982 = vst.msk [vmem:[#allocation3 + $0x190] sm:$0xff] %vm4956, %v4881
        %4983 = vst.msk [vmem:[#allocation3 + $0x1a0] sm:$0xff] %vm4956, %v4883
        %4984 = vst.msk [vmem:[#allocation3 + $0x1b0] sm:$0xff] %vm4956, %v4885
        %4985 = vst.msk [vmem:[#allocation3 + $0x1c0] sm:$0xff] %vm4956, %v4887
        %4986 = vst.msk [vmem:[#allocation3 + $0x1d0] sm:$0xff] %vm4956, %v4889
        %4987 = vst.msk [vmem:[#allocation3 + $0x1e0] sm:$0xff] %vm4956, %v4891
        %4988 = vst.msk [vmem:[#allocation3 + $0x1f0] sm:$0xff] %vm4956, %v4893
        %4989 = vst.msk [vmem:[#allocation3 + $0x200] sm:$0xff] %vm4956, %v4895
        %4990 = vst.msk [vmem:[#allocation3 + $0x210] sm:$0xff] %vm4956, %v4897
        %4991 = vst.msk [vmem:[#allocation3 + $0x220] sm:$0xff] %vm4956, %v4899
        %4992 = vst.msk [vmem:[#allocation3 + $0x230] sm:$0xff] %vm4956, %v4901
        %4993 = vst.msk [vmem:[#allocation3 + $0x240] sm:$0xff] %vm4956, %v4903
        %4994 = vst.msk [vmem:[#allocation3 + $0x250] sm:$0xff] %vm4956, %v4905
        %4995 = vst.msk [vmem:[#allocation3 + $0x260] sm:$0xff] %vm4956, %v4907
        %4996 = vst.msk [vmem:[#allocation3 + $0x270] sm:$0xff] %vm4956, %v4909
        %4997 = vst.msk [vmem:[#allocation3 + $0x280] sm:$0xff] %vm4956, %v4911
        %vm4998 = vcmask 913216
        %4999 = vst.msk [vmem:[#allocation3 + $0x290] sm:$0xf] %vm4998, %v4913
        %v5000 = vld [vmem:[#allocation2 + $0x20] sm:$0xff]
        %v5001 = vld [vmem:[#allocation2 + $0x28] sm:$0xff]
        %v5002 = vld [vmem:[#allocation2 + $0x30] sm:$0xff]
        %v5003 = vld [vmem:[#allocation2 + $0x38] sm:$0xff]
        %v5004 = vld [vmem:[#allocation2 + $0x40] sm:$0xff]
        %v5005 = vld [vmem:[#allocation2 + $0x48] sm:$0xff]
        %v5006 = vld [vmem:[#allocation2 + $0x50] sm:$0xff]
        %v5007 = vld [vmem:[#allocation2 + $0x58] sm:$0xff]
        %v5008 = vld [vmem:[#allocation2 + $0x60] sm:$0xff]
        %v5009 = vld [vmem:[#allocation2 + $0x68] sm:$0xff]
        %v5010 = vld [vmem:[#allocation2 + $0x70] sm:$0xff]
        %v5011 = vld [vmem:[#allocation2 + $0x78] sm:$0xff]
        %v5012 = vld [vmem:[#allocation2 + $0x80] sm:$0xff]
        %v5013 = vld [vmem:[#allocation2 + $0x88] sm:$0xff]
        %v5014 = vld [vmem:[#allocation2 + $0x90] sm:$0xff]
        %v5015 = vld [vmem:[#allocation2 + $0x98] sm:$0xff]
        %v5016 = vld [vmem:[#allocation2 + $0xa0] sm:$0xff]
        %v5017 = vld [vmem:[#allocation2 + $0xa8] sm:$0xff]
        %v5018 = vld [vmem:[#allocation2 + $0xb0] sm:$0xff]
        %v5019 = vld [vmem:[#allocation2 + $0xb8] sm:$0xff]
        %v5020 = vld [vmem:[#allocation2 + $0xc0] sm:$0xff]
        %v5021 = vld [vmem:[#allocation2 + $0xc8] sm:$0xff]
        %v5022 = vld [vmem:[#allocation2 + $0xd0] sm:$0xff]
        %v5023 = vld [vmem:[#allocation2 + $0xd8] sm:$0xff]
        %v5024 = vld [vmem:[#allocation2 + $0xe0] sm:$0xff]
        %v5025 = vld [vmem:[#allocation2 + $0xe8] sm:$0xff]
        %v5026 = vld [vmem:[#allocation2 + $0xf0] sm:$0xff]
        %v5027 = vld [vmem:[#allocation2 + $0xf8] sm:$0xff]
        %v5028 = vld [vmem:[#allocation2 + $0x100] sm:$0xff]
        %v5029 = vld [vmem:[#allocation2 + $0x108] sm:$0xff]
        %v5030 = vld [vmem:[#allocation2 + $0x110] sm:$0xff]
        %v5031 = vld [vmem:[#allocation2 + $0x118] sm:$0xff]
        %v5032 = vld [vmem:[#allocation2 + $0x120] sm:$0xff]
        %v5033 = vld [vmem:[#allocation2 + $0x128] sm:$0xff]
        %v5034 = vld [vmem:[#allocation2 + $0x130] sm:$0xff]
        %v5035 = vld [vmem:[#allocation2 + $0x138] sm:$0xff]
        %v5036 = vld [vmem:[#allocation2 + $0x140] sm:$0xff]
        %v5037 = vld [vmem:[#allocation2 + $0x148] sm:$0xff]
        %v5038 = vld [vmem:[#allocation2 + $0x150] sm:$0xff]
        %v5039 = vld [vmem:[#allocation2 + $0x158] sm:$0xff]
        %v5040 = vld [vmem:[#allocation2 + $0x160] sm:$0xff]
        %v5041 = vld [vmem:[#allocation2 + $0x168] sm:$0xf]
        %5084 = vrot.lane.b32.xlu0 %v5000, 112
        %v5085 = vpop.permute.xlu0 %5084
        %5086 = vrot.lane.b32.xlu0 %v5001, 112
        %v5087 = vpop.permute.xlu0 %5086
        %5088 = vrot.lane.b32.xlu0 %v5002, 112
        %v5089 = vpop.permute.xlu0 %5088
        %5090 = vrot.lane.b32.xlu0 %v5003, 112
        %v5091 = vpop.permute.xlu0 %5090
        %5092 = vrot.lane.b32.xlu0 %v5004, 112
        %v5093 = vpop.permute.xlu0 %5092
        %5094 = vrot.lane.b32.xlu0 %v5005, 112
        %v5095 = vpop.permute.xlu0 %5094
        %5096 = vrot.lane.b32.xlu0 %v5006, 112
        %v5097 = vpop.permute.xlu0 %5096
        %5098 = vrot.lane.b32.xlu0 %v5007, 112
        %v5099 = vpop.permute.xlu0 %5098
        %5100 = vrot.lane.b32.xlu0 %v5008, 112
        %v5101 = vpop.permute.xlu0 %5100
        %5102 = vrot.lane.b32.xlu0 %v5009, 112
        %v5103 = vpop.permute.xlu0 %5102
        %5104 = vrot.lane.b32.xlu0 %v5010, 112
        %v5105 = vpop.permute.xlu0 %5104
        %5106 = vrot.lane.b32.xlu0 %v5011, 112
        %v5107 = vpop.permute.xlu0 %5106
        %5108 = vrot.lane.b32.xlu0 %v5012, 112
        %v5109 = vpop.permute.xlu0 %5108
        %5110 = vrot.lane.b32.xlu0 %v5013, 112
        %v5111 = vpop.permute.xlu0 %5110
        %5112 = vrot.lane.b32.xlu0 %v5014, 112
        %v5113 = vpop.permute.xlu0 %5112
        %5114 = vrot.lane.b32.xlu0 %v5015, 112
        %v5115 = vpop.permute.xlu0 %5114
        %5116 = vrot.lane.b32.xlu0 %v5016, 112
        %v5117 = vpop.permute.xlu0 %5116
        %5118 = vrot.lane.b32.xlu0 %v5017, 112
        %v5119 = vpop.permute.xlu0 %5118
        %5120 = vrot.lane.b32.xlu0 %v5018, 112
        %v5121 = vpop.permute.xlu0 %5120
        %5122 = vrot.lane.b32.xlu0 %v5019, 112
        %v5123 = vpop.permute.xlu0 %5122
        %5124 = vrot.lane.b32.xlu0 %v5020, 112
        %v5125 = vpop.permute.xlu0 %5124
        %5126 = vrot.lane.b32.xlu0 %v5021, 112
        %v5127 = vpop.permute.xlu0 %5126
        %5128 = vrot.lane.b32.xlu0 %v5022, 112
        %v5129 = vpop.permute.xlu0 %5128
        %5130 = vrot.lane.b32.xlu0 %v5023, 112
        %v5131 = vpop.permute.xlu0 %5130
        %5132 = vrot.lane.b32.xlu0 %v5024, 112
        %v5133 = vpop.permute.xlu0 %5132
        %5134 = vrot.lane.b32.xlu0 %v5025, 112
        %v5135 = vpop.permute.xlu0 %5134
        %5136 = vrot.lane.b32.xlu0 %v5026, 112
        %v5137 = vpop.permute.xlu0 %5136
        %5138 = vrot.lane.b32.xlu0 %v5027, 112
        %v5139 = vpop.permute.xlu0 %5138
        %5140 = vrot.lane.b32.xlu0 %v5028, 112
        %v5141 = vpop.permute.xlu0 %5140
        %5142 = vrot.lane.b32.xlu0 %v5029, 112
        %v5143 = vpop.permute.xlu0 %5142
        %5144 = vrot.lane.b32.xlu0 %v5030, 112
        %v5145 = vpop.permute.xlu0 %5144
        %5146 = vrot.lane.b32.xlu0 %v5031, 112
        %v5147 = vpop.permute.xlu0 %5146
        %5148 = vrot.lane.b32.xlu0 %v5032, 112
        %v5149 = vpop.permute.xlu0 %5148
        %5150 = vrot.lane.b32.xlu0 %v5033, 112
        %v5151 = vpop.permute.xlu0 %5150
        %5152 = vrot.lane.b32.xlu0 %v5034, 112
        %v5153 = vpop.permute.xlu0 %5152
        %5154 = vrot.lane.b32.xlu0 %v5035, 112
        %v5155 = vpop.permute.xlu0 %5154
        %5156 = vrot.lane.b32.xlu0 %v5036, 112
        %v5157 = vpop.permute.xlu0 %5156
        %5158 = vrot.lane.b32.xlu0 %v5037, 112
        %v5159 = vpop.permute.xlu0 %5158
        %5160 = vrot.lane.b32.xlu0 %v5038, 112
        %v5161 = vpop.permute.xlu0 %5160
        %5162 = vrot.lane.b32.xlu0 %v5039, 112
        %v5163 = vpop.permute.xlu0 %5162
        %5164 = vrot.lane.b32.xlu0 %v5040, 112
        %v5165 = vpop.permute.xlu0 %5164
        %5166 = vrot.lane.b32.xlu0 %v5041, 112
        %v5167 = vpop.permute.xlu0 %5166
        %vm5210 = vcmask 982912
        %5211 = vst.msk [vmem:[#allocation3] sm:$0xff] %vm5210, %v5085
        %5212 = vst.msk [vmem:[#allocation3 + $0x10] sm:$0xff] %vm5210, %v5087
        %5213 = vst.msk [vmem:[#allocation3 + $0x20] sm:$0xff] %vm5210, %v5089
        %5214 = vst.msk [vmem:[#allocation3 + $0x30] sm:$0xff] %vm5210, %v5091
        %5215 = vst.msk [vmem:[#allocation3 + $0x40] sm:$0xff] %vm5210, %v5093
        %5216 = vst.msk [vmem:[#allocation3 + $0x50] sm:$0xff] %vm5210, %v5095
        %5217 = vst.msk [vmem:[#allocation3 + $0x60] sm:$0xff] %vm5210, %v5097
        %5218 = vst.msk [vmem:[#allocation3 + $0x70] sm:$0xff] %vm5210, %v5099
        %5219 = vst.msk [vmem:[#allocation3 + $0x80] sm:$0xff] %vm5210, %v5101
        %5220 = vst.msk [vmem:[#allocation3 + $0x90] sm:$0xff] %vm5210, %v5103
        %5221 = vst.msk [vmem:[#allocation3 + $0xa0] sm:$0xff] %vm5210, %v5105
        %5222 = vst.msk [vmem:[#allocation3 + $0xb0] sm:$0xff] %vm5210, %v5107
        %5223 = vst.msk [vmem:[#allocation3 + $0xc0] sm:$0xff] %vm5210, %v5109
        %5224 = vst.msk [vmem:[#allocation3 + $0xd0] sm:$0xff] %vm5210, %v5111
        %5225 = vst.msk [vmem:[#allocation3 + $0xe0] sm:$0xff] %vm5210, %v5113
        %5226 = vst.msk [vmem:[#allocation3 + $0xf0] sm:$0xff] %vm5210, %v5115
        %5227 = vst.msk [vmem:[#allocation3 + $0x100] sm:$0xff] %vm5210, %v5117
        %5228 = vst.msk [vmem:[#allocation3 + $0x110] sm:$0xff] %vm5210, %v5119
        %5229 = vst.msk [vmem:[#allocation3 + $0x120] sm:$0xff] %vm5210, %v5121
        %5230 = vst.msk [vmem:[#allocation3 + $0x130] sm:$0xff] %vm5210, %v5123
        %5231 = vst.msk [vmem:[#allocation3 + $0x140] sm:$0xff] %vm5210, %v5125
        %5232 = vst.msk [vmem:[#allocation3 + $0x150] sm:$0xff] %vm5210, %v5127
        %5233 = vst.msk [vmem:[#allocation3 + $0x160] sm:$0xff] %vm5210, %v5129
        %5234 = vst.msk [vmem:[#allocation3 + $0x170] sm:$0xff] %vm5210, %v5131
        %5235 = vst.msk [vmem:[#allocation3 + $0x180] sm:$0xff] %vm5210, %v5133
        %5236 = vst.msk [vmem:[#allocation3 + $0x190] sm:$0xff] %vm5210, %v5135
        %5237 = vst.msk [vmem:[#allocation3 + $0x1a0] sm:$0xff] %vm5210, %v5137
        %5238 = vst.msk [vmem:[#allocation3 + $0x1b0] sm:$0xff] %vm5210, %v5139
        %5239 = vst.msk [vmem:[#allocation3 + $0x1c0] sm:$0xff] %vm5210, %v5141
        %5240 = vst.msk [vmem:[#allocation3 + $0x1d0] sm:$0xff] %vm5210, %v5143
        %5241 = vst.msk [vmem:[#allocation3 + $0x1e0] sm:$0xff] %vm5210, %v5145
        %5242 = vst.msk [vmem:[#allocation3 + $0x1f0] sm:$0xff] %vm5210, %v5147
        %5243 = vst.msk [vmem:[#allocation3 + $0x200] sm:$0xff] %vm5210, %v5149
        %5244 = vst.msk [vmem:[#allocation3 + $0x210] sm:$0xff] %vm5210, %v5151
        %5245 = vst.msk [vmem:[#allocation3 + $0x220] sm:$0xff] %vm5210, %v5153
        %5246 = vst.msk [vmem:[#allocation3 + $0x230] sm:$0xff] %vm5210, %v5155
        %5247 = vst.msk [vmem:[#allocation3 + $0x240] sm:$0xff] %vm5210, %v5157
        %5248 = vst.msk [vmem:[#allocation3 + $0x250] sm:$0xff] %vm5210, %v5159
        %5249 = vst.msk [vmem:[#allocation3 + $0x260] sm:$0xff] %vm5210, %v5161
        %5250 = vst.msk [vmem:[#allocation3 + $0x270] sm:$0xff] %vm5210, %v5163
        %5251 = vst.msk [vmem:[#allocation3 + $0x280] sm:$0xff] %vm5210, %v5165
        %vm5252 = vcmask 978816
        %5253 = vst.msk [vmem:[#allocation3 + $0x290] sm:$0xf] %vm5252, %v5167
        %v5254 = vld [vmem:[#allocation2 + $0x2a] sm:$0xff]
        %v5255 = vld [vmem:[#allocation2 + $0x32] sm:$0xff]
        %v5256 = vld [vmem:[#allocation2 + $0x3a] sm:$0xff]
        %v5257 = vld [vmem:[#allocation2 + $0x42] sm:$0xff]
        %v5258 = vld [vmem:[#allocation2 + $0x4a] sm:$0xff]
        %v5259 = vld [vmem:[#allocation2 + $0x52] sm:$0xff]
        %v5260 = vld [vmem:[#allocation2 + $0x5a] sm:$0xff]
        %v5261 = vld [vmem:[#allocation2 + $0x62] sm:$0xff]
        %v5262 = vld [vmem:[#allocation2 + $0x6a] sm:$0xff]
        %v5263 = vld [vmem:[#allocation2 + $0x72] sm:$0xff]
        %v5264 = vld [vmem:[#allocation2 + $0x7a] sm:$0xff]
        %v5265 = vld [vmem:[#allocation2 + $0x82] sm:$0xff]
        %v5266 = vld [vmem:[#allocation2 + $0x8a] sm:$0xff]
        %v5267 = vld [vmem:[#allocation2 + $0x92] sm:$0xff]
        %v5268 = vld [vmem:[#allocation2 + $0x9a] sm:$0xff]
        %v5269 = vld [vmem:[#allocation2 + $0xa2] sm:$0xff]
        %v5270 = vld [vmem:[#allocation2 + $0xaa] sm:$0xff]
        %v5271 = vld [vmem:[#allocation2 + $0xb2] sm:$0xff]
        %v5272 = vld [vmem:[#allocation2 + $0xba] sm:$0xff]
        %v5273 = vld [vmem:[#allocation2 + $0xc2] sm:$0xff]
        %v5274 = vld [vmem:[#allocation2 + $0xca] sm:$0xff]
        %v5275 = vld [vmem:[#allocation2 + $0xd2] sm:$0xff]
        %v5276 = vld [vmem:[#allocation2 + $0xda] sm:$0xff]
        %v5277 = vld [vmem:[#allocation2 + $0xe2] sm:$0xff]
        %v5278 = vld [vmem:[#allocation2 + $0xea] sm:$0xff]
        %v5279 = vld [vmem:[#allocation2 + $0xf2] sm:$0xff]
        %v5280 = vld [vmem:[#allocation2 + $0xfa] sm:$0xff]
        %v5281 = vld [vmem:[#allocation2 + $0x102] sm:$0xff]
        %v5282 = vld [vmem:[#allocation2 + $0x10a] sm:$0xff]
        %v5283 = vld [vmem:[#allocation2 + $0x112] sm:$0xff]
        %v5284 = vld [vmem:[#allocation2 + $0x11a] sm:$0xff]
        %v5285 = vld [vmem:[#allocation2 + $0x122] sm:$0xff]
        %v5286 = vld [vmem:[#allocation2 + $0x12a] sm:$0xff]
        %v5287 = vld [vmem:[#allocation2 + $0x132] sm:$0xff]
        %v5288 = vld [vmem:[#allocation2 + $0x13a] sm:$0xff]
        %v5289 = vld [vmem:[#allocation2 + $0x142] sm:$0xff]
        %v5290 = vld [vmem:[#allocation2 + $0x14a] sm:$0xff]
        %v5291 = vld [vmem:[#allocation2 + $0x152] sm:$0xff]
        %v5292 = vld [vmem:[#allocation2 + $0x15a] sm:$0xff]
        %v5293 = vld [vmem:[#allocation2 + $0x162] sm:$0xff]
        %v5294 = vld [vmem:[#allocation2 + $0x16a] sm:$0xff]
        %v5295 = vld [vmem:[#allocation2 + $0x172] sm:$0xf]
        %5338 = vrot.lane.b32.xlu0 %v5254, 120
        %v5339 = vpop.permute.xlu0 %5338
        %5340 = vrot.lane.b32.xlu0 %v5255, 120
        %v5341 = vpop.permute.xlu0 %5340
        %5342 = vrot.lane.b32.xlu0 %v5256, 120
        %v5343 = vpop.permute.xlu0 %5342
        %5344 = vrot.lane.b32.xlu0 %v5257, 120
        %v5345 = vpop.permute.xlu0 %5344
        %5346 = vrot.lane.b32.xlu0 %v5258, 120
        %v5347 = vpop.permute.xlu0 %5346
        %5348 = vrot.lane.b32.xlu0 %v5259, 120
        %v5349 = vpop.permute.xlu0 %5348
        %5350 = vrot.lane.b32.xlu0 %v5260, 120
        %v5351 = vpop.permute.xlu0 %5350
        %5352 = vrot.lane.b32.xlu0 %v5261, 120
        %v5353 = vpop.permute.xlu0 %5352
        %5354 = vrot.lane.b32.xlu0 %v5262, 120
        %v5355 = vpop.permute.xlu0 %5354
        %5356 = vrot.lane.b32.xlu0 %v5263, 120
        %v5357 = vpop.permute.xlu0 %5356
        %5358 = vrot.lane.b32.xlu0 %v5264, 120
        %v5359 = vpop.permute.xlu0 %5358
        %5360 = vrot.lane.b32.xlu0 %v5265, 120
        %v5361 = vpop.permute.xlu0 %5360
        %5362 = vrot.lane.b32.xlu0 %v5266, 120
        %v5363 = vpop.permute.xlu0 %5362
        %5364 = vrot.lane.b32.xlu0 %v5267, 120
        %v5365 = vpop.permute.xlu0 %5364
        %5366 = vrot.lane.b32.xlu0 %v5268, 120
        %v5367 = vpop.permute.xlu0 %5366
        %5368 = vrot.lane.b32.xlu0 %v5269, 120
        %v5369 = vpop.permute.xlu0 %5368
        %5370 = vrot.lane.b32.xlu0 %v5270, 120
        %v5371 = vpop.permute.xlu0 %5370
        %5372 = vrot.lane.b32.xlu0 %v5271, 120
        %v5373 = vpop.permute.xlu0 %5372
        %5374 = vrot.lane.b32.xlu0 %v5272, 120
        %v5375 = vpop.permute.xlu0 %5374
        %5376 = vrot.lane.b32.xlu0 %v5273, 120
        %v5377 = vpop.permute.xlu0 %5376
        %5378 = vrot.lane.b32.xlu0 %v5274, 120
        %v5379 = vpop.permute.xlu0 %5378
        %5380 = vrot.lane.b32.xlu0 %v5275, 120
        %v5381 = vpop.permute.xlu0 %5380
        %5382 = vrot.lane.b32.xlu0 %v5276, 120
        %v5383 = vpop.permute.xlu0 %5382
        %5384 = vrot.lane.b32.xlu0 %v5277, 120
        %v5385 = vpop.permute.xlu0 %5384
        %5386 = vrot.lane.b32.xlu0 %v5278, 120
        %v5387 = vpop.permute.xlu0 %5386
        %5388 = vrot.lane.b32.xlu0 %v5279, 120
        %v5389 = vpop.permute.xlu0 %5388
        %5390 = vrot.lane.b32.xlu0 %v5280, 120
        %v5391 = vpop.permute.xlu0 %5390
        %5392 = vrot.lane.b32.xlu0 %v5281, 120
        %v5393 = vpop.permute.xlu0 %5392
        %5394 = vrot.lane.b32.xlu0 %v5282, 120
        %v5395 = vpop.permute.xlu0 %5394
        %5396 = vrot.lane.b32.xlu0 %v5283, 120
        %v5397 = vpop.permute.xlu0 %5396
        %5398 = vrot.lane.b32.xlu0 %v5284, 120
        %v5399 = vpop.permute.xlu0 %5398
        %5400 = vrot.lane.b32.xlu0 %v5285, 120
        %v5401 = vpop.permute.xlu0 %5400
        %5402 = vrot.lane.b32.xlu0 %v5286, 120
        %v5403 = vpop.permute.xlu0 %5402
        %5404 = vrot.lane.b32.xlu0 %v5287, 120
        %v5405 = vpop.permute.xlu0 %5404
        %5406 = vrot.lane.b32.xlu0 %v5288, 120
        %v5407 = vpop.permute.xlu0 %5406
        %5408 = vrot.lane.b32.xlu0 %v5289, 120
        %v5409 = vpop.permute.xlu0 %5408
        %5410 = vrot.lane.b32.xlu0 %v5290, 120
        %v5411 = vpop.permute.xlu0 %5410
        %5412 = vrot.lane.b32.xlu0 %v5291, 120
        %v5413 = vpop.permute.xlu0 %5412
        %5414 = vrot.lane.b32.xlu0 %v5292, 120
        %v5415 = vpop.permute.xlu0 %5414
        %5416 = vrot.lane.b32.xlu0 %v5293, 120
        %v5417 = vpop.permute.xlu0 %5416
        %5418 = vrot.lane.b32.xlu0 %v5294, 120
        %v5419 = vpop.permute.xlu0 %5418
        %5420 = vrot.lane.b32.xlu0 %v5295, 120
        %v5421 = vpop.permute.xlu0 %5420
        %vm5464 = vcmask 1048512
        %5465 = vst.msk [vmem:[#allocation3] sm:$0xff] %vm5464, %v5339
        %5466 = vst.msk [vmem:[#allocation3 + $0x10] sm:$0xff] %vm5464, %v5341
        %5467 = vst.msk [vmem:[#allocation3 + $0x20] sm:$0xff] %vm5464, %v5343
        %5468 = vst.msk [vmem:[#allocation3 + $0x30] sm:$0xff] %vm5464, %v5345
        %5469 = vst.msk [vmem:[#allocation3 + $0x40] sm:$0xff] %vm5464, %v5347
        %5470 = vst.msk [vmem:[#allocation3 + $0x50] sm:$0xff] %vm5464, %v5349
        %5471 = vst.msk [vmem:[#allocation3 + $0x60] sm:$0xff] %vm5464, %v5351
        %5472 = vst.msk [vmem:[#allocation3 + $0x70] sm:$0xff] %vm5464, %v5353
        %5473 = vst.msk [vmem:[#allocation3 + $0x80] sm:$0xff] %vm5464, %v5355
        %5474 = vst.msk [vmem:[#allocation3 + $0x90] sm:$0xff] %vm5464, %v5357
        %5475 = vst.msk [vmem:[#allocation3 + $0xa0] sm:$0xff] %vm5464, %v5359
        %5476 = vst.msk [vmem:[#allocation3 + $0xb0] sm:$0xff] %vm5464, %v5361
        %5477 = vst.msk [vmem:[#allocation3 + $0xc0] sm:$0xff] %vm5464, %v5363
        %5478 = vst.msk [vmem:[#allocation3 + $0xd0] sm:$0xff] %vm5464, %v5365
        %5479 = vst.msk [vmem:[#allocation3 + $0xe0] sm:$0xff] %vm5464, %v5367
        %5480 = vst.msk [vmem:[#allocation3 + $0xf0] sm:$0xff] %vm5464, %v5369
        %5481 = vst.msk [vmem:[#allocation3 + $0x100] sm:$0xff] %vm5464, %v5371
        %5482 = vst.msk [vmem:[#allocation3 + $0x110] sm:$0xff] %vm5464, %v5373
        %5483 = vst.msk [vmem:[#allocation3 + $0x120] sm:$0xff] %vm5464, %v5375
        %5484 = vst.msk [vmem:[#allocation3 + $0x130] sm:$0xff] %vm5464, %v5377
        %5485 = vst.msk [vmem:[#allocation3 + $0x140] sm:$0xff] %vm5464, %v5379
        %5486 = vst.msk [vmem:[#allocation3 + $0x150] sm:$0xff] %vm5464, %v5381
        %5487 = vst.msk [vmem:[#allocation3 + $0x160] sm:$0xff] %vm5464, %v5383
        %5488 = vst.msk [vmem:[#allocation3 + $0x170] sm:$0xff] %vm5464, %v5385
        %5489 = vst.msk [vmem:[#allocation3 + $0x180] sm:$0xff] %vm5464, %v5387
        %5490 = vst.msk [vmem:[#allocation3 + $0x190] sm:$0xff] %vm5464, %v5389
        %5491 = vst.msk [vmem:[#allocation3 + $0x1a0] sm:$0xff] %vm5464, %v5391
        %5492 = vst.msk [vmem:[#allocation3 + $0x1b0] sm:$0xff] %vm5464, %v5393
        %5493 = vst.msk [vmem:[#allocation3 + $0x1c0] sm:$0xff] %vm5464, %v5395
        %5494 = vst.msk [vmem:[#allocation3 + $0x1d0] sm:$0xff] %vm5464, %v5397
        %5495 = vst.msk [vmem:[#allocation3 + $0x1e0] sm:$0xff] %vm5464, %v5399
        %5496 = vst.msk [vmem:[#allocation3 + $0x1f0] sm:$0xff] %vm5464, %v5401
        %5497 = vst.msk [vmem:[#allocation3 + $0x200] sm:$0xff] %vm5464, %v5403
        %5498 = vst.msk [vmem:[#allocation3 + $0x210] sm:$0xff] %vm5464, %v5405
        %5499 = vst.msk [vmem:[#allocation3 + $0x220] sm:$0xff] %vm5464, %v5407
        %5500 = vst.msk [vmem:[#allocation3 + $0x230] sm:$0xff] %vm5464, %v5409
        %5501 = vst.msk [vmem:[#allocation3 + $0x240] sm:$0xff] %vm5464, %v5411
        %5502 = vst.msk [vmem:[#allocation3 + $0x250] sm:$0xff] %vm5464, %v5413
        %5503 = vst.msk [vmem:[#allocation3 + $0x260] sm:$0xff] %vm5464, %v5415
        %5504 = vst.msk [vmem:[#allocation3 + $0x270] sm:$0xff] %vm5464, %v5417
        %5505 = vst.msk [vmem:[#allocation3 + $0x280] sm:$0xff] %vm5464, %v5419
        %vm5506 = vcmask 1044416
        %5507 = vst.msk [vmem:[#allocation3 + $0x290] sm:$0xf] %vm5506, %v5421
        %v5508 = vld [vmem:[#allocation2 + $0x2b] sm:$0xff]
        %v5509 = vld [vmem:[#allocation2 + $0x33] sm:$0xff]
        %v5510 = vld [vmem:[#allocation2 + $0x3b] sm:$0xff]
        %v5511 = vld [vmem:[#allocation2 + $0x43] sm:$0xff]
        %v5512 = vld [vmem:[#allocation2 + $0x4b] sm:$0xff]
        %v5513 = vld [vmem:[#allocation2 + $0x53] sm:$0xff]
        %v5514 = vld [vmem:[#allocation2 + $0x5b] sm:$0xff]
        %v5515 = vld [vmem:[#allocation2 + $0x63] sm:$0xff]
        %v5516 = vld [vmem:[#allocation2 + $0x6b] sm:$0xff]
        %v5517 = vld [vmem:[#allocation2 + $0x73] sm:$0xff]
        %v5518 = vld [vmem:[#allocation2 + $0x7b] sm:$0xff]
        %v5519 = vld [vmem:[#allocation2 + $0x83] sm:$0xff]
        %v5520 = vld [vmem:[#allocation2 + $0x8b] sm:$0xff]
        %v5521 = vld [vmem:[#allocation2 + $0x93] sm:$0xff]
        %v5522 = vld [vmem:[#allocation2 + $0x9b] sm:$0xff]
        %v5523 = vld [vmem:[#allocation2 + $0xa3] sm:$0xff]
        %v5524 = vld [vmem:[#allocation2 + $0xab] sm:$0xff]
        %v5525 = vld [vmem:[#allocation2 + $0xb3] sm:$0xff]
        %v5526 = vld [vmem:[#allocation2 + $0xbb] sm:$0xff]
        %v5527 = vld [vmem:[#allocation2 + $0xc3] sm:$0xff]
        %v5528 = vld [vmem:[#allocation2 + $0xcb] sm:$0xff]
        %v5529 = vld [vmem:[#allocation2 + $0xd3] sm:$0xff]
        %v5530 = vld [vmem:[#allocation2 + $0xdb] sm:$0xff]
        %v5531 = vld [vmem:[#allocation2 + $0xe3] sm:$0xff]
        %v5532 = vld [vmem:[#allocation2 + $0xeb] sm:$0xff]
        %v5533 = vld [vmem:[#allocation2 + $0xf3] sm:$0xff]
        %v5534 = vld [vmem:[#allocation2 + $0xfb] sm:$0xff]
        %v5535 = vld [vmem:[#allocation2 + $0x103] sm:$0xff]
        %v5536 = vld [vmem:[#allocation2 + $0x10b] sm:$0xff]
        %v5537 = vld [vmem:[#allocation2 + $0x113] sm:$0xff]
        %v5538 = vld [vmem:[#allocation2 + $0x11b] sm:$0xff]
        %v5539 = vld [vmem:[#allocation2 + $0x123] sm:$0xff]
        %v5540 = vld [vmem:[#allocation2 + $0x12b] sm:$0xff]
        %v5541 = vld [vmem:[#allocation2 + $0x133] sm:$0xff]
        %v5542 = vld [vmem:[#allocation2 + $0x13b] sm:$0xff]
        %v5543 = vld [vmem:[#allocation2 + $0x143] sm:$0xff]
        %v5544 = vld [vmem:[#allocation2 + $0x14b] sm:$0xff]
        %v5545 = vld [vmem:[#allocation2 + $0x153] sm:$0xff]
        %v5546 = vld [vmem:[#allocation2 + $0x15b] sm:$0xff]
        %v5547 = vld [vmem:[#allocation2 + $0x163] sm:$0xff]
        %v5548 = vld [vmem:[#allocation2 + $0x16b] sm:$0xff]
        %v5549 = vld [vmem:[#allocation2 + $0x173] sm:$0xf]
        %5550 = vst.msk [vmem:[#allocation3 + $0x8] sm:$0xff] %vm1563, %v5508
        %5551 = vst.msk [vmem:[#allocation3 + $0x18] sm:$0xff] %vm1563, %v5509
        %5552 = vst.msk [vmem:[#allocation3 + $0x28] sm:$0xff] %vm1563, %v5510
        %5553 = vst.msk [vmem:[#allocation3 + $0x38] sm:$0xff] %vm1563, %v5511
        %5554 = vst.msk [vmem:[#allocation3 + $0x48] sm:$0xff] %vm1563, %v5512
        %5555 = vst.msk [vmem:[#allocation3 + $0x58] sm:$0xff] %vm1563, %v5513
        %5556 = vst.msk [vmem:[#allocation3 + $0x68] sm:$0xff] %vm1563, %v5514
        %5557 = vst.msk [vmem:[#allocation3 + $0x78] sm:$0xff] %vm1563, %v5515
        %5558 = vst.msk [vmem:[#allocation3 + $0x88] sm:$0xff] %vm1563, %v5516
        %5559 = vst.msk [vmem:[#allocation3 + $0x98] sm:$0xff] %vm1563, %v5517
        %5560 = vst.msk [vmem:[#allocation3 + $0xa8] sm:$0xff] %vm1563, %v5518
        %5561 = vst.msk [vmem:[#allocation3 + $0xb8] sm:$0xff] %vm1563, %v5519
        %5562 = vst.msk [vmem:[#allocation3 + $0xc8] sm:$0xff] %vm1563, %v5520
        %5563 = vst.msk [vmem:[#allocation3 + $0xd8] sm:$0xff] %vm1563, %v5521
        %5564 = vst.msk [vmem:[#allocation3 + $0xe8] sm:$0xff] %vm1563, %v5522
        %5565 = vst.msk [vmem:[#allocation3 + $0xf8] sm:$0xff] %vm1563, %v5523
        %5566 = vst.msk [vmem:[#allocation3 + $0x108] sm:$0xff] %vm1563, %v5524
        %5567 = vst.msk [vmem:[#allocation3 + $0x118] sm:$0xff] %vm1563, %v5525
        %5568 = vst.msk [vmem:[#allocation3 + $0x128] sm:$0xff] %vm1563, %v5526
        %5569 = vst.msk [vmem:[#allocation3 + $0x138] sm:$0xff] %vm1563, %v5527
        %5570 = vst.msk [vmem:[#allocation3 + $0x148] sm:$0xff] %vm1563, %v5528
        %5571 = vst.msk [vmem:[#allocation3 + $0x158] sm:$0xff] %vm1563, %v5529
        %5572 = vst.msk [vmem:[#allocation3 + $0x168] sm:$0xff] %vm1563, %v5530
        %5573 = vst.msk [vmem:[#allocation3 + $0x178] sm:$0xff] %vm1563, %v5531
        %5574 = vst.msk [vmem:[#allocation3 + $0x188] sm:$0xff] %vm1563, %v5532
        %5575 = vst.msk [vmem:[#allocation3 + $0x198] sm:$0xff] %vm1563, %v5533
        %5576 = vst.msk [vmem:[#allocation3 + $0x1a8] sm:$0xff] %vm1563, %v5534
        %5577 = vst.msk [vmem:[#allocation3 + $0x1b8] sm:$0xff] %vm1563, %v5535
        %5578 = vst.msk [vmem:[#allocation3 + $0x1c8] sm:$0xff] %vm1563, %v5536
        %5579 = vst.msk [vmem:[#allocation3 + $0x1d8] sm:$0xff] %vm1563, %v5537
        %5580 = vst.msk [vmem:[#allocation3 + $0x1e8] sm:$0xff] %vm1563, %v5538
        %5581 = vst.msk [vmem:[#allocation3 + $0x1f8] sm:$0xff] %vm1563, %v5539
        %5582 = vst.msk [vmem:[#allocation3 + $0x208] sm:$0xff] %vm1563, %v5540
        %5583 = vst.msk [vmem:[#allocation3 + $0x218] sm:$0xff] %vm1563, %v5541
        %5584 = vst.msk [vmem:[#allocation3 + $0x228] sm:$0xff] %vm1563, %v5542
        %5585 = vst.msk [vmem:[#allocation3 + $0x238] sm:$0xff] %vm1563, %v5543
        %5586 = vst.msk [vmem:[#allocation3 + $0x248] sm:$0xff] %vm1563, %v5544
        %5587 = vst.msk [vmem:[#allocation3 + $0x258] sm:$0xff] %vm1563, %v5545
        %5588 = vst.msk [vmem:[#allocation3 + $0x268] sm:$0xff] %vm1563, %v5546
        %5589 = vst.msk [vmem:[#allocation3 + $0x278] sm:$0xff] %vm1563, %v5547
        %5590 = vst.msk [vmem:[#allocation3 + $0x288] sm:$0xff] %vm1563, %v5548
        %5591 = vst.msk [vmem:[#allocation3 + $0x298] sm:$0xf] %vm1696, %v5549
        %v5592 = vld [vmem:[#allocation2 + $0x2c] sm:$0xff]
        %v5593 = vld [vmem:[#allocation2 + $0x34] sm:$0xff]
        %v5594 = vld [vmem:[#allocation2 + $0x3c] sm:$0xff]
        %v5595 = vld [vmem:[#allocation2 + $0x44] sm:$0xff]
        %v5596 = vld [vmem:[#allocation2 + $0x4c] sm:$0xff]
        %v5597 = vld [vmem:[#allocation2 + $0x54] sm:$0xff]
        %v5598 = vld [vmem:[#allocation2 + $0x5c] sm:$0xff]
        %v5599 = vld [vmem:[#allocation2 + $0x64] sm:$0xff]
        %v5600 = vld [vmem:[#allocation2 + $0x6c] sm:$0xff]
        %v5601 = vld [vmem:[#allocation2 + $0x74] sm:$0xff]
        %v5602 = vld [vmem:[#allocation2 + $0x7c] sm:$0xff]
        %v5603 = vld [vmem:[#allocation2 + $0x84] sm:$0xff]
        %v5604 = vld [vmem:[#allocation2 + $0x8c] sm:$0xff]
        %v5605 = vld [vmem:[#allocation2 + $0x94] sm:$0xff]
        %v5606 = vld [vmem:[#allocation2 + $0x9c] sm:$0xff]
        %v5607 = vld [vmem:[#allocation2 + $0xa4] sm:$0xff]
        %v5608 = vld [vmem:[#allocation2 + $0xac] sm:$0xff]
        %v5609 = vld [vmem:[#allocation2 + $0xb4] sm:$0xff]
        %v5610 = vld [vmem:[#allocation2 + $0xbc] sm:$0xff]
        %v5611 = vld [vmem:[#allocation2 + $0xc4] sm:$0xff]
        %v5612 = vld [vmem:[#allocation2 + $0xcc] sm:$0xff]
        %v5613 = vld [vmem:[#allocation2 + $0xd4] sm:$0xff]
        %v5614 = vld [vmem:[#allocation2 + $0xdc] sm:$0xff]
        %v5615 = vld [vmem:[#allocation2 + $0xe4] sm:$0xff]
        %v5616 = vld [vmem:[#allocation2 + $0xec] sm:$0xff]
        %v5617 = vld [vmem:[#allocation2 + $0xf4] sm:$0xff]
        %v5618 = vld [vmem:[#allocation2 + $0xfc] sm:$0xff]
        %v5619 = vld [vmem:[#allocation2 + $0x104] sm:$0xff]
        %v5620 = vld [vmem:[#allocation2 + $0x10c] sm:$0xff]
        %v5621 = vld [vmem:[#allocation2 + $0x114] sm:$0xff]
        %v5622 = vld [vmem:[#allocation2 + $0x11c] sm:$0xff]
        %v5623 = vld [vmem:[#allocation2 + $0x124] sm:$0xff]
        %v5624 = vld [vmem:[#allocation2 + $0x12c] sm:$0xff]
        %v5625 = vld [vmem:[#allocation2 + $0x134] sm:$0xff]
        %v5626 = vld [vmem:[#allocation2 + $0x13c] sm:$0xff]
        %v5627 = vld [vmem:[#allocation2 + $0x144] sm:$0xff]
        %v5628 = vld [vmem:[#allocation2 + $0x14c] sm:$0xff]
        %v5629 = vld [vmem:[#allocation2 + $0x154] sm:$0xff]
        %v5630 = vld [vmem:[#allocation2 + $0x15c] sm:$0xff]
        %v5631 = vld [vmem:[#allocation2 + $0x164] sm:$0xff]
        %v5632 = vld [vmem:[#allocation2 + $0x16c] sm:$0xff]
        %v5633 = vld [vmem:[#allocation2 + $0x174] sm:$0xf]
        %5676 = vrot.lane.b32.xlu0 %v5592, 8
        %v5677 = vpop.permute.xlu0 %5676
        %5678 = vrot.lane.b32.xlu0 %v5593, 8
        %v5679 = vpop.permute.xlu0 %5678
        %5680 = vrot.lane.b32.xlu0 %v5594, 8
        %v5681 = vpop.permute.xlu0 %5680
        %5682 = vrot.lane.b32.xlu0 %v5595, 8
        %v5683 = vpop.permute.xlu0 %5682
        %5684 = vrot.lane.b32.xlu0 %v5596, 8
        %v5685 = vpop.permute.xlu0 %5684
        %5686 = vrot.lane.b32.xlu0 %v5597, 8
        %v5687 = vpop.permute.xlu0 %5686
        %5688 = vrot.lane.b32.xlu0 %v5598, 8
        %v5689 = vpop.permute.xlu0 %5688
        %5690 = vrot.lane.b32.xlu0 %v5599, 8
        %v5691 = vpop.permute.xlu0 %5690
        %5692 = vrot.lane.b32.xlu0 %v5600, 8
        %v5693 = vpop.permute.xlu0 %5692
        %5694 = vrot.lane.b32.xlu0 %v5601, 8
        %v5695 = vpop.permute.xlu0 %5694
        %5696 = vrot.lane.b32.xlu0 %v5602, 8
        %v5697 = vpop.permute.xlu0 %5696
        %5698 = vrot.lane.b32.xlu0 %v5603, 8
        %v5699 = vpop.permute.xlu0 %5698
        %5700 = vrot.lane.b32.xlu0 %v5604, 8
        %v5701 = vpop.permute.xlu0 %5700
        %5702 = vrot.lane.b32.xlu0 %v5605, 8
        %v5703 = vpop.permute.xlu0 %5702
        %5704 = vrot.lane.b32.xlu0 %v5606, 8
        %v5705 = vpop.permute.xlu0 %5704
        %5706 = vrot.lane.b32.xlu0 %v5607, 8
        %v5707 = vpop.permute.xlu0 %5706
        %5708 = vrot.lane.b32.xlu0 %v5608, 8
        %v5709 = vpop.permute.xlu0 %5708
        %5710 = vrot.lane.b32.xlu0 %v5609, 8
        %v5711 = vpop.permute.xlu0 %5710
        %5712 = vrot.lane.b32.xlu0 %v5610, 8
        %v5713 = vpop.permute.xlu0 %5712
        %5714 = vrot.lane.b32.xlu0 %v5611, 8
        %v5715 = vpop.permute.xlu0 %5714
        %5716 = vrot.lane.b32.xlu0 %v5612, 8
        %v5717 = vpop.permute.xlu0 %5716
        %5718 = vrot.lane.b32.xlu0 %v5613, 8
        %v5719 = vpop.permute.xlu0 %5718
        %5720 = vrot.lane.b32.xlu0 %v5614, 8
        %v5721 = vpop.permute.xlu0 %5720
        %5722 = vrot.lane.b32.xlu0 %v5615, 8
        %v5723 = vpop.permute.xlu0 %5722
        %5724 = vrot.lane.b32.xlu0 %v5616, 8
        %v5725 = vpop.permute.xlu0 %5724
        %5726 = vrot.lane.b32.xlu0 %v5617, 8
        %v5727 = vpop.permute.xlu0 %5726
        %5728 = vrot.lane.b32.xlu0 %v5618, 8
        %v5729 = vpop.permute.xlu0 %5728
        %5730 = vrot.lane.b32.xlu0 %v5619, 8
        %v5731 = vpop.permute.xlu0 %5730
        %5732 = vrot.lane.b32.xlu0 %v5620, 8
        %v5733 = vpop.permute.xlu0 %5732
        %5734 = vrot.lane.b32.xlu0 %v5621, 8
        %v5735 = vpop.permute.xlu0 %5734
        %5736 = vrot.lane.b32.xlu0 %v5622, 8
        %v5737 = vpop.permute.xlu0 %5736
        %5738 = vrot.lane.b32.xlu0 %v5623, 8
        %v5739 = vpop.permute.xlu0 %5738
        %5740 = vrot.lane.b32.xlu0 %v5624, 8
        %v5741 = vpop.permute.xlu0 %5740
        %5742 = vrot.lane.b32.xlu0 %v5625, 8
        %v5743 = vpop.permute.xlu0 %5742
        %5744 = vrot.lane.b32.xlu0 %v5626, 8
        %v5745 = vpop.permute.xlu0 %5744
        %5746 = vrot.lane.b32.xlu0 %v5627, 8
        %v5747 = vpop.permute.xlu0 %5746
        %5748 = vrot.lane.b32.xlu0 %v5628, 8
        %v5749 = vpop.permute.xlu0 %5748
        %5750 = vrot.lane.b32.xlu0 %v5629, 8
        %v5751 = vpop.permute.xlu0 %5750
        %5752 = vrot.lane.b32.xlu0 %v5630, 8
        %v5753 = vpop.permute.xlu0 %5752
        %5754 = vrot.lane.b32.xlu0 %v5631, 8
        %v5755 = vpop.permute.xlu0 %5754
        %5756 = vrot.lane.b32.xlu0 %v5632, 8
        %v5757 = vpop.permute.xlu0 %5756
        %5758 = vrot.lane.b32.xlu0 %v5633, 8
        %v5759 = vpop.permute.xlu0 %5758
        %5802 = vst.msk [vmem:[#allocation3 + $0x8] sm:$0xff] %vm1908, %v5677
        %5803 = vst.msk [vmem:[#allocation3 + $0x18] sm:$0xff] %vm1908, %v5679
        %5804 = vst.msk [vmem:[#allocation3 + $0x28] sm:$0xff] %vm1908, %v5681
        %5805 = vst.msk [vmem:[#allocation3 + $0x38] sm:$0xff] %vm1908, %v5683
        %5806 = vst.msk [vmem:[#allocation3 + $0x48] sm:$0xff] %vm1908, %v5685
        %5807 = vst.msk [vmem:[#allocation3 + $0x58] sm:$0xff] %vm1908, %v5687
        %5808 = vst.msk [vmem:[#allocation3 + $0x68] sm:$0xff] %vm1908, %v5689
        %5809 = vst.msk [vmem:[#allocation3 + $0x78] sm:$0xff] %vm1908, %v5691
        %5810 = vst.msk [vmem:[#allocation3 + $0x88] sm:$0xff] %vm1908, %v5693
        %5811 = vst.msk [vmem:[#allocation3 + $0x98] sm:$0xff] %vm1908, %v5695
        %5812 = vst.msk [vmem:[#allocation3 + $0xa8] sm:$0xff] %vm1908, %v5697
        %5813 = vst.msk [vmem:[#allocation3 + $0xb8] sm:$0xff] %vm1908, %v5699
        %5814 = vst.msk [vmem:[#allocation3 + $0xc8] sm:$0xff] %vm1908, %v5701
        %5815 = vst.msk [vmem:[#allocation3 + $0xd8] sm:$0xff] %vm1908, %v5703
        %5816 = vst.msk [vmem:[#allocation3 + $0xe8] sm:$0xff] %vm1908, %v5705
        %5817 = vst.msk [vmem:[#allocation3 + $0xf8] sm:$0xff] %vm1908, %v5707
        %5818 = vst.msk [vmem:[#allocation3 + $0x108] sm:$0xff] %vm1908, %v5709
        %5819 = vst.msk [vmem:[#allocation3 + $0x118] sm:$0xff] %vm1908, %v5711
        %5820 = vst.msk [vmem:[#allocation3 + $0x128] sm:$0xff] %vm1908, %v5713
        %5821 = vst.msk [vmem:[#allocation3 + $0x138] sm:$0xff] %vm1908, %v5715
        %5822 = vst.msk [vmem:[#allocation3 + $0x148] sm:$0xff] %vm1908, %v5717
        %5823 = vst.msk [vmem:[#allocation3 + $0x158] sm:$0xff] %vm1908, %v5719
        %5824 = vst.msk [vmem:[#allocation3 + $0x168] sm:$0xff] %vm1908, %v5721
        %5825 = vst.msk [vmem:[#allocation3 + $0x178] sm:$0xff] %vm1908, %v5723
        %5826 = vst.msk [vmem:[#allocation3 + $0x188] sm:$0xff] %vm1908, %v5725
        %5827 = vst.msk [vmem:[#allocation3 + $0x198] sm:$0xff] %vm1908, %v5727
        %5828 = vst.msk [vmem:[#allocation3 + $0x1a8] sm:$0xff] %vm1908, %v5729
        %5829 = vst.msk [vmem:[#allocation3 + $0x1b8] sm:$0xff] %vm1908, %v5731
        %5830 = vst.msk [vmem:[#allocation3 + $0x1c8] sm:$0xff] %vm1908, %v5733
        %5831 = vst.msk [vmem:[#allocation3 + $0x1d8] sm:$0xff] %vm1908, %v5735
        %5832 = vst.msk [vmem:[#allocation3 + $0x1e8] sm:$0xff] %vm1908, %v5737
        %5833 = vst.msk [vmem:[#allocation3 + $0x1f8] sm:$0xff] %vm1908, %v5739
        %5834 = vst.msk [vmem:[#allocation3 + $0x208] sm:$0xff] %vm1908, %v5741
        %5835 = vst.msk [vmem:[#allocation3 + $0x218] sm:$0xff] %vm1908, %v5743
        %5836 = vst.msk [vmem:[#allocation3 + $0x228] sm:$0xff] %vm1908, %v5745
        %5837 = vst.msk [vmem:[#allocation3 + $0x238] sm:$0xff] %vm1908, %v5747
        %5838 = vst.msk [vmem:[#allocation3 + $0x248] sm:$0xff] %vm1908, %v5749
        %5839 = vst.msk [vmem:[#allocation3 + $0x258] sm:$0xff] %vm1908, %v5751
        %5840 = vst.msk [vmem:[#allocation3 + $0x268] sm:$0xff] %vm1908, %v5753
        %5841 = vst.msk [vmem:[#allocation3 + $0x278] sm:$0xff] %vm1908, %v5755
        %5842 = vst.msk [vmem:[#allocation3 + $0x288] sm:$0xff] %vm1908, %v5757
        %5843 = vst.msk [vmem:[#allocation3 + $0x298] sm:$0xf] %vm1950, %v5759
        %v5844 = vld [vmem:[#allocation2 + $0x2d] sm:$0xff]
        %v5845 = vld [vmem:[#allocation2 + $0x35] sm:$0xff]
        %v5846 = vld [vmem:[#allocation2 + $0x3d] sm:$0xff]
        %v5847 = vld [vmem:[#allocation2 + $0x45] sm:$0xff]
        %v5848 = vld [vmem:[#allocation2 + $0x4d] sm:$0xff]
        %v5849 = vld [vmem:[#allocation2 + $0x55] sm:$0xff]
        %v5850 = vld [vmem:[#allocation2 + $0x5d] sm:$0xff]
        %v5851 = vld [vmem:[#allocation2 + $0x65] sm:$0xff]
        %v5852 = vld [vmem:[#allocation2 + $0x6d] sm:$0xff]
        %v5853 = vld [vmem:[#allocation2 + $0x75] sm:$0xff]
        %v5854 = vld [vmem:[#allocation2 + $0x7d] sm:$0xff]
        %v5855 = vld [vmem:[#allocation2 + $0x85] sm:$0xff]
        %v5856 = vld [vmem:[#allocation2 + $0x8d] sm:$0xff]
        %v5857 = vld [vmem:[#allocation2 + $0x95] sm:$0xff]
        %v5858 = vld [vmem:[#allocation2 + $0x9d] sm:$0xff]
        %v5859 = vld [vmem:[#allocation2 + $0xa5] sm:$0xff]
        %v5860 = vld [vmem:[#allocation2 + $0xad] sm:$0xff]
        %v5861 = vld [vmem:[#allocation2 + $0xb5] sm:$0xff]
        %v5862 = vld [vmem:[#allocation2 + $0xbd] sm:$0xff]
        %v5863 = vld [vmem:[#allocation2 + $0xc5] sm:$0xff]
        %v5864 = vld [vmem:[#allocation2 + $0xcd] sm:$0xff]
        %v5865 = vld [vmem:[#allocation2 + $0xd5] sm:$0xff]
        %v5866 = vld [vmem:[#allocation2 + $0xdd] sm:$0xff]
        %v5867 = vld [vmem:[#allocation2 + $0xe5] sm:$0xff]
        %v5868 = vld [vmem:[#allocation2 + $0xed] sm:$0xff]
        %v5869 = vld [vmem:[#allocation2 + $0xf5] sm:$0xff]
        %v5870 = vld [vmem:[#allocation2 + $0xfd] sm:$0xff]
        %v5871 = vld [vmem:[#allocation2 + $0x105] sm:$0xff]
        %v5872 = vld [vmem:[#allocation2 + $0x10d] sm:$0xff]
        %v5873 = vld [vmem:[#allocation2 + $0x115] sm:$0xff]
        %v5874 = vld [vmem:[#allocation2 + $0x11d] sm:$0xff]
        %v5875 = vld [vmem:[#allocation2 + $0x125] sm:$0xff]
        %v5876 = vld [vmem:[#allocation2 + $0x12d] sm:$0xff]
        %v5877 = vld [vmem:[#allocation2 + $0x135] sm:$0xff]
        %v5878 = vld [vmem:[#allocation2 + $0x13d] sm:$0xff]
        %v5879 = vld [vmem:[#allocation2 + $0x145] sm:$0xff]
        %v5880 = vld [vmem:[#allocation2 + $0x14d] sm:$0xff]
        %v5881 = vld [vmem:[#allocation2 + $0x155] sm:$0xff]
        %v5882 = vld [vmem:[#allocation2 + $0x15d] sm:$0xff]
        %v5883 = vld [vmem:[#allocation2 + $0x165] sm:$0xff]
        %v5884 = vld [vmem:[#allocation2 + $0x16d] sm:$0xff]
        %v5885 = vld [vmem:[#allocation2 + $0x175] sm:$0xf]
        %5928 = vrot.lane.b32.xlu0 %v5844, 16
        %v5929 = vpop.permute.xlu0 %5928
        %5930 = vrot.lane.b32.xlu0 %v5845, 16
        %v5931 = vpop.permute.xlu0 %5930
        %5932 = vrot.lane.b32.xlu0 %v5846, 16
        %v5933 = vpop.permute.xlu0 %5932
        %5934 = vrot.lane.b32.xlu0 %v5847, 16
        %v5935 = vpop.permute.xlu0 %5934
        %5936 = vrot.lane.b32.xlu0 %v5848, 16
        %v5937 = vpop.permute.xlu0 %5936
        %5938 = vrot.lane.b32.xlu0 %v5849, 16
        %v5939 = vpop.permute.xlu0 %5938
        %5940 = vrot.lane.b32.xlu0 %v5850, 16
        %v5941 = vpop.permute.xlu0 %5940
        %5942 = vrot.lane.b32.xlu0 %v5851, 16
        %v5943 = vpop.permute.xlu0 %5942
        %5944 = vrot.lane.b32.xlu0 %v5852, 16
        %v5945 = vpop.permute.xlu0 %5944
        %5946 = vrot.lane.b32.xlu0 %v5853, 16
        %v5947 = vpop.permute.xlu0 %5946
        %5948 = vrot.lane.b32.xlu0 %v5854, 16
        %v5949 = vpop.permute.xlu0 %5948
        %5950 = vrot.lane.b32.xlu0 %v5855, 16
        %v5951 = vpop.permute.xlu0 %5950
        %5952 = vrot.lane.b32.xlu0 %v5856, 16
        %v5953 = vpop.permute.xlu0 %5952
        %5954 = vrot.lane.b32.xlu0 %v5857, 16
        %v5955 = vpop.permute.xlu0 %5954
        %5956 = vrot.lane.b32.xlu0 %v5858, 16
        %v5957 = vpop.permute.xlu0 %5956
        %5958 = vrot.lane.b32.xlu0 %v5859, 16
        %v5959 = vpop.permute.xlu0 %5958
        %5960 = vrot.lane.b32.xlu0 %v5860, 16
        %v5961 = vpop.permute.xlu0 %5960
        %5962 = vrot.lane.b32.xlu0 %v5861, 16
        %v5963 = vpop.permute.xlu0 %5962
        %5964 = vrot.lane.b32.xlu0 %v5862, 16
        %v5965 = vpop.permute.xlu0 %5964
        %5966 = vrot.lane.b32.xlu0 %v5863, 16
        %v5967 = vpop.permute.xlu0 %5966
        %5968 = vrot.lane.b32.xlu0 %v5864, 16
        %v5969 = vpop.permute.xlu0 %5968
        %5970 = vrot.lane.b32.xlu0 %v5865, 16
        %v5971 = vpop.permute.xlu0 %5970
        %5972 = vrot.lane.b32.xlu0 %v5866, 16
        %v5973 = vpop.permute.xlu0 %5972
        %5974 = vrot.lane.b32.xlu0 %v5867, 16
        %v5975 = vpop.permute.xlu0 %5974
        %5976 = vrot.lane.b32.xlu0 %v5868, 16
        %v5977 = vpop.permute.xlu0 %5976
        %5978 = vrot.lane.b32.xlu0 %v5869, 16
        %v5979 = vpop.permute.xlu0 %5978
        %5980 = vrot.lane.b32.xlu0 %v5870, 16
        %v5981 = vpop.permute.xlu0 %5980
        %5982 = vrot.lane.b32.xlu0 %v5871, 16
        %v5983 = vpop.permute.xlu0 %5982
        %5984 = vrot.lane.b32.xlu0 %v5872, 16
        %v5985 = vpop.permute.xlu0 %5984
        %5986 = vrot.lane.b32.xlu0 %v5873, 16
        %v5987 = vpop.permute.xlu0 %5986
        %5988 = vrot.lane.b32.xlu0 %v5874, 16
        %v5989 = vpop.permute.xlu0 %5988
        %5990 = vrot.lane.b32.xlu0 %v5875, 16
        %v5991 = vpop.permute.xlu0 %5990
        %5992 = vrot.lane.b32.xlu0 %v5876, 16
        %v5993 = vpop.permute.xlu0 %5992
        %5994 = vrot.lane.b32.xlu0 %v5877, 16
        %v5995 = vpop.permute.xlu0 %5994
        %5996 = vrot.lane.b32.xlu0 %v5878, 16
        %v5997 = vpop.permute.xlu0 %5996
        %5998 = vrot.lane.b32.xlu0 %v5879, 16
        %v5999 = vpop.permute.xlu0 %5998
        %6000 = vrot.lane.b32.xlu0 %v5880, 16
        %v6001 = vpop.permute.xlu0 %6000
        %6002 = vrot.lane.b32.xlu0 %v5881, 16
        %v6003 = vpop.permute.xlu0 %6002
        %6004 = vrot.lane.b32.xlu0 %v5882, 16
        %v6005 = vpop.permute.xlu0 %6004
        %6006 = vrot.lane.b32.xlu0 %v5883, 16
        %v6007 = vpop.permute.xlu0 %6006
        %6008 = vrot.lane.b32.xlu0 %v5884, 16
        %v6009 = vpop.permute.xlu0 %6008
        %6010 = vrot.lane.b32.xlu0 %v5885, 16
        %v6011 = vpop.permute.xlu0 %6010
        %6054 = vst.msk [vmem:[#allocation3 + $0x8] sm:$0xff] %vm2162, %v5929
        %6055 = vst.msk [vmem:[#allocation3 + $0x18] sm:$0xff] %vm2162, %v5931
        %6056 = vst.msk [vmem:[#allocation3 + $0x28] sm:$0xff] %vm2162, %v5933
        %6057 = vst.msk [vmem:[#allocation3 + $0x38] sm:$0xff] %vm2162, %v5935
        %6058 = vst.msk [vmem:[#allocation3 + $0x48] sm:$0xff] %vm2162, %v5937
        %6059 = vst.msk [vmem:[#allocation3 + $0x58] sm:$0xff] %vm2162, %v5939
        %6060 = vst.msk [vmem:[#allocation3 + $0x68] sm:$0xff] %vm2162, %v5941
        %6061 = vst.msk [vmem:[#allocation3 + $0x78] sm:$0xff] %vm2162, %v5943
        %6062 = vst.msk [vmem:[#allocation3 + $0x88] sm:$0xff] %vm2162, %v5945
        %6063 = vst.msk [vmem:[#allocation3 + $0x98] sm:$0xff] %vm2162, %v5947
        %6064 = vst.msk [vmem:[#allocation3 + $0xa8] sm:$0xff] %vm2162, %v5949
        %6065 = vst.msk [vmem:[#allocation3 + $0xb8] sm:$0xff] %vm2162, %v5951
        %6066 = vst.msk [vmem:[#allocation3 + $0xc8] sm:$0xff] %vm2162, %v5953
        %6067 = vst.msk [vmem:[#allocation3 + $0xd8] sm:$0xff] %vm2162, %v5955
        %6068 = vst.msk [vmem:[#allocation3 + $0xe8] sm:$0xff] %vm2162, %v5957
        %6069 = vst.msk [vmem:[#allocation3 + $0xf8] sm:$0xff] %vm2162, %v5959
        %6070 = vst.msk [vmem:[#allocation3 + $0x108] sm:$0xff] %vm2162, %v5961
        %6071 = vst.msk [vmem:[#allocation3 + $0x118] sm:$0xff] %vm2162, %v5963
        %6072 = vst.msk [vmem:[#allocation3 + $0x128] sm:$0xff] %vm2162, %v5965
        %6073 = vst.msk [vmem:[#allocation3 + $0x138] sm:$0xff] %vm2162, %v5967
        %6074 = vst.msk [vmem:[#allocation3 + $0x148] sm:$0xff] %vm2162, %v5969
        %6075 = vst.msk [vmem:[#allocation3 + $0x158] sm:$0xff] %vm2162, %v5971
        %6076 = vst.msk [vmem:[#allocation3 + $0x168] sm:$0xff] %vm2162, %v5973
        %6077 = vst.msk [vmem:[#allocation3 + $0x178] sm:$0xff] %vm2162, %v5975
        %6078 = vst.msk [vmem:[#allocation3 + $0x188] sm:$0xff] %vm2162, %v5977
        %6079 = vst.msk [vmem:[#allocation3 + $0x198] sm:$0xff] %vm2162, %v5979
        %6080 = vst.msk [vmem:[#allocation3 + $0x1a8] sm:$0xff] %vm2162, %v5981
        %6081 = vst.msk [vmem:[#allocation3 + $0x1b8] sm:$0xff] %vm2162, %v5983
        %6082 = vst.msk [vmem:[#allocation3 + $0x1c8] sm:$0xff] %vm2162, %v5985
        %6083 = vst.msk [vmem:[#allocation3 + $0x1d8] sm:$0xff] %vm2162, %v5987
        %6084 = vst.msk [vmem:[#allocation3 + $0x1e8] sm:$0xff] %vm2162, %v5989
        %6085 = vst.msk [vmem:[#allocation3 + $0x1f8] sm:$0xff] %vm2162, %v5991
        %6086 = vst.msk [vmem:[#allocation3 + $0x208] sm:$0xff] %vm2162, %v5993
        %6087 = vst.msk [vmem:[#allocation3 + $0x218] sm:$0xff] %vm2162, %v5995
        %6088 = vst.msk [vmem:[#allocation3 + $0x228] sm:$0xff] %vm2162, %v5997
        %6089 = vst.msk [vmem:[#allocation3 + $0x238] sm:$0xff] %vm2162, %v5999
        %6090 = vst.msk [vmem:[#allocation3 + $0x248] sm:$0xff] %vm2162, %v6001
        %6091 = vst.msk [vmem:[#allocation3 + $0x258] sm:$0xff] %vm2162, %v6003
        %6092 = vst.msk [vmem:[#allocation3 + $0x268] sm:$0xff] %vm2162, %v6005
        %6093 = vst.msk [vmem:[#allocation3 + $0x278] sm:$0xff] %vm2162, %v6007
        %6094 = vst.msk [vmem:[#allocation3 + $0x288] sm:$0xff] %vm2162, %v6009
        %6095 = vst.msk [vmem:[#allocation3 + $0x298] sm:$0xf] %vm2204, %v6011
        %v6096 = vld [vmem:[#allocation2 + $0x2e] sm:$0xff]
        %v6097 = vld [vmem:[#allocation2 + $0x36] sm:$0xff]
        %v6098 = vld [vmem:[#allocation2 + $0x3e] sm:$0xff]
        %v6099 = vld [vmem:[#allocation2 + $0x46] sm:$0xff]
        %v6100 = vld [vmem:[#allocation2 + $0x4e] sm:$0xff]
        %v6101 = vld [vmem:[#allocation2 + $0x56] sm:$0xff]
        %v6102 = vld [vmem:[#allocation2 + $0x5e] sm:$0xff]
        %v6103 = vld [vmem:[#allocation2 + $0x66] sm:$0xff]
        %v6104 = vld [vmem:[#allocation2 + $0x6e] sm:$0xff]
        %v6105 = vld [vmem:[#allocation2 + $0x76] sm:$0xff]
        %v6106 = vld [vmem:[#allocation2 + $0x7e] sm:$0xff]
        %v6107 = vld [vmem:[#allocation2 + $0x86] sm:$0xff]
        %v6108 = vld [vmem:[#allocation2 + $0x8e] sm:$0xff]
        %v6109 = vld [vmem:[#allocation2 + $0x96] sm:$0xff]
        %v6110 = vld [vmem:[#allocation2 + $0x9e] sm:$0xff]
        %v6111 = vld [vmem:[#allocation2 + $0xa6] sm:$0xff]
        %v6112 = vld [vmem:[#allocation2 + $0xae] sm:$0xff]
        %v6113 = vld [vmem:[#allocation2 + $0xb6] sm:$0xff]
        %v6114 = vld [vmem:[#allocation2 + $0xbe] sm:$0xff]
        %v6115 = vld [vmem:[#allocation2 + $0xc6] sm:$0xff]
        %v6116 = vld [vmem:[#allocation2 + $0xce] sm:$0xff]
        %v6117 = vld [vmem:[#allocation2 + $0xd6] sm:$0xff]
        %v6118 = vld [vmem:[#allocation2 + $0xde] sm:$0xff]
        %v6119 = vld [vmem:[#allocation2 + $0xe6] sm:$0xff]
        %v6120 = vld [vmem:[#allocation2 + $0xee] sm:$0xff]
        %v6121 = vld [vmem:[#allocation2 + $0xf6] sm:$0xff]
        %v6122 = vld [vmem:[#allocation2 + $0xfe] sm:$0xff]
        %v6123 = vld [vmem:[#allocation2 + $0x106] sm:$0xff]
        %v6124 = vld [vmem:[#allocation2 + $0x10e] sm:$0xff]
        %v6125 = vld [vmem:[#allocation2 + $0x116] sm:$0xff]
        %v6126 = vld [vmem:[#allocation2 + $0x11e] sm:$0xff]
        %v6127 = vld [vmem:[#allocation2 + $0x126] sm:$0xff]
        %v6128 = vld [vmem:[#allocation2 + $0x12e] sm:$0xff]
        %v6129 = vld [vmem:[#allocation2 + $0x136] sm:$0xff]
        %v6130 = vld [vmem:[#allocation2 + $0x13e] sm:$0xff]
        %v6131 = vld [vmem:[#allocation2 + $0x146] sm:$0xff]
        %v6132 = vld [vmem:[#allocation2 + $0x14e] sm:$0xff]
        %v6133 = vld [vmem:[#allocation2 + $0x156] sm:$0xff]
        %v6134 = vld [vmem:[#allocation2 + $0x15e] sm:$0xff]
        %v6135 = vld [vmem:[#allocation2 + $0x166] sm:$0xff]
        %v6136 = vld [vmem:[#allocation2 + $0x16e] sm:$0xff]
        %v6137 = vld [vmem:[#allocation2 + $0x176] sm:$0xf]
        %6180 = vrot.lane.b32.xlu0 %v6096, 24
        %v6181 = vpop.permute.xlu0 %6180
        %6182 = vrot.lane.b32.xlu0 %v6097, 24
        %v6183 = vpop.permute.xlu0 %6182
        %6184 = vrot.lane.b32.xlu0 %v6098, 24
        %v6185 = vpop.permute.xlu0 %6184
        %6186 = vrot.lane.b32.xlu0 %v6099, 24
        %v6187 = vpop.permute.xlu0 %6186
        %6188 = vrot.lane.b32.xlu0 %v6100, 24
        %v6189 = vpop.permute.xlu0 %6188
        %6190 = vrot.lane.b32.xlu0 %v6101, 24
        %v6191 = vpop.permute.xlu0 %6190
        %6192 = vrot.lane.b32.xlu0 %v6102, 24
        %v6193 = vpop.permute.xlu0 %6192
        %6194 = vrot.lane.b32.xlu0 %v6103, 24
        %v6195 = vpop.permute.xlu0 %6194
        %6196 = vrot.lane.b32.xlu0 %v6104, 24
        %v6197 = vpop.permute.xlu0 %6196
        %6198 = vrot.lane.b32.xlu0 %v6105, 24
        %v6199 = vpop.permute.xlu0 %6198
        %6200 = vrot.lane.b32.xlu0 %v6106, 24
        %v6201 = vpop.permute.xlu0 %6200
        %6202 = vrot.lane.b32.xlu0 %v6107, 24
        %v6203 = vpop.permute.xlu0 %6202
        %6204 = vrot.lane.b32.xlu0 %v6108, 24
        %v6205 = vpop.permute.xlu0 %6204
        %6206 = vrot.lane.b32.xlu0 %v6109, 24
        %v6207 = vpop.permute.xlu0 %6206
        %6208 = vrot.lane.b32.xlu0 %v6110, 24
        %v6209 = vpop.permute.xlu0 %6208
        %6210 = vrot.lane.b32.xlu0 %v6111, 24
        %v6211 = vpop.permute.xlu0 %6210
        %6212 = vrot.lane.b32.xlu0 %v6112, 24
        %v6213 = vpop.permute.xlu0 %6212
        %6214 = vrot.lane.b32.xlu0 %v6113, 24
        %v6215 = vpop.permute.xlu0 %6214
        %6216 = vrot.lane.b32.xlu0 %v6114, 24
        %v6217 = vpop.permute.xlu0 %6216
        %6218 = vrot.lane.b32.xlu0 %v6115, 24
        %v6219 = vpop.permute.xlu0 %6218
        %6220 = vrot.lane.b32.xlu0 %v6116, 24
        %v6221 = vpop.permute.xlu0 %6220
        %6222 = vrot.lane.b32.xlu0 %v6117, 24
        %v6223 = vpop.permute.xlu0 %6222
        %6224 = vrot.lane.b32.xlu0 %v6118, 24
        %v6225 = vpop.permute.xlu0 %6224
        %6226 = vrot.lane.b32.xlu0 %v6119, 24
        %v6227 = vpop.permute.xlu0 %6226
        %6228 = vrot.lane.b32.xlu0 %v6120, 24
        %v6229 = vpop.permute.xlu0 %6228
        %6230 = vrot.lane.b32.xlu0 %v6121, 24
        %v6231 = vpop.permute.xlu0 %6230
        %6232 = vrot.lane.b32.xlu0 %v6122, 24
        %v6233 = vpop.permute.xlu0 %6232
        %6234 = vrot.lane.b32.xlu0 %v6123, 24
        %v6235 = vpop.permute.xlu0 %6234
        %6236 = vrot.lane.b32.xlu0 %v6124, 24
        %v6237 = vpop.permute.xlu0 %6236
        %6238 = vrot.lane.b32.xlu0 %v6125, 24
        %v6239 = vpop.permute.xlu0 %6238
        %6240 = vrot.lane.b32.xlu0 %v6126, 24
        %v6241 = vpop.permute.xlu0 %6240
        %6242 = vrot.lane.b32.xlu0 %v6127, 24
        %v6243 = vpop.permute.xlu0 %6242
        %6244 = vrot.lane.b32.xlu0 %v6128, 24
        %v6245 = vpop.permute.xlu0 %6244
        %6246 = vrot.lane.b32.xlu0 %v6129, 24
        %v6247 = vpop.permute.xlu0 %6246
        %6248 = vrot.lane.b32.xlu0 %v6130, 24
        %v6249 = vpop.permute.xlu0 %6248
        %6250 = vrot.lane.b32.xlu0 %v6131, 24
        %v6251 = vpop.permute.xlu0 %6250
        %6252 = vrot.lane.b32.xlu0 %v6132, 24
        %v6253 = vpop.permute.xlu0 %6252
        %6254 = vrot.lane.b32.xlu0 %v6133, 24
        %v6255 = vpop.permute.xlu0 %6254
        %6256 = vrot.lane.b32.xlu0 %v6134, 24
        %v6257 = vpop.permute.xlu0 %6256
        %6258 = vrot.lane.b32.xlu0 %v6135, 24
        %v6259 = vpop.permute.xlu0 %6258
        %6260 = vrot.lane.b32.xlu0 %v6136, 24
        %v6261 = vpop.permute.xlu0 %6260
        %6262 = vrot.lane.b32.xlu0 %v6137, 24
        %v6263 = vpop.permute.xlu0 %6262
        %6306 = vst.msk [vmem:[#allocation3 + $0x8] sm:$0xff] %vm2416, %v6181
        %6307 = vst.msk [vmem:[#allocation3 + $0x18] sm:$0xff] %vm2416, %v6183
        %6308 = vst.msk [vmem:[#allocation3 + $0x28] sm:$0xff] %vm2416, %v6185
        %6309 = vst.msk [vmem:[#allocation3 + $0x38] sm:$0xff] %vm2416, %v6187
        %6310 = vst.msk [vmem:[#allocation3 + $0x48] sm:$0xff] %vm2416, %v6189
        %6311 = vst.msk [vmem:[#allocation3 + $0x58] sm:$0xff] %vm2416, %v6191
        %6312 = vst.msk [vmem:[#allocation3 + $0x68] sm:$0xff] %vm2416, %v6193
        %6313 = vst.msk [vmem:[#allocation3 + $0x78] sm:$0xff] %vm2416, %v6195
        %6314 = vst.msk [vmem:[#allocation3 + $0x88] sm:$0xff] %vm2416, %v6197
        %6315 = vst.msk [vmem:[#allocation3 + $0x98] sm:$0xff] %vm2416, %v6199
        %6316 = vst.msk [vmem:[#allocation3 + $0xa8] sm:$0xff] %vm2416, %v6201
        %6317 = vst.msk [vmem:[#allocation3 + $0xb8] sm:$0xff] %vm2416, %v6203
        %6318 = vst.msk [vmem:[#allocation3 + $0xc8] sm:$0xff] %vm2416, %v6205
        %6319 = vst.msk [vmem:[#allocation3 + $0xd8] sm:$0xff] %vm2416, %v6207
        %6320 = vst.msk [vmem:[#allocation3 + $0xe8] sm:$0xff] %vm2416, %v6209
        %6321 = vst.msk [vmem:[#allocation3 + $0xf8] sm:$0xff] %vm2416, %v6211
        %6322 = vst.msk [vmem:[#allocation3 + $0x108] sm:$0xff] %vm2416, %v6213
        %6323 = vst.msk [vmem:[#allocation3 + $0x118] sm:$0xff] %vm2416, %v6215
        %6324 = vst.msk [vmem:[#allocation3 + $0x128] sm:$0xff] %vm2416, %v6217
        %6325 = vst.msk [vmem:[#allocation3 + $0x138] sm:$0xff] %vm2416, %v6219
        %6326 = vst.msk [vmem:[#allocation3 + $0x148] sm:$0xff] %vm2416, %v6221
        %6327 = vst.msk [vmem:[#allocation3 + $0x158] sm:$0xff] %vm2416, %v6223
        %6328 = vst.msk [vmem:[#allocation3 + $0x168] sm:$0xff] %vm2416, %v6225
        %6329 = vst.msk [vmem:[#allocation3 + $0x178] sm:$0xff] %vm2416, %v6227
        %6330 = vst.msk [vmem:[#allocation3 + $0x188] sm:$0xff] %vm2416, %v6229
        %6331 = vst.msk [vmem:[#allocation3 + $0x198] sm:$0xff] %vm2416, %v6231
        %6332 = vst.msk [vmem:[#allocation3 + $0x1a8] sm:$0xff] %vm2416, %v6233
        %6333 = vst.msk [vmem:[#allocation3 + $0x1b8] sm:$0xff] %vm2416, %v6235
        %6334 = vst.msk [vmem:[#allocation3 + $0x1c8] sm:$0xff] %vm2416, %v6237
        %6335 = vst.msk [vmem:[#allocation3 + $0x1d8] sm:$0xff] %vm2416, %v6239
        %6336 = vst.msk [vmem:[#allocation3 + $0x1e8] sm:$0xff] %vm2416, %v6241
        %6337 = vst.msk [vmem:[#allocation3 + $0x1f8] sm:$0xff] %vm2416, %v6243
        %6338 = vst.msk [vmem:[#allocation3 + $0x208] sm:$0xff] %vm2416, %v6245
        %6339 = vst.msk [vmem:[#allocation3 + $0x218] sm:$0xff] %vm2416, %v6247
        %6340 = vst.msk [vmem:[#allocation3 + $0x228] sm:$0xff] %vm2416, %v6249
        %6341 = vst.msk [vmem:[#allocation3 + $0x238] sm:$0xff] %vm2416, %v6251
        %6342 = vst.msk [vmem:[#allocation3 + $0x248] sm:$0xff] %vm2416, %v6253
        %6343 = vst.msk [vmem:[#allocation3 + $0x258] sm:$0xff] %vm2416, %v6255
        %6344 = vst.msk [vmem:[#allocation3 + $0x268] sm:$0xff] %vm2416, %v6257
        %6345 = vst.msk [vmem:[#allocation3 + $0x278] sm:$0xff] %vm2416, %v6259
        %6346 = vst.msk [vmem:[#allocation3 + $0x288] sm:$0xff] %vm2416, %v6261
        %6347 = vst.msk [vmem:[#allocation3 + $0x298] sm:$0xf] %vm2458, %v6263
        %v6348 = vld [vmem:[#allocation2 + $0x38] sm:$0xff]
        %v6349 = vld [vmem:[#allocation2 + $0x40] sm:$0xff]
        %v6350 = vld [vmem:[#allocation2 + $0x48] sm:$0xff]
        %v6351 = vld [vmem:[#allocation2 + $0x50] sm:$0xff]
        %v6352 = vld [vmem:[#allocation2 + $0x58] sm:$0xff]
        %v6353 = vld [vmem:[#allocation2 + $0x60] sm:$0xff]
        %v6354 = vld [vmem:[#allocation2 + $0x68] sm:$0xff]
        %v6355 = vld [vmem:[#allocation2 + $0x70] sm:$0xff]
        %v6356 = vld [vmem:[#allocation2 + $0x78] sm:$0xff]
        %v6357 = vld [vmem:[#allocation2 + $0x80] sm:$0xff]
        %v6358 = vld [vmem:[#allocation2 + $0x88] sm:$0xff]
        %v6359 = vld [vmem:[#allocation2 + $0x90] sm:$0xff]
        %v6360 = vld [vmem:[#allocation2 + $0x98] sm:$0xff]
        %v6361 = vld [vmem:[#allocation2 + $0xa0] sm:$0xff]
        %v6362 = vld [vmem:[#allocation2 + $0xa8] sm:$0xff]
        %v6363 = vld [vmem:[#allocation2 + $0xb0] sm:$0xff]
        %v6364 = vld [vmem:[#allocation2 + $0xb8] sm:$0xff]
        %v6365 = vld [vmem:[#allocation2 + $0xc0] sm:$0xff]
        %v6366 = vld [vmem:[#allocation2 + $0xc8] sm:$0xff]
        %v6367 = vld [vmem:[#allocation2 + $0xd0] sm:$0xff]
        %v6368 = vld [vmem:[#allocation2 + $0xd8] sm:$0xff]
        %v6369 = vld [vmem:[#allocation2 + $0xe0] sm:$0xff]
        %v6370 = vld [vmem:[#allocation2 + $0xe8] sm:$0xff]
        %v6371 = vld [vmem:[#allocation2 + $0xf0] sm:$0xff]
        %v6372 = vld [vmem:[#allocation2 + $0xf8] sm:$0xff]
        %v6373 = vld [vmem:[#allocation2 + $0x100] sm:$0xff]
        %v6374 = vld [vmem:[#allocation2 + $0x108] sm:$0xff]
        %v6375 = vld [vmem:[#allocation2 + $0x110] sm:$0xff]
        %v6376 = vld [vmem:[#allocation2 + $0x118] sm:$0xff]
        %v6377 = vld [vmem:[#allocation2 + $0x120] sm:$0xff]
        %v6378 = vld [vmem:[#allocation2 + $0x128] sm:$0xff]
        %v6379 = vld [vmem:[#allocation2 + $0x130] sm:$0xff]
        %v6380 = vld [vmem:[#allocation2 + $0x138] sm:$0xff]
        %v6381 = vld [vmem:[#allocation2 + $0x140] sm:$0xff]
        %v6382 = vld [vmem:[#allocation2 + $0x148] sm:$0xff]
        %v6383 = vld [vmem:[#allocation2 + $0x150] sm:$0xff]
        %v6384 = vld [vmem:[#allocation2 + $0x158] sm:$0xff]
        %v6385 = vld [vmem:[#allocation2 + $0x160] sm:$0xff]
        %v6386 = vld [vmem:[#allocation2 + $0x168] sm:$0xff]
        %v6387 = vld [vmem:[#allocation2 + $0x170] sm:$0xff]
        %v6388 = vld [vmem:[#allocation2 + $0x178] sm:$0xff]
        %v6389 = vld [vmem:[#allocation2 + $0x180] sm:$0xf]
        %6432 = vrot.lane.b32.xlu0 %v6348, 32
        %v6433 = vpop.permute.xlu0 %6432
        %6434 = vrot.lane.b32.xlu0 %v6349, 32
        %v6435 = vpop.permute.xlu0 %6434
        %6436 = vrot.lane.b32.xlu0 %v6350, 32
        %v6437 = vpop.permute.xlu0 %6436
        %6438 = vrot.lane.b32.xlu0 %v6351, 32
        %v6439 = vpop.permute.xlu0 %6438
        %6440 = vrot.lane.b32.xlu0 %v6352, 32
        %v6441 = vpop.permute.xlu0 %6440
        %6442 = vrot.lane.b32.xlu0 %v6353, 32
        %v6443 = vpop.permute.xlu0 %6442
        %6444 = vrot.lane.b32.xlu0 %v6354, 32
        %v6445 = vpop.permute.xlu0 %6444
        %6446 = vrot.lane.b32.xlu0 %v6355, 32
        %v6447 = vpop.permute.xlu0 %6446
        %6448 = vrot.lane.b32.xlu0 %v6356, 32
        %v6449 = vpop.permute.xlu0 %6448
        %6450 = vrot.lane.b32.xlu0 %v6357, 32
        %v6451 = vpop.permute.xlu0 %6450
        %6452 = vrot.lane.b32.xlu0 %v6358, 32
        %v6453 = vpop.permute.xlu0 %6452
        %6454 = vrot.lane.b32.xlu0 %v6359, 32
        %v6455 = vpop.permute.xlu0 %6454
        %6456 = vrot.lane.b32.xlu0 %v6360, 32
        %v6457 = vpop.permute.xlu0 %6456
        %6458 = vrot.lane.b32.xlu0 %v6361, 32
        %v6459 = vpop.permute.xlu0 %6458
        %6460 = vrot.lane.b32.xlu0 %v6362, 32
        %v6461 = vpop.permute.xlu0 %6460
        %6462 = vrot.lane.b32.xlu0 %v6363, 32
        %v6463 = vpop.permute.xlu0 %6462
        %6464 = vrot.lane.b32.xlu0 %v6364, 32
        %v6465 = vpop.permute.xlu0 %6464
        %6466 = vrot.lane.b32.xlu0 %v6365, 32
        %v6467 = vpop.permute.xlu0 %6466
        %6468 = vrot.lane.b32.xlu0 %v6366, 32
        %v6469 = vpop.permute.xlu0 %6468
        %6470 = vrot.lane.b32.xlu0 %v6367, 32
        %v6471 = vpop.permute.xlu0 %6470
        %6472 = vrot.lane.b32.xlu0 %v6368, 32
        %v6473 = vpop.permute.xlu0 %6472
        %6474 = vrot.lane.b32.xlu0 %v6369, 32
        %v6475 = vpop.permute.xlu0 %6474
        %6476 = vrot.lane.b32.xlu0 %v6370, 32
        %v6477 = vpop.permute.xlu0 %6476
        %6478 = vrot.lane.b32.xlu0 %v6371, 32
        %v6479 = vpop.permute.xlu0 %6478
        %6480 = vrot.lane.b32.xlu0 %v6372, 32
        %v6481 = vpop.permute.xlu0 %6480
        %6482 = vrot.lane.b32.xlu0 %v6373, 32
        %v6483 = vpop.permute.xlu0 %6482
        %6484 = vrot.lane.b32.xlu0 %v6374, 32
        %v6485 = vpop.permute.xlu0 %6484
        %6486 = vrot.lane.b32.xlu0 %v6375, 32
        %v6487 = vpop.permute.xlu0 %6486
        %6488 = vrot.lane.b32.xlu0 %v6376, 32
        %v6489 = vpop.permute.xlu0 %6488
        %6490 = vrot.lane.b32.xlu0 %v6377, 32
        %v6491 = vpop.permute.xlu0 %6490
        %6492 = vrot.lane.b32.xlu0 %v6378, 32
        %v6493 = vpop.permute.xlu0 %6492
        %6494 = vrot.lane.b32.xlu0 %v6379, 32
        %v6495 = vpop.permute.xlu0 %6494
        %6496 = vrot.lane.b32.xlu0 %v6380, 32
        %v6497 = vpop.permute.xlu0 %6496
        %6498 = vrot.lane.b32.xlu0 %v6381, 32
        %v6499 = vpop.permute.xlu0 %6498
        %6500 = vrot.lane.b32.xlu0 %v6382, 32
        %v6501 = vpop.permute.xlu0 %6500
        %6502 = vrot.lane.b32.xlu0 %v6383, 32
        %v6503 = vpop.permute.xlu0 %6502
        %6504 = vrot.lane.b32.xlu0 %v6384, 32
        %v6505 = vpop.permute.xlu0 %6504
        %6506 = vrot.lane.b32.xlu0 %v6385, 32
        %v6507 = vpop.permute.xlu0 %6506
        %6508 = vrot.lane.b32.xlu0 %v6386, 32
        %v6509 = vpop.permute.xlu0 %6508
        %6510 = vrot.lane.b32.xlu0 %v6387, 32
        %v6511 = vpop.permute.xlu0 %6510
        %6512 = vrot.lane.b32.xlu0 %v6388, 32
        %v6513 = vpop.permute.xlu0 %6512
        %6514 = vrot.lane.b32.xlu0 %v6389, 32
        %v6515 = vpop.permute.xlu0 %6514
        %6558 = vst.msk [vmem:[#allocation3 + $0x8] sm:$0xff] %vm2670, %v6433
        %6559 = vst.msk [vmem:[#allocation3 + $0x18] sm:$0xff] %vm2670, %v6435
        %6560 = vst.msk [vmem:[#allocation3 + $0x28] sm:$0xff] %vm2670, %v6437
        %6561 = vst.msk [vmem:[#allocation3 + $0x38] sm:$0xff] %vm2670, %v6439
        %6562 = vst.msk [vmem:[#allocation3 + $0x48] sm:$0xff] %vm2670, %v6441
        %6563 = vst.msk [vmem:[#allocation3 + $0x58] sm:$0xff] %vm2670, %v6443
        %6564 = vst.msk [vmem:[#allocation3 + $0x68] sm:$0xff] %vm2670, %v6445
        %6565 = vst.msk [vmem:[#allocation3 + $0x78] sm:$0xff] %vm2670, %v6447
        %6566 = vst.msk [vmem:[#allocation3 + $0x88] sm:$0xff] %vm2670, %v6449
        %6567 = vst.msk [vmem:[#allocation3 + $0x98] sm:$0xff] %vm2670, %v6451
        %6568 = vst.msk [vmem:[#allocation3 + $0xa8] sm:$0xff] %vm2670, %v6453
        %6569 = vst.msk [vmem:[#allocation3 + $0xb8] sm:$0xff] %vm2670, %v6455
        %6570 = vst.msk [vmem:[#allocation3 + $0xc8] sm:$0xff] %vm2670, %v6457
        %6571 = vst.msk [vmem:[#allocation3 + $0xd8] sm:$0xff] %vm2670, %v6459
        %6572 = vst.msk [vmem:[#allocation3 + $0xe8] sm:$0xff] %vm2670, %v6461
        %6573 = vst.msk [vmem:[#allocation3 + $0xf8] sm:$0xff] %vm2670, %v6463
        %6574 = vst.msk [vmem:[#allocation3 + $0x108] sm:$0xff] %vm2670, %v6465
        %6575 = vst.msk [vmem:[#allocation3 + $0x118] sm:$0xff] %vm2670, %v6467
        %6576 = vst.msk [vmem:[#allocation3 + $0x128] sm:$0xff] %vm2670, %v6469
        %6577 = vst.msk [vmem:[#allocation3 + $0x138] sm:$0xff] %vm2670, %v6471
        %6578 = vst.msk [vmem:[#allocation3 + $0x148] sm:$0xff] %vm2670, %v6473
        %6579 = vst.msk [vmem:[#allocation3 + $0x158] sm:$0xff] %vm2670, %v6475
        %6580 = vst.msk [vmem:[#allocation3 + $0x168] sm:$0xff] %vm2670, %v6477
        %6581 = vst.msk [vmem:[#allocation3 + $0x178] sm:$0xff] %vm2670, %v6479
        %6582 = vst.msk [vmem:[#allocation3 + $0x188] sm:$0xff] %vm2670, %v6481
        %6583 = vst.msk [vmem:[#allocation3 + $0x198] sm:$0xff] %vm2670, %v6483
        %6584 = vst.msk [vmem:[#allocation3 + $0x1a8] sm:$0xff] %vm2670, %v6485
        %6585 = vst.msk [vmem:[#allocation3 + $0x1b8] sm:$0xff] %vm2670, %v6487
        %6586 = vst.msk [vmem:[#allocation3 + $0x1c8] sm:$0xff] %vm2670, %v6489
        %6587 = vst.msk [vmem:[#allocation3 + $0x1d8] sm:$0xff] %vm2670, %v6491
        %6588 = vst.msk [vmem:[#allocation3 + $0x1e8] sm:$0xff] %vm2670, %v6493
        %6589 = vst.msk [vmem:[#allocation3 + $0x1f8] sm:$0xff] %vm2670, %v6495
        %6590 = vst.msk [vmem:[#allocation3 + $0x208] sm:$0xff] %vm2670, %v6497
        %6591 = vst.msk [vmem:[#allocation3 + $0x218] sm:$0xff] %vm2670, %v6499
        %6592 = vst.msk [vmem:[#allocation3 + $0x228] sm:$0xff] %vm2670, %v6501
        %6593 = vst.msk [vmem:[#allocation3 + $0x238] sm:$0xff] %vm2670, %v6503
        %6594 = vst.msk [vmem:[#allocation3 + $0x248] sm:$0xff] %vm2670, %v6505
        %6595 = vst.msk [vmem:[#allocation3 + $0x258] sm:$0xff] %vm2670, %v6507
        %6596 = vst.msk [vmem:[#allocation3 + $0x268] sm:$0xff] %vm2670, %v6509
        %6597 = vst.msk [vmem:[#allocation3 + $0x278] sm:$0xff] %vm2670, %v6511
        %6598 = vst.msk [vmem:[#allocation3 + $0x288] sm:$0xff] %vm2670, %v6513
        %6599 = vst.msk [vmem:[#allocation3 + $0x298] sm:$0xf] %vm2712, %v6515
        %v6600 = vld [vmem:[#allocation2 + $0x39] sm:$0xff]
        %v6601 = vld [vmem:[#allocation2 + $0x41] sm:$0xff]
        %v6602 = vld [vmem:[#allocation2 + $0x49] sm:$0xff]
        %v6603 = vld [vmem:[#allocation2 + $0x51] sm:$0xff]
        %v6604 = vld [vmem:[#allocation2 + $0x59] sm:$0xff]
        %v6605 = vld [vmem:[#allocation2 + $0x61] sm:$0xff]
        %v6606 = vld [vmem:[#allocation2 + $0x69] sm:$0xff]
        %v6607 = vld [vmem:[#allocation2 + $0x71] sm:$0xff]
        %v6608 = vld [vmem:[#allocation2 + $0x79] sm:$0xff]
        %v6609 = vld [vmem:[#allocation2 + $0x81] sm:$0xff]
        %v6610 = vld [vmem:[#allocation2 + $0x89] sm:$0xff]
        %v6611 = vld [vmem:[#allocation2 + $0x91] sm:$0xff]
        %v6612 = vld [vmem:[#allocation2 + $0x99] sm:$0xff]
        %v6613 = vld [vmem:[#allocation2 + $0xa1] sm:$0xff]
        %v6614 = vld [vmem:[#allocation2 + $0xa9] sm:$0xff]
        %v6615 = vld [vmem:[#allocation2 + $0xb1] sm:$0xff]
        %v6616 = vld [vmem:[#allocation2 + $0xb9] sm:$0xff]
        %v6617 = vld [vmem:[#allocation2 + $0xc1] sm:$0xff]
        %v6618 = vld [vmem:[#allocation2 + $0xc9] sm:$0xff]
        %v6619 = vld [vmem:[#allocation2 + $0xd1] sm:$0xff]
        %v6620 = vld [vmem:[#allocation2 + $0xd9] sm:$0xff]
        %v6621 = vld [vmem:[#allocation2 + $0xe1] sm:$0xff]
        %v6622 = vld [vmem:[#allocation2 + $0xe9] sm:$0xff]
        %v6623 = vld [vmem:[#allocation2 + $0xf1] sm:$0xff]
        %v6624 = vld [vmem:[#allocation2 + $0xf9] sm:$0xff]
        %v6625 = vld [vmem:[#allocation2 + $0x101] sm:$0xff]
        %v6626 = vld [vmem:[#allocation2 + $0x109] sm:$0xff]
        %v6627 = vld [vmem:[#allocation2 + $0x111] sm:$0xff]
        %v6628 = vld [vmem:[#allocation2 + $0x119] sm:$0xff]
        %v6629 = vld [vmem:[#allocation2 + $0x121] sm:$0xff]
        %v6630 = vld [vmem:[#allocation2 + $0x129] sm:$0xff]
        %v6631 = vld [vmem:[#allocation2 + $0x131] sm:$0xff]
        %v6632 = vld [vmem:[#allocation2 + $0x139] sm:$0xff]
        %v6633 = vld [vmem:[#allocation2 + $0x141] sm:$0xff]
        %v6634 = vld [vmem:[#allocation2 + $0x149] sm:$0xff]
        %v6635 = vld [vmem:[#allocation2 + $0x151] sm:$0xff]
        %v6636 = vld [vmem:[#allocation2 + $0x159] sm:$0xff]
        %v6637 = vld [vmem:[#allocation2 + $0x161] sm:$0xff]
        %v6638 = vld [vmem:[#allocation2 + $0x169] sm:$0xff]
        %v6639 = vld [vmem:[#allocation2 + $0x171] sm:$0xff]
        %v6640 = vld [vmem:[#allocation2 + $0x179] sm:$0xff]
        %v6641 = vld [vmem:[#allocation2 + $0x181] sm:$0xf]
        %6684 = vrot.lane.b32.xlu0 %v6600, 40
        %v6685 = vpop.permute.xlu0 %6684
        %6686 = vrot.lane.b32.xlu0 %v6601, 40
        %v6687 = vpop.permute.xlu0 %6686
        %6688 = vrot.lane.b32.xlu0 %v6602, 40
        %v6689 = vpop.permute.xlu0 %6688
        %6690 = vrot.lane.b32.xlu0 %v6603, 40
        %v6691 = vpop.permute.xlu0 %6690
        %6692 = vrot.lane.b32.xlu0 %v6604, 40
        %v6693 = vpop.permute.xlu0 %6692
        %6694 = vrot.lane.b32.xlu0 %v6605, 40
        %v6695 = vpop.permute.xlu0 %6694
        %6696 = vrot.lane.b32.xlu0 %v6606, 40
        %v6697 = vpop.permute.xlu0 %6696
        %6698 = vrot.lane.b32.xlu0 %v6607, 40
        %v6699 = vpop.permute.xlu0 %6698
        %6700 = vrot.lane.b32.xlu0 %v6608, 40
        %v6701 = vpop.permute.xlu0 %6700
        %6702 = vrot.lane.b32.xlu0 %v6609, 40
        %v6703 = vpop.permute.xlu0 %6702
        %6704 = vrot.lane.b32.xlu0 %v6610, 40
        %v6705 = vpop.permute.xlu0 %6704
        %6706 = vrot.lane.b32.xlu0 %v6611, 40
        %v6707 = vpop.permute.xlu0 %6706
        %6708 = vrot.lane.b32.xlu0 %v6612, 40
        %v6709 = vpop.permute.xlu0 %6708
        %6710 = vrot.lane.b32.xlu0 %v6613, 40
        %v6711 = vpop.permute.xlu0 %6710
        %6712 = vrot.lane.b32.xlu0 %v6614, 40
        %v6713 = vpop.permute.xlu0 %6712
        %6714 = vrot.lane.b32.xlu0 %v6615, 40
        %v6715 = vpop.permute.xlu0 %6714
        %6716 = vrot.lane.b32.xlu0 %v6616, 40
        %v6717 = vpop.permute.xlu0 %6716
        %6718 = vrot.lane.b32.xlu0 %v6617, 40
        %v6719 = vpop.permute.xlu0 %6718
        %6720 = vrot.lane.b32.xlu0 %v6618, 40
        %v6721 = vpop.permute.xlu0 %6720
        %6722 = vrot.lane.b32.xlu0 %v6619, 40
        %v6723 = vpop.permute.xlu0 %6722
        %6724 = vrot.lane.b32.xlu0 %v6620, 40
        %v6725 = vpop.permute.xlu0 %6724
        %6726 = vrot.lane.b32.xlu0 %v6621, 40
        %v6727 = vpop.permute.xlu0 %6726
        %6728 = vrot.lane.b32.xlu0 %v6622, 40
        %v6729 = vpop.permute.xlu0 %6728
        %6730 = vrot.lane.b32.xlu0 %v6623, 40
        %v6731 = vpop.permute.xlu0 %6730
        %6732 = vrot.lane.b32.xlu0 %v6624, 40
        %v6733 = vpop.permute.xlu0 %6732
        %6734 = vrot.lane.b32.xlu0 %v6625, 40
        %v6735 = vpop.permute.xlu0 %6734
        %6736 = vrot.lane.b32.xlu0 %v6626, 40
        %v6737 = vpop.permute.xlu0 %6736
        %6738 = vrot.lane.b32.xlu0 %v6627, 40
        %v6739 = vpop.permute.xlu0 %6738
        %6740 = vrot.lane.b32.xlu0 %v6628, 40
        %v6741 = vpop.permute.xlu0 %6740
        %6742 = vrot.lane.b32.xlu0 %v6629, 40
        %v6743 = vpop.permute.xlu0 %6742
        %6744 = vrot.lane.b32.xlu0 %v6630, 40
        %v6745 = vpop.permute.xlu0 %6744
        %6746 = vrot.lane.b32.xlu0 %v6631, 40
        %v6747 = vpop.permute.xlu0 %6746
        %6748 = vrot.lane.b32.xlu0 %v6632, 40
        %v6749 = vpop.permute.xlu0 %6748
        %6750 = vrot.lane.b32.xlu0 %v6633, 40
        %v6751 = vpop.permute.xlu0 %6750
        %6752 = vrot.lane.b32.xlu0 %v6634, 40
        %v6753 = vpop.permute.xlu0 %6752
        %6754 = vrot.lane.b32.xlu0 %v6635, 40
        %v6755 = vpop.permute.xlu0 %6754
        %6756 = vrot.lane.b32.xlu0 %v6636, 40
        %v6757 = vpop.permute.xlu0 %6756
        %6758 = vrot.lane.b32.xlu0 %v6637, 40
        %v6759 = vpop.permute.xlu0 %6758
        %6760 = vrot.lane.b32.xlu0 %v6638, 40
        %v6761 = vpop.permute.xlu0 %6760
        %6762 = vrot.lane.b32.xlu0 %v6639, 40
        %v6763 = vpop.permute.xlu0 %6762
        %6764 = vrot.lane.b32.xlu0 %v6640, 40
        %v6765 = vpop.permute.xlu0 %6764
        %6766 = vrot.lane.b32.xlu0 %v6641, 40
        %v6767 = vpop.permute.xlu0 %6766
        %6810 = vst.msk [vmem:[#allocation3 + $0x8] sm:$0xff] %vm2924, %v6685
        %6811 = vst.msk [vmem:[#allocation3 + $0x18] sm:$0xff] %vm2924, %v6687
        %6812 = vst.msk [vmem:[#allocation3 + $0x28] sm:$0xff] %vm2924, %v6689
        %6813 = vst.msk [vmem:[#allocation3 + $0x38] sm:$0xff] %vm2924, %v6691
        %6814 = vst.msk [vmem:[#allocation3 + $0x48] sm:$0xff] %vm2924, %v6693
        %6815 = vst.msk [vmem:[#allocation3 + $0x58] sm:$0xff] %vm2924, %v6695
        %6816 = vst.msk [vmem:[#allocation3 + $0x68] sm:$0xff] %vm2924, %v6697
        %6817 = vst.msk [vmem:[#allocation3 + $0x78] sm:$0xff] %vm2924, %v6699
        %6818 = vst.msk [vmem:[#allocation3 + $0x88] sm:$0xff] %vm2924, %v6701
        %6819 = vst.msk [vmem:[#allocation3 + $0x98] sm:$0xff] %vm2924, %v6703
        %6820 = vst.msk [vmem:[#allocation3 + $0xa8] sm:$0xff] %vm2924, %v6705
        %6821 = vst.msk [vmem:[#allocation3 + $0xb8] sm:$0xff] %vm2924, %v6707
        %6822 = vst.msk [vmem:[#allocation3 + $0xc8] sm:$0xff] %vm2924, %v6709
        %6823 = vst.msk [vmem:[#allocation3 + $0xd8] sm:$0xff] %vm2924, %v6711
        %6824 = vst.msk [vmem:[#allocation3 + $0xe8] sm:$0xff] %vm2924, %v6713
        %6825 = vst.msk [vmem:[#allocation3 + $0xf8] sm:$0xff] %vm2924, %v6715
        %6826 = vst.msk [vmem:[#allocation3 + $0x108] sm:$0xff] %vm2924, %v6717
        %6827 = vst.msk [vmem:[#allocation3 + $0x118] sm:$0xff] %vm2924, %v6719
        %6828 = vst.msk [vmem:[#allocation3 + $0x128] sm:$0xff] %vm2924, %v6721
        %6829 = vst.msk [vmem:[#allocation3 + $0x138] sm:$0xff] %vm2924, %v6723
        %6830 = vst.msk [vmem:[#allocation3 + $0x148] sm:$0xff] %vm2924, %v6725
        %6831 = vst.msk [vmem:[#allocation3 + $0x158] sm:$0xff] %vm2924, %v6727
        %6832 = vst.msk [vmem:[#allocation3 + $0x168] sm:$0xff] %vm2924, %v6729
        %6833 = vst.msk [vmem:[#allocation3 + $0x178] sm:$0xff] %vm2924, %v6731
        %6834 = vst.msk [vmem:[#allocation3 + $0x188] sm:$0xff] %vm2924, %v6733
        %6835 = vst.msk [vmem:[#allocation3 + $0x198] sm:$0xff] %vm2924, %v6735
        %6836 = vst.msk [vmem:[#allocation3 + $0x1a8] sm:$0xff] %vm2924, %v6737
        %6837 = vst.msk [vmem:[#allocation3 + $0x1b8] sm:$0xff] %vm2924, %v6739
        %6838 = vst.msk [vmem:[#allocation3 + $0x1c8] sm:$0xff] %vm2924, %v6741
        %6839 = vst.msk [vmem:[#allocation3 + $0x1d8] sm:$0xff] %vm2924, %v6743
        %6840 = vst.msk [vmem:[#allocation3 + $0x1e8] sm:$0xff] %vm2924, %v6745
        %6841 = vst.msk [vmem:[#allocation3 + $0x1f8] sm:$0xff] %vm2924, %v6747
        %6842 = vst.msk [vmem:[#allocation3 + $0x208] sm:$0xff] %vm2924, %v6749
        %6843 = vst.msk [vmem:[#allocation3 + $0x218] sm:$0xff] %vm2924, %v6751
        %6844 = vst.msk [vmem:[#allocation3 + $0x228] sm:$0xff] %vm2924, %v6753
        %6845 = vst.msk [vmem:[#allocation3 + $0x238] sm:$0xff] %vm2924, %v6755
        %6846 = vst.msk [vmem:[#allocation3 + $0x248] sm:$0xff] %vm2924, %v6757
        %6847 = vst.msk [vmem:[#allocation3 + $0x258] sm:$0xff] %vm2924, %v6759
        %6848 = vst.msk [vmem:[#allocation3 + $0x268] sm:$0xff] %vm2924, %v6761
        %6849 = vst.msk [vmem:[#allocation3 + $0x278] sm:$0xff] %vm2924, %v6763
        %6850 = vst.msk [vmem:[#allocation3 + $0x288] sm:$0xff] %vm2924, %v6765
        %6851 = vst.msk [vmem:[#allocation3 + $0x298] sm:$0xf] %vm2966, %v6767
        %v6852 = vld [vmem:[#allocation2 + $0x3a] sm:$0xff]
        %v6853 = vld [vmem:[#allocation2 + $0x42] sm:$0xff]
        %v6854 = vld [vmem:[#allocation2 + $0x4a] sm:$0xff]
        %v6855 = vld [vmem:[#allocation2 + $0x52] sm:$0xff]
        %v6856 = vld [vmem:[#allocation2 + $0x5a] sm:$0xff]
        %v6857 = vld [vmem:[#allocation2 + $0x62] sm:$0xff]
        %v6858 = vld [vmem:[#allocation2 + $0x6a] sm:$0xff]
        %v6859 = vld [vmem:[#allocation2 + $0x72] sm:$0xff]
        %v6860 = vld [vmem:[#allocation2 + $0x7a] sm:$0xff]
        %v6861 = vld [vmem:[#allocation2 + $0x82] sm:$0xff]
        %v6862 = vld [vmem:[#allocation2 + $0x8a] sm:$0xff]
        %v6863 = vld [vmem:[#allocation2 + $0x92] sm:$0xff]
        %v6864 = vld [vmem:[#allocation2 + $0x9a] sm:$0xff]
        %v6865 = vld [vmem:[#allocation2 + $0xa2] sm:$0xff]
        %v6866 = vld [vmem:[#allocation2 + $0xaa] sm:$0xff]
        %v6867 = vld [vmem:[#allocation2 + $0xb2] sm:$0xff]
        %v6868 = vld [vmem:[#allocation2 + $0xba] sm:$0xff]
        %v6869 = vld [vmem:[#allocation2 + $0xc2] sm:$0xff]
        %v6870 = vld [vmem:[#allocation2 + $0xca] sm:$0xff]
        %v6871 = vld [vmem:[#allocation2 + $0xd2] sm:$0xff]
        %v6872 = vld [vmem:[#allocation2 + $0xda] sm:$0xff]
        %v6873 = vld [vmem:[#allocation2 + $0xe2] sm:$0xff]
        %v6874 = vld [vmem:[#allocation2 + $0xea] sm:$0xff]
        %v6875 = vld [vmem:[#allocation2 + $0xf2] sm:$0xff]
        %v6876 = vld [vmem:[#allocation2 + $0xfa] sm:$0xff]
        %v6877 = vld [vmem:[#allocation2 + $0x102] sm:$0xff]
        %v6878 = vld [vmem:[#allocation2 + $0x10a] sm:$0xff]
        %v6879 = vld [vmem:[#allocation2 + $0x112] sm:$0xff]
        %v6880 = vld [vmem:[#allocation2 + $0x11a] sm:$0xff]
        %v6881 = vld [vmem:[#allocation2 + $0x122] sm:$0xff]
        %v6882 = vld [vmem:[#allocation2 + $0x12a] sm:$0xff]
        %v6883 = vld [vmem:[#allocation2 + $0x132] sm:$0xff]
        %v6884 = vld [vmem:[#allocation2 + $0x13a] sm:$0xff]
        %v6885 = vld [vmem:[#allocation2 + $0x142] sm:$0xff]
        %v6886 = vld [vmem:[#allocation2 + $0x14a] sm:$0xff]
        %v6887 = vld [vmem:[#allocation2 + $0x152] sm:$0xff]
        %v6888 = vld [vmem:[#allocation2 + $0x15a] sm:$0xff]
        %v6889 = vld [vmem:[#allocation2 + $0x162] sm:$0xff]
        %v6890 = vld [vmem:[#allocation2 + $0x16a] sm:$0xff]
        %v6891 = vld [vmem:[#allocation2 + $0x172] sm:$0xff]
        %v6892 = vld [vmem:[#allocation2 + $0x17a] sm:$0xff]
        %v6893 = vld [vmem:[#allocation2 + $0x182] sm:$0xf]
        %6936 = vrot.lane.b32.xlu0 %v6852, 48
        %v6937 = vpop.permute.xlu0 %6936
        %6938 = vrot.lane.b32.xlu0 %v6853, 48
        %v6939 = vpop.permute.xlu0 %6938
        %6940 = vrot.lane.b32.xlu0 %v6854, 48
        %v6941 = vpop.permute.xlu0 %6940
        %6942 = vrot.lane.b32.xlu0 %v6855, 48
        %v6943 = vpop.permute.xlu0 %6942
        %6944 = vrot.lane.b32.xlu0 %v6856, 48
        %v6945 = vpop.permute.xlu0 %6944
        %6946 = vrot.lane.b32.xlu0 %v6857, 48
        %v6947 = vpop.permute.xlu0 %6946
        %6948 = vrot.lane.b32.xlu0 %v6858, 48
        %v6949 = vpop.permute.xlu0 %6948
        %6950 = vrot.lane.b32.xlu0 %v6859, 48
        %v6951 = vpop.permute.xlu0 %6950
        %6952 = vrot.lane.b32.xlu0 %v6860, 48
        %v6953 = vpop.permute.xlu0 %6952
        %6954 = vrot.lane.b32.xlu0 %v6861, 48
        %v6955 = vpop.permute.xlu0 %6954
        %6956 = vrot.lane.b32.xlu0 %v6862, 48
        %v6957 = vpop.permute.xlu0 %6956
        %6958 = vrot.lane.b32.xlu0 %v6863, 48
        %v6959 = vpop.permute.xlu0 %6958
        %6960 = vrot.lane.b32.xlu0 %v6864, 48
        %v6961 = vpop.permute.xlu0 %6960
        %6962 = vrot.lane.b32.xlu0 %v6865, 48
        %v6963 = vpop.permute.xlu0 %6962
        %6964 = vrot.lane.b32.xlu0 %v6866, 48
        %v6965 = vpop.permute.xlu0 %6964
        %6966 = vrot.lane.b32.xlu0 %v6867, 48
        %v6967 = vpop.permute.xlu0 %6966
        %6968 = vrot.lane.b32.xlu0 %v6868, 48
        %v6969 = vpop.permute.xlu0 %6968
        %6970 = vrot.lane.b32.xlu0 %v6869, 48
        %v6971 = vpop.permute.xlu0 %6970
        %6972 = vrot.lane.b32.xlu0 %v6870, 48
        %v6973 = vpop.permute.xlu0 %6972
        %6974 = vrot.lane.b32.xlu0 %v6871, 48
        %v6975 = vpop.permute.xlu0 %6974
        %6976 = vrot.lane.b32.xlu0 %v6872, 48
        %v6977 = vpop.permute.xlu0 %6976
        %6978 = vrot.lane.b32.xlu0 %v6873, 48
        %v6979 = vpop.permute.xlu0 %6978
        %6980 = vrot.lane.b32.xlu0 %v6874, 48
        %v6981 = vpop.permute.xlu0 %6980
        %6982 = vrot.lane.b32.xlu0 %v6875, 48
        %v6983 = vpop.permute.xlu0 %6982
        %6984 = vrot.lane.b32.xlu0 %v6876, 48
        %v6985 = vpop.permute.xlu0 %6984
        %6986 = vrot.lane.b32.xlu0 %v6877, 48
        %v6987 = vpop.permute.xlu0 %6986
        %6988 = vrot.lane.b32.xlu0 %v6878, 48
        %v6989 = vpop.permute.xlu0 %6988
        %6990 = vrot.lane.b32.xlu0 %v6879, 48
        %v6991 = vpop.permute.xlu0 %6990
        %6992 = vrot.lane.b32.xlu0 %v6880, 48
        %v6993 = vpop.permute.xlu0 %6992
        %6994 = vrot.lane.b32.xlu0 %v6881, 48
        %v6995 = vpop.permute.xlu0 %6994
        %6996 = vrot.lane.b32.xlu0 %v6882, 48
        %v6997 = vpop.permute.xlu0 %6996
        %6998 = vrot.lane.b32.xlu0 %v6883, 48
        %v6999 = vpop.permute.xlu0 %6998
        %7000 = vrot.lane.b32.xlu0 %v6884, 48
        %v7001 = vpop.permute.xlu0 %7000
        %7002 = vrot.lane.b32.xlu0 %v6885, 48
        %v7003 = vpop.permute.xlu0 %7002
        %7004 = vrot.lane.b32.xlu0 %v6886, 48
        %v7005 = vpop.permute.xlu0 %7004
        %7006 = vrot.lane.b32.xlu0 %v6887, 48
        %v7007 = vpop.permute.xlu0 %7006
        %7008 = vrot.lane.b32.xlu0 %v6888, 48
        %v7009 = vpop.permute.xlu0 %7008
        %7010 = vrot.lane.b32.xlu0 %v6889, 48
        %v7011 = vpop.permute.xlu0 %7010
        %7012 = vrot.lane.b32.xlu0 %v6890, 48
        %v7013 = vpop.permute.xlu0 %7012
        %7014 = vrot.lane.b32.xlu0 %v6891, 48
        %v7015 = vpop.permute.xlu0 %7014
        %7016 = vrot.lane.b32.xlu0 %v6892, 48
        %v7017 = vpop.permute.xlu0 %7016
        %7018 = vrot.lane.b32.xlu0 %v6893, 48
        %v7019 = vpop.permute.xlu0 %7018
        %7062 = vst.msk [vmem:[#allocation3 + $0x8] sm:$0xff] %vm3178, %v6937
        %7063 = vst.msk [vmem:[#allocation3 + $0x18] sm:$0xff] %vm3178, %v6939
        %7064 = vst.msk [vmem:[#allocation3 + $0x28] sm:$0xff] %vm3178, %v6941
        %7065 = vst.msk [vmem:[#allocation3 + $0x38] sm:$0xff] %vm3178, %v6943
        %7066 = vst.msk [vmem:[#allocation3 + $0x48] sm:$0xff] %vm3178, %v6945
        %7067 = vst.msk [vmem:[#allocation3 + $0x58] sm:$0xff] %vm3178, %v6947
        %7068 = vst.msk [vmem:[#allocation3 + $0x68] sm:$0xff] %vm3178, %v6949
        %7069 = vst.msk [vmem:[#allocation3 + $0x78] sm:$0xff] %vm3178, %v6951
        %7070 = vst.msk [vmem:[#allocation3 + $0x88] sm:$0xff] %vm3178, %v6953
        %7071 = vst.msk [vmem:[#allocation3 + $0x98] sm:$0xff] %vm3178, %v6955
        %7072 = vst.msk [vmem:[#allocation3 + $0xa8] sm:$0xff] %vm3178, %v6957
        %7073 = vst.msk [vmem:[#allocation3 + $0xb8] sm:$0xff] %vm3178, %v6959
        %7074 = vst.msk [vmem:[#allocation3 + $0xc8] sm:$0xff] %vm3178, %v6961
        %7075 = vst.msk [vmem:[#allocation3 + $0xd8] sm:$0xff] %vm3178, %v6963
        %7076 = vst.msk [vmem:[#allocation3 + $0xe8] sm:$0xff] %vm3178, %v6965
        %7077 = vst.msk [vmem:[#allocation3 + $0xf8] sm:$0xff] %vm3178, %v6967
        %7078 = vst.msk [vmem:[#allocation3 + $0x108] sm:$0xff] %vm3178, %v6969
        %7079 = vst.msk [vmem:[#allocation3 + $0x118] sm:$0xff] %vm3178, %v6971
        %7080 = vst.msk [vmem:[#allocation3 + $0x128] sm:$0xff] %vm3178, %v6973
        %7081 = vst.msk [vmem:[#allocation3 + $0x138] sm:$0xff] %vm3178, %v6975
        %7082 = vst.msk [vmem:[#allocation3 + $0x148] sm:$0xff] %vm3178, %v6977
        %7083 = vst.msk [vmem:[#allocation3 + $0x158] sm:$0xff] %vm3178, %v6979
        %7084 = vst.msk [vmem:[#allocation3 + $0x168] sm:$0xff] %vm3178, %v6981
        %7085 = vst.msk [vmem:[#allocation3 + $0x178] sm:$0xff] %vm3178, %v6983
        %7086 = vst.msk [vmem:[#allocation3 + $0x188] sm:$0xff] %vm3178, %v6985
        %7087 = vst.msk [vmem:[#allocation3 + $0x198] sm:$0xff] %vm3178, %v6987
        %7088 = vst.msk [vmem:[#allocation3 + $0x1a8] sm:$0xff] %vm3178, %v6989
        %7089 = vst.msk [vmem:[#allocation3 + $0x1b8] sm:$0xff] %vm3178, %v6991
        %7090 = vst.msk [vmem:[#allocation3 + $0x1c8] sm:$0xff] %vm3178, %v6993
        %7091 = vst.msk [vmem:[#allocation3 + $0x1d8] sm:$0xff] %vm3178, %v6995
        %7092 = vst.msk [vmem:[#allocation3 + $0x1e8] sm:$0xff] %vm3178, %v6997
        %7093 = vst.msk [vmem:[#allocation3 + $0x1f8] sm:$0xff] %vm3178, %v6999
        %7094 = vst.msk [vmem:[#allocation3 + $0x208] sm:$0xff] %vm3178, %v7001
        %7095 = vst.msk [vmem:[#allocation3 + $0x218] sm:$0xff] %vm3178, %v7003
        %7096 = vst.msk [vmem:[#allocation3 + $0x228] sm:$0xff] %vm3178, %v7005
        %7097 = vst.msk [vmem:[#allocation3 + $0x238] sm:$0xff] %vm3178, %v7007
        %7098 = vst.msk [vmem:[#allocation3 + $0x248] sm:$0xff] %vm3178, %v7009
        %7099 = vst.msk [vmem:[#allocation3 + $0x258] sm:$0xff] %vm3178, %v7011
        %7100 = vst.msk [vmem:[#allocation3 + $0x268] sm:$0xff] %vm3178, %v7013
        %7101 = vst.msk [vmem:[#allocation3 + $0x278] sm:$0xff] %vm3178, %v7015
        %7102 = vst.msk [vmem:[#allocation3 + $0x288] sm:$0xff] %vm3178, %v7017
        %7103 = vst.msk [vmem:[#allocation3 + $0x298] sm:$0xf] %vm3220, %v7019
        %v7104 = vld [vmem:[#allocation2 + $0x3b] sm:$0xff]
        %v7105 = vld [vmem:[#allocation2 + $0x43] sm:$0xff]
        %v7106 = vld [vmem:[#allocation2 + $0x4b] sm:$0xff]
        %v7107 = vld [vmem:[#allocation2 + $0x53] sm:$0xff]
        %v7108 = vld [vmem:[#allocation2 + $0x5b] sm:$0xff]
        %v7109 = vld [vmem:[#allocation2 + $0x63] sm:$0xff]
        %v7110 = vld [vmem:[#allocation2 + $0x6b] sm:$0xff]
        %v7111 = vld [vmem:[#allocation2 + $0x73] sm:$0xff]
        %v7112 = vld [vmem:[#allocation2 + $0x7b] sm:$0xff]
        %v7113 = vld [vmem:[#allocation2 + $0x83] sm:$0xff]
        %v7114 = vld [vmem:[#allocation2 + $0x8b] sm:$0xff]
        %v7115 = vld [vmem:[#allocation2 + $0x93] sm:$0xff]
        %v7116 = vld [vmem:[#allocation2 + $0x9b] sm:$0xff]
        %v7117 = vld [vmem:[#allocation2 + $0xa3] sm:$0xff]
        %v7118 = vld [vmem:[#allocation2 + $0xab] sm:$0xff]
        %v7119 = vld [vmem:[#allocation2 + $0xb3] sm:$0xff]
        %v7120 = vld [vmem:[#allocation2 + $0xbb] sm:$0xff]
        %v7121 = vld [vmem:[#allocation2 + $0xc3] sm:$0xff]
        %v7122 = vld [vmem:[#allocation2 + $0xcb] sm:$0xff]
        %v7123 = vld [vmem:[#allocation2 + $0xd3] sm:$0xff]
        %v7124 = vld [vmem:[#allocation2 + $0xdb] sm:$0xff]
        %v7125 = vld [vmem:[#allocation2 + $0xe3] sm:$0xff]
        %v7126 = vld [vmem:[#allocation2 + $0xeb] sm:$0xff]
        %v7127 = vld [vmem:[#allocation2 + $0xf3] sm:$0xff]
        %v7128 = vld [vmem:[#allocation2 + $0xfb] sm:$0xff]
        %v7129 = vld [vmem:[#allocation2 + $0x103] sm:$0xff]
        %v7130 = vld [vmem:[#allocation2 + $0x10b] sm:$0xff]
        %v7131 = vld [vmem:[#allocation2 + $0x113] sm:$0xff]
        %v7132 = vld [vmem:[#allocation2 + $0x11b] sm:$0xff]
        %v7133 = vld [vmem:[#allocation2 + $0x123] sm:$0xff]
        %v7134 = vld [vmem:[#allocation2 + $0x12b] sm:$0xff]
        %v7135 = vld [vmem:[#allocation2 + $0x133] sm:$0xff]
        %v7136 = vld [vmem:[#allocation2 + $0x13b] sm:$0xff]
        %v7137 = vld [vmem:[#allocation2 + $0x143] sm:$0xff]
        %v7138 = vld [vmem:[#allocation2 + $0x14b] sm:$0xff]
        %v7139 = vld [vmem:[#allocation2 + $0x153] sm:$0xff]
        %v7140 = vld [vmem:[#allocation2 + $0x15b] sm:$0xff]
        %v7141 = vld [vmem:[#allocation2 + $0x163] sm:$0xff]
        %v7142 = vld [vmem:[#allocation2 + $0x16b] sm:$0xff]
        %v7143 = vld [vmem:[#allocation2 + $0x173] sm:$0xff]
        %v7144 = vld [vmem:[#allocation2 + $0x17b] sm:$0xff]
        %v7145 = vld [vmem:[#allocation2 + $0x183] sm:$0xf]
        %7188 = vrot.lane.b32.xlu0 %v7104, 56
        %v7189 = vpop.permute.xlu0 %7188
        %7190 = vrot.lane.b32.xlu0 %v7105, 56
        %v7191 = vpop.permute.xlu0 %7190
        %7192 = vrot.lane.b32.xlu0 %v7106, 56
        %v7193 = vpop.permute.xlu0 %7192
        %7194 = vrot.lane.b32.xlu0 %v7107, 56
        %v7195 = vpop.permute.xlu0 %7194
        %7196 = vrot.lane.b32.xlu0 %v7108, 56
        %v7197 = vpop.permute.xlu0 %7196
        %7198 = vrot.lane.b32.xlu0 %v7109, 56
        %v7199 = vpop.permute.xlu0 %7198
        %7200 = vrot.lane.b32.xlu0 %v7110, 56
        %v7201 = vpop.permute.xlu0 %7200
        %7202 = vrot.lane.b32.xlu0 %v7111, 56
        %v7203 = vpop.permute.xlu0 %7202
        %7204 = vrot.lane.b32.xlu0 %v7112, 56
        %v7205 = vpop.permute.xlu0 %7204
        %7206 = vrot.lane.b32.xlu0 %v7113, 56
        %v7207 = vpop.permute.xlu0 %7206
        %7208 = vrot.lane.b32.xlu0 %v7114, 56
        %v7209 = vpop.permute.xlu0 %7208
        %7210 = vrot.lane.b32.xlu0 %v7115, 56
        %v7211 = vpop.permute.xlu0 %7210
        %7212 = vrot.lane.b32.xlu0 %v7116, 56
        %v7213 = vpop.permute.xlu0 %7212
        %7214 = vrot.lane.b32.xlu0 %v7117, 56
        %v7215 = vpop.permute.xlu0 %7214
        %7216 = vrot.lane.b32.xlu0 %v7118, 56
        %v7217 = vpop.permute.xlu0 %7216
        %7218 = vrot.lane.b32.xlu0 %v7119, 56
        %v7219 = vpop.permute.xlu0 %7218
        %7220 = vrot.lane.b32.xlu0 %v7120, 56
        %v7221 = vpop.permute.xlu0 %7220
        %7222 = vrot.lane.b32.xlu0 %v7121, 56
        %v7223 = vpop.permute.xlu0 %7222
        %7224 = vrot.lane.b32.xlu0 %v7122, 56
        %v7225 = vpop.permute.xlu0 %7224
        %7226 = vrot.lane.b32.xlu0 %v7123, 56
        %v7227 = vpop.permute.xlu0 %7226
        %7228 = vrot.lane.b32.xlu0 %v7124, 56
        %v7229 = vpop.permute.xlu0 %7228
        %7230 = vrot.lane.b32.xlu0 %v7125, 56
        %v7231 = vpop.permute.xlu0 %7230
        %7232 = vrot.lane.b32.xlu0 %v7126, 56
        %v7233 = vpop.permute.xlu0 %7232
        %7234 = vrot.lane.b32.xlu0 %v7127, 56
        %v7235 = vpop.permute.xlu0 %7234
        %7236 = vrot.lane.b32.xlu0 %v7128, 56
        %v7237 = vpop.permute.xlu0 %7236
        %7238 = vrot.lane.b32.xlu0 %v7129, 56
        %v7239 = vpop.permute.xlu0 %7238
        %7240 = vrot.lane.b32.xlu0 %v7130, 56
        %v7241 = vpop.permute.xlu0 %7240
        %7242 = vrot.lane.b32.xlu0 %v7131, 56
        %v7243 = vpop.permute.xlu0 %7242
        %7244 = vrot.lane.b32.xlu0 %v7132, 56
        %v7245 = vpop.permute.xlu0 %7244
        %7246 = vrot.lane.b32.xlu0 %v7133, 56
        %v7247 = vpop.permute.xlu0 %7246
        %7248 = vrot.lane.b32.xlu0 %v7134, 56
        %v7249 = vpop.permute.xlu0 %7248
        %7250 = vrot.lane.b32.xlu0 %v7135, 56
        %v7251 = vpop.permute.xlu0 %7250
        %7252 = vrot.lane.b32.xlu0 %v7136, 56
        %v7253 = vpop.permute.xlu0 %7252
        %7254 = vrot.lane.b32.xlu0 %v7137, 56
        %v7255 = vpop.permute.xlu0 %7254
        %7256 = vrot.lane.b32.xlu0 %v7138, 56
        %v7257 = vpop.permute.xlu0 %7256
        %7258 = vrot.lane.b32.xlu0 %v7139, 56
        %v7259 = vpop.permute.xlu0 %7258
        %7260 = vrot.lane.b32.xlu0 %v7140, 56
        %v7261 = vpop.permute.xlu0 %7260
        %7262 = vrot.lane.b32.xlu0 %v7141, 56
        %v7263 = vpop.permute.xlu0 %7262
        %7264 = vrot.lane.b32.xlu0 %v7142, 56
        %v7265 = vpop.permute.xlu0 %7264
        %7266 = vrot.lane.b32.xlu0 %v7143, 56
        %v7267 = vpop.permute.xlu0 %7266
        %7268 = vrot.lane.b32.xlu0 %v7144, 56
        %v7269 = vpop.permute.xlu0 %7268
        %7270 = vrot.lane.b32.xlu0 %v7145, 56
        %v7271 = vpop.permute.xlu0 %7270
        %7314 = vst.msk [vmem:[#allocation3 + $0x8] sm:$0xff] %vm3432, %v7189
        %7315 = vst.msk [vmem:[#allocation3 + $0x18] sm:$0xff] %vm3432, %v7191
        %7316 = vst.msk [vmem:[#allocation3 + $0x28] sm:$0xff] %vm3432, %v7193
        %7317 = vst.msk [vmem:[#allocation3 + $0x38] sm:$0xff] %vm3432, %v7195
        %7318 = vst.msk [vmem:[#allocation3 + $0x48] sm:$0xff] %vm3432, %v7197
        %7319 = vst.msk [vmem:[#allocation3 + $0x58] sm:$0xff] %vm3432, %v7199
        %7320 = vst.msk [vmem:[#allocation3 + $0x68] sm:$0xff] %vm3432, %v7201
        %7321 = vst.msk [vmem:[#allocation3 + $0x78] sm:$0xff] %vm3432, %v7203
        %7322 = vst.msk [vmem:[#allocation3 + $0x88] sm:$0xff] %vm3432, %v7205
        %7323 = vst.msk [vmem:[#allocation3 + $0x98] sm:$0xff] %vm3432, %v7207
        %7324 = vst.msk [vmem:[#allocation3 + $0xa8] sm:$0xff] %vm3432, %v7209
        %7325 = vst.msk [vmem:[#allocation3 + $0xb8] sm:$0xff] %vm3432, %v7211
        %7326 = vst.msk [vmem:[#allocation3 + $0xc8] sm:$0xff] %vm3432, %v7213
        %7327 = vst.msk [vmem:[#allocation3 + $0xd8] sm:$0xff] %vm3432, %v7215
        %7328 = vst.msk [vmem:[#allocation3 + $0xe8] sm:$0xff] %vm3432, %v7217
        %7329 = vst.msk [vmem:[#allocation3 + $0xf8] sm:$0xff] %vm3432, %v7219
        %7330 = vst.msk [vmem:[#allocation3 + $0x108] sm:$0xff] %vm3432, %v7221
        %7331 = vst.msk [vmem:[#allocation3 + $0x118] sm:$0xff] %vm3432, %v7223
        %7332 = vst.msk [vmem:[#allocation3 + $0x128] sm:$0xff] %vm3432, %v7225
        %7333 = vst.msk [vmem:[#allocation3 + $0x138] sm:$0xff] %vm3432, %v7227
        %7334 = vst.msk [vmem:[#allocation3 + $0x148] sm:$0xff] %vm3432, %v7229
        %7335 = vst.msk [vmem:[#allocation3 + $0x158] sm:$0xff] %vm3432, %v7231
        %7336 = vst.msk [vmem:[#allocation3 + $0x168] sm:$0xff] %vm3432, %v7233
        %7337 = vst.msk [vmem:[#allocation3 + $0x178] sm:$0xff] %vm3432, %v7235
        %7338 = vst.msk [vmem:[#allocation3 + $0x188] sm:$0xff] %vm3432, %v7237
        %7339 = vst.msk [vmem:[#allocation3 + $0x198] sm:$0xff] %vm3432, %v7239
        %7340 = vst.msk [vmem:[#allocation3 + $0x1a8] sm:$0xff] %vm3432, %v7241
        %7341 = vst.msk [vmem:[#allocation3 + $0x1b8] sm:$0xff] %vm3432, %v7243
        %7342 = vst.msk [vmem:[#allocation3 + $0x1c8] sm:$0xff] %vm3432, %v7245
        %7343 = vst.msk [vmem:[#allocation3 + $0x1d8] sm:$0xff] %vm3432, %v7247
        %7344 = vst.msk [vmem:[#allocation3 + $0x1e8] sm:$0xff] %vm3432, %v7249
        %7345 = vst.msk [vmem:[#allocation3 + $0x1f8] sm:$0xff] %vm3432, %v7251
        %7346 = vst.msk [vmem:[#allocation3 + $0x208] sm:$0xff] %vm3432, %v7253
        %7347 = vst.msk [vmem:[#allocation3 + $0x218] sm:$0xff] %vm3432, %v7255
        %7348 = vst.msk [vmem:[#allocation3 + $0x228] sm:$0xff] %vm3432, %v7257
        %7349 = vst.msk [vmem:[#allocation3 + $0x238] sm:$0xff] %vm3432, %v7259
        %7350 = vst.msk [vmem:[#allocation3 + $0x248] sm:$0xff] %vm3432, %v7261
        %7351 = vst.msk [vmem:[#allocation3 + $0x258] sm:$0xff] %vm3432, %v7263
        %7352 = vst.msk [vmem:[#allocation3 + $0x268] sm:$0xff] %vm3432, %v7265
        %7353 = vst.msk [vmem:[#allocation3 + $0x278] sm:$0xff] %vm3432, %v7267
        %7354 = vst.msk [vmem:[#allocation3 + $0x288] sm:$0xff] %vm3432, %v7269
        %7355 = vst.msk [vmem:[#allocation3 + $0x298] sm:$0xf] %vm3474, %v7271
        %v7356 = vld [vmem:[#allocation2 + $0x3c] sm:$0xff]
        %v7357 = vld [vmem:[#allocation2 + $0x44] sm:$0xff]
        %v7358 = vld [vmem:[#allocation2 + $0x4c] sm:$0xff]
        %v7359 = vld [vmem:[#allocation2 + $0x54] sm:$0xff]
        %v7360 = vld [vmem:[#allocation2 + $0x5c] sm:$0xff]
        %v7361 = vld [vmem:[#allocation2 + $0x64] sm:$0xff]
        %v7362 = vld [vmem:[#allocation2 + $0x6c] sm:$0xff]
        %v7363 = vld [vmem:[#allocation2 + $0x74] sm:$0xff]
        %v7364 = vld [vmem:[#allocation2 + $0x7c] sm:$0xff]
        %v7365 = vld [vmem:[#allocation2 + $0x84] sm:$0xff]
        %v7366 = vld [vmem:[#allocation2 + $0x8c] sm:$0xff]
        %v7367 = vld [vmem:[#allocation2 + $0x94] sm:$0xff]
        %v7368 = vld [vmem:[#allocation2 + $0x9c] sm:$0xff]
        %v7369 = vld [vmem:[#allocation2 + $0xa4] sm:$0xff]
        %v7370 = vld [vmem:[#allocation2 + $0xac] sm:$0xff]
        %v7371 = vld [vmem:[#allocation2 + $0xb4] sm:$0xff]
        %v7372 = vld [vmem:[#allocation2 + $0xbc] sm:$0xff]
        %v7373 = vld [vmem:[#allocation2 + $0xc4] sm:$0xff]
        %v7374 = vld [vmem:[#allocation2 + $0xcc] sm:$0xff]
        %v7375 = vld [vmem:[#allocation2 + $0xd4] sm:$0xff]
        %v7376 = vld [vmem:[#allocation2 + $0xdc] sm:$0xff]
        %v7377 = vld [vmem:[#allocation2 + $0xe4] sm:$0xff]
        %v7378 = vld [vmem:[#allocation2 + $0xec] sm:$0xff]
        %v7379 = vld [vmem:[#allocation2 + $0xf4] sm:$0xff]
        %v7380 = vld [vmem:[#allocation2 + $0xfc] sm:$0xff]
        %v7381 = vld [vmem:[#allocation2 + $0x104] sm:$0xff]
        %v7382 = vld [vmem:[#allocation2 + $0x10c] sm:$0xff]
        %v7383 = vld [vmem:[#allocation2 + $0x114] sm:$0xff]
        %v7384 = vld [vmem:[#allocation2 + $0x11c] sm:$0xff]
        %v7385 = vld [vmem:[#allocation2 + $0x124] sm:$0xff]
        %v7386 = vld [vmem:[#allocation2 + $0x12c] sm:$0xff]
        %v7387 = vld [vmem:[#allocation2 + $0x134] sm:$0xff]
        %v7388 = vld [vmem:[#allocation2 + $0x13c] sm:$0xff]
        %v7389 = vld [vmem:[#allocation2 + $0x144] sm:$0xff]
        %v7390 = vld [vmem:[#allocation2 + $0x14c] sm:$0xff]
        %v7391 = vld [vmem:[#allocation2 + $0x154] sm:$0xff]
        %v7392 = vld [vmem:[#allocation2 + $0x15c] sm:$0xff]
        %v7393 = vld [vmem:[#allocation2 + $0x164] sm:$0xff]
        %v7394 = vld [vmem:[#allocation2 + $0x16c] sm:$0xff]
        %v7395 = vld [vmem:[#allocation2 + $0x174] sm:$0xff]
        %v7396 = vld [vmem:[#allocation2 + $0x17c] sm:$0xff]
        %v7397 = vld [vmem:[#allocation2 + $0x184] sm:$0xf]
        %7440 = vrot.lane.b32.xlu0 %v7356, 64
        %v7441 = vpop.permute.xlu0 %7440
        %7442 = vrot.lane.b32.xlu0 %v7357, 64
        %v7443 = vpop.permute.xlu0 %7442
        %7444 = vrot.lane.b32.xlu0 %v7358, 64
        %v7445 = vpop.permute.xlu0 %7444
        %7446 = vrot.lane.b32.xlu0 %v7359, 64
        %v7447 = vpop.permute.xlu0 %7446
        %7448 = vrot.lane.b32.xlu0 %v7360, 64
        %v7449 = vpop.permute.xlu0 %7448
        %7450 = vrot.lane.b32.xlu0 %v7361, 64
        %v7451 = vpop.permute.xlu0 %7450
        %7452 = vrot.lane.b32.xlu0 %v7362, 64
        %v7453 = vpop.permute.xlu0 %7452
        %7454 = vrot.lane.b32.xlu0 %v7363, 64
        %v7455 = vpop.permute.xlu0 %7454
        %7456 = vrot.lane.b32.xlu0 %v7364, 64
        %v7457 = vpop.permute.xlu0 %7456
        %7458 = vrot.lane.b32.xlu0 %v7365, 64
        %v7459 = vpop.permute.xlu0 %7458
        %7460 = vrot.lane.b32.xlu0 %v7366, 64
        %v7461 = vpop.permute.xlu0 %7460
        %7462 = vrot.lane.b32.xlu0 %v7367, 64
        %v7463 = vpop.permute.xlu0 %7462
        %7464 = vrot.lane.b32.xlu0 %v7368, 64
        %v7465 = vpop.permute.xlu0 %7464
        %7466 = vrot.lane.b32.xlu0 %v7369, 64
        %v7467 = vpop.permute.xlu0 %7466
        %7468 = vrot.lane.b32.xlu0 %v7370, 64
        %v7469 = vpop.permute.xlu0 %7468
        %7470 = vrot.lane.b32.xlu0 %v7371, 64
        %v7471 = vpop.permute.xlu0 %7470
        %7472 = vrot.lane.b32.xlu0 %v7372, 64
        %v7473 = vpop.permute.xlu0 %7472
        %7474 = vrot.lane.b32.xlu0 %v7373, 64
        %v7475 = vpop.permute.xlu0 %7474
        %7476 = vrot.lane.b32.xlu0 %v7374, 64
        %v7477 = vpop.permute.xlu0 %7476
        %7478 = vrot.lane.b32.xlu0 %v7375, 64
        %v7479 = vpop.permute.xlu0 %7478
        %7480 = vrot.lane.b32.xlu0 %v7376, 64
        %v7481 = vpop.permute.xlu0 %7480
        %7482 = vrot.lane.b32.xlu0 %v7377, 64
        %v7483 = vpop.permute.xlu0 %7482
        %7484 = vrot.lane.b32.xlu0 %v7378, 64
        %v7485 = vpop.permute.xlu0 %7484
        %7486 = vrot.lane.b32.xlu0 %v7379, 64
        %v7487 = vpop.permute.xlu0 %7486
        %7488 = vrot.lane.b32.xlu0 %v7380, 64
        %v7489 = vpop.permute.xlu0 %7488
        %7490 = vrot.lane.b32.xlu0 %v7381, 64
        %v7491 = vpop.permute.xlu0 %7490
        %7492 = vrot.lane.b32.xlu0 %v7382, 64
        %v7493 = vpop.permute.xlu0 %7492
        %7494 = vrot.lane.b32.xlu0 %v7383, 64
        %v7495 = vpop.permute.xlu0 %7494
        %7496 = vrot.lane.b32.xlu0 %v7384, 64
        %v7497 = vpop.permute.xlu0 %7496
        %7498 = vrot.lane.b32.xlu0 %v7385, 64
        %v7499 = vpop.permute.xlu0 %7498
        %7500 = vrot.lane.b32.xlu0 %v7386, 64
        %v7501 = vpop.permute.xlu0 %7500
        %7502 = vrot.lane.b32.xlu0 %v7387, 64
        %v7503 = vpop.permute.xlu0 %7502
        %7504 = vrot.lane.b32.xlu0 %v7388, 64
        %v7505 = vpop.permute.xlu0 %7504
        %7506 = vrot.lane.b32.xlu0 %v7389, 64
        %v7507 = vpop.permute.xlu0 %7506
        %7508 = vrot.lane.b32.xlu0 %v7390, 64
        %v7509 = vpop.permute.xlu0 %7508
        %7510 = vrot.lane.b32.xlu0 %v7391, 64
        %v7511 = vpop.permute.xlu0 %7510
        %7512 = vrot.lane.b32.xlu0 %v7392, 64
        %v7513 = vpop.permute.xlu0 %7512
        %7514 = vrot.lane.b32.xlu0 %v7393, 64
        %v7515 = vpop.permute.xlu0 %7514
        %7516 = vrot.lane.b32.xlu0 %v7394, 64
        %v7517 = vpop.permute.xlu0 %7516
        %7518 = vrot.lane.b32.xlu0 %v7395, 64
        %v7519 = vpop.permute.xlu0 %7518
        %7520 = vrot.lane.b32.xlu0 %v7396, 64
        %v7521 = vpop.permute.xlu0 %7520
        %7522 = vrot.lane.b32.xlu0 %v7397, 64
        %v7523 = vpop.permute.xlu0 %7522
        %7566 = vst.msk [vmem:[#allocation3 + $0x8] sm:$0xff] %vm3686, %v7441
        %7567 = vst.msk [vmem:[#allocation3 + $0x18] sm:$0xff] %vm3686, %v7443
        %7568 = vst.msk [vmem:[#allocation3 + $0x28] sm:$0xff] %vm3686, %v7445
        %7569 = vst.msk [vmem:[#allocation3 + $0x38] sm:$0xff] %vm3686, %v7447
        %7570 = vst.msk [vmem:[#allocation3 + $0x48] sm:$0xff] %vm3686, %v7449
        %7571 = vst.msk [vmem:[#allocation3 + $0x58] sm:$0xff] %vm3686, %v7451
        %7572 = vst.msk [vmem:[#allocation3 + $0x68] sm:$0xff] %vm3686, %v7453
        %7573 = vst.msk [vmem:[#allocation3 + $0x78] sm:$0xff] %vm3686, %v7455
        %7574 = vst.msk [vmem:[#allocation3 + $0x88] sm:$0xff] %vm3686, %v7457
        %7575 = vst.msk [vmem:[#allocation3 + $0x98] sm:$0xff] %vm3686, %v7459
        %7576 = vst.msk [vmem:[#allocation3 + $0xa8] sm:$0xff] %vm3686, %v7461
        %7577 = vst.msk [vmem:[#allocation3 + $0xb8] sm:$0xff] %vm3686, %v7463
        %7578 = vst.msk [vmem:[#allocation3 + $0xc8] sm:$0xff] %vm3686, %v7465
        %7579 = vst.msk [vmem:[#allocation3 + $0xd8] sm:$0xff] %vm3686, %v7467
        %7580 = vst.msk [vmem:[#allocation3 + $0xe8] sm:$0xff] %vm3686, %v7469
        %7581 = vst.msk [vmem:[#allocation3 + $0xf8] sm:$0xff] %vm3686, %v7471
        %7582 = vst.msk [vmem:[#allocation3 + $0x108] sm:$0xff] %vm3686, %v7473
        %7583 = vst.msk [vmem:[#allocation3 + $0x118] sm:$0xff] %vm3686, %v7475
        %7584 = vst.msk [vmem:[#allocation3 + $0x128] sm:$0xff] %vm3686, %v7477
        %7585 = vst.msk [vmem:[#allocation3 + $0x138] sm:$0xff] %vm3686, %v7479
        %7586 = vst.msk [vmem:[#allocation3 + $0x148] sm:$0xff] %vm3686, %v7481
        %7587 = vst.msk [vmem:[#allocation3 + $0x158] sm:$0xff] %vm3686, %v7483
        %7588 = vst.msk [vmem:[#allocation3 + $0x168] sm:$0xff] %vm3686, %v7485
        %7589 = vst.msk [vmem:[#allocation3 + $0x178] sm:$0xff] %vm3686, %v7487
        %7590 = vst.msk [vmem:[#allocation3 + $0x188] sm:$0xff] %vm3686, %v7489
        %7591 = vst.msk [vmem:[#allocation3 + $0x198] sm:$0xff] %vm3686, %v7491
        %7592 = vst.msk [vmem:[#allocation3 + $0x1a8] sm:$0xff] %vm3686, %v7493
        %7593 = vst.msk [vmem:[#allocation3 + $0x1b8] sm:$0xff] %vm3686, %v7495
        %7594 = vst.msk [vmem:[#allocation3 + $0x1c8] sm:$0xff] %vm3686, %v7497
        %7595 = vst.msk [vmem:[#allocation3 + $0x1d8] sm:$0xff] %vm3686, %v7499
        %7596 = vst.msk [vmem:[#allocation3 + $0x1e8] sm:$0xff] %vm3686, %v7501
        %7597 = vst.msk [vmem:[#allocation3 + $0x1f8] sm:$0xff] %vm3686, %v7503
        %7598 = vst.msk [vmem:[#allocation3 + $0x208] sm:$0xff] %vm3686, %v7505
        %7599 = vst.msk [vmem:[#allocation3 + $0x218] sm:$0xff] %vm3686, %v7507
        %7600 = vst.msk [vmem:[#allocation3 + $0x228] sm:$0xff] %vm3686, %v7509
        %7601 = vst.msk [vmem:[#allocation3 + $0x238] sm:$0xff] %vm3686, %v7511
        %7602 = vst.msk [vmem:[#allocation3 + $0x248] sm:$0xff] %vm3686, %v7513
        %7603 = vst.msk [vmem:[#allocation3 + $0x258] sm:$0xff] %vm3686, %v7515
        %7604 = vst.msk [vmem:[#allocation3 + $0x268] sm:$0xff] %vm3686, %v7517
        %7605 = vst.msk [vmem:[#allocation3 + $0x278] sm:$0xff] %vm3686, %v7519
        %7606 = vst.msk [vmem:[#allocation3 + $0x288] sm:$0xff] %vm3686, %v7521
        %7607 = vst.msk [vmem:[#allocation3 + $0x298] sm:$0xf] %vm3728, %v7523
        %v7608 = vld [vmem:[#allocation3] sm:$0xff]
        %v7609 = vld [vmem:[#allocation3 + $0x8] sm:$0xff]
        %v7610 = vld [vmem:[#allocation3 + $0x10] sm:$0xff]
        %v7611 = vld [vmem:[#allocation3 + $0x18] sm:$0xff]
        %v7612 = vld [vmem:[#allocation3 + $0x20] sm:$0xff]
        %v7613 = vld [vmem:[#allocation3 + $0x28] sm:$0xff]
        %v7614 = vld [vmem:[#allocation3 + $0x30] sm:$0xff]
        %v7615 = vld [vmem:[#allocation3 + $0x38] sm:$0xff]
        %v7616 = vld [vmem:[#allocation3 + $0x40] sm:$0xff]
        %v7617 = vld [vmem:[#allocation3 + $0x48] sm:$0xff]
        %v7618 = vld [vmem:[#allocation3 + $0x50] sm:$0xff]
        %v7619 = vld [vmem:[#allocation3 + $0x58] sm:$0xff]
        %v7620 = vld [vmem:[#allocation3 + $0x60] sm:$0xff]
        %v7621 = vld [vmem:[#allocation3 + $0x68] sm:$0xff]
        %v7622 = vld [vmem:[#allocation3 + $0x70] sm:$0xff]
        %v7623 = vld [vmem:[#allocation3 + $0x78] sm:$0xff]
        %v7624 = vld [vmem:[#allocation3 + $0x80] sm:$0xff]
        %v7625 = vld [vmem:[#allocation3 + $0x88] sm:$0xff]
        %v7626 = vld [vmem:[#allocation3 + $0x90] sm:$0xff]
        %v7627 = vld [vmem:[#allocation3 + $0x98] sm:$0xff]
        %v7628 = vld [vmem:[#allocation3 + $0xa0] sm:$0xff]
        %v7629 = vld [vmem:[#allocation3 + $0xa8] sm:$0xff]
        %v7630 = vld [vmem:[#allocation3 + $0xb0] sm:$0xff]
        %v7631 = vld [vmem:[#allocation3 + $0xb8] sm:$0xff]
        %v7632 = vld [vmem:[#allocation3 + $0xc0] sm:$0xff]
        %v7633 = vld [vmem:[#allocation3 + $0xc8] sm:$0xff]
        %v7634 = vld [vmem:[#allocation3 + $0xd0] sm:$0xff]
        %v7635 = vld [vmem:[#allocation3 + $0xd8] sm:$0xff]
        %v7636 = vld [vmem:[#allocation3 + $0xe0] sm:$0xff]
        %v7637 = vld [vmem:[#allocation3 + $0xe8] sm:$0xff]
        %v7638 = vld [vmem:[#allocation3 + $0xf0] sm:$0xff]
        %v7639 = vld [vmem:[#allocation3 + $0xf8] sm:$0xff]
        %v7640 = vld [vmem:[#allocation3 + $0x100] sm:$0xff]
        %v7641 = vld [vmem:[#allocation3 + $0x108] sm:$0xff]
        %v7642 = vld [vmem:[#allocation3 + $0x110] sm:$0xff]
        %v7643 = vld [vmem:[#allocation3 + $0x118] sm:$0xff]
        %v7644 = vld [vmem:[#allocation3 + $0x120] sm:$0xff]
        %v7645 = vld [vmem:[#allocation3 + $0x128] sm:$0xff]
        %v7646 = vld [vmem:[#allocation3 + $0x130] sm:$0xff]
        %v7647 = vld [vmem:[#allocation3 + $0x138] sm:$0xff]
        %v7648 = vld [vmem:[#allocation3 + $0x140] sm:$0xff]
        %v7649 = vld [vmem:[#allocation3 + $0x148] sm:$0xff]
        %v7650 = vld [vmem:[#allocation3 + $0x150] sm:$0xff]
        %v7651 = vld [vmem:[#allocation3 + $0x158] sm:$0xff]
        %v7652 = vld [vmem:[#allocation3 + $0x160] sm:$0xff]
        %v7653 = vld [vmem:[#allocation3 + $0x168] sm:$0xff]
        %v7654 = vld [vmem:[#allocation3 + $0x170] sm:$0xff]
        %v7655 = vld [vmem:[#allocation3 + $0x178] sm:$0xff]
        %v7656 = vld [vmem:[#allocation3 + $0x180] sm:$0xff]
        %v7657 = vld [vmem:[#allocation3 + $0x188] sm:$0xff]
        %v7658 = vld [vmem:[#allocation3 + $0x190] sm:$0xff]
        %v7659 = vld [vmem:[#allocation3 + $0x198] sm:$0xff]
        %v7660 = vld [vmem:[#allocation3 + $0x1a0] sm:$0xff]
        %v7661 = vld [vmem:[#allocation3 + $0x1a8] sm:$0xff]
        %v7662 = vld [vmem:[#allocation3 + $0x1b0] sm:$0xff]
        %v7663 = vld [vmem:[#allocation3 + $0x1b8] sm:$0xff]
        %v7664 = vld [vmem:[#allocation3 + $0x1c0] sm:$0xff]
        %v7665 = vld [vmem:[#allocation3 + $0x1c8] sm:$0xff]
        %v7666 = vld [vmem:[#allocation3 + $0x1d0] sm:$0xff]
        %v7667 = vld [vmem:[#allocation3 + $0x1d8] sm:$0xff]
        %v7668 = vld [vmem:[#allocation3 + $0x1e0] sm:$0xff]
        %v7669 = vld [vmem:[#allocation3 + $0x1e8] sm:$0xff]
        %v7670 = vld [vmem:[#allocation3 + $0x1f0] sm:$0xff]
        %v7671 = vld [vmem:[#allocation3 + $0x1f8] sm:$0xff]
        %v7672 = vld [vmem:[#allocation3 + $0x200] sm:$0xff]
        %v7673 = vld [vmem:[#allocation3 + $0x208] sm:$0xff]
        %v7674 = vld [vmem:[#allocation3 + $0x210] sm:$0xff]
        %v7675 = vld [vmem:[#allocation3 + $0x218] sm:$0xff]
        %v7676 = vld [vmem:[#allocation3 + $0x220] sm:$0xff]
        %v7677 = vld [vmem:[#allocation3 + $0x228] sm:$0xff]
        %v7678 = vld [vmem:[#allocation3 + $0x230] sm:$0xff]
        %v7679 = vld [vmem:[#allocation3 + $0x238] sm:$0xff]
        %v7680 = vld [vmem:[#allocation3 + $0x240] sm:$0xff]
        %v7681 = vld [vmem:[#allocation3 + $0x248] sm:$0xff]
        %v7682 = vld [vmem:[#allocation3 + $0x250] sm:$0xff]
        %v7683 = vld [vmem:[#allocation3 + $0x258] sm:$0xff]
        %v7684 = vld [vmem:[#allocation3 + $0x260] sm:$0xff]
        %v7685 = vld [vmem:[#allocation3 + $0x268] sm:$0xff]
        %v7686 = vld [vmem:[#allocation3 + $0x270] sm:$0xff]
        %v7687 = vld [vmem:[#allocation3 + $0x278] sm:$0xff]
        %v7688 = vld [vmem:[#allocation3 + $0x280] sm:$0xff]
        %v7689 = vld [vmem:[#allocation3 + $0x288] sm:$0xff]
        %v7690 = vld [vmem:[#allocation3 + $0x290] sm:$0xf]
        %v7691 = vld [vmem:[#allocation3 + $0x298] sm:$0xf]
        %v7692 = vpack.c.bf16 %v7610, %v7608
        %v7693 = vpack.c.bf16 %v7611, %v7609
        %v7694 = vpack.c.bf16 %v7614, %v7612
        %v7695 = vpack.c.bf16 %v7615, %v7613
        %v7696 = vpack.c.bf16 %v7618, %v7616
        %v7697 = vpack.c.bf16 %v7619, %v7617
        %v7698 = vpack.c.bf16 %v7622, %v7620
        %v7699 = vpack.c.bf16 %v7623, %v7621
        %v7700 = vpack.c.bf16 %v7626, %v7624
        %v7701 = vpack.c.bf16 %v7627, %v7625
        %v7702 = vpack.c.bf16 %v7630, %v7628
        %v7703 = vpack.c.bf16 %v7631, %v7629
        %v7704 = vpack.c.bf16 %v7634, %v7632
        %v7705 = vpack.c.bf16 %v7635, %v7633
        %v7706 = vpack.c.bf16 %v7638, %v7636
        %v7707 = vpack.c.bf16 %v7639, %v7637
        %v7708 = vpack.c.bf16 %v7642, %v7640
        %v7709 = vpack.c.bf16 %v7643, %v7641
        %v7710 = vpack.c.bf16 %v7646, %v7644
        %v7711 = vpack.c.bf16 %v7647, %v7645
        %v7712 = vpack.c.bf16 %v7650, %v7648
        %v7713 = vpack.c.bf16 %v7651, %v7649
        %v7714 = vpack.c.bf16 %v7654, %v7652
        %v7715 = vpack.c.bf16 %v7655, %v7653
        %v7716 = vpack.c.bf16 %v7658, %v7656
        %v7717 = vpack.c.bf16 %v7659, %v7657
        %v7718 = vpack.c.bf16 %v7662, %v7660
        %v7719 = vpack.c.bf16 %v7663, %v7661
        %v7720 = vpack.c.bf16 %v7666, %v7664
        %v7721 = vpack.c.bf16 %v7667, %v7665
        %v7722 = vpack.c.bf16 %v7670, %v7668
        %v7723 = vpack.c.bf16 %v7671, %v7669
        %v7724 = vpack.c.bf16 %v7674, %v7672
        %v7725 = vpack.c.bf16 %v7675, %v7673
        %v7726 = vpack.c.bf16 %v7678, %v7676
        %v7727 = vpack.c.bf16 %v7679, %v7677
        %v7728 = vpack.c.bf16 %v7682, %v7680
        %v7729 = vpack.c.bf16 %v7683, %v7681
        %v7730 = vpack.c.bf16 %v7686, %v7684
        %v7731 = vpack.c.bf16 %v7687, %v7685
        %v7732 = vpack.c.bf16 %v7690, %v7688
        %v7733 = vpack.c.bf16 %v7691, %v7689
        %v7734 = vld [vmem:[%s3] sm:$0xf]
        %v7735 = vld [vmem:[%s3 + $0x4] sm:$0xf]
        %v7736 = vld [vmem:[%s3 + $0x8] sm:$0xf]
        %v7737 = vld [vmem:[%s3 + $0xc] sm:$0xf]
        %v7738 = vld [vmem:[%s3 + $0x10] sm:$0xf]
        %v7739 = vld [vmem:[%s3 + $0x14] sm:$0xf]
        %v7740 = vld [vmem:[%s3 + $0x18] sm:$0xf]
        %v7741 = vld [vmem:[%s3 + $0x1c] sm:$0xf]
        %v7742 = vld [vmem:[%s3 + $0x20] sm:$0xf]
        %v7743 = vld [vmem:[%s3 + $0x24] sm:$0xf]
        %v7744 = vld [vmem:[%s3 + $0x28] sm:$0xf]
        %v7745 = vld [vmem:[%s3 + $0x2c] sm:$0xf]
        %v7746 = vld [vmem:[%s3 + $0x30] sm:$0xf]
        %v7747 = vld [vmem:[%s3 + $0x34] sm:$0xf]
        %v7748 = vld [vmem:[%s3 + $0x38] sm:$0xf]
        %v7749 = vld [vmem:[%s3 + $0x3c] sm:$0xf]
        %v7750 = vld [vmem:[%s3 + $0x40] sm:$0xf]
        %v7751 = vld [vmem:[%s3 + $0x44] sm:$0xf]
        %v7752 = vld [vmem:[%s3 + $0x48] sm:$0xf]
        %v7753 = vld [vmem:[%s3 + $0x4c] sm:$0xf]
        %v7754 = vld [vmem:[%s3 + $0x50] sm:$0xf]
        %v7755 = vld [vmem:[%s3 + $0x54] sm:$0xf]
        %v7756 = vld [vmem:[%s3 + $0x58] sm:$0xf]
        %v7757 = vld [vmem:[%s3 + $0x5c] sm:$0xf]
        %v7758 = vld [vmem:[%s3 + $0x60] sm:$0xf]
        %v7759 = vld [vmem:[%s4] sm:$0x1]
        %v7761 = vlaneseq
        %v7762 = vshrl.u32 %v7761, 7
        %v7763 = vsub.s32 0, %v7762
        %v7764 = vrot.slane %v7759, %v7763
        %v7791 = vunpack.c.l.b16 %v7734
        %v7792 = vunpack.c.l.b16 %v7735
        %v7793 = vunpack.c.l.b16 %v7736
        %v7794 = vunpack.c.l.b16 %v7737
        %v7795 = vunpack.c.l.b16 %v7738
        %v7796 = vunpack.c.l.b16 %v7739
        %v7797 = vunpack.c.l.b16 %v7740
        %v7798 = vunpack.c.l.b16 %v7741
        %v7799 = vunpack.c.l.b16 %v7742
        %v7800 = vunpack.c.l.b16 %v7743
        %v7801 = vunpack.c.l.b16 %v7744
        %v7802 = vunpack.c.l.b16 %v7745
        %v7803 = vunpack.c.l.b16 %v7746
        %v7804 = vunpack.c.l.b16 %v7747
        %v7805 = vunpack.c.l.b16 %v7748
        %v7806 = vunpack.c.l.b16 %v7749
        %v7807 = vunpack.c.l.b16 %v7750
        %v7808 = vunpack.c.l.b16 %v7751
        %v7809 = vunpack.c.l.b16 %v7752
        %v7810 = vunpack.c.l.b16 %v7753
        %v7811 = vunpack.c.l.b16 %v7754
        %v7812 = vunpack.c.l.b16 %v7755
        %v7813 = vunpack.c.l.b16 %v7756
        %v7814 = vunpack.c.l.b16 %v7757
        %v7815 = vunpack.c.l.b16 %v7758
        %v7816 = vpack.c.b16 %v7792, %v7791
        %v7817 = vpack.c.b16 %v7794, %v7793
        %v7818 = vpack.c.b16 %v7796, %v7795
        %v7819 = vpack.c.b16 %v7798, %v7797
        %v7820 = vpack.c.b16 %v7800, %v7799
        %v7821 = vpack.c.b16 %v7802, %v7801
        %v7822 = vpack.c.b16 %v7804, %v7803
        %v7823 = vpack.c.b16 %v7806, %v7805
        %v7824 = vpack.c.b16 %v7808, %v7807
        %v7825 = vpack.c.b16 %v7810, %v7809
        %v7826 = vpack.c.b16 %v7812, %v7811
        %v7827 = vpack.c.b16 %v7814, %v7813
        %v7828 = vpack.c.b16 %v7815, %v7815
        %vm7841 = vcmask 588800
        %v7843 = vsel %vm7841, %v7693, 0
        %v7846 = vsel %vm7841, %v7695, 0
        %v7849 = vsel %vm7841, %v7697, 0
        %v7852 = vsel %vm7841, %v7699, 0
        %v7855 = vsel %vm7841, %v7701, 0
        %v7858 = vsel %vm7841, %v7703, 0
        %v7861 = vsel %vm7841, %v7705, 0
        %v7864 = vsel %vm7841, %v7707, 0
        %v7867 = vsel %vm7841, %v7709, 0
        %v7870 = vsel %vm7841, %v7711, 0
        %v7873 = vsel %vm7841, %v7713, 0
        %v7876 = vsel %vm7841, %v7715, 0
        %v7879 = vsel %vm7841, %v7717, 0
        %v7882 = vsel %vm7841, %v7719, 0
        %v7885 = vsel %vm7841, %v7721, 0
        %v7888 = vsel %vm7841, %v7723, 0
        %v7891 = vsel %vm7841, %v7725, 0
        %v7894 = vsel %vm7841, %v7727, 0
        %v7897 = vsel %vm7841, %v7729, 0
        %v7900 = vsel %vm7841, %v7731, 0
        %v7903 = vsel %vm7841, %v7733, 0
        %vm7905 = vcmask 1043456
        %v7907 = vsel %vm7905, %v7828, 0
        %7909 = vmatprep.subr.bf16.mxu0 0
        %7910 = vmatpush1.bf16.msra.mxu0 %v7816
        %7911 = vmatprep.subr.bf16.mxu0 0
        %7912 = vmatpush1.bf16.msra.mxu0 %v7817
        %7913 = vmatprep.subr.bf16.mxu0 0
        %7914 = vmatpush1.bf16.msra.mxu0 %v7818
        %7915 = vmatprep.subr.bf16.mxu0 0
        %7916 = vmatpush1.bf16.msra.mxu0 %v7819
        %7917 = vmatprep.subr.bf16.mxu0 0
        %7918 = vmatpush1.bf16.msra.mxu0 %v7820
        %7919 = vmatprep.subr.bf16.mxu0 0
        %7920 = vmatpush1.bf16.msra.mxu0 %v7821
        %7921 = vmatprep.subr.bf16.mxu0 0
        %7922 = vmatpush1.bf16.msra.mxu0 %v7822
        %7923 = vmatprep.subr.bf16.mxu0 0
        %7924 = vmatpush1.bf16.msra.mxu0 %v7823
        %7925 = vmatprep.subr.bf16.mxu0 0
        %7926 = vmatpush1.bf16.msra.mxu0 %v7824
        %7927 = vmatprep.subr.bf16.mxu0 0
        %7928 = vmatpush1.bf16.msra.mxu0 %v7825
        %7929 = vmatprep.subr.bf16.mxu0 0
        %7930 = vmatpush1.bf16.msra.mxu0 %v7826
        %7931 = vmatprep.subr.bf16.mxu0 0
        %7932 = vmatpush1.bf16.msra.mxu0 %v7827
        %7933 = vmatprep.subr.bf16.mxu0 0
        %7934 = vmatpush1.bf16.msra.mxu0 %v7907
        %7935 = vmatprep.subr.bf16.mxu0 0
        %7936 = vmatpush1.bf16.msra.mxu0 0
        %7937 = vmatprep.subr.bf16.mxu0 0
        %7938 = vmatpush1.bf16.msra.mxu0 0
        %7939 = vmatprep.subr.bf16.mxu0 0
        %7940 = vmatpush1.bf16.msra.mxu0 0
        %7941 = vmatprep.mubr.bf16.mxu0 %v7843
        %7942 = vmatmul.mubr.bf16.gmra.mrb[0].mxu0 %v7692
        %v7943 = vpop.f32.mrb[0].mxu0
        %v7944 = vadd.f32 %v7764, %v7943
        %v7945 = vpop.f32.mrb[0].mxu0
        %v7946 = vpop.f32.mrb[0].mxu0
        %v7947 = vadd.f32 %v7764, %v7946
        %v7948 = vpop.f32.mrb[0].mxu0
        %7949 = vmatprep.mubr.bf16.mxu0 %v7846
        %7950 = vmatmul.mubr.bf16.gmra.mrb[0].mxu0 %v7694
        %v7951 = vpop.f32.mrb[0].mxu0
        %v7952 = vadd.f32 %v7764, %v7951
        %v7953 = vpop.f32.mrb[0].mxu0
        %v7954 = vpop.f32.mrb[0].mxu0
        %v7955 = vadd.f32 %v7764, %v7954
        %v7956 = vpop.f32.mrb[0].mxu0
        %7957 = vmatprep.mubr.bf16.mxu0 %v7849
        %7958 = vmatmul.mubr.bf16.gmra.mrb[0].mxu0 %v7696
        %v7959 = vpop.f32.mrb[0].mxu0
        %v7960 = vadd.f32 %v7764, %v7959
        %v7961 = vpop.f32.mrb[0].mxu0
        %v7962 = vpop.f32.mrb[0].mxu0
        %v7963 = vadd.f32 %v7764, %v7962
        %v7964 = vpop.f32.mrb[0].mxu0
        %7965 = vmatprep.mubr.bf16.mxu0 %v7852
        %7966 = vmatmul.mubr.bf16.gmra.mrb[0].mxu0 %v7698
        %v7967 = vpop.f32.mrb[0].mxu0
        %v7968 = vadd.f32 %v7764, %v7967
        %v7969 = vpop.f32.mrb[0].mxu0
        %v7970 = vpop.f32.mrb[0].mxu0
        %v7971 = vadd.f32 %v7764, %v7970
        %v7972 = vpop.f32.mrb[0].mxu0
        %7973 = vmatprep.mubr.bf16.mxu0 %v7855
        %7974 = vmatmul.mubr.bf16.gmra.mrb[0].mxu0 %v7700
        %v7975 = vpop.f32.mrb[0].mxu0
        %v7976 = vadd.f32 %v7764, %v7975
        %v7977 = vpop.f32.mrb[0].mxu0
        %v7978 = vpop.f32.mrb[0].mxu0
        %v7979 = vadd.f32 %v7764, %v7978
        %v7980 = vpop.f32.mrb[0].mxu0
        %7981 = vmatprep.mubr.bf16.mxu0 %v7858
        %7982 = vmatmul.mubr.bf16.gmra.mrb[0].mxu0 %v7702
        %v7983 = vpop.f32.mrb[0].mxu0
        %v7984 = vadd.f32 %v7764, %v7983
        %v7985 = vpop.f32.mrb[0].mxu0
        %v7986 = vpop.f32.mrb[0].mxu0
        %v7987 = vadd.f32 %v7764, %v7986
        %v7988 = vpop.f32.mrb[0].mxu0
        %7989 = vmatprep.mubr.bf16.mxu0 %v7861
        %7990 = vmatmul.mubr.bf16.gmra.mrb[0].mxu0 %v7704
        %v7991 = vpop.f32.mrb[0].mxu0
        %v7992 = vadd.f32 %v7764, %v7991
        %v7993 = vpop.f32.mrb[0].mxu0
        %v7994 = vpop.f32.mrb[0].mxu0
        %v7995 = vadd.f32 %v7764, %v7994
        %v7996 = vpop.f32.mrb[0].mxu0
        %7997 = vmatprep.mubr.bf16.mxu0 %v7864
        %7998 = vmatmul.mubr.bf16.gmra.mrb[0].mxu0 %v7706
        %v7999 = vpop.f32.mrb[0].mxu0
        %v8000 = vadd.f32 %v7764, %v7999
        %v8001 = vpop.f32.mrb[0].mxu0
        %v8002 = vpop.f32.mrb[0].mxu0
        %v8003 = vadd.f32 %v7764, %v8002
        %v8004 = vpop.f32.mrb[0].mxu0
        %8005 = vmatprep.mubr.bf16.mxu0 %v7867
        %8006 = vmatmul.mubr.bf16.gmra.mrb[0].mxu0 %v7708
        %v8007 = vpop.f32.mrb[0].mxu0
        %v8008 = vadd.f32 %v7764, %v8007
        %v8009 = vpop.f32.mrb[0].mxu0
        %v8010 = vpop.f32.mrb[0].mxu0
        %v8011 = vadd.f32 %v7764, %v8010
        %v8012 = vpop.f32.mrb[0].mxu0
        %8013 = vmatprep.mubr.bf16.mxu0 %v7870
        %8014 = vmatmul.mubr.bf16.gmra.mrb[0].mxu0 %v7710
        %v8015 = vpop.f32.mrb[0].mxu0
        %v8016 = vadd.f32 %v7764, %v8015
        %v8017 = vpop.f32.mrb[0].mxu0
        %v8018 = vpop.f32.mrb[0].mxu0
        %v8019 = vadd.f32 %v7764, %v8018
        %v8020 = vpop.f32.mrb[0].mxu0
        %8021 = vmatprep.mubr.bf16.mxu0 %v7873
        %8022 = vmatmul.mubr.bf16.gmra.mrb[0].mxu0 %v7712
        %v8023 = vpop.f32.mrb[0].mxu0
        %v8024 = vadd.f32 %v7764, %v8023
        %v8025 = vpop.f32.mrb[0].mxu0
        %v8026 = vpop.f32.mrb[0].mxu0
        %v8027 = vadd.f32 %v7764, %v8026
        %v8028 = vpop.f32.mrb[0].mxu0
        %8029 = vmatprep.mubr.bf16.mxu0 %v7876
        %8030 = vmatmul.mubr.bf16.gmra.mrb[0].mxu0 %v7714
        %v8031 = vpop.f32.mrb[0].mxu0
        %v8032 = vadd.f32 %v7764, %v8031
        %v8033 = vpop.f32.mrb[0].mxu0
        %v8034 = vpop.f32.mrb[0].mxu0
        %v8035 = vadd.f32 %v7764, %v8034
        %v8036 = vpop.f32.mrb[0].mxu0
        %8037 = vmatprep.mubr.bf16.mxu0 %v7879
        %8038 = vmatmul.mubr.bf16.gmra.mrb[0].mxu0 %v7716
        %v8039 = vpop.f32.mrb[0].mxu0
        %v8040 = vadd.f32 %v7764, %v8039
        %v8041 = vpop.f32.mrb[0].mxu0
        %v8042 = vpop.f32.mrb[0].mxu0
        %v8043 = vadd.f32 %v7764, %v8042
        %v8044 = vpop.f32.mrb[0].mxu0
        %8045 = vmatprep.mubr.bf16.mxu0 %v7882
        %8046 = vmatmul.mubr.bf16.gmra.mrb[0].mxu0 %v7718
        %v8047 = vpop.f32.mrb[0].mxu0
        %v8048 = vadd.f32 %v7764, %v8047
        %v8049 = vpop.f32.mrb[0].mxu0
        %v8050 = vpop.f32.mrb[0].mxu0
        %v8051 = vadd.f32 %v7764, %v8050
        %v8052 = vpop.f32.mrb[0].mxu0
        %8053 = vmatprep.mubr.bf16.mxu0 %v7885
        %8054 = vmatmul.mubr.bf16.gmra.mrb[0].mxu0 %v7720
        %v8055 = vpop.f32.mrb[0].mxu0
        %v8056 = vadd.f32 %v7764, %v8055
        %v8057 = vpop.f32.mrb[0].mxu0
        %v8058 = vpop.f32.mrb[0].mxu0
        %v8059 = vadd.f32 %v7764, %v8058
        %v8060 = vpop.f32.mrb[0].mxu0
        %8061 = vmatprep.mubr.bf16.mxu0 %v7888
        %8062 = vmatmul.mubr.bf16.gmra.mrb[0].mxu0 %v7722
        %v8063 = vpop.f32.mrb[0].mxu0
        %v8064 = vadd.f32 %v7764, %v8063
        %v8065 = vpop.f32.mrb[0].mxu0
        %v8066 = vpop.f32.mrb[0].mxu0
        %v8067 = vadd.f32 %v7764, %v8066
        %v8068 = vpop.f32.mrb[0].mxu0
        %8069 = vmatprep.mubr.bf16.mxu0 %v7891
        %8070 = vmatmul.mubr.bf16.gmra.mrb[0].mxu0 %v7724
        %v8071 = vpop.f32.mrb[0].mxu0
        %v8072 = vadd.f32 %v7764, %v8071
        %v8073 = vpop.f32.mrb[0].mxu0
        %v8074 = vpop.f32.mrb[0].mxu0
        %v8075 = vadd.f32 %v7764, %v8074
        %v8076 = vpop.f32.mrb[0].mxu0
        %8077 = vmatprep.mubr.bf16.mxu0 %v7894
        %8078 = vmatmul.mubr.bf16.gmra.mrb[0].mxu0 %v7726
        %v8079 = vpop.f32.mrb[0].mxu0
        %v8080 = vadd.f32 %v7764, %v8079
        %v8081 = vpop.f32.mrb[0].mxu0
        %v8082 = vpop.f32.mrb[0].mxu0
        %v8083 = vadd.f32 %v7764, %v8082
        %v8084 = vpop.f32.mrb[0].mxu0
        %8085 = vmatprep.mubr.bf16.mxu0 %v7897
        %8086 = vmatmul.mubr.bf16.gmra.mrb[0].mxu0 %v7728
        %v8087 = vpop.f32.mrb[0].mxu0
        %v8088 = vadd.f32 %v7764, %v8087
        %v8089 = vpop.f32.mrb[0].mxu0
        %v8090 = vpop.f32.mrb[0].mxu0
        %v8091 = vadd.f32 %v7764, %v8090
        %v8092 = vpop.f32.mrb[0].mxu0
        %8093 = vmatprep.mubr.bf16.mxu0 %v7900
        %8094 = vmatmul.mubr.bf16.gmra.mrb[0].mxu0 %v7730
        %v8095 = vpop.f32.mrb[0].mxu0
        %v8096 = vadd.f32 %v7764, %v8095
        %v8097 = vpop.f32.mrb[0].mxu0
        %v8098 = vpop.f32.mrb[0].mxu0
        %v8099 = vadd.f32 %v7764, %v8098
        %v8100 = vpop.f32.mrb[0].mxu0
        %8101 = vmatprep.mubr.bf16.mxu0 %v7903
        %8102 = vmatmul.mubr.bf16.gmra.mrb[0].mxu0 %v7732
        %v8103 = vpop.f32.mrb[0].mxu0
        %v8104 = vadd.f32 %v7764, %v8103
        %v8105 = vpop.f32.mrb[0].mxu0
        %v8106 = vpop.f32.mrb[0].mxu0
        %v8107 = vadd.f32 %v7764, %v8106
        %v8108 = vpop.f32.mrb[0].mxu0
        %8109 = vdwg.mxu0
        %v8110 = vtanh.pop %v7944
        %v8111 = vtanh.pop %v7947
        %v8112 = vtanh.pop %v7952
        %v8113 = vtanh.pop %v7955
        %v8114 = vtanh.pop %v7960
        %v8115 = vtanh.pop %v7963
        %v8116 = vtanh.pop %v7968
        %v8117 = vtanh.pop %v7971
        %v8118 = vtanh.pop %v7976
        %v8119 = vtanh.pop %v7979
        %v8120 = vtanh.pop %v7984
        %v8121 = vtanh.pop %v7987
        %v8122 = vtanh.pop %v7992
        %v8123 = vtanh.pop %v7995
        %v8124 = vtanh.pop %v8000
        %v8125 = vtanh.pop %v8003
        %v8126 = vtanh.pop %v8008
        %v8127 = vtanh.pop %v8011
        %v8128 = vtanh.pop %v8016
        %v8129 = vtanh.pop %v8019
        %v8130 = vtanh.pop %v8024
        %v8131 = vtanh.pop %v8027
        %v8132 = vtanh.pop %v8032
        %v8133 = vtanh.pop %v8035
        %v8134 = vtanh.pop %v8040
        %v8135 = vtanh.pop %v8043
        %v8136 = vtanh.pop %v8048
        %v8137 = vtanh.pop %v8051
        %v8138 = vtanh.pop %v8056
        %v8139 = vtanh.pop %v8059
        %v8140 = vtanh.pop %v8064
        %v8141 = vtanh.pop %v8067
        %v8142 = vtanh.pop %v8072
        %v8143 = vtanh.pop %v8075
        %v8144 = vtanh.pop %v8080
        %v8145 = vtanh.pop %v8083
        %v8146 = vtanh.pop %v8088
        %v8147 = vtanh.pop %v8091
        %v8148 = vtanh.pop %v8096
        %v8149 = vtanh.pop %v8099
        %v8150 = vtanh.pop %v8104
        %v8151 = vtanh.pop %v8107
        %v8152 = vpack.c.bf16 %v8111, %v8110
        %v8153 = vpack.c.bf16 %v8113, %v8112
        %v8154 = vpack.c.bf16 %v8115, %v8114
        %v8155 = vpack.c.bf16 %v8117, %v8116
        %v8156 = vpack.c.bf16 %v8119, %v8118
        %v8157 = vpack.c.bf16 %v8121, %v8120
        %v8158 = vpack.c.bf16 %v8123, %v8122
        %v8159 = vpack.c.bf16 %v8125, %v8124
        %v8160 = vpack.c.bf16 %v8127, %v8126
        %v8161 = vpack.c.bf16 %v8129, %v8128
        %v8162 = vpack.c.bf16 %v8131, %v8130
        %v8163 = vpack.c.bf16 %v8133, %v8132
        %v8164 = vpack.c.bf16 %v8135, %v8134
        %v8165 = vpack.c.bf16 %v8137, %v8136
        %v8166 = vpack.c.bf16 %v8139, %v8138
        %v8167 = vpack.c.bf16 %v8141, %v8140
        %v8168 = vpack.c.bf16 %v8143, %v8142
        %v8169 = vpack.c.bf16 %v8145, %v8144
        %v8170 = vpack.c.bf16 %v8147, %v8146
        %v8171 = vpack.c.bf16 %v8149, %v8148
        %v8172 = vpack.c.bf16 %v8151, %v8150
        %v8173 = vld [vmem:[%s5] sm:$0xff]
        %v8174 = vld [vmem:[%s5 + $0x8] sm:$0xf]
        %v8175 = vld [vmem:[%s5 + $0xc] sm:$0xff]
        %v8176 = vld [vmem:[%s5 + $0x14] sm:$0xf]
        %v8177 = vld [vmem:[%s5 + $0x18] sm:$0xff]
        %v8178 = vld [vmem:[%s5 + $0x20] sm:$0xf]
        %v8179 = vld [vmem:[%s5 + $0x24] sm:$0xff]
        %v8180 = vld [vmem:[%s5 + $0x2c] sm:$0xf]
        %v8181 = vld [vmem:[%s5 + $0x30] sm:$0xff]
        %v8182 = vld [vmem:[%s5 + $0x38] sm:$0xf]
        %v8183 = vld [vmem:[%s5 + $0x3c] sm:$0xff]
        %v8184 = vld [vmem:[%s5 + $0x44] sm:$0xf]
        %v8185 = vld [vmem:[%s5 + $0x48] sm:$0x11]
        %v8186 = vld [vmem:[%s5 + $0x50] sm:$0x1]
        %v8201 = vunpack.c.l.b16 %v8173
        %v8202 = vunpack.c.h.b16 %v8173
        %v8203 = vunpack.c.l.b16 %v8174
        %v8204 = vunpack.c.l.b16 %v8175
        %v8205 = vunpack.c.h.b16 %v8175
        %v8206 = vunpack.c.l.b16 %v8176
        %v8207 = vunpack.c.l.b16 %v8177
        %v8208 = vunpack.c.h.b16 %v8177
        %v8209 = vunpack.c.l.b16 %v8178
        %v8210 = vunpack.c.l.b16 %v8179
        %v8211 = vunpack.c.h.b16 %v8179
        %v8212 = vunpack.c.l.b16 %v8180
        %v8213 = vunpack.c.l.b16 %v8181
        %v8214 = vunpack.c.h.b16 %v8181
        %v8215 = vunpack.c.l.b16 %v8182
        %v8216 = vunpack.c.l.b16 %v8183
        %v8217 = vunpack.c.h.b16 %v8183
        %v8218 = vunpack.c.l.b16 %v8184
        %v8219 = vunpack.c.l.b16 %v8185
        %v8220 = vunpack.c.h.b16 %v8185
        %v8221 = vunpack.c.l.b16 %v8186
        %v8222 = vpack.c.b16 %v8204, %v8201
        %v8223 = vpack.c.b16 %v8205, %v8202
        %v8224 = vpack.c.b16 %v8206, %v8203
        %v8225 = vpack.c.b16 %v8210, %v8207
        %v8226 = vpack.c.b16 %v8211, %v8208
        %v8227 = vpack.c.b16 %v8212, %v8209
        %v8228 = vpack.c.b16 %v8216, %v8213
        %v8229 = vpack.c.b16 %v8217, %v8214
        %v8230 = vpack.c.b16 %v8218, %v8215
        %v8231 = vpack.c.b16 %v8219, %v8219
        %v8232 = vpack.c.b16 %v8220, %v8220
        %v8233 = vpack.c.b16 %v8221, %v8221
        %vm8242 = vcmask 621568
        %v8244 = vsel %vm8242, %v8224, 0
        %v8247 = vsel %vm8242, %v8227, 0
        %v8250 = vsel %vm8242, %v8230, 0
        %v8253 = vsel %vm8242, %v8233, 0
        %vm8255 = vcmask 1045504
        %v8257 = vsel %vm8255, %v8172, 0
        %8259 = vmatprep.subr.bf16.mxu0 0
        %8260 = vmatpush1.bf16.msra.mxu0 %v8152
        %8261 = vmatprep.subr.bf16.mxu0 0
        %8262 = vmatpush1.bf16.msra.mxu0 %v8153
        %8263 = vmatprep.subr.bf16.mxu0 0
        %8264 = vmatpush1.bf16.msra.mxu0 %v8154
        %8265 = vmatprep.subr.bf16.mxu0 0
        %8266 = vmatpush1.bf16.msra.mxu0 %v8155
        %8267 = vmatprep.subr.bf16.mxu0 0
        %8268 = vmatpush1.bf16.msra.mxu0 %v8156
        %8269 = vmatprep.subr.bf16.mxu0 0
        %8270 = vmatpush1.bf16.msra.mxu0 %v8157
        %8271 = vmatprep.subr.bf16.mxu0 0
        %8272 = vmatpush1.bf16.msra.mxu0 %v8158
        %8273 = vmatprep.subr.bf16.mxu0 0
        %8274 = vmatpush1.bf16.msra.mxu0 %v8159
        %8275 = vmatprep.subr.bf16.mxu0 0
        %8276 = vmatpush1.bf16.msra.mxu0 %v8160
        %8277 = vmatprep.subr.bf16.mxu0 0
        %8278 = vmatpush1.bf16.msra.mxu0 %v8161
        %8279 = vmatprep.subr.bf16.mxu0 0
        %8280 = vmatpush1.bf16.msra.mxu0 %v8162
        %8281 = vmatprep.subr.bf16.mxu0 0
        %8282 = vmatpush1.bf16.msra.mxu0 %v8163
        %8283 = vmatprep.subr.bf16.mxu0 0
        %8284 = vmatpush1.bf16.msra.mxu0 %v8164
        %8285 = vmatprep.subr.bf16.mxu0 0
        %8286 = vmatpush1.bf16.msra.mxu0 %v8165
        %8287 = vmatprep.subr.bf16.mxu0 0
        %8288 = vmatpush1.bf16.msra.mxu0 %v8166
        %8289 = vmatprep.subr.bf16.mxu0 0
        %8290 = vmatpush1.bf16.msra.mxu0 %v8167
        %8291 = vmatprep.mubr.bf16.mxu0 %v8223
        %8292 = vmatmul.mubr.bf16.gmra.mrb[0].mxu0 %v8222
        %v8293 = vpop.f32.mrb[0].mxu0
        %v8294 = vadd.f32 0.0, %v8293
        %v8295 = vpop.f32.mrb[0].mxu0
        %v8296 = vpop.f32.mrb[0].mxu0
        %v8297 = vadd.f32 0.0, %v8296
        %v8298 = vpop.f32.mrb[0].mxu0
        %8299 = vmatprep.mubr.bf16.mxu0 %v8226
        %8300 = vmatmul.mubr.bf16.gmra.mrb[0].mxu0 %v8225
        %v8301 = vpop.f32.mrb[0].mxu0
        %v8302 = vadd.f32 0.0, %v8301
        %v8303 = vpop.f32.mrb[0].mxu0
        %v8304 = vpop.f32.mrb[0].mxu0
        %v8305 = vadd.f32 0.0, %v8304
        %v8306 = vpop.f32.mrb[0].mxu0
        %8307 = vmatprep.mubr.bf16.mxu0 %v8229
        %8308 = vmatmul.mubr.bf16.gmra.mrb[0].mxu0 %v8228
        %v8309 = vpop.f32.mrb[0].mxu0
        %v8310 = vadd.f32 0.0, %v8309
        %v8311 = vpop.f32.mrb[0].mxu0
        %v8312 = vpop.f32.mrb[0].mxu0
        %v8313 = vadd.f32 0.0, %v8312
        %v8314 = vpop.f32.mrb[0].mxu0
        %8315 = vmatprep.mubr.bf16.mxu0 %v8232
        %8316 = vmatmul.mubr.bf16.gmra.mrb[0].mxu0 %v8231
        %v8317 = vpop.f32.mrb[0].mxu0
        %v8318 = vadd.f32 0.0, %v8317
        %v8319 = vpop.f32.mrb[0].mxu0
        %v8320 = vpop.f32.mrb[0].mxu0
        %v8321 = vpop.f32.mrb[0].mxu0
        %8322 = vdwg.mxu0
        %8323 = vmatprep.subr.bf16.mxu0 0
        %8324 = vmatpush1.bf16.msra.mxu0 %v8168
        %8325 = vmatprep.subr.bf16.mxu0 0
        %8326 = vmatpush1.bf16.msra.mxu0 %v8169
        %8327 = vmatprep.subr.bf16.mxu0 0
        %8328 = vmatpush1.bf16.msra.mxu0 %v8170
        %8329 = vmatprep.subr.bf16.mxu0 0
        %8330 = vmatpush1.bf16.msra.mxu0 %v8171
        %8331 = vmatprep.subr.bf16.mxu0 0
        %8332 = vmatpush1.bf16.msra.mxu0 %v8257
        %8333 = vmatprep.subr.bf16.mxu0 0
        %8334 = vmatpush1.bf16.msra.mxu0 0
        %8335 = vmatprep.subr.bf16.mxu0 0
        %8336 = vmatpush1.bf16.msra.mxu0 0
        %8337 = vmatprep.subr.bf16.mxu0 0
        %8338 = vmatpush1.bf16.msra.mxu0 0
        %8339 = vmatprep.subr.bf16.mxu0 0
        %8340 = vmatpush1.bf16.msra.mxu0 0
        %8341 = vmatprep.subr.bf16.mxu0 0
        %8342 = vmatpush1.bf16.msra.mxu0 0
        %8343 = vmatprep.subr.bf16.mxu0 0
        %8344 = vmatpush1.bf16.msra.mxu0 0
        %8345 = vmatprep.subr.bf16.mxu0 0
        %8346 = vmatpush1.bf16.msra.mxu0 0
        %8347 = vmatprep.subr.bf16.mxu0 0
        %8348 = vmatpush1.bf16.msra.mxu0 0
        %8349 = vmatprep.subr.bf16.mxu0 0
        %8350 = vmatpush1.bf16.msra.mxu0 0
        %8351 = vmatprep.subr.bf16.mxu0 0
        %8352 = vmatpush1.bf16.msra.mxu0 0
        %8353 = vmatprep.subr.bf16.mxu0 0
        %8354 = vmatpush1.bf16.msra.mxu0 0
        %8355 = vmatprep.mubr.bf16.mxu0 0
        %8356 = vmatmul.mubr.bf16.gmra.mrb[0].mxu0 %v8244
        %v8357 = vpop.f32.mrb[0].mxu0
        %v8358 = vadd.f32 %v8294, %v8357
        %v8359 = vpop.f32.mrb[0].mxu0
        %v8360 = vpop.f32.mrb[0].mxu0
        %v8361 = vadd.f32 %v8297, %v8360
        %v8362 = vpop.f32.mrb[0].mxu0
        %8363 = vmatprep.mubr.bf16.mxu0 0
        %8364 = vmatmul.mubr.bf16.gmra.mrb[0].mxu0 %v8247
        %v8365 = vpop.f32.mrb[0].mxu0
        %v8366 = vadd.f32 %v8302, %v8365
        %v8367 = vpop.f32.mrb[0].mxu0
        %v8368 = vpop.f32.mrb[0].mxu0
        %v8369 = vadd.f32 %v8305, %v8368
        %v8370 = vpop.f32.mrb[0].mxu0
        %8371 = vmatprep.mubr.bf16.mxu0 0
        %8372 = vmatmul.mubr.bf16.gmra.mrb[0].mxu0 %v8250
        %v8373 = vpop.f32.mrb[0].mxu0
        %v8374 = vadd.f32 %v8310, %v8373
        %v8375 = vpop.f32.mrb[0].mxu0
        %v8376 = vpop.f32.mrb[0].mxu0
        %v8377 = vadd.f32 %v8313, %v8376
        %v8378 = vpop.f32.mrb[0].mxu0
        %8379 = vmatprep.mubr.bf16.mxu0 0
        %8380 = vmatmul.mubr.bf16.gmra.mrb[0].mxu0 %v8253
        %v8381 = vpop.f32.mrb[0].mxu0
        %v8382 = vadd.f32 %v8318, %v8381
        %v8383 = vpop.f32.mrb[0].mxu0
        %v8384 = vpop.f32.mrb[0].mxu0
        %v8385 = vpop.f32.mrb[0].mxu0
        %8386 = vdwg.mxu0
        %vm8387 = vcmask 123904
        %8388 = vst.msk [vmem:[#allocation4] sm:$0x3] %vm8387, %v8358
        %v8391 = vunpack.c.l.s4 1983009808
        %v8392 = vunpack.c.0.s8 %v8391
        %v8393 = vlaneseq
        %v8394 = vshrl.u32 %v8393, 7
        %v8395 = vsub.s32 %v8392, %v8394
        %v8396 = vrot.slane %v8358, %v8395
        %v8397 = vcombine.high %v8396, %v8396
        %8398 = vrot.lane.b32.xlu0 %v8397, 16
        %v8399 = vpop.permute.xlu0 %8398
        %vm8401 = vcmask 255104
        %8402 = vst.msk [vmem:[#allocation4] sm:$0x3] %vm8401, %v8399
        %v8403 = vcombine.high %v8358, %v8358
        %v8405 = vunpack.c.l.s4 1983009808
        %v8406 = vunpack.c.0.s8 %v8405
        %v8407 = vlaneseq
        %v8408 = vshrl.u32 %v8407, 7
        %v8409 = vsub.s32 %v8406, %v8408
        %v8410 = vrot.slane %v8403, %v8409
        %8411 = vrot.lane.b32.xlu0 %v8410, 32
        %v8412 = vpop.permute.xlu0 %8411
        %vm8414 = vcmask 386304
        %8415 = vst.msk [vmem:[#allocation4] sm:$0x3] %vm8414, %v8412
        %v8416 = vcombine.high %v8410, %v8410
        %8417 = vrot.lane.b32.xlu0 %v8416, 48
        %v8418 = vpop.permute.xlu0 %8417
        %vm8420 = vcmask 517504
        %8421 = vst.msk [vmem:[#allocation4] sm:$0x3] %vm8420, %v8418
        %v8424 = vunpack.c.l.s4 1983009808
        %v8425 = vunpack.c.0.s8 %v8424
        %v8426 = vlaneseq
        %v8427 = vshrl.u32 %v8426, 7
        %v8428 = vsub.s32 %v8425, %v8427
        %v8429 = vrot.slane %v8361, %v8428
        %8430 = vrot.lane.b32.xlu0 %v8429, 64
        %v8431 = vpop.permute.xlu0 %8430
        %vm8433 = vcmask 648704
        %8434 = vst.msk [vmem:[#allocation4] sm:$0x3] %vm8433, %v8431
        %v8435 = vcombine.high %v8429, %v8429
        %8436 = vrot.lane.b32.xlu0 %v8435, 80
        %v8437 = vpop.permute.xlu0 %8436
        %vm8439 = vcmask 779904
        %8440 = vst.msk [vmem:[#allocation4] sm:$0x3] %vm8439, %v8437
        %v8441 = vcombine.high %v8361, %v8361
        %v8443 = vunpack.c.l.s4 1983009808
        %v8444 = vunpack.c.0.s8 %v8443
        %v8445 = vlaneseq
        %v8446 = vshrl.u32 %v8445, 7
        %v8447 = vsub.s32 %v8444, %v8446
        %v8448 = vrot.slane %v8441, %v8447
        %8449 = vrot.lane.b32.xlu0 %v8448, 96
        %v8450 = vpop.permute.xlu0 %8449
        %vm8452 = vcmask 911104
        %8453 = vst.msk [vmem:[#allocation4] sm:$0x3] %vm8452, %v8450
        %v8454 = vcombine.high %v8448, %v8448
        %8455 = vrot.lane.b32.xlu0 %v8454, 112
        %v8456 = vpop.permute.xlu0 %8455
        %vm8458 = vcmask 1042304
        %8459 = vst.msk [vmem:[#allocation4] sm:$0x3] %vm8458, %v8456
        %8460 = vst.msk [vmem:[#allocation4 + $0x2] sm:$0x3] %vm8387, %v8366
        %v8463 = vunpack.c.l.s4 1983009808
        %v8464 = vunpack.c.0.s8 %v8463
        %v8465 = vlaneseq
        %v8466 = vshrl.u32 %v8465, 7
        %v8467 = vsub.s32 %v8464, %v8466
        %v8468 = vrot.slane %v8366, %v8467
        %v8469 = vcombine.high %v8468, %v8468
        %8470 = vrot.lane.b32.xlu0 %v8469, 16
        %v8471 = vpop.permute.xlu0 %8470
        %8473 = vst.msk [vmem:[#allocation4 + $0x2] sm:$0x3] %vm8401, %v8471
        %v8474 = vcombine.high %v8366, %v8366
        %v8476 = vunpack.c.l.s4 1983009808
        %v8477 = vunpack.c.0.s8 %v8476
        %v8478 = vlaneseq
        %v8479 = vshrl.u32 %v8478, 7
        %v8480 = vsub.s32 %v8477, %v8479
        %v8481 = vrot.slane %v8474, %v8480
        %8482 = vrot.lane.b32.xlu0 %v8481, 32
        %v8483 = vpop.permute.xlu0 %8482
        %8485 = vst.msk [vmem:[#allocation4 + $0x2] sm:$0x3] %vm8414, %v8483
        %v8486 = vcombine.high %v8481, %v8481
        %8487 = vrot.lane.b32.xlu0 %v8486, 48
        %v8488 = vpop.permute.xlu0 %8487
        %8490 = vst.msk [vmem:[#allocation4 + $0x2] sm:$0x3] %vm8420, %v8488
        %v8493 = vunpack.c.l.s4 1983009808
        %v8494 = vunpack.c.0.s8 %v8493
        %v8495 = vlaneseq
        %v8496 = vshrl.u32 %v8495, 7
        %v8497 = vsub.s32 %v8494, %v8496
        %v8498 = vrot.slane %v8369, %v8497
        %8499 = vrot.lane.b32.xlu0 %v8498, 64
        %v8500 = vpop.permute.xlu0 %8499
        %8502 = vst.msk [vmem:[#allocation4 + $0x2] sm:$0x3] %vm8433, %v8500
        %v8503 = vcombine.high %v8498, %v8498
        %8504 = vrot.lane.b32.xlu0 %v8503, 80
        %v8505 = vpop.permute.xlu0 %8504
        %8507 = vst.msk [vmem:[#allocation4 + $0x2] sm:$0x3] %vm8439, %v8505
        %v8508 = vcombine.high %v8369, %v8369
        %v8510 = vunpack.c.l.s4 1983009808
        %v8511 = vunpack.c.0.s8 %v8510
        %v8512 = vlaneseq
        %v8513 = vshrl.u32 %v8512, 7
        %v8514 = vsub.s32 %v8511, %v8513
        %v8515 = vrot.slane %v8508, %v8514
        %8516 = vrot.lane.b32.xlu0 %v8515, 96
        %v8517 = vpop.permute.xlu0 %8516
        %8519 = vst.msk [vmem:[#allocation4 + $0x2] sm:$0x3] %vm8452, %v8517
        %v8520 = vcombine.high %v8515, %v8515
        %8521 = vrot.lane.b32.xlu0 %v8520, 112
        %v8522 = vpop.permute.xlu0 %8521
        %8524 = vst.msk [vmem:[#allocation4 + $0x2] sm:$0x3] %vm8458, %v8522
        %8525 = vst.msk [vmem:[#allocation4 + $0x4] sm:$0x3] %vm8387, %v8374
        %v8528 = vunpack.c.l.s4 1983009808
        %v8529 = vunpack.c.0.s8 %v8528
        %v8530 = vlaneseq
        %v8531 = vshrl.u32 %v8530, 7
        %v8532 = vsub.s32 %v8529, %v8531
        %v8533 = vrot.slane %v8374, %v8532
        %v8534 = vcombine.high %v8533, %v8533
        %8535 = vrot.lane.b32.xlu0 %v8534, 16
        %v8536 = vpop.permute.xlu0 %8535
        %8538 = vst.msk [vmem:[#allocation4 + $0x4] sm:$0x3] %vm8401, %v8536
        %v8539 = vcombine.high %v8374, %v8374
        %v8541 = vunpack.c.l.s4 1983009808
        %v8542 = vunpack.c.0.s8 %v8541
        %v8543 = vlaneseq
        %v8544 = vshrl.u32 %v8543, 7
        %v8545 = vsub.s32 %v8542, %v8544
        %v8546 = vrot.slane %v8539, %v8545
        %8547 = vrot.lane.b32.xlu0 %v8546, 32
        %v8548 = vpop.permute.xlu0 %8547
        %8550 = vst.msk [vmem:[#allocation4 + $0x4] sm:$0x3] %vm8414, %v8548
        %v8551 = vcombine.high %v8546, %v8546
        %8552 = vrot.lane.b32.xlu0 %v8551, 48
        %v8553 = vpop.permute.xlu0 %8552
        %8555 = vst.msk [vmem:[#allocation4 + $0x4] sm:$0x3] %vm8420, %v8553
        %v8558 = vunpack.c.l.s4 1983009808
        %v8559 = vunpack.c.0.s8 %v8558
        %v8560 = vlaneseq
        %v8561 = vshrl.u32 %v8560, 7
        %v8562 = vsub.s32 %v8559, %v8561
        %v8563 = vrot.slane %v8377, %v8562
        %8564 = vrot.lane.b32.xlu0 %v8563, 64
        %v8565 = vpop.permute.xlu0 %8564
        %8567 = vst.msk [vmem:[#allocation4 + $0x4] sm:$0x3] %vm8433, %v8565
        %v8568 = vcombine.high %v8563, %v8563
        %8569 = vrot.lane.b32.xlu0 %v8568, 80
        %v8570 = vpop.permute.xlu0 %8569
        %8572 = vst.msk [vmem:[#allocation4 + $0x4] sm:$0x3] %vm8439, %v8570
        %v8573 = vcombine.high %v8377, %v8377
        %v8575 = vunpack.c.l.s4 1983009808
        %v8576 = vunpack.c.0.s8 %v8575
        %v8577 = vlaneseq
        %v8578 = vshrl.u32 %v8577, 7
        %v8579 = vsub.s32 %v8576, %v8578
        %v8580 = vrot.slane %v8573, %v8579
        %8581 = vrot.lane.b32.xlu0 %v8580, 96
        %v8582 = vpop.permute.xlu0 %8581
        %8584 = vst.msk [vmem:[#allocation4 + $0x4] sm:$0x3] %vm8452, %v8582
        %v8585 = vcombine.high %v8580, %v8580
        %8586 = vrot.lane.b32.xlu0 %v8585, 112
        %v8587 = vpop.permute.xlu0 %8586
        %8589 = vst.msk [vmem:[#allocation4 + $0x4] sm:$0x3] %vm8458, %v8587
        %8590 = vst.msk [vmem:[#allocation4 + $0x6] sm:$0x3] %vm8387, %v8382
        %v8591 = vld [vmem:[#allocation4] sm:$0xff]
        %v8593 = vcombine.high %v8591, %v8591
        %v8595 = vunpack.c.l.s4 1983009808
        %v8596 = vunpack.c.0.s8 %v8595
        %v8597 = vlaneseq
        %v8598 = vshrl.u32 %v8597, 7
        %v8599 = vsub.s32 %v8596, %v8598
        %v8600 = vrot.slane %v8591, %v8599
        %v8602 = vunpack.c.l.s4 1983009808
        %v8603 = vunpack.c.0.s8 %v8602
        %v8604 = vlaneseq
        %v8605 = vshrl.u32 %v8604, 7
        %v8606 = vsub.s32 %v8603, %v8605
        %v8607 = vrot.slane %v8593, %v8606
        %v8608 = vcombine.high %v8600, %v8600
        %v8609 = vcombine.high %v8607, %v8607
        %v8614 = vpack.c.bf16 %v8600, %v8600
        %v8615 = vpack.c.bf16 %v8608, %v8608
        %v8616 = vpack.c.bf16 %v8607, %v8607
        %v8617 = vpack.c.bf16 %v8609, %v8609
        %v8618 = vld [vmem:[%s6] sm:$0xf]
        %v8619 = vld [vmem:[%s6 + $0x4] sm:$0xf]
        %v8620 = vld [vmem:[%s6 + $0x8] sm:$0xf]
        %v8621 = vld [vmem:[%s6 + $0xc] sm:$0xf]
        %v8622 = vld [vmem:[%s6 + $0x10] sm:$0xf]
        %v8623 = vld [vmem:[%s6 + $0x14] sm:$0xf]
        %v8624 = vld [vmem:[%s6 + $0x18] sm:$0xf]
        %v8625 = vld [vmem:[%s6 + $0x1c] sm:$0xf]
        %v8626 = vld [vmem:[%s6 + $0x20] sm:$0xf]
        %v8627 = vld [vmem:[%s6 + $0x24] sm:$0xf]
        %v8628 = vld [vmem:[%s6 + $0x28] sm:$0xf]
        %v8629 = vld [vmem:[%s6 + $0x2c] sm:$0xf]
        %v8630 = vld [vmem:[%s6 + $0x30] sm:$0xf]
        %v8631 = vld [vmem:[%s6 + $0x34] sm:$0xf]
        %v8632 = vld [vmem:[%s6 + $0x38] sm:$0xf]
        %v8633 = vld [vmem:[%s6 + $0x3c] sm:$0xf]
        %v8634 = vld [vmem:[%s6 + $0x40] sm:$0xf]
        %v8635 = vld [vmem:[%s6 + $0x44] sm:$0xf]
        %v8636 = vld [vmem:[%s6 + $0x48] sm:$0xf]
        %v8637 = vld [vmem:[%s6 + $0x4c] sm:$0xf]
        %v8638 = vld [vmem:[%s6 + $0x50] sm:$0xf]
        %v8639 = vld [vmem:[%s6 + $0x54] sm:$0xf]
        %v8640 = vld [vmem:[%s6 + $0x58] sm:$0xf]
        %v8641 = vld [vmem:[%s6 + $0x5c] sm:$0xf]
        %v8642 = vld [vmem:[%s6 + $0x60] sm:$0xf]
        %v8643 = vld [vmem:[%s6 + $0x64] sm:$0xf]
        %v8644 = vld [vmem:[%s6 + $0x68] sm:$0xf]
        %v8645 = vld [vmem:[%s6 + $0x6c] sm:$0xf]
        %v8646 = vld [vmem:[%s6 + $0x70] sm:$0xf]
        %v8647 = vld [vmem:[%s6 + $0x74] sm:$0xf]
        %v8648 = vld [vmem:[%s6 + $0x78] sm:$0xf]
        %v8649 = vld [vmem:[%s6 + $0x7c] sm:$0xf]
        %v8650 = vld [vmem:[%s6 + $0x80] sm:$0xf]
        %v8651 = vld [vmem:[%s6 + $0x84] sm:$0xf]
        %v8652 = vld [vmem:[%s6 + $0x88] sm:$0xf]
        %v8653 = vld [vmem:[%s6 + $0x8c] sm:$0xf]
        %v8654 = vld [vmem:[%s6 + $0x90] sm:$0xf]
        %v8655 = vld [vmem:[%s6 + $0x94] sm:$0xf]
        %v8656 = vld [vmem:[%s6 + $0x98] sm:$0xf]
        %v8657 = vld [vmem:[%s6 + $0x9c] sm:$0xf]
        %v8658 = vld [vmem:[%s6 + $0xa0] sm:$0xf]
        %v8659 = vld [vmem:[%s6 + $0xa4] sm:$0xf]
        %v8660 = vld [vmem:[%s6 + $0xa8] sm:$0xf]
        %v8661 = vld [vmem:[%s6 + $0xac] sm:$0xf]
        %v8662 = vld [vmem:[%s6 + $0xb0] sm:$0xf]
        %v8663 = vld [vmem:[%s6 + $0xb4] sm:$0xf]
        %v8664 = vld [vmem:[%s6 + $0xb8] sm:$0xf]
        %v8665 = vld [vmem:[%s6 + $0xbc] sm:$0xf]
        %v8666 = vld [vmem:[%s6 + $0xc0] sm:$0xf]
        %v8667 = vld [vmem:[%s6 + $0xc4] sm:$0xf]
        %v8668 = vld [vmem:[%s7] sm:$0x1]
        %v8670 = vlaneseq
        %v8671 = vshrl.u32 %v8670, 7
        %v8672 = vsub.s32 0, %v8671
        %v8673 = vrot.slane %v8668, %v8672
        %v8725 = vunpack.c.l.b16 %v8618
        %v8726 = vunpack.c.l.b16 %v8619
        %v8727 = vunpack.c.l.b16 %v8620
        %v8728 = vunpack.c.l.b16 %v8621
        %v8729 = vunpack.c.l.b16 %v8622
        %v8730 = vunpack.c.l.b16 %v8623
        %v8731 = vunpack.c.l.b16 %v8624
        %v8732 = vunpack.c.l.b16 %v8625
        %v8733 = vunpack.c.l.b16 %v8626
        %v8734 = vunpack.c.l.b16 %v8627
        %v8735 = vunpack.c.l.b16 %v8628
        %v8736 = vunpack.c.l.b16 %v8629
        %v8737 = vunpack.c.l.b16 %v8630
        %v8738 = vunpack.c.l.b16 %v8631
        %v8739 = vunpack.c.l.b16 %v8632
        %v8740 = vunpack.c.l.b16 %v8633
        %v8741 = vunpack.c.l.b16 %v8634
        %v8742 = vunpack.c.l.b16 %v8635
        %v8743 = vunpack.c.l.b16 %v8636
        %v8744 = vunpack.c.l.b16 %v8637
        %v8745 = vunpack.c.l.b16 %v8638
        %v8746 = vunpack.c.l.b16 %v8639
        %v8747 = vunpack.c.l.b16 %v8640
        %v8748 = vunpack.c.l.b16 %v8641
        %v8749 = vunpack.c.l.b16 %v8642
        %v8750 = vunpack.c.l.b16 %v8643
        %v8751 = vunpack.c.l.b16 %v8644
        %v8752 = vunpack.c.l.b16 %v8645
        %v8753 = vunpack.c.l.b16 %v8646
        %v8754 = vunpack.c.l.b16 %v8647
        %v8755 = vunpack.c.l.b16 %v8648
        %v8756 = vunpack.c.l.b16 %v8649
        %v8757 = vunpack.c.l.b16 %v8650
        %v8758 = vunpack.c.l.b16 %v8651
        %v8759 = vunpack.c.l.b16 %v8652
        %v8760 = vunpack.c.l.b16 %v8653
        %v8761 = vunpack.c.l.b16 %v8654
        %v8762 = vunpack.c.l.b16 %v8655
        %v8763 = vunpack.c.l.b16 %v8656
        %v8764 = vunpack.c.l.b16 %v8657
        %v8765 = vunpack.c.l.b16 %v8658
        %v8766 = vunpack.c.l.b16 %v8659
        %v8767 = vunpack.c.l.b16 %v8660
        %v8768 = vunpack.c.l.b16 %v8661
        %v8769 = vunpack.c.l.b16 %v8662
        %v8770 = vunpack.c.l.b16 %v8663
        %v8771 = vunpack.c.l.b16 %v8664
        %v8772 = vunpack.c.l.b16 %v8665
        %v8773 = vunpack.c.l.b16 %v8666
        %v8774 = vunpack.c.l.b16 %v8667
        %v8775 = vpack.c.b16 %v8726, %v8725
        %v8776 = vpack.c.b16 %v8728, %v8727
        %v8777 = vpack.c.b16 %v8730, %v8729
        %v8778 = vpack.c.b16 %v8732, %v8731
        %v8779 = vpack.c.b16 %v8734, %v8733
        %v8780 = vpack.c.b16 %v8736, %v8735
        %v8781 = vpack.c.b16 %v8738, %v8737
        %v8782 = vpack.c.b16 %v8740, %v8739
        %v8783 = vpack.c.b16 %v8742, %v8741
        %v8784 = vpack.c.b16 %v8744, %v8743
        %v8785 = vpack.c.b16 %v8746, %v8745
        %v8786 = vpack.c.b16 %v8748, %v8747
        %v8787 = vpack.c.b16 %v8750, %v8749
        %v8788 = vpack.c.b16 %v8752, %v8751
        %v8789 = vpack.c.b16 %v8754, %v8753
        %v8790 = vpack.c.b16 %v8756, %v8755
        %v8791 = vpack.c.b16 %v8758, %v8757
        %v8792 = vpack.c.b16 %v8760, %v8759
        %v8793 = vpack.c.b16 %v8762, %v8761
        %v8794 = vpack.c.b16 %v8764, %v8763
        %v8795 = vpack.c.b16 %v8766, %v8765
        %v8796 = vpack.c.b16 %v8768, %v8767
        %v8797 = vpack.c.b16 %v8770, %v8769
        %v8798 = vpack.c.b16 %v8772, %v8771
        %v8799 = vpack.c.b16 %v8774, %v8773
        %vm8825 = vcmask 130048
        %v8827 = vsel %vm8825, %v8617, 0
        %8829 = vmatprep.subr.bf16.mxu0 0
        %8830 = vmatpush1.bf16.msra.mxu0 %v8775
        %8831 = vmatprep.subr.bf16.mxu0 0
        %8832 = vmatpush1.bf16.msra.mxu0 %v8776
        %8833 = vmatprep.subr.bf16.mxu0 0
        %8834 = vmatpush1.bf16.msra.mxu0 %v8777
        %8835 = vmatprep.subr.bf16.mxu0 0
        %8836 = vmatpush1.bf16.msra.mxu0 %v8778
        %8837 = vmatprep.subr.bf16.mxu0 0
        %8838 = vmatpush1.bf16.msra.mxu0 %v8779
        %8839 = vmatprep.subr.bf16.mxu0 0
        %8840 = vmatpush1.bf16.msra.mxu0 %v8780
        %8841 = vmatprep.subr.bf16.mxu0 0
        %8842 = vmatpush1.bf16.msra.mxu0 %v8781
        %8843 = vmatprep.subr.bf16.mxu0 0
        %8844 = vmatpush1.bf16.msra.mxu0 %v8782
        %8845 = vmatprep.subr.bf16.mxu0 0
        %8846 = vmatpush1.bf16.msra.mxu0 %v8783
        %8847 = vmatprep.subr.bf16.mxu0 0
        %8848 = vmatpush1.bf16.msra.mxu0 %v8784
        %8849 = vmatprep.subr.bf16.mxu0 0
        %8850 = vmatpush1.bf16.msra.mxu0 %v8785
        %8851 = vmatprep.subr.bf16.mxu0 0
        %8852 = vmatpush1.bf16.msra.mxu0 %v8786
        %8853 = vmatprep.subr.bf16.mxu0 0
        %8854 = vmatpush1.bf16.msra.mxu0 %v8787
        %8855 = vmatprep.subr.bf16.mxu0 0
        %8856 = vmatpush1.bf16.msra.mxu0 %v8788
        %8857 = vmatprep.subr.bf16.mxu0 0
        %8858 = vmatpush1.bf16.msra.mxu0 %v8789
        %8859 = vmatprep.subr.bf16.mxu0 0
        %8860 = vmatpush1.bf16.msra.mxu0 %v8790
        %8861 = vmatprep.mubr.bf16.mxu0 %v8615
        %8862 = vmatmul.mubr.bf16.gmra.mrb[0].mxu0 %v8614
        %v8863 = vpop.f32.mrb[0].mxu0
        %v8864 = vadd.f32 %v8673, %v8863
        %v8865 = vpop.f32.mrb[0].mxu0
        %v8866 = vpop.f32.mrb[0].mxu0
        %v8867 = vpop.f32.mrb[0].mxu0
        %8868 = vdwg.mxu0
        %8869 = vmatprep.subr.bf16.mxu0 0
        %8870 = vmatpush1.bf16.msra.mxu0 %v8791
        %8871 = vmatprep.subr.bf16.mxu0 0
        %8872 = vmatpush1.bf16.msra.mxu0 %v8792
        %8873 = vmatprep.subr.bf16.mxu0 0
        %8874 = vmatpush1.bf16.msra.mxu0 %v8793
        %8875 = vmatprep.subr.bf16.mxu0 0
        %8876 = vmatpush1.bf16.msra.mxu0 %v8794
        %8877 = vmatprep.subr.bf16.mxu0 0
        %8878 = vmatpush1.bf16.msra.mxu0 %v8795
        %8879 = vmatprep.subr.bf16.mxu0 0
        %8880 = vmatpush1.bf16.msra.mxu0 %v8796
        %8881 = vmatprep.subr.bf16.mxu0 0
        %8882 = vmatpush1.bf16.msra.mxu0 %v8797
        %8883 = vmatprep.subr.bf16.mxu0 0
        %8884 = vmatpush1.bf16.msra.mxu0 %v8798
        %8885 = vmatprep.subr.bf16.mxu0 0
        %8886 = vmatpush1.bf16.msra.mxu0 %v8799
        %8887 = vmatprep.subr.bf16.mxu0 0
        %8888 = vmatpush1.bf16.msra.mxu0 0
        %8889 = vmatprep.subr.bf16.mxu0 0
        %8890 = vmatpush1.bf16.msra.mxu0 0
        %8891 = vmatprep.subr.bf16.mxu0 0
        %8892 = vmatpush1.bf16.msra.mxu0 0
        %8893 = vmatprep.subr.bf16.mxu0 0
        %8894 = vmatpush1.bf16.msra.mxu0 0
        %8895 = vmatprep.subr.bf16.mxu0 0
        %8896 = vmatpush1.bf16.msra.mxu0 0
        %8897 = vmatprep.subr.bf16.mxu0 0
        %8898 = vmatpush1.bf16.msra.mxu0 0
        %8899 = vmatprep.subr.bf16.mxu0 0
        %8900 = vmatpush1.bf16.msra.mxu0 0
        %8901 = vmatprep.mubr.bf16.mxu0 %v8827
        %8902 = vmatmul.mubr.bf16.gmra.mrb[0].mxu0 %v8616
        %v8903 = vpop.f32.mrb[0].mxu0
        %v8904 = vadd.f32 %v8864, %v8903
        %v8905 = vpop.f32.mrb[0].mxu0
        %v8906 = vpop.f32.mrb[0].mxu0
        %v8907 = vpop.f32.mrb[0].mxu0
        %8908 = vdwg.mxu0
        %v8909 = vtanh.pop %v8904
        %v8910 = vpack.c.bf16 %v8909, %v8909
        %v8911 = vld [vmem:[%s8] sm:$0xf]
        %v8912 = vld [vmem:[%s8 + $0x4] sm:$0xf]
        %v8913 = vld [vmem:[%s8 + $0x8] sm:$0xf]
        %v8914 = vld [vmem:[%s8 + $0xc] sm:$0xf]
        %v8915 = vld [vmem:[%s8 + $0x10] sm:$0xf]
        %v8916 = vld [vmem:[%s8 + $0x14] sm:$0xf]
        %v8917 = vld [vmem:[%s8 + $0x18] sm:$0xf]
        %v8918 = vld [vmem:[%s8 + $0x1c] sm:$0xf]
        %v8919 = vld [vmem:[%s8 + $0x20] sm:$0xf]
        %v8920 = vld [vmem:[%s8 + $0x24] sm:$0xf]
        %v8921 = vld [vmem:[%s8 + $0x28] sm:$0xf]
        %v8922 = vld [vmem:[%s8 + $0x2c] sm:$0xf]
        %v8923 = vld [vmem:[%s8 + $0x30] sm:$0xf]
        %v8924 = vld [vmem:[%s8 + $0x34] sm:$0xf]
        %v8925 = vld [vmem:[%s8 + $0x38] sm:$0xf]
        %v8926 = vld [vmem:[%s8 + $0x3c] sm:$0xf]
        %v8927 = vld [vmem:[%s9] sm:$0x1]
        %v8929 = vlaneseq
        %v8930 = vshrl.u32 %v8929, 7
        %v8931 = vsub.s32 0, %v8930
        %v8932 = vrot.slane %v8927, %v8931
        %v8950 = vunpack.c.l.b16 %v8911
        %v8951 = vunpack.c.l.b16 %v8912
        %v8952 = vunpack.c.l.b16 %v8913
        %v8953 = vunpack.c.l.b16 %v8914
        %v8954 = vunpack.c.l.b16 %v8915
        %v8955 = vunpack.c.l.b16 %v8916
        %v8956 = vunpack.c.l.b16 %v8917
        %v8957 = vunpack.c.l.b16 %v8918
        %v8958 = vunpack.c.l.b16 %v8919
        %v8959 = vunpack.c.l.b16 %v8920
        %v8960 = vunpack.c.l.b16 %v8921
        %v8961 = vunpack.c.l.b16 %v8922
        %v8962 = vunpack.c.l.b16 %v8923
        %v8963 = vunpack.c.l.b16 %v8924
        %v8964 = vunpack.c.l.b16 %v8925
        %v8965 = vunpack.c.l.b16 %v8926
        %v8966 = vpack.c.b16 %v8951, %v8950
        %v8967 = vpack.c.b16 %v8953, %v8952
        %v8968 = vpack.c.b16 %v8955, %v8954
        %v8969 = vpack.c.b16 %v8957, %v8956
        %v8970 = vpack.c.b16 %v8959, %v8958
        %v8971 = vpack.c.b16 %v8961, %v8960
        %v8972 = vpack.c.b16 %v8963, %v8962
        %v8973 = vpack.c.b16 %v8965, %v8964
        %8982 = vmatprep.subr.bf16.mxu0 0
        %8983 = vmatpush1.bf16.msra.mxu0 %v8966
        %8984 = vmatprep.subr.bf16.mxu0 0
        %8985 = vmatpush1.bf16.msra.mxu0 %v8967
        %8986 = vmatprep.subr.bf16.mxu0 0
        %8987 = vmatpush1.bf16.msra.mxu0 %v8968
        %8988 = vmatprep.subr.bf16.mxu0 0
        %8989 = vmatpush1.bf16.msra.mxu0 %v8969
        %8990 = vmatprep.subr.bf16.mxu0 0
        %8991 = vmatpush1.bf16.msra.mxu0 %v8970
        %8992 = vmatprep.subr.bf16.mxu0 0
        %8993 = vmatpush1.bf16.msra.mxu0 %v8971
        %8994 = vmatprep.subr.bf16.mxu0 0
        %8995 = vmatpush1.bf16.msra.mxu0 %v8972
        %8996 = vmatprep.subr.bf16.mxu0 0
        %8997 = vmatpush1.bf16.msra.mxu0 %v8973
        %8998 = vmatprep.subr.bf16.mxu0 0
        %8999 = vmatpush1.bf16.msra.mxu0 0
        %9000 = vmatprep.subr.bf16.mxu0 0
        %9001 = vmatpush1.bf16.msra.mxu0 0
        %9002 = vmatprep.subr.bf16.mxu0 0
        %9003 = vmatpush1.bf16.msra.mxu0 0
        %9004 = vmatprep.subr.bf16.mxu0 0
        %9005 = vmatpush1.bf16.msra.mxu0 0
        %9006 = vmatprep.subr.bf16.mxu0 0
        %9007 = vmatpush1.bf16.msra.mxu0 0
        %9008 = vmatprep.subr.bf16.mxu0 0
        %9009 = vmatpush1.bf16.msra.mxu0 0
        %9010 = vmatprep.subr.bf16.mxu0 0
        %9011 = vmatpush1.bf16.msra.mxu0 0
        %9012 = vmatprep.subr.bf16.mxu0 0
        %9013 = vmatpush1.bf16.msra.mxu0 0
        %9014 = vmatprep.mubr.bf16.mxu0 0
        %9015 = vmatmul.mubr.bf16.gmra.mrb[0].mxu0 %v8910
        %v9016 = vpop.f32.mrb[0].mxu0
        %v9017 = vadd.f32 %v8932, %v9016
        %v9018 = vpop.f32.mrb[0].mxu0
        %v9019 = vpop.f32.mrb[0].mxu0
        %v9020 = vpop.f32.mrb[0].mxu0
        %9021 = vdwg.mxu0
        %v9022 = vtanh.pop %v9017
        %v9023 = vpack.c.bf16 %v9022, %v9022
        %v9024 = vld [vmem:[%s10] sm:$0xf]
        %v9025 = vld [vmem:[%s10 + $0x4] sm:$0xf]
        %v9026 = vld [vmem:[%s10 + $0x8] sm:$0xf]
        %v9027 = vld [vmem:[%s10 + $0xc] sm:$0xf]
        %v9028 = vld [vmem:[%s10 + $0x10] sm:$0xf]
        %v9029 = vld [vmem:[%s10 + $0x14] sm:$0xf]
        %v9030 = vld [vmem:[%s10 + $0x18] sm:$0xf]
        %v9031 = vld [vmem:[%s10 + $0x1c] sm:$0xf]
        %v9032 = vld [vmem:[%s10 + $0x20] sm:$0xf]
        %v9033 = vld [vmem:[%s10 + $0x24] sm:$0xf]
        %v9034 = vld [vmem:[%s10 + $0x28] sm:$0xf]
        %v9035 = vld [vmem:[%s10 + $0x2c] sm:$0xf]
        %v9036 = vld [vmem:[%s10 + $0x30] sm:$0xf]
        %v9037 = vld [vmem:[%s10 + $0x34] sm:$0xf]
        %v9038 = vld [vmem:[%s10 + $0x38] sm:$0xf]
        %v9039 = vld [vmem:[%s10 + $0x3c] sm:$0xf]
        %v9040 = vld [vmem:[%s11] sm:$0x1]
        %v9042 = vlaneseq
        %v9043 = vshrl.u32 %v9042, 7
        %v9044 = vsub.s32 0, %v9043
        %v9045 = vrot.slane %v9040, %v9044
        %v9063 = vunpack.c.l.b16 %v9024
        %v9064 = vunpack.c.l.b16 %v9025
        %v9065 = vunpack.c.l.b16 %v9026
        %v9066 = vunpack.c.l.b16 %v9027
        %v9067 = vunpack.c.l.b16 %v9028
        %v9068 = vunpack.c.l.b16 %v9029
        %v9069 = vunpack.c.l.b16 %v9030
        %v9070 = vunpack.c.l.b16 %v9031
        %v9071 = vunpack.c.l.b16 %v9032
        %v9072 = vunpack.c.l.b16 %v9033
        %v9073 = vunpack.c.l.b16 %v9034
        %v9074 = vunpack.c.l.b16 %v9035
        %v9075 = vunpack.c.l.b16 %v9036
        %v9076 = vunpack.c.l.b16 %v9037
        %v9077 = vunpack.c.l.b16 %v9038
        %v9078 = vunpack.c.l.b16 %v9039
        %v9079 = vpack.c.b16 %v9064, %v9063
        %v9080 = vpack.c.b16 %v9066, %v9065
        %v9081 = vpack.c.b16 %v9068, %v9067
        %v9082 = vpack.c.b16 %v9070, %v9069
        %v9083 = vpack.c.b16 %v9072, %v9071
        %v9084 = vpack.c.b16 %v9074, %v9073
        %v9085 = vpack.c.b16 %v9076, %v9075
        %v9086 = vpack.c.b16 %v9078, %v9077
        %9095 = vmatprep.subr.bf16.mxu0 0
        %9096 = vmatpush1.bf16.msra.mxu0 %v9079
        %9097 = vmatprep.subr.bf16.mxu0 0
        %9098 = vmatpush1.bf16.msra.mxu0 %v9080
        %9099 = vmatprep.subr.bf16.mxu0 0
        %9100 = vmatpush1.bf16.msra.mxu0 %v9081
        %9101 = vmatprep.subr.bf16.mxu0 0
        %9102 = vmatpush1.bf16.msra.mxu0 %v9082
        %9103 = vmatprep.subr.bf16.mxu0 0
        %9104 = vmatpush1.bf16.msra.mxu0 %v9083
        %9105 = vmatprep.subr.bf16.mxu0 0
        %9106 = vmatpush1.bf16.msra.mxu0 %v9084
        %9107 = vmatprep.subr.bf16.mxu0 0
        %9108 = vmatpush1.bf16.msra.mxu0 %v9085
        %9109 = vmatprep.subr.bf16.mxu0 0
        %9110 = vmatpush1.bf16.msra.mxu0 %v9086
        %9111 = vmatprep.subr.bf16.mxu0 0
        %9112 = vmatpush1.bf16.msra.mxu0 0
        %9113 = vmatprep.subr.bf16.mxu0 0
        %9114 = vmatpush1.bf16.msra.mxu0 0
        %9115 = vmatprep.subr.bf16.mxu0 0
        %9116 = vmatpush1.bf16.msra.mxu0 0
        %9117 = vmatprep.subr.bf16.mxu0 0
        %9118 = vmatpush1.bf16.msra.mxu0 0
        %9119 = vmatprep.subr.bf16.mxu0 0
        %9120 = vmatpush1.bf16.msra.mxu0 0
        %9121 = vmatprep.subr.bf16.mxu0 0
        %9122 = vmatpush1.bf16.msra.mxu0 0
        %9123 = vmatprep.subr.bf16.mxu0 0
        %9124 = vmatpush1.bf16.msra.mxu0 0
        %9125 = vmatprep.subr.bf16.mxu0 0
        %9126 = vmatpush1.bf16.msra.mxu0 0
        %9127 = vmatprep.mubr.bf16.mxu0 0
        %9128 = vmatmul.mubr.bf16.gmra.mrb[0].mxu0 %v9023
        %v9129 = vpop.f32.mrb[0].mxu0
        %v9130 = vadd.f32 %v9045, %v9129
        %v9131 = vpop.f32.mrb[0].mxu0
        %v9132 = vpop.f32.mrb[0].mxu0
        %v9133 = vpop.f32.mrb[0].mxu0
        %9134 = vdwg.mxu0
        %9135 = vst [vmem:[%s407] sm:$0x3] %v9130
        %s9136 = sand.u32 %s291, 1
        %s9137 = scalar_lea.sflag [#allocation6], %s9136
        %s9138 = sand.u32 %s291, 1
        %s9139 = smul.addr %s9138, 2
        %s9140 = scalar_lea.vmem [#allocation5], %s9139
        // Predicated region
        $region69: #{lenet5_forward.1} parent=67 // pred_check
          %p9141 = pneg %p301
        $region70: #{lenet5_forward.1} parent=67 // pred_check_branch
          %9143 = sbr.rel (%p9141) target = $region72
        $region71: #{lenet5_forward.1} parent=67 // pred_region
          %s9145 = ssub.s32 32, 32
          %9146 = vsyncadd %s9137, %s9145
          %s9147 = smul.addr %s26, 32
          %s9148 = scalar_lea.hbm %s12, %s9147
          %s9150 = sshll.u32 %s9140, 4
          %s9151 = int_to_ptr.vmem [resolvable:$true] %s9150
          %9153 = dma.vmem_to_hbm [thread:$0]  %s9151, 32, %s9148, %s9137
        $region72: #{lenet5_forward.1} parent=67 // pred_fallthru
          _
      $region68: #{lenet5_forward.1} parent=5 // pred_fallthru
        _
      %p9154 = scmp.le.s32.totalorder 2, %s21
      // Predicated region
      $region73: #{lenet5_forward.1} parent=5 // pred_check
        %p9155 = pneg %p9154
      $region74: #{lenet5_forward.1} parent=5 // pred_check_branch
        %9157 = sbr.rel (%p9155) target = $region76
      $region75: #{lenet5_forward.1} parent=5 // pred_region
        %s9158 = ssub.s32 %s21, 2
        // Predicated region
        $region77: #{lenet5_forward.1} parent=75 // pred_check
          %p9159 = pneg %p307
        $region78: #{lenet5_forward.1} parent=75 // pred_check_branch
          %9161 = sbr.rel (%p9159) target = $region80
        $region79: #{lenet5_forward.1} parent=75 // pred_region
          %s9162 = sand.u32 %s292, 1
          %s9163 = scalar_lea.sflag [#allocation6], %s9162
          %s9164 = sand.u32 %s292, 1
          %s9165 = smul.addr %s9164, 2
          %s9166 = scalar_lea.vmem [#allocation5], %s9165
          %9167 = dma.done %s9163, 32
        $region80: #{lenet5_forward.1} parent=75 // pred_fallthru
          _
      $region76: #{lenet5_forward.1} parent=5 // pred_fallthru
        _
    $region6: #{lenet5_forward.1} parent=1 // loop_footer
      %s25 = sadd.s32 1, %s21
    $region7: #{lenet5_forward.1} parent=1 // loop_footer_branch
      %20 = sbr.rel target = $region3
    $region8: #{lenet5_forward.1} parent=1 // loop_exit
      _
    %9168 = vsyncpa [#allocation6], 1
    %s9169 = scalar_lea.sflag [#allocation6], 1
    %9170 = vsyncpa %s9169, 1

</llo_original>
